<compile_context>
chip_gen: v7x
topology: tpu7x:2x2x1
jax: 0.10.0
libtpu: 0.0.40
codegen_flags: <defaults>
</compile_context>

<pallas_src>
import functools
from collections import namedtuple

import numpy as np
import jax
import jax.numpy as jnp
from jax import lax
from jax.experimental import pallas as pl
from jax.experimental.pallas import tpu as pltpu

ALIGN_CORNERS = False  # TODO(synk): ALIGN_CORNERS is repo-config-defined in the source; assumed False.
BN_EPS = 1e-5

_VMEM = pl.BlockSpec(memory_space=pltpu.MemorySpace.VMEM)


def _pick_tile(m, target):
    """Largest row-tile <= target that divides m (multiple of 8), else the full dim."""
    if m <= target:
        return m
    for tm in (target, target // 2, 256, 128, 64, 32, 16, 8):
        if tm <= target and m % tm == 0:
            return tm
    return m


# ----------------------------------------------------------------------------
# Pallas kernels
# ----------------------------------------------------------------------------

def _matmul_epilogue_kernel(*refs, relu, has_res):
    """Fused conv-as-matmul: (TM,K)@(K,Cout) + shift (+ residual) (+ ReLU)."""
    if has_res:
        p_ref, w_ref, s_ref, r_ref, o_ref = refs
    else:
        p_ref, w_ref, s_ref, o_ref = refs
    acc = jnp.dot(p_ref[...], w_ref[...], preferred_element_type=jnp.float32)
    y = acc + s_ref[...]                      # per-channel shift (folded BN beta / conv bias)
    if has_res:
        y = y + r_ref[...]
    if relu:
        y = jnp.maximum(y, 0.0)
    o_ref[...] = y


def _sum_relu_kernel(*refs):
    """relu(sum of inputs) -- the HighResolutionModule fuse combination (2-D lane-dense view)."""
    o_ref = refs[-1]
    acc = refs[0][...]
    for r in refs[1:-1]:
        acc = acc + r[...]
    o_ref[...] = jnp.maximum(acc, 0.0)


def _resize_kernel(x_ref, rh_ref, rw_ref, o_ref):
    """Bilinear resize of both spatial axes in one kernel (no HBM transposes).

    x_ref: (N, Hi, Wi, C); rh_ref: (Ho, Hi); rw_ref: (Wo, Wi); o_ref: (N, Ho, Wo, C).
    """
    N, Hi, Wi, C = x_ref.shape
    Ho, Wo = o_ref.shape[1], o_ref.shape[2]
    rh = rh_ref[...]
    rw = rw_ref[...]
    for n in range(N):
        xm = x_ref[n].reshape(Hi, Wi * C)
        t = jnp.dot(rh, xm, preferred_element_type=jnp.float32).reshape(Ho, Wi, C)
        for h in range(Ho):
            o_ref[n, h] = jnp.dot(rw, t[h], preferred_element_type=jnp.float32)


# ----------------------------------------------------------------------------
# Pallas wrappers (glue: padding, strided tap slicing, free reshapes)
# ----------------------------------------------------------------------------

def _fused_matmul(patches, w, shift, residual, relu):
    M, K = patches.shape
    Cout = w.shape[1]
    tm = _pick_tile(M, 1024)
    grid = (M // tm,)
    in_specs = [pl.BlockSpec((tm, K), lambda i: (i, 0)),
                pl.BlockSpec((K, Cout), lambda i: (0, 0)),
                pl.BlockSpec((1, Cout), lambda i: (0, 0))]
    args = [patches, w, shift]
    if residual is not None:
        in_specs.append(pl.BlockSpec((tm, Cout), lambda i: (i, 0)))
        args.append(residual)
    return pl.pallas_call(
        functools.partial(_matmul_epilogue_kernel, relu=relu,
                          has_res=residual is not None),
        out_shape=jax.ShapeDtypeStruct((M, Cout), jnp.float32),
        grid=grid,
        in_specs=in_specs,
        out_specs=pl.BlockSpec((tm, Cout), lambda i: (i, 0)),
        compiler_params=pltpu.CompilerParams(dimension_semantics=("parallel",)),
    )(*args)


def conv_bn_act(x, p, *, stride=1, relu=True, residual=None):
    """conv(KHxKW, stride, pad=(KH-1)//2, bias=False) + folded BN + optional residual + ReLU.

    x: (N, H, W, Cin) f32; p: dict(w=(KH*KW*Cin, Cout), shift=(1, Cout), kh, kw).
    Strided convs compute only the needed output pixels (per-tap strided slicing).
    """
    KH, KW = p['kh'], p['kw']
    w, shift = p['w'], p['shift']
    Cout = w.shape[1]
    N, H, W, Cin = x.shape
    pad = (KH - 1) // 2
    Ho = (H + 2 * pad - KH) // stride + 1
    Wo = (W + 2 * pad - KW) // stride + 1

    if KH == 1 and KW == 1 and stride == 1:
        patches = x.reshape(N * H * W, Cin)              # free, contiguous
    else:
        xp = jnp.pad(x, ((0, 0), (pad, pad), (pad, pad), (0, 0))) if pad else x
        taps = []
        for kh in range(KH):
            for kw in range(KW):
                taps.append(xp[:, kh:kh + (Ho - 1) * stride + 1:stride,
                                  kw:kw + (Wo - 1) * stride + 1:stride, :])
        patches = jnp.concatenate(taps, axis=-1).reshape(N * Ho * Wo, KH * KW * Cin)

    res2d = None
    if residual is not None:
        res2d = residual.reshape(N * Ho * Wo, Cout)      # free, contiguous
    y = _fused_matmul(patches, w, shift, res2d, relu)
    return y.reshape(N, Ho, Wo, Cout)


def sum_relu(xs):
    """relu(sum(xs)) on a lane-dense (N*H, W*C) 2-D view."""
    N, H, W, C = xs[0].shape
    xs2 = [t.reshape(N * H, W * C) for t in xs]          # free reshapes
    M, L = xs2[0].shape
    tm = _pick_tile(M, 512)
    y = pl.pallas_call(
        _sum_relu_kernel,
        out_shape=jax.ShapeDtypeStruct((M, L), jnp.float32),
        grid=(M // tm,),
        in_specs=[pl.BlockSpec((tm, L), lambda i: (i, 0))] * len(xs2),
        out_specs=pl.BlockSpec((tm, L), lambda i: (i, 0)),
        compiler_params=pltpu.CompilerParams(dimension_semantics=("parallel",)),
    )(*xs2)
    return y.reshape(N, H, W, C)


def _bilinear_matrix(out_size, in_size, align_corners):
    if align_corners and out_size > 1:
        src = np.arange(out_size) * (in_size - 1) / (out_size - 1)
    else:
        scale = in_size / out_size
        src = (np.arange(out_size) + 0.5) * scale - 0.5
        src = np.maximum(src, 0.0)
    lo = np.minimum(np.floor(src).astype(np.int64), in_size - 1)
    hi = np.minimum(lo + 1, in_size - 1)
    frac = (src - lo).astype(np.float32)
    m = np.zeros((out_size, in_size), np.float32)
    m[np.arange(out_size), lo] += 1.0 - frac
    m[np.arange(out_size), hi] += frac
    return jnp.asarray(m)


def resize_bilinear(x, out_h, out_w, align_corners=False):
    N, Hi, Wi, C = x.shape
    if out_h == Hi and out_w == Wi:
        return x                                          # identity resize
    rh = _bilinear_matrix(out_h, Hi, align_corners)
    rw = _bilinear_matrix(out_w, Wi, align_corners)
    return pl.pallas_call(
        _resize_kernel,
        out_shape=jax.ShapeDtypeStruct((N, out_h, out_w, C), jnp.float32),
        in_specs=[_VMEM, _VMEM, _VMEM],
        out_specs=_VMEM,
    )(x, rh, rw)


# ----------------------------------------------------------------------------
# Parameter construction (deterministic, synthetic; BN folded to eval-mode affine)
# ----------------------------------------------------------------------------

StageArgs = namedtuple('StageArgs',
                       ['num_modules', 'num_branches', 'num_blocks', 'num_channels', 'block'])
_EXPANSION = {'BASIC': 1, 'BOTTLENECK': 4}


class ParamGen:
    def __init__(self, seed):
        self._key = jax.random.PRNGKey(seed)
        self._n = 0

    def _k(self):
        self._n += 1
        return jax.random.fold_in(self._key, self._n)

    def _conv_w(self, kh, kw, cin, cout):
        std = (2.0 / (kh * kw * cin)) ** 0.5
        return std * jax.random.normal(self._k(), (kh, kw, cin, cout), jnp.float32)

    def conv_bn(self, kh, kw, cin, cout):
        """Conv(no bias) + inference-mode BatchNorm folded into (w2d, shift).

        TODO(synk): PyTorch default (train-mode) BN uses batch statistics; here we
        reproduce eval()/inference semantics with synthetic running stats so the
        result is batch-independent and the BN becomes a per-channel affine.
        """
        w = self._conv_w(kh, kw, cin, cout)
        gamma = 1.0 + 0.1 * jax.random.normal(self._k(), (cout,), jnp.float32)
        beta = 0.05 * jax.random.normal(self._k(), (cout,), jnp.float32)
        rmean = 0.05 * jax.random.normal(self._k(), (cout,), jnp.float32)
        rvar = 1.0 + 0.1 * jax.random.uniform(self._k(), (cout,), jnp.float32)
        scale = gamma * lax.rsqrt(rvar + BN_EPS)
        shift = beta - rmean * scale
        w2d = (w * scale).reshape(kh * kw * cin, cout)
        return dict(w=w2d, shift=shift.reshape(1, cout), kh=kh, kw=kw)

    def conv_bias(self, kh, kw, cin, cout):
        w = self._conv_w(kh, kw, cin, cout)
        bias = 0.05 * jax.random.normal(self._k(), (cout,), jnp.float32)
        return dict(w=w.reshape(kh * kw * cin, cout), shift=bias.reshape(1, cout),
                    kh=kh, kw=kw)


def _make_block(pg, block, inplanes, planes):
    exp = _EXPANSION[block]
    ds = None
    if inplanes != planes * exp:
        ds = pg.conv_bn(1, 1, inplanes, planes * exp)
    if block == 'BASIC':
        return dict(type='BASIC',
                    c1=pg.conv_bn(3, 3, inplanes, planes),
                    c2=pg.conv_bn(3, 3, planes, planes), ds=ds)
    return dict(type='BOTTLENECK',
                c1=pg.conv_bn(1, 1, inplanes, planes),
                c2=pg.conv_bn(3, 3, planes, planes),
                c3=pg.conv_bn(1, 1, planes, planes * exp), ds=ds)


def _make_hr_module(pg, st, num_inchannels, multi_scale_output):
    num_inchannels = list(num_inchannels)
    exp = _EXPANSION[st.block]
    branches = []
    for b in range(st.num_branches):
        inc = num_inchannels[b]
        planes = st.num_channels[b]
        blocks = []
        for _ in range(st.num_blocks[b]):
            blocks.append(_make_block(pg, st.block, inc, planes))
            inc = planes * exp
        num_inchannels[b] = planes * exp
        branches.append(blocks)
    fuse = None
    if st.num_branches > 1:
        fuse = []
        n_out = st.num_branches if multi_scale_output else 1
        for end in range(n_out):
            row = []
            for start in range(st.num_branches):
                if start == end:
                    row.append(('identity', None))
                elif start > end:
                    row.append(('up', pg.conv_bn(1, 1, num_inchannels[start],
                                                 num_inchannels[end])))
                else:
                    chain = []
                    for _ in range(end - start - 1):
                        chain.append(dict(conv=pg.conv_bn(3, 3, num_inchannels[start],
                                                          num_inchannels[start]),
                                          relu=True))
                    chain.append(dict(conv=pg.conv_bn(3, 3, num_inchannels[start],
                                                      num_inchannels[end]),
                                      relu=False))
                    row.append(('down', chain))
            fuse.append(row)
    return dict(branches=branches, fuse=fuse), num_inchannels


def _make_transition(pg, pre_ch, cur_ch):
    layers = []
    npre = len(pre_ch)
    for i in range(len(cur_ch)):
        if i < npre:
            if cur_ch[i] != pre_ch[i]:
                layers.append([dict(conv=pg.conv_bn(3, 3, pre_ch[i], cur_ch[i]), stride=1)])
            else:
                layers.append(None)  # nn.Identity
        else:
            chain = []
            for j in range(i + 1 - npre):
                inc = pre_ch[-1]
                outc = cur_ch[i] if j == i - npre else inc
                chain.append(dict(conv=pg.conv_bn(3, 3, inc, outc), stride=2))
            layers.append(chain)
    return layers


def build_hrnet_params(seed, config, inp_classes, num_classes, multi_scale_output=True):
    pg = ParamGen(seed)
    params = {}
    params['stem'] = [
        dict(conv=pg.conv_bn(3, 3, inp_classes, 64), stride=1),
        dict(conv=pg.conv_bn(3, 3, 64, 64), stride=2),
    ]
    num_inchannels = [64]
    stages, transitions = [], []
    pre_stage_channels = None
    for i, st in enumerate(config):
        mso = True if i < len(config) - 1 else multi_scale_output
        modules = []
        for _ in range(st.num_modules):
            mod, num_inchannels = _make_hr_module(pg, st, num_inchannels, mso)
            modules.append(mod)
        stages.append(modules)
        # TODO(synk): deep_supervision heads exist in __init__ but deep_supervision=False here.
        if i < len(config) - 1 and st.num_branches < config[i + 1].num_branches:
            nxt = config[i + 1]
            exp = _EXPANSION[nxt.block]
            pre_stage_channels = [c * exp for c in nxt.num_channels]
            transitions.append(_make_transition(pg, num_inchannels, pre_stage_channels))
            num_inchannels = pre_stage_channels
    params['stages'] = stages
    params['transitions'] = transitions
    last_inp = int(sum(pre_stage_channels))
    params['aux_head'] = dict(
        c1=pg.conv_bn(1, 1, last_inp, last_inp),
        c2=pg.conv_bias(1, 1, last_inp, num_classes))
    return params


# ----------------------------------------------------------------------------
# Forward pass
# ----------------------------------------------------------------------------

def _apply_block(x, p):
    if p['type'] == 'BASIC':
        out = conv_bn_act(x, p['c1'], relu=True)
        residual = x if p['ds'] is None else conv_bn_act(x, p['ds'], relu=False)
        return conv_bn_act(out, p['c2'], relu=True, residual=residual)
    # BOTTLENECK (TODO(synk): Attention module skipped -- ratio=None path)
    out = conv_bn_act(x, p['c1'], relu=True)
    out = conv_bn_act(out, p['c2'], relu=True)
    residual = x if p['ds'] is None else conv_bn_act(x, p['ds'], relu=False)
    return conv_bn_act(out, p['c3'], relu=True, residual=residual)


def _apply_hr_module(xs, mod):
    outs = []
    for b, blocks in enumerate(mod['branches']):
        y = xs[b]
        for blk in blocks:
            y = _apply_block(y, blk)
        outs.append(y)
    if mod['fuse'] is None:          # single-branch module
        return outs
    fused = []
    for end, row in enumerate(mod['fuse']):
        terms = []
        for start, (kind, p) in enumerate(row):
            if kind == 'identity':
                v = outs[start]
            elif kind == 'up':
                v = conv_bn_act(outs[start], p, relu=False)
                v = resize_bilinear(v, outs[end].shape[1], outs[end].shape[2],
                                    align_corners=ALIGN_CORNERS)
            else:  # 'down'
                v = outs[start]
                for layer in p:
                    v = conv_bn_act(v, layer['conv'], stride=2, relu=layer['relu'])
            terms.append(v)
        fused.append(sum_relu(terms))
    return fused


def _apply_transition(xs, trans):
    outs = []
    n = len(trans)
    for j, t in enumerate(trans):
        inp = xs[j] if j < n - 1 else xs[-1]
        if t is None:
            outs.append(inp)
        else:
            y = inp
            for layer in t:
                y = conv_bn_act(y, layer['conv'], stride=layer['stride'], relu=True)
            outs.append(y)
    return outs


def hrnet_forward(params, x_nchw, scale_factor=2):
    x = jnp.transpose(x_nchw, (0, 2, 3, 1)).astype(jnp.float32)   # NCHW -> NHWC
    h0, w0 = x.shape[1], x.shape[2]
    # F.interpolate(x, scale_factor=2, mode='bilinear') (align_corners=False)
    x = resize_bilinear(x, int(h0 * scale_factor), int(w0 * scale_factor),
                        align_corners=False)
    for layer in params['stem']:
        x = conv_bn_act(x, layer['conv'], stride=layer['stride'], relu=True)
    xs = [x]
    stages, transitions = params['stages'], params['transitions']
    for i in range(len(stages) - 1):
        for mod in stages[i]:
            xs = _apply_hr_module(xs, mod)
        xs = _apply_transition(xs, transitions[i])
    for mod in stages[-1]:
        xs = _apply_hr_module(xs, mod)
    resized = [resize_bilinear(t, h0, w0, align_corners=ALIGN_CORNERS) for t in xs]
    feats = jnp.concatenate(resized, axis=-1)
    a = params['aux_head']
    y = conv_bn_act(feats, a['c1'], relu=True)
    y = conv_bn_act(y, a['c2'], relu=False)                       # 1x1 classifier w/ bias
    return jnp.transpose(y, (0, 3, 1, 2))                         # NHWC -> NCHW


# ----------------------------------------------------------------------------
# Main
# ----------------------------------------------------------------------------

if __name__ == "__main__":
    config = [
        StageArgs(1, 1, [1], [16], 'BOTTLENECK'),
        StageArgs(1, 2, [1, 1], [8, 16], 'BASIC'),
        StageArgs(1, 3, [1, 1, 1], [8, 16, 32], 'BASIC'),
        StageArgs(1, 4, [1, 1, 1, 1], [8, 16, 32, 64], 'BASIC'),
    ]
    inp_classes, num_classes = 4, 3
    params = build_hrnet_params(1234, config, inp_classes, num_classes)

    x = jax.random.normal(jax.random.PRNGKey(0), (2, inp_classes, 16, 16), jnp.float32)
    out_aux = hrnet_forward(params, x)
    out_aux = jax.block_until_ready(out_aux)
    assert out_aux.shape == (2, num_classes, 16, 16), out_aux.shape
    assert bool(jnp.all(jnp.isfinite(out_aux)))
    print("KERNEL_OK")
</pallas_src>

<mosaic_0001>
module attributes {stable_mosaic.version = 11 : i64} {
  func.func @_resize_kernel(%arg0: memref<2x16x16x4xf32, #tpu.memory_space<vmem>>, %arg1: memref<32x16xf32, #tpu.memory_space<vmem>>, %arg2: memref<32x16xf32, #tpu.memory_space<vmem>>, %arg3: memref<2x32x32x4xf32, #tpu.memory_space<vmem>>) attributes {dimension_semantics = [], scalar_prefetch = 0 : i64, scratch_operands = 0 : i64, tpu.core_type = #tpu.core_type<tc>} {
    %c0 = arith.constant 0 : index
    %c0_0 = arith.constant 0 : index
    %0 = vector.load %arg1[%c0, %c0_0] : memref<32x16xf32, #tpu.memory_space<vmem>>, vector<32x16xf32>
    %c0_1 = arith.constant 0 : index
    %c0_2 = arith.constant 0 : index
    %1 = vector.load %arg2[%c0_1, %c0_2] : memref<32x16xf32, #tpu.memory_space<vmem>>, vector<32x16xf32>
    %c0_3 = arith.constant 0 : index
    %c0_4 = arith.constant 0 : index
    %c0_5 = arith.constant 0 : index
    %c0_6 = arith.constant 0 : index
    %2 = vector.load %arg0[%c0_3, %c0_4, %c0_5, %c0_6] : memref<2x16x16x4xf32, #tpu.memory_space<vmem>>, vector<1x16x16x4xf32>
    %3 = vector.shape_cast %2 : vector<1x16x16x4xf32> to vector<16x16x4xf32>
    %4 = vector.shape_cast %3 : vector<16x16x4xf32> to vector<16x64xf32>
    %cst = arith.constant dense<0.000000e+00> : vector<32x64xf32>
    %5 = tpu.matmul %0, %4, %cst {dimension_numbers = #tpu.dot_dimension_numbers<[1], [0], [0], [1], [0, 0, 1, 1], [], []>} : vector<32x16xf32>, vector<16x64xf32>, vector<32x64xf32> -> vector<32x64xf32>
    %6 = vector.shape_cast %5 : vector<32x64xf32> to vector<32x16x4xf32>
    %7 = vector.extract_strided_slice %6 {offsets = [0, 0, 0], sizes = [1, 16, 4], strides = [1, 1, 1]} : vector<32x16x4xf32> to vector<1x16x4xf32>
    %8 = vector.shape_cast %7 : vector<1x16x4xf32> to vector<16x4xf32>
    %cst_7 = arith.constant dense<0.000000e+00> : vector<32x4xf32>
    %9 = tpu.matmul %1, %8, %cst_7 {dimension_numbers = #tpu.dot_dimension_numbers<[1], [0], [0], [1], [0, 0, 1, 1], [], []>} : vector<32x16xf32>, vector<16x4xf32>, vector<32x4xf32> -> vector<32x4xf32>
    %c0_8 = arith.constant 0 : index
    %c0_9 = arith.constant 0 : index
    %c0_10 = arith.constant 0 : index
    %c0_11 = arith.constant 0 : index
    %10 = vector.load %arg3[%c0_8, %c0_9, %c0_10, %c0_11] : memref<2x32x32x4xf32, #tpu.memory_space<vmem>>, vector<1x1x32x4xf32>
    %11 = vector.shape_cast %10 : vector<1x1x32x4xf32> to vector<32x4xf32>
    %12 = vector.shape_cast %9 : vector<32x4xf32> to vector<1x1x32x4xf32>
    tpu.vector_store %arg3[%c0_8, %c0_9, %c0_10, %c0_11], %12 {strides = array<i32>} : memref<2x32x32x4xf32, #tpu.memory_space<vmem>>, vector<1x1x32x4xf32>,
    %13 = vector.extract_strided_slice %6 {offsets = [1, 0, 0], sizes = [1, 16, 4], strides = [1, 1, 1]} : vector<32x16x4xf32> to vector<1x16x4xf32>
    %14 = vector.shape_cast %13 : vector<1x16x4xf32> to vector<16x4xf32>
    %cst_12 = arith.constant dense<0.000000e+00> : vector<32x4xf32>
    %15 = tpu.matmul %1, %14, %cst_12 {dimension_numbers = #tpu.dot_dimension_numbers<[1], [0], [0], [1], [0, 0, 1, 1], [], []>} : vector<32x16xf32>, vector<16x4xf32>, vector<32x4xf32> -> vector<32x4xf32>
    %c0_13 = arith.constant 0 : index
    %c1 = arith.constant 1 : index
    %c0_14 = arith.constant 0 : index
    %c0_15 = arith.constant 0 : index
    %16 = vector.load %arg3[%c0_13, %c1, %c0_14, %c0_15] : memref<2x32x32x4xf32, #tpu.memory_space<vmem>>, vector<1x1x32x4xf32>
    %17 = vector.shape_cast %16 : vector<1x1x32x4xf32> to vector<32x4xf32>
    %18 = vector.shape_cast %15 : vector<32x4xf32> to vector<1x1x32x4xf32>
    tpu.vector_store %arg3[%c0_13, %c1, %c0_14, %c0_15], %18 {strides = array<i32>} : memref<2x32x32x4xf32, #tpu.memory_space<vmem>>, vector<1x1x32x4xf32>,
    %19 = vector.extract_strided_slice %6 {offsets = [2, 0, 0], sizes = [1, 16, 4], strides = [1, 1, 1]} : vector<32x16x4xf32> to vector<1x16x4xf32>
    %20 = vector.shape_cast %19 : vector<1x16x4xf32> to vector<16x4xf32>
    %cst_16 = arith.constant dense<0.000000e+00> : vector<32x4xf32>
    %21 = tpu.matmul %1, %20, %cst_16 {dimension_numbers = #tpu.dot_dimension_numbers<[1], [0], [0], [1], [0, 0, 1, 1], [], []>} : vector<32x16xf32>, vector<16x4xf32>, vector<32x4xf32> -> vector<32x4xf32>
    %c0_17 = arith.constant 0 : index
    %c2 = arith.constant 2 : index
    %c0_18 = arith.constant 0 : index
    %c0_19 = arith.constant 0 : index
    %22 = vector.load %arg3[%c0_17, %c2, %c0_18, %c0_19] : memref<2x32x32x4xf32, #tpu.memory_space<vmem>>, vector<1x1x32x4xf32>
    %23 = vector.shape_cast %22 : vector<1x1x32x4xf32> to vector<32x4xf32>
    %24 = vector.shape_cast %21 : vector<32x4xf32> to vector<1x1x32x4xf32>
    tpu.vector_store %arg3[%c0_17, %c2, %c0_18, %c0_19], %24 {strides = array<i32>} : memref<2x32x32x4xf32, #tpu.memory_space<vmem>>, vector<1x1x32x4xf32>,
    %25 = vector.extract_strided_slice %6 {offsets = [3, 0, 0], sizes = [1, 16, 4], strides = [1, 1, 1]} : vector<32x16x4xf32> to vector<1x16x4xf32>
    %26 = vector.shape_cast %25 : vector<1x16x4xf32> to vector<16x4xf32>
    %cst_20 = arith.constant dense<0.000000e+00> : vector<32x4xf32>
    %27 = tpu.matmul %1, %26, %cst_20 {dimension_numbers = #tpu.dot_dimension_numbers<[1], [0], [0], [1], [0, 0, 1, 1], [], []>} : vector<32x16xf32>, vector<16x4xf32>, vector<32x4xf32> -> vector<32x4xf32>
    %c0_21 = arith.constant 0 : index
    %c3 = arith.constant 3 : index
    %c0_22 = arith.constant 0 : index
    %c0_23 = arith.constant 0 : index
    %28 = vector.load %arg3[%c0_21, %c3, %c0_22, %c0_23] : memref<2x32x32x4xf32, #tpu.memory_space<vmem>>, vector<1x1x32x4xf32>
    %29 = vector.shape_cast %28 : vector<1x1x32x4xf32> to vector<32x4xf32>
    %30 = vector.shape_cast %27 : vector<32x4xf32> to vector<1x1x32x4xf32>
    tpu.vector_store %arg3[%c0_21, %c3, %c0_22, %c0_23], %30 {strides = array<i32>} : memref<2x32x32x4xf32, #tpu.memory_space<vmem>>, vector<1x1x32x4xf32>,
    %31 = vector.extract_strided_slice %6 {offsets = [4, 0, 0], sizes = [1, 16, 4], strides = [1, 1, 1]} : vector<32x16x4xf32> to vector<1x16x4xf32>
    %32 = vector.shape_cast %31 : vector<1x16x4xf32> to vector<16x4xf32>
    %cst_24 = arith.constant dense<0.000000e+00> : vector<32x4xf32>
    %33 = tpu.matmul %1, %32, %cst_24 {dimension_numbers = #tpu.dot_dimension_numbers<[1], [0], [0], [1], [0, 0, 1, 1], [], []>} : vector<32x16xf32>, vector<16x4xf32>, vector<32x4xf32> -> vector<32x4xf32>
    %c0_25 = arith.constant 0 : index
    %c4 = arith.constant 4 : index
    %c0_26 = arith.constant 0 : index
    %c0_27 = arith.constant 0 : index
    %34 = vector.load %arg3[%c0_25, %c4, %c0_26, %c0_27] : memref<2x32x32x4xf32, #tpu.memory_space<vmem>>, vector<1x1x32x4xf32>
    %35 = vector.shape_cast %34 : vector<1x1x32x4xf32> to vector<32x4xf32>
    %36 = vector.shape_cast %33 : vector<32x4xf32> to vector<1x1x32x4xf32>
    tpu.vector_store %arg3[%c0_25, %c4, %c0_26, %c0_27], %36 {strides = array<i32>} : memref<2x32x32x4xf32, #tpu.memory_space<vmem>>, vector<1x1x32x4xf32>,
    %37 = vector.extract_strided_slice %6 {offsets = [5, 0, 0], sizes = [1, 16, 4], strides = [1, 1, 1]} : vector<32x16x4xf32> to vector<1x16x4xf32>
    %38 = vector.shape_cast %37 : vector<1x16x4xf32> to vector<16x4xf32>
    %cst_28 = arith.constant dense<0.000000e+00> : vector<32x4xf32>
    %39 = tpu.matmul %1, %38, %cst_28 {dimension_numbers = #tpu.dot_dimension_numbers<[1], [0], [0], [1], [0, 0, 1, 1], [], []>} : vector<32x16xf32>, vector<16x4xf32>, vector<32x4xf32> -> vector<32x4xf32>
    %c0_29 = arith.constant 0 : index
    %c5 = arith.constant 5 : index
    %c0_30 = arith.constant 0 : index
    %c0_31 = arith.constant 0 : index
    %40 = vector.load %arg3[%c0_29, %c5, %c0_30, %c0_31] : memref<2x32x32x4xf32, #tpu.memory_space<vmem>>, vector<1x1x32x4xf32>
    %41 = vector.shape_cast %40 : vector<1x1x32x4xf32> to vector<32x4xf32>
    %42 = vector.shape_cast %39 : vector<32x4xf32> to vector<1x1x32x4xf32>
    tpu.vector_store %arg3[%c0_29, %c5, %c0_30, %c0_31], %42 {strides = array<i32>} : memref<2x32x32x4xf32, #tpu.memory_space<vmem>>, vector<1x1x32x4xf32>,
    %43 = vector.extract_strided_slice %6 {offsets = [6, 0, 0], sizes = [1, 16, 4], strides = [1, 1, 1]} : vector<32x16x4xf32> to vector<1x16x4xf32>
    %44 = vector.shape_cast %43 : vector<1x16x4xf32> to vector<16x4xf32>
    %cst_32 = arith.constant dense<0.000000e+00> : vector<32x4xf32>
    %45 = tpu.matmul %1, %44, %cst_32 {dimension_numbers = #tpu.dot_dimension_numbers<[1], [0], [0], [1], [0, 0, 1, 1], [], []>} : vector<32x16xf32>, vector<16x4xf32>, vector<32x4xf32> -> vector<32x4xf32>
    %c0_33 = arith.constant 0 : index
    %c6 = arith.constant 6 : index
    %c0_34 = arith.constant 0 : index
    %c0_35 = arith.constant 0 : index
    %46 = vector.load %arg3[%c0_33, %c6, %c0_34, %c0_35] : memref<2x32x32x4xf32, #tpu.memory_space<vmem>>, vector<1x1x32x4xf32>
    %47 = vector.shape_cast %46 : vector<1x1x32x4xf32> to vector<32x4xf32>
    %48 = vector.shape_cast %45 : vector<32x4xf32> to vector<1x1x32x4xf32>
    tpu.vector_store %arg3[%c0_33, %c6, %c0_34, %c0_35], %48 {strides = array<i32>} : memref<2x32x32x4xf32, #tpu.memory_space<vmem>>, vector<1x1x32x4xf32>,
    %49 = vector.extract_strided_slice %6 {offsets = [7, 0, 0], sizes = [1, 16, 4], strides = [1, 1, 1]} : vector<32x16x4xf32> to vector<1x16x4xf32>
    %50 = vector.shape_cast %49 : vector<1x16x4xf32> to vector<16x4xf32>
    %cst_36 = arith.constant dense<0.000000e+00> : vector<32x4xf32>
    %51 = tpu.matmul %1, %50, %cst_36 {dimension_numbers = #tpu.dot_dimension_numbers<[1], [0], [0], [1], [0, 0, 1, 1], [], []>} : vector<32x16xf32>, vector<16x4xf32>, vector<32x4xf32> -> vector<32x4xf32>
    %c0_37 = arith.constant 0 : index
    %c7 = arith.constant 7 : index
    %c0_38 = arith.constant 0 : index
    %c0_39 = arith.constant 0 : index
    %52 = vector.load %arg3[%c0_37, %c7, %c0_38, %c0_39] : memref<2x32x32x4xf32, #tpu.memory_space<vmem>>, vector<1x1x32x4xf32>
    %53 = vector.shape_cast %52 : vector<1x1x32x4xf32> to vector<32x4xf32>
    %54 = vector.shape_cast %51 : vector<32x4xf32> to vector<1x1x32x4xf32>
    tpu.vector_store %arg3[%c0_37, %c7, %c0_38, %c0_39], %54 {strides = array<i32>} : memref<2x32x32x4xf32, #tpu.memory_space<vmem>>, vector<1x1x32x4xf32>,
    %55 = vector.extract_strided_slice %6 {offsets = [8, 0, 0], sizes = [1, 16, 4], strides = [1, 1, 1]} : vector<32x16x4xf32> to vector<1x16x4xf32>
    %56 = vector.shape_cast %55 : vector<1x16x4xf32> to vector<16x4xf32>
    %cst_40 = arith.constant dense<0.000000e+00> : vector<32x4xf32>
    %57 = tpu.matmul %1, %56, %cst_40 {dimension_numbers = #tpu.dot_dimension_numbers<[1], [0], [0], [1], [0, 0, 1, 1], [], []>} : vector<32x16xf32>, vector<16x4xf32>, vector<32x4xf32> -> vector<32x4xf32>
    %c0_41 = arith.constant 0 : index
    %c8 = arith.constant 8 : index
    %c0_42 = arith.constant 0 : index
    %c0_43 = arith.constant 0 : index
    %58 = vector.load %arg3[%c0_41, %c8, %c0_42, %c0_43] : memref<2x32x32x4xf32, #tpu.memory_space<vmem>>, vector<1x1x32x4xf32>
    %59 = vector.shape_cast %58 : vector<1x1x32x4xf32> to vector<32x4xf32>
    %60 = vector.shape_cast %57 : vector<32x4xf32> to vector<1x1x32x4xf32>
    tpu.vector_store %arg3[%c0_41, %c8, %c0_42, %c0_43], %60 {strides = array<i32>} : memref<2x32x32x4xf32, #tpu.memory_space<vmem>>, vector<1x1x32x4xf32>,
    %61 = vector.extract_strided_slice %6 {offsets = [9, 0, 0], sizes = [1, 16, 4], strides = [1, 1, 1]} : vector<32x16x4xf32> to vector<1x16x4xf32>
    %62 = vector.shape_cast %61 : vector<1x16x4xf32> to vector<16x4xf32>
    %cst_44 = arith.constant dense<0.000000e+00> : vector<32x4xf32>
    %63 = tpu.matmul %1, %62, %cst_44 {dimension_numbers = #tpu.dot_dimension_numbers<[1], [0], [0], [1], [0, 0, 1, 1], [], []>} : vector<32x16xf32>, vector<16x4xf32>, vector<32x4xf32> -> vector<32x4xf32>
    %c0_45 = arith.constant 0 : index
    %c9 = arith.constant 9 : index
    %c0_46 = arith.constant 0 : index
    %c0_47 = arith.constant 0 : index
    %64 = vector.load %arg3[%c0_45, %c9, %c0_46, %c0_47] : memref<2x32x32x4xf32, #tpu.memory_space<vmem>>, vector<1x1x32x4xf32>
    %65 = vector.shape_cast %64 : vector<1x1x32x4xf32> to vector<32x4xf32>
    %66 = vector.shape_cast %63 : vector<32x4xf32> to vector<1x1x32x4xf32>
    tpu.vector_store %arg3[%c0_45, %c9, %c0_46, %c0_47], %66 {strides = array<i32>} : memref<2x32x32x4xf32, #tpu.memory_space<vmem>>, vector<1x1x32x4xf32>,
    %67 = vector.extract_strided_slice %6 {offsets = [10, 0, 0], sizes = [1, 16, 4], strides = [1, 1, 1]} : vector<32x16x4xf32> to vector<1x16x4xf32>
    %68 = vector.shape_cast %67 : vector<1x16x4xf32> to vector<16x4xf32>
    %cst_48 = arith.constant dense<0.000000e+00> : vector<32x4xf32>
    %69 = tpu.matmul %1, %68, %cst_48 {dimension_numbers = #tpu.dot_dimension_numbers<[1], [0], [0], [1], [0, 0, 1, 1], [], []>} : vector<32x16xf32>, vector<16x4xf32>, vector<32x4xf32> -> vector<32x4xf32>
    %c0_49 = arith.constant 0 : index
    %c10 = arith.constant 10 : index
    %c0_50 = arith.constant 0 : index
    %c0_51 = arith.constant 0 : index
    %70 = vector.load %arg3[%c0_49, %c10, %c0_50, %c0_51] : memref<2x32x32x4xf32, #tpu.memory_space<vmem>>, vector<1x1x32x4xf32>
    %71 = vector.shape_cast %70 : vector<1x1x32x4xf32> to vector<32x4xf32>
    %72 = vector.shape_cast %69 : vector<32x4xf32> to vector<1x1x32x4xf32>
    tpu.vector_store %arg3[%c0_49, %c10, %c0_50, %c0_51], %72 {strides = array<i32>} : memref<2x32x32x4xf32, #tpu.memory_space<vmem>>, vector<1x1x32x4xf32>,
    %73 = vector.extract_strided_slice %6 {offsets = [11, 0, 0], sizes = [1, 16, 4], strides = [1, 1, 1]} : vector<32x16x4xf32> to vector<1x16x4xf32>
    %74 = vector.shape_cast %73 : vector<1x16x4xf32> to vector<16x4xf32>
    %cst_52 = arith.constant dense<0.000000e+00> : vector<32x4xf32>
    %75 = tpu.matmul %1, %74, %cst_52 {dimension_numbers = #tpu.dot_dimension_numbers<[1], [0], [0], [1], [0, 0, 1, 1], [], []>} : vector<32x16xf32>, vector<16x4xf32>, vector<32x4xf32> -> vector<32x4xf32>
    %c0_53 = arith.constant 0 : index
    %c11 = arith.constant 11 : index
    %c0_54 = arith.constant 0 : index
    %c0_55 = arith.constant 0 : index
    %76 = vector.load %arg3[%c0_53, %c11, %c0_54, %c0_55] : memref<2x32x32x4xf32, #tpu.memory_space<vmem>>, vector<1x1x32x4xf32>
    %77 = vector.shape_cast %76 : vector<1x1x32x4xf32> to vector<32x4xf32>
    %78 = vector.shape_cast %75 : vector<32x4xf32> to vector<1x1x32x4xf32>
    tpu.vector_store %arg3[%c0_53, %c11, %c0_54, %c0_55], %78 {strides = array<i32>} : memref<2x32x32x4xf32, #tpu.memory_space<vmem>>, vector<1x1x32x4xf32>,
    %79 = vector.extract_strided_slice %6 {offsets = [12, 0, 0], sizes = [1, 16, 4], strides = [1, 1, 1]} : vector<32x16x4xf32> to vector<1x16x4xf32>
    %80 = vector.shape_cast %79 : vector<1x16x4xf32> to vector<16x4xf32>
    %cst_56 = arith.constant dense<0.000000e+00> : vector<32x4xf32>
    %81 = tpu.matmul %1, %80, %cst_56 {dimension_numbers = #tpu.dot_dimension_numbers<[1], [0], [0], [1], [0, 0, 1, 1], [], []>} : vector<32x16xf32>, vector<16x4xf32>, vector<32x4xf32> -> vector<32x4xf32>
    %c0_57 = arith.constant 0 : index
    %c12 = arith.constant 12 : index
    %c0_58 = arith.constant 0 : index
    %c0_59 = arith.constant 0 : index
    %82 = vector.load %arg3[%c0_57, %c12, %c0_58, %c0_59] : memref<2x32x32x4xf32, #tpu.memory_space<vmem>>, vector<1x1x32x4xf32>
    %83 = vector.shape_cast %82 : vector<1x1x32x4xf32> to vector<32x4xf32>
    %84 = vector.shape_cast %81 : vector<32x4xf32> to vector<1x1x32x4xf32>
    tpu.vector_store %arg3[%c0_57, %c12, %c0_58, %c0_59], %84 {strides = array<i32>} : memref<2x32x32x4xf32, #tpu.memory_space<vmem>>, vector<1x1x32x4xf32>,
    %85 = vector.extract_strided_slice %6 {offsets = [13, 0, 0], sizes = [1, 16, 4], strides = [1, 1, 1]} : vector<32x16x4xf32> to vector<1x16x4xf32>
    %86 = vector.shape_cast %85 : vector<1x16x4xf32> to vector<16x4xf32>
    %cst_60 = arith.constant dense<0.000000e+00> : vector<32x4xf32>
    %87 = tpu.matmul %1, %86, %cst_60 {dimension_numbers = #tpu.dot_dimension_numbers<[1], [0], [0], [1], [0, 0, 1, 1], [], []>} : vector<32x16xf32>, vector<16x4xf32>, vector<32x4xf32> -> vector<32x4xf32>
    %c0_61 = arith.constant 0 : index
    %c13 = arith.constant 13 : index
    %c0_62 = arith.constant 0 : index
    %c0_63 = arith.constant 0 : index
    %88 = vector.load %arg3[%c0_61, %c13, %c0_62, %c0_63] : memref<2x32x32x4xf32, #tpu.memory_space<vmem>>, vector<1x1x32x4xf32>
    %89 = vector.shape_cast %88 : vector<1x1x32x4xf32> to vector<32x4xf32>
    %90 = vector.shape_cast %87 : vector<32x4xf32> to vector<1x1x32x4xf32>
    tpu.vector_store %arg3[%c0_61, %c13, %c0_62, %c0_63], %90 {strides = array<i32>} : memref<2x32x32x4xf32, #tpu.memory_space<vmem>>, vector<1x1x32x4xf32>,
    %91 = vector.extract_strided_slice %6 {offsets = [14, 0, 0], sizes = [1, 16, 4], strides = [1, 1, 1]} : vector<32x16x4xf32> to vector<1x16x4xf32>
    %92 = vector.shape_cast %91 : vector<1x16x4xf32> to vector<16x4xf32>
    %cst_64 = arith.constant dense<0.000000e+00> : vector<32x4xf32>
    %93 = tpu.matmul %1, %92, %cst_64 {dimension_numbers = #tpu.dot_dimension_numbers<[1], [0], [0], [1], [0, 0, 1, 1], [], []>} : vector<32x16xf32>, vector<16x4xf32>, vector<32x4xf32> -> vector<32x4xf32>
    %c0_65 = arith.constant 0 : index
    %c14 = arith.constant 14 : index
    %c0_66 = arith.constant 0 : index
    %c0_67 = arith.constant 0 : index
    %94 = vector.load %arg3[%c0_65, %c14, %c0_66, %c0_67] : memref<2x32x32x4xf32, #tpu.memory_space<vmem>>, vector<1x1x32x4xf32>
    %95 = vector.shape_cast %94 : vector<1x1x32x4xf32> to vector<32x4xf32>
    %96 = vector.shape_cast %93 : vector<32x4xf32> to vector<1x1x32x4xf32>
    tpu.vector_store %arg3[%c0_65, %c14, %c0_66, %c0_67], %96 {strides = array<i32>} : memref<2x32x32x4xf32, #tpu.memory_space<vmem>>, vector<1x1x32x4xf32>,
    %97 = vector.extract_strided_slice %6 {offsets = [15, 0, 0], sizes = [1, 16, 4], strides = [1, 1, 1]} : vector<32x16x4xf32> to vector<1x16x4xf32>
    %98 = vector.shape_cast %97 : vector<1x16x4xf32> to vector<16x4xf32>
    %cst_68 = arith.constant dense<0.000000e+00> : vector<32x4xf32>
    %99 = tpu.matmul %1, %98, %cst_68 {dimension_numbers = #tpu.dot_dimension_numbers<[1], [0], [0], [1], [0, 0, 1, 1], [], []>} : vector<32x16xf32>, vector<16x4xf32>, vector<32x4xf32> -> vector<32x4xf32>
    %c0_69 = arith.constant 0 : index
    %c15 = arith.constant 15 : index
    %c0_70 = arith.constant 0 : index
    %c0_71 = arith.constant 0 : index
    %100 = vector.load %arg3[%c0_69, %c15, %c0_70, %c0_71] : memref<2x32x32x4xf32, #tpu.memory_space<vmem>>, vector<1x1x32x4xf32>
    %101 = vector.shape_cast %100 : vector<1x1x32x4xf32> to vector<32x4xf32>
    %102 = vector.shape_cast %99 : vector<32x4xf32> to vector<1x1x32x4xf32>
    tpu.vector_store %arg3[%c0_69, %c15, %c0_70, %c0_71], %102 {strides = array<i32>} : memref<2x32x32x4xf32, #tpu.memory_space<vmem>>, vector<1x1x32x4xf32>,
    %103 = vector.extract_strided_slice %6 {offsets = [16, 0, 0], sizes = [1, 16, 4], strides = [1, 1, 1]} : vector<32x16x4xf32> to vector<1x16x4xf32>
    %104 = vector.shape_cast %103 : vector<1x16x4xf32> to vector<16x4xf32>
    %cst_72 = arith.constant dense<0.000000e+00> : vector<32x4xf32>
    %105 = tpu.matmul %1, %104, %cst_72 {dimension_numbers = #tpu.dot_dimension_numbers<[1], [0], [0], [1], [0, 0, 1, 1], [], []>} : vector<32x16xf32>, vector<16x4xf32>, vector<32x4xf32> -> vector<32x4xf32>
    %c0_73 = arith.constant 0 : index
    %c16 = arith.constant 16 : index
    %c0_74 = arith.constant 0 : index
    %c0_75 = arith.constant 0 : index
    %106 = vector.load %arg3[%c0_73, %c16, %c0_74, %c0_75] : memref<2x32x32x4xf32, #tpu.memory_space<vmem>>, vector<1x1x32x4xf32>
    %107 = vector.shape_cast %106 : vector<1x1x32x4xf32> to vector<32x4xf32>
    %108 = vector.shape_cast %105 : vector<32x4xf32> to vector<1x1x32x4xf32>
    tpu.vector_store %arg3[%c0_73, %c16, %c0_74, %c0_75], %108 {strides = array<i32>} : memref<2x32x32x4xf32, #tpu.memory_space<vmem>>, vector<1x1x32x4xf32>,
    %109 = vector.extract_strided_slice %6 {offsets = [17, 0, 0], sizes = [1, 16, 4], strides = [1, 1, 1]} : vector<32x16x4xf32> to vector<1x16x4xf32>
    %110 = vector.shape_cast %109 : vector<1x16x4xf32> to vector<16x4xf32>
    %cst_76 = arith.constant dense<0.000000e+00> : vector<32x4xf32>
    %111 = tpu.matmul %1, %110, %cst_76 {dimension_numbers = #tpu.dot_dimension_numbers<[1], [0], [0], [1], [0, 0, 1, 1], [], []>} : vector<32x16xf32>, vector<16x4xf32>, vector<32x4xf32> -> vector<32x4xf32>
    %c0_77 = arith.constant 0 : index
    %c17 = arith.constant 17 : index
    %c0_78 = arith.constant 0 : index
    %c0_79 = arith.constant 0 : index
    %112 = vector.load %arg3[%c0_77, %c17, %c0_78, %c0_79] : memref<2x32x32x4xf32, #tpu.memory_space<vmem>>, vector<1x1x32x4xf32>
    %113 = vector.shape_cast %112 : vector<1x1x32x4xf32> to vector<32x4xf32>
    %114 = vector.shape_cast %111 : vector<32x4xf32> to vector<1x1x32x4xf32>
    tpu.vector_store %arg3[%c0_77, %c17, %c0_78, %c0_79], %114 {strides = array<i32>} : memref<2x32x32x4xf32, #tpu.memory_space<vmem>>, vector<1x1x32x4xf32>,
    %115 = vector.extract_strided_slice %6 {offsets = [18, 0, 0], sizes = [1, 16, 4], strides = [1, 1, 1]} : vector<32x16x4xf32> to vector<1x16x4xf32>
    %116 = vector.shape_cast %115 : vector<1x16x4xf32> to vector<16x4xf32>
    %cst_80 = arith.constant dense<0.000000e+00> : vector<32x4xf32>
    %117 = tpu.matmul %1, %116, %cst_80 {dimension_numbers = #tpu.dot_dimension_numbers<[1], [0], [0], [1], [0, 0, 1, 1], [], []>} : vector<32x16xf32>, vector<16x4xf32>, vector<32x4xf32> -> vector<32x4xf32>
    %c0_81 = arith.constant 0 : index
    %c18 = arith.constant 18 : index
    %c0_82 = arith.constant 0 : index
    %c0_83 = arith.constant 0 : index
    %118 = vector.load %arg3[%c0_81, %c18, %c0_82, %c0_83] : memref<2x32x32x4xf32, #tpu.memory_space<vmem>>, vector<1x1x32x4xf32>
    %119 = vector.shape_cast %118 : vector<1x1x32x4xf32> to vector<32x4xf32>
    %120 = vector.shape_cast %117 : vector<32x4xf32> to vector<1x1x32x4xf32>
    tpu.vector_store %arg3[%c0_81, %c18, %c0_82, %c0_83], %120 {strides = array<i32>} : memref<2x32x32x4xf32, #tpu.memory_space<vmem>>, vector<1x1x32x4xf32>,
    %121 = vector.extract_strided_slice %6 {offsets = [19, 0, 0], sizes = [1, 16, 4], strides = [1, 1, 1]} : vector<32x16x4xf32> to vector<1x16x4xf32>
    %122 = vector.shape_cast %121 : vector<1x16x4xf32> to vector<16x4xf32>
    %cst_84 = arith.constant dense<0.000000e+00> : vector<32x4xf32>
    %123 = tpu.matmul %1, %122, %cst_84 {dimension_numbers = #tpu.dot_dimension_numbers<[1], [0], [0], [1], [0, 0, 1, 1], [], []>} : vector<32x16xf32>, vector<16x4xf32>, vector<32x4xf32> -> vector<32x4xf32>
    %c0_85 = arith.constant 0 : index
    %c19 = arith.constant 19 : index
    %c0_86 = arith.constant 0 : index
    %c0_87 = arith.constant 0 : index
    %124 = vector.load %arg3[%c0_85, %c19, %c0_86, %c0_87] : memref<2x32x32x4xf32, #tpu.memory_space<vmem>>, vector<1x1x32x4xf32>
    %125 = vector.shape_cast %124 : vector<1x1x32x4xf32> to vector<32x4xf32>
    %126 = vector.shape_cast %123 : vector<32x4xf32> to vector<1x1x32x4xf32>
    tpu.vector_store %arg3[%c0_85, %c19, %c0_86, %c0_87], %126 {strides = array<i32>} : memref<2x32x32x4xf32, #tpu.memory_space<vmem>>, vector<1x1x32x4xf32>,
    %127 = vector.extract_strided_slice %6 {offsets = [20, 0, 0], sizes = [1, 16, 4], strides = [1, 1, 1]} : vector<32x16x4xf32> to vector<1x16x4xf32>
    %128 = vector.shape_cast %127 : vector<1x16x4xf32> to vector<16x4xf32>
    %cst_88 = arith.constant dense<0.000000e+00> : vector<32x4xf32>
    %129 = tpu.matmul %1, %128, %cst_88 {dimension_numbers = #tpu.dot_dimension_numbers<[1], [0], [0], [1], [0, 0, 1, 1], [], []>} : vector<32x16xf32>, vector<16x4xf32>, vector<32x4xf32> -> vector<32x4xf32>
    %c0_89 = arith.constant 0 : index
    %c20 = arith.constant 20 : index
    %c0_90 = arith.constant 0 : index
    %c0_91 = arith.constant 0 : index
    %130 = vector.load %arg3[%c0_89, %c20, %c0_90, %c0_91] : memref<2x32x32x4xf32, #tpu.memory_space<vmem>>, vector<1x1x32x4xf32>
    %131 = vector.shape_cast %130 : vector<1x1x32x4xf32> to vector<32x4xf32>
    %132 = vector.shape_cast %129 : vector<32x4xf32> to vector<1x1x32x4xf32>
    tpu.vector_store %arg3[%c0_89, %c20, %c0_90, %c0_91], %132 {strides = array<i32>} : memref<2x32x32x4xf32, #tpu.memory_space<vmem>>, vector<1x1x32x4xf32>,
    %133 = vector.extract_strided_slice %6 {offsets = [21, 0, 0], sizes = [1, 16, 4], strides = [1, 1, 1]} : vector<32x16x4xf32> to vector<1x16x4xf32>
    %134 = vector.shape_cast %133 : vector<1x16x4xf32> to vector<16x4xf32>
    %cst_92 = arith.constant dense<0.000000e+00> : vector<32x4xf32>
    %135 = tpu.matmul %1, %134, %cst_92 {dimension_numbers = #tpu.dot_dimension_numbers<[1], [0], [0], [1], [0, 0, 1, 1], [], []>} : vector<32x16xf32>, vector<16x4xf32>, vector<32x4xf32> -> vector<32x4xf32>
    %c0_93 = arith.constant 0 : index
    %c21 = arith.constant 21 : index
    %c0_94 = arith.constant 0 : index
    %c0_95 = arith.constant 0 : index
    %136 = vector.load %arg3[%c0_93, %c21, %c0_94, %c0_95] : memref<2x32x32x4xf32, #tpu.memory_space<vmem>>, vector<1x1x32x4xf32>
    %137 = vector.shape_cast %136 : vector<1x1x32x4xf32> to vector<32x4xf32>
    %138 = vector.shape_cast %135 : vector<32x4xf32> to vector<1x1x32x4xf32>
    tpu.vector_store %arg3[%c0_93, %c21, %c0_94, %c0_95], %138 {strides = array<i32>} : memref<2x32x32x4xf32, #tpu.memory_space<vmem>>, vector<1x1x32x4xf32>,
    %139 = vector.extract_strided_slice %6 {offsets = [22, 0, 0], sizes = [1, 16, 4], strides = [1, 1, 1]} : vector<32x16x4xf32> to vector<1x16x4xf32>
    %140 = vector.shape_cast %139 : vector<1x16x4xf32> to vector<16x4xf32>
    %cst_96 = arith.constant dense<0.000000e+00> : vector<32x4xf32>
    %141 = tpu.matmul %1, %140, %cst_96 {dimension_numbers = #tpu.dot_dimension_numbers<[1], [0], [0], [1], [0, 0, 1, 1], [], []>} : vector<32x16xf32>, vector<16x4xf32>, vector<32x4xf32> -> vector<32x4xf32>
    %c0_97 = arith.constant 0 : index
    %c22 = arith.constant 22 : index
    %c0_98 = arith.constant 0 : index
    %c0_99 = arith.constant 0 : index
    %142 = vector.load %arg3[%c0_97, %c22, %c0_98, %c0_99] : memref<2x32x32x4xf32, #tpu.memory_space<vmem>>, vector<1x1x32x4xf32>
    %143 = vector.shape_cast %142 : vector<1x1x32x4xf32> to vector<32x4xf32>
    %144 = vector.shape_cast %141 : vector<32x4xf32> to vector<1x1x32x4xf32>
    tpu.vector_store %arg3[%c0_97, %c22, %c0_98, %c0_99], %144 {strides = array<i32>} : memref<2x32x32x4xf32, #tpu.memory_space<vmem>>, vector<1x1x32x4xf32>,
    %145 = vector.extract_strided_slice %6 {offsets = [23, 0, 0], sizes = [1, 16, 4], strides = [1, 1, 1]} : vector<32x16x4xf32> to vector<1x16x4xf32>
    %146 = vector.shape_cast %145 : vector<1x16x4xf32> to vector<16x4xf32>
    %cst_100 = arith.constant dense<0.000000e+00> : vector<32x4xf32>
    %147 = tpu.matmul %1, %146, %cst_100 {dimension_numbers = #tpu.dot_dimension_numbers<[1], [0], [0], [1], [0, 0, 1, 1], [], []>} : vector<32x16xf32>, vector<16x4xf32>, vector<32x4xf32> -> vector<32x4xf32>
    %c0_101 = arith.constant 0 : index
    %c23 = arith.constant 23 : index
    %c0_102 = arith.constant 0 : index
    %c0_103 = arith.constant 0 : index
    %148 = vector.load %arg3[%c0_101, %c23, %c0_102, %c0_103] : memref<2x32x32x4xf32, #tpu.memory_space<vmem>>, vector<1x1x32x4xf32>
    %149 = vector.shape_cast %148 : vector<1x1x32x4xf32> to vector<32x4xf32>
    %150 = vector.shape_cast %147 : vector<32x4xf32> to vector<1x1x32x4xf32>
    tpu.vector_store %arg3[%c0_101, %c23, %c0_102, %c0_103], %150 {strides = array<i32>} : memref<2x32x32x4xf32, #tpu.memory_space<vmem>>, vector<1x1x32x4xf32>,
    %151 = vector.extract_strided_slice %6 {offsets = [24, 0, 0], sizes = [1, 16, 4], strides = [1, 1, 1]} : vector<32x16x4xf32> to vector<1x16x4xf32>
    %152 = vector.shape_cast %151 : vector<1x16x4xf32> to vector<16x4xf32>
    %cst_104 = arith.constant dense<0.000000e+00> : vector<32x4xf32>
    %153 = tpu.matmul %1, %152, %cst_104 {dimension_numbers = #tpu.dot_dimension_numbers<[1], [0], [0], [1], [0, 0, 1, 1], [], []>} : vector<32x16xf32>, vector<16x4xf32>, vector<32x4xf32> -> vector<32x4xf32>
    %c0_105 = arith.constant 0 : index
    %c24 = arith.constant 24 : index
    %c0_106 = arith.constant 0 : index
    %c0_107 = arith.constant 0 : index
    %154 = vector.load %arg3[%c0_105, %c24, %c0_106, %c0_107] : memref<2x32x32x4xf32, #tpu.memory_space<vmem>>, vector<1x1x32x4xf32>
    %155 = vector.shape_cast %154 : vector<1x1x32x4xf32> to vector<32x4xf32>
    %156 = vector.shape_cast %153 : vector<32x4xf32> to vector<1x1x32x4xf32>
    tpu.vector_store %arg3[%c0_105, %c24, %c0_106, %c0_107], %156 {strides = array<i32>} : memref<2x32x32x4xf32, #tpu.memory_space<vmem>>, vector<1x1x32x4xf32>,
    %157 = vector.extract_strided_slice %6 {offsets = [25, 0, 0], sizes = [1, 16, 4], strides = [1, 1, 1]} : vector<32x16x4xf32> to vector<1x16x4xf32>
    %158 = vector.shape_cast %157 : vector<1x16x4xf32> to vector<16x4xf32>
    %cst_108 = arith.constant dense<0.000000e+00> : vector<32x4xf32>
    %159 = tpu.matmul %1, %158, %cst_108 {dimension_numbers = #tpu.dot_dimension_numbers<[1], [0], [0], [1], [0, 0, 1, 1], [], []>} : vector<32x16xf32>, vector<16x4xf32>, vector<32x4xf32> -> vector<32x4xf32>
    %c0_109 = arith.constant 0 : index
    %c25 = arith.constant 25 : index
    %c0_110 = arith.constant 0 : index
    %c0_111 = arith.constant 0 : index
    %160 = vector.load %arg3[%c0_109, %c25, %c0_110, %c0_111] : memref<2x32x32x4xf32, #tpu.memory_space<vmem>>, vector<1x1x32x4xf32>
    %161 = vector.shape_cast %160 : vector<1x1x32x4xf32> to vector<32x4xf32>
    %162 = vector.shape_cast %159 : vector<32x4xf32> to vector<1x1x32x4xf32>
    tpu.vector_store %arg3[%c0_109, %c25, %c0_110, %c0_111], %162 {strides = array<i32>} : memref<2x32x32x4xf32, #tpu.memory_space<vmem>>, vector<1x1x32x4xf32>,
    %163 = vector.extract_strided_slice %6 {offsets = [26, 0, 0], sizes = [1, 16, 4], strides = [1, 1, 1]} : vector<32x16x4xf32> to vector<1x16x4xf32>
    %164 = vector.shape_cast %163 : vector<1x16x4xf32> to vector<16x4xf32>
    %cst_112 = arith.constant dense<0.000000e+00> : vector<32x4xf32>
    %165 = tpu.matmul %1, %164, %cst_112 {dimension_numbers = #tpu.dot_dimension_numbers<[1], [0], [0], [1], [0, 0, 1, 1], [], []>} : vector<32x16xf32>, vector<16x4xf32>, vector<32x4xf32> -> vector<32x4xf32>
    %c0_113 = arith.constant 0 : index
    %c26 = arith.constant 26 : index
    %c0_114 = arith.constant 0 : index
    %c0_115 = arith.constant 0 : index
    %166 = vector.load %arg3[%c0_113, %c26, %c0_114, %c0_115] : memref<2x32x32x4xf32, #tpu.memory_space<vmem>>, vector<1x1x32x4xf32>
    %167 = vector.shape_cast %166 : vector<1x1x32x4xf32> to vector<32x4xf32>
    %168 = vector.shape_cast %165 : vector<32x4xf32> to vector<1x1x32x4xf32>
    tpu.vector_store %arg3[%c0_113, %c26, %c0_114, %c0_115], %168 {strides = array<i32>} : memref<2x32x32x4xf32, #tpu.memory_space<vmem>>, vector<1x1x32x4xf32>,
    %169 = vector.extract_strided_slice %6 {offsets = [27, 0, 0], sizes = [1, 16, 4], strides = [1, 1, 1]} : vector<32x16x4xf32> to vector<1x16x4xf32>
    %170 = vector.shape_cast %169 : vector<1x16x4xf32> to vector<16x4xf32>
    %cst_116 = arith.constant dense<0.000000e+00> : vector<32x4xf32>
    %171 = tpu.matmul %1, %170, %cst_116 {dimension_numbers = #tpu.dot_dimension_numbers<[1], [0], [0], [1], [0, 0, 1, 1], [], []>} : vector<32x16xf32>, vector<16x4xf32>, vector<32x4xf32> -> vector<32x4xf32>
    %c0_117 = arith.constant 0 : index
    %c27 = arith.constant 27 : index
    %c0_118 = arith.constant 0 : index
    %c0_119 = arith.constant 0 : index
    %172 = vector.load %arg3[%c0_117, %c27, %c0_118, %c0_119] : memref<2x32x32x4xf32, #tpu.memory_space<vmem>>, vector<1x1x32x4xf32>
    %173 = vector.shape_cast %172 : vector<1x1x32x4xf32> to vector<32x4xf32>
    %174 = vector.shape_cast %171 : vector<32x4xf32> to vector<1x1x32x4xf32>
    tpu.vector_store %arg3[%c0_117, %c27, %c0_118, %c0_119], %174 {strides = array<i32>} : memref<2x32x32x4xf32, #tpu.memory_space<vmem>>, vector<1x1x32x4xf32>,
    %175 = vector.extract_strided_slice %6 {offsets = [28, 0, 0], sizes = [1, 16, 4], strides = [1, 1, 1]} : vector<32x16x4xf32> to vector<1x16x4xf32>
    %176 = vector.shape_cast %175 : vector<1x16x4xf32> to vector<16x4xf32>
    %cst_120 = arith.constant dense<0.000000e+00> : vector<32x4xf32>
    %177 = tpu.matmul %1, %176, %cst_120 {dimension_numbers = #tpu.dot_dimension_numbers<[1], [0], [0], [1], [0, 0, 1, 1], [], []>} : vector<32x16xf32>, vector<16x4xf32>, vector<32x4xf32> -> vector<32x4xf32>
    %c0_121 = arith.constant 0 : index
    %c28 = arith.constant 28 : index
    %c0_122 = arith.constant 0 : index
    %c0_123 = arith.constant 0 : index
    %178 = vector.load %arg3[%c0_121, %c28, %c0_122, %c0_123] : memref<2x32x32x4xf32, #tpu.memory_space<vmem>>, vector<1x1x32x4xf32>
    %179 = vector.shape_cast %178 : vector<1x1x32x4xf32> to vector<32x4xf32>
    %180 = vector.shape_cast %177 : vector<32x4xf32> to vector<1x1x32x4xf32>
    tpu.vector_store %arg3[%c0_121, %c28, %c0_122, %c0_123], %180 {strides = array<i32>} : memref<2x32x32x4xf32, #tpu.memory_space<vmem>>, vector<1x1x32x4xf32>,
    %181 = vector.extract_strided_slice %6 {offsets = [29, 0, 0], sizes = [1, 16, 4], strides = [1, 1, 1]} : vector<32x16x4xf32> to vector<1x16x4xf32>
    %182 = vector.shape_cast %181 : vector<1x16x4xf32> to vector<16x4xf32>
    %cst_124 = arith.constant dense<0.000000e+00> : vector<32x4xf32>
    %183 = tpu.matmul %1, %182, %cst_124 {dimension_numbers = #tpu.dot_dimension_numbers<[1], [0], [0], [1], [0, 0, 1, 1], [], []>} : vector<32x16xf32>, vector<16x4xf32>, vector<32x4xf32> -> vector<32x4xf32>
    %c0_125 = arith.constant 0 : index
    %c29 = arith.constant 29 : index
    %c0_126 = arith.constant 0 : index
    %c0_127 = arith.constant 0 : index
    %184 = vector.load %arg3[%c0_125, %c29, %c0_126, %c0_127] : memref<2x32x32x4xf32, #tpu.memory_space<vmem>>, vector<1x1x32x4xf32>
    %185 = vector.shape_cast %184 : vector<1x1x32x4xf32> to vector<32x4xf32>
    %186 = vector.shape_cast %183 : vector<32x4xf32> to vector<1x1x32x4xf32>
    tpu.vector_store %arg3[%c0_125, %c29, %c0_126, %c0_127], %186 {strides = array<i32>} : memref<2x32x32x4xf32, #tpu.memory_space<vmem>>, vector<1x1x32x4xf32>,
    %187 = vector.extract_strided_slice %6 {offsets = [30, 0, 0], sizes = [1, 16, 4], strides = [1, 1, 1]} : vector<32x16x4xf32> to vector<1x16x4xf32>
    %188 = vector.shape_cast %187 : vector<1x16x4xf32> to vector<16x4xf32>
    %cst_128 = arith.constant dense<0.000000e+00> : vector<32x4xf32>
    %189 = tpu.matmul %1, %188, %cst_128 {dimension_numbers = #tpu.dot_dimension_numbers<[1], [0], [0], [1], [0, 0, 1, 1], [], []>} : vector<32x16xf32>, vector<16x4xf32>, vector<32x4xf32> -> vector<32x4xf32>
    %c0_129 = arith.constant 0 : index
    %c30 = arith.constant 30 : index
    %c0_130 = arith.constant 0 : index
    %c0_131 = arith.constant 0 : index
    %190 = vector.load %arg3[%c0_129, %c30, %c0_130, %c0_131] : memref<2x32x32x4xf32, #tpu.memory_space<vmem>>, vector<1x1x32x4xf32>
    %191 = vector.shape_cast %190 : vector<1x1x32x4xf32> to vector<32x4xf32>
    %192 = vector.shape_cast %189 : vector<32x4xf32> to vector<1x1x32x4xf32>
    tpu.vector_store %arg3[%c0_129, %c30, %c0_130, %c0_131], %192 {strides = array<i32>} : memref<2x32x32x4xf32, #tpu.memory_space<vmem>>, vector<1x1x32x4xf32>,
    %193 = vector.extract_strided_slice %6 {offsets = [31, 0, 0], sizes = [1, 16, 4], strides = [1, 1, 1]} : vector<32x16x4xf32> to vector<1x16x4xf32>
    %194 = vector.shape_cast %193 : vector<1x16x4xf32> to vector<16x4xf32>
    %cst_132 = arith.constant dense<0.000000e+00> : vector<32x4xf32>
    %195 = tpu.matmul %1, %194, %cst_132 {dimension_numbers = #tpu.dot_dimension_numbers<[1], [0], [0], [1], [0, 0, 1, 1], [], []>} : vector<32x16xf32>, vector<16x4xf32>, vector<32x4xf32> -> vector<32x4xf32>
    %c0_133 = arith.constant 0 : index
    %c31 = arith.constant 31 : index
    %c0_134 = arith.constant 0 : index
    %c0_135 = arith.constant 0 : index
    %196 = vector.load %arg3[%c0_133, %c31, %c0_134, %c0_135] : memref<2x32x32x4xf32, #tpu.memory_space<vmem>>, vector<1x1x32x4xf32>
    %197 = vector.shape_cast %196 : vector<1x1x32x4xf32> to vector<32x4xf32>
    %198 = vector.shape_cast %195 : vector<32x4xf32> to vector<1x1x32x4xf32>
    tpu.vector_store %arg3[%c0_133, %c31, %c0_134, %c0_135], %198 {strides = array<i32>} : memref<2x32x32x4xf32, #tpu.memory_space<vmem>>, vector<1x1x32x4xf32>,
    %c1_136 = arith.constant 1 : index
    %c0_137 = arith.constant 0 : index
    %c0_138 = arith.constant 0 : index
    %c0_139 = arith.constant 0 : index
    %199 = vector.load %arg0[%c1_136, %c0_137, %c0_138, %c0_139] : memref<2x16x16x4xf32, #tpu.memory_space<vmem>>, vector<1x16x16x4xf32>
    %200 = vector.shape_cast %199 : vector<1x16x16x4xf32> to vector<16x16x4xf32>
    %201 = vector.shape_cast %200 : vector<16x16x4xf32> to vector<16x64xf32>
    %cst_140 = arith.constant dense<0.000000e+00> : vector<32x64xf32>
    %202 = tpu.matmul %0, %201, %cst_140 {dimension_numbers = #tpu.dot_dimension_numbers<[1], [0], [0], [1], [0, 0, 1, 1], [], []>} : vector<32x16xf32>, vector<16x64xf32>, vector<32x64xf32> -> vector<32x64xf32>
    %203 = vector.shape_cast %202 : vector<32x64xf32> to vector<32x16x4xf32>
    %204 = vector.extract_strided_slice %203 {offsets = [0, 0, 0], sizes = [1, 16, 4], strides = [1, 1, 1]} : vector<32x16x4xf32> to vector<1x16x4xf32>
    %205 = vector.shape_cast %204 : vector<1x16x4xf32> to vector<16x4xf32>
    %cst_141 = arith.constant dense<0.000000e+00> : vector<32x4xf32>
    %206 = tpu.matmul %1, %205, %cst_141 {dimension_numbers = #tpu.dot_dimension_numbers<[1], [0], [0], [1], [0, 0, 1, 1], [], []>} : vector<32x16xf32>, vector<16x4xf32>, vector<32x4xf32> -> vector<32x4xf32>
    %c1_142 = arith.constant 1 : index
    %c0_143 = arith.constant 0 : index
    %c0_144 = arith.constant 0 : index
    %c0_145 = arith.constant 0 : index
    %207 = vector.load %arg3[%c1_142, %c0_143, %c0_144, %c0_145] : memref<2x32x32x4xf32, #tpu.memory_space<vmem>>, vector<1x1x32x4xf32>
    %208 = vector.shape_cast %207 : vector<1x1x32x4xf32> to vector<32x4xf32>
    %209 = vector.shape_cast %206 : vector<32x4xf32> to vector<1x1x32x4xf32>
    tpu.vector_store %arg3[%c1_142, %c0_143, %c0_144, %c0_145], %209 {strides = array<i32>} : memref<2x32x32x4xf32, #tpu.memory_space<vmem>>, vector<1x1x32x4xf32>,
    %210 = vector.extract_strided_slice %203 {offsets = [1, 0, 0], sizes = [1, 16, 4], strides = [1, 1, 1]} : vector<32x16x4xf32> to vector<1x16x4xf32>
    %211 = vector.shape_cast %210 : vector<1x16x4xf32> to vector<16x4xf32>
    %cst_146 = arith.constant dense<0.000000e+00> : vector<32x4xf32>
    %212 = tpu.matmul %1, %211, %cst_146 {dimension_numbers = #tpu.dot_dimension_numbers<[1], [0], [0], [1], [0, 0, 1, 1], [], []>} : vector<32x16xf32>, vector<16x4xf32>, vector<32x4xf32> -> vector<32x4xf32>
    %c1_147 = arith.constant 1 : index
    %c1_148 = arith.constant 1 : index
    %c0_149 = arith.constant 0 : index
    %c0_150 = arith.constant 0 : index
    %213 = vector.load %arg3[%c1_147, %c1_148, %c0_149, %c0_150] : memref<2x32x32x4xf32, #tpu.memory_space<vmem>>, vector<1x1x32x4xf32>
    %214 = vector.shape_cast %213 : vector<1x1x32x4xf32> to vector<32x4xf32>
    %215 = vector.shape_cast %212 : vector<32x4xf32> to vector<1x1x32x4xf32>
    tpu.vector_store %arg3[%c1_147, %c1_148, %c0_149, %c0_150], %215 {strides = array<i32>} : memref<2x32x32x4xf32, #tpu.memory_space<vmem>>, vector<1x1x32x4xf32>,
    %216 = vector.extract_strided_slice %203 {offsets = [2, 0, 0], sizes = [1, 16, 4], strides = [1, 1, 1]} : vector<32x16x4xf32> to vector<1x16x4xf32>
    %217 = vector.shape_cast %216 : vector<1x16x4xf32> to vector<16x4xf32>
    %cst_151 = arith.constant dense<0.000000e+00> : vector<32x4xf32>
    %218 = tpu.matmul %1, %217, %cst_151 {dimension_numbers = #tpu.dot_dimension_numbers<[1], [0], [0], [1], [0, 0, 1, 1], [], []>} : vector<32x16xf32>, vector<16x4xf32>, vector<32x4xf32> -> vector<32x4xf32>
    %c1_152 = arith.constant 1 : index
    %c2_153 = arith.constant 2 : index
    %c0_154 = arith.constant 0 : index
    %c0_155 = arith.constant 0 : index
    %219 = vector.load %arg3[%c1_152, %c2_153, %c0_154, %c0_155] : memref<2x32x32x4xf32, #tpu.memory_space<vmem>>, vector<1x1x32x4xf32>
    %220 = vector.shape_cast %219 : vector<1x1x32x4xf32> to vector<32x4xf32>
    %221 = vector.shape_cast %218 : vector<32x4xf32> to vector<1x1x32x4xf32>
    tpu.vector_store %arg3[%c1_152, %c2_153, %c0_154, %c0_155], %221 {strides = array<i32>} : memref<2x32x32x4xf32, #tpu.memory_space<vmem>>, vector<1x1x32x4xf32>,
    %222 = vector.extract_strided_slice %203 {offsets = [3, 0, 0], sizes = [1, 16, 4], strides = [1, 1, 1]} : vector<32x16x4xf32> to vector<1x16x4xf32>
    %223 = vector.shape_cast %222 : vector<1x16x4xf32> to vector<16x4xf32>
    %cst_156 = arith.constant dense<0.000000e+00> : vector<32x4xf32>
    %224 = tpu.matmul %1, %223, %cst_156 {dimension_numbers = #tpu.dot_dimension_numbers<[1], [0], [0], [1], [0, 0, 1, 1], [], []>} : vector<32x16xf32>, vector<16x4xf32>, vector<32x4xf32> -> vector<32x4xf32>
    %c1_157 = arith.constant 1 : index
    %c3_158 = arith.constant 3 : index
    %c0_159 = arith.constant 0 : index
    %c0_160 = arith.constant 0 : index
    %225 = vector.load %arg3[%c1_157, %c3_158, %c0_159, %c0_160] : memref<2x32x32x4xf32, #tpu.memory_space<vmem>>, vector<1x1x32x4xf32>
    %226 = vector.shape_cast %225 : vector<1x1x32x4xf32> to vector<32x4xf32>
    %227 = vector.shape_cast %224 : vector<32x4xf32> to vector<1x1x32x4xf32>
    tpu.vector_store %arg3[%c1_157, %c3_158, %c0_159, %c0_160], %227 {strides = array<i32>} : memref<2x32x32x4xf32, #tpu.memory_space<vmem>>, vector<1x1x32x4xf32>,
    %228 = vector.extract_strided_slice %203 {offsets = [4, 0, 0], sizes = [1, 16, 4], strides = [1, 1, 1]} : vector<32x16x4xf32> to vector<1x16x4xf32>
    %229 = vector.shape_cast %228 : vector<1x16x4xf32> to vector<16x4xf32>
    %cst_161 = arith.constant dense<0.000000e+00> : vector<32x4xf32>
    %230 = tpu.matmul %1, %229, %cst_161 {dimension_numbers = #tpu.dot_dimension_numbers<[1], [0], [0], [1], [0, 0, 1, 1], [], []>} : vector<32x16xf32>, vector<16x4xf32>, vector<32x4xf32> -> vector<32x4xf32>
    %c1_162 = arith.constant 1 : index
    %c4_163 = arith.constant 4 : index
    %c0_164 = arith.constant 0 : index
    %c0_165 = arith.constant 0 : index
    %231 = vector.load %arg3[%c1_162, %c4_163, %c0_164, %c0_165] : memref<2x32x32x4xf32, #tpu.memory_space<vmem>>, vector<1x1x32x4xf32>
    %232 = vector.shape_cast %231 : vector<1x1x32x4xf32> to vector<32x4xf32>
    %233 = vector.shape_cast %230 : vector<32x4xf32> to vector<1x1x32x4xf32>
    tpu.vector_store %arg3[%c1_162, %c4_163, %c0_164, %c0_165], %233 {strides = array<i32>} : memref<2x32x32x4xf32, #tpu.memory_space<vmem>>, vector<1x1x32x4xf32>,
    %234 = vector.extract_strided_slice %203 {offsets = [5, 0, 0], sizes = [1, 16, 4], strides = [1, 1, 1]} : vector<32x16x4xf32> to vector<1x16x4xf32>
    %235 = vector.shape_cast %234 : vector<1x16x4xf32> to vector<16x4xf32>
    %cst_166 = arith.constant dense<0.000000e+00> : vector<32x4xf32>
    %236 = tpu.matmul %1, %235, %cst_166 {dimension_numbers = #tpu.dot_dimension_numbers<[1], [0], [0], [1], [0, 0, 1, 1], [], []>} : vector<32x16xf32>, vector<16x4xf32>, vector<32x4xf32> -> vector<32x4xf32>
    %c1_167 = arith.constant 1 : index
    %c5_168 = arith.constant 5 : index
    %c0_169 = arith.constant 0 : index
    %c0_170 = arith.constant 0 : index
    %237 = vector.load %arg3[%c1_167, %c5_168, %c0_169, %c0_170] : memref<2x32x32x4xf32, #tpu.memory_space<vmem>>, vector<1x1x32x4xf32>
    %238 = vector.shape_cast %237 : vector<1x1x32x4xf32> to vector<32x4xf32>
    %239 = vector.shape_cast %236 : vector<32x4xf32> to vector<1x1x32x4xf32>
    tpu.vector_store %arg3[%c1_167, %c5_168, %c0_169, %c0_170], %239 {strides = array<i32>} : memref<2x32x32x4xf32, #tpu.memory_space<vmem>>, vector<1x1x32x4xf32>,
    %240 = vector.extract_strided_slice %203 {offsets = [6, 0, 0], sizes = [1, 16, 4], strides = [1, 1, 1]} : vector<32x16x4xf32> to vector<1x16x4xf32>
    %241 = vector.shape_cast %240 : vector<1x16x4xf32> to vector<16x4xf32>
    %cst_171 = arith.constant dense<0.000000e+00> : vector<32x4xf32>
    %242 = tpu.matmul %1, %241, %cst_171 {dimension_numbers = #tpu.dot_dimension_numbers<[1], [0], [0], [1], [0, 0, 1, 1], [], []>} : vector<32x16xf32>, vector<16x4xf32>, vector<32x4xf32> -> vector<32x4xf32>
    %c1_172 = arith.constant 1 : index
    %c6_173 = arith.constant 6 : index
    %c0_174 = arith.constant 0 : index
    %c0_175 = arith.constant 0 : index
    %243 = vector.load %arg3[%c1_172, %c6_173, %c0_174, %c0_175] : memref<2x32x32x4xf32, #tpu.memory_space<vmem>>, vector<1x1x32x4xf32>
    %244 = vector.shape_cast %243 : vector<1x1x32x4xf32> to vector<32x4xf32>
    %245 = vector.shape_cast %242 : vector<32x4xf32> to vector<1x1x32x4xf32>
    tpu.vector_store %arg3[%c1_172, %c6_173, %c0_174, %c0_175], %245 {strides = array<i32>} : memref<2x32x32x4xf32, #tpu.memory_space<vmem>>, vector<1x1x32x4xf32>,
    %246 = vector.extract_strided_slice %203 {offsets = [7, 0, 0], sizes = [1, 16, 4], strides = [1, 1, 1]} : vector<32x16x4xf32> to vector<1x16x4xf32>
    %247 = vector.shape_cast %246 : vector<1x16x4xf32> to vector<16x4xf32>
    %cst_176 = arith.constant dense<0.000000e+00> : vector<32x4xf32>
    %248 = tpu.matmul %1, %247, %cst_176 {dimension_numbers = #tpu.dot_dimension_numbers<[1], [0], [0], [1], [0, 0, 1, 1], [], []>} : vector<32x16xf32>, vector<16x4xf32>, vector<32x4xf32> -> vector<32x4xf32>
    %c1_177 = arith.constant 1 : index
    %c7_178 = arith.constant 7 : index
    %c0_179 = arith.constant 0 : index
    %c0_180 = arith.constant 0 : index
    %249 = vector.load %arg3[%c1_177, %c7_178, %c0_179, %c0_180] : memref<2x32x32x4xf32, #tpu.memory_space<vmem>>, vector<1x1x32x4xf32>
    %250 = vector.shape_cast %249 : vector<1x1x32x4xf32> to vector<32x4xf32>
    %251 = vector.shape_cast %248 : vector<32x4xf32> to vector<1x1x32x4xf32>
    tpu.vector_store %arg3[%c1_177, %c7_178, %c0_179, %c0_180], %251 {strides = array<i32>} : memref<2x32x32x4xf32, #tpu.memory_space<vmem>>, vector<1x1x32x4xf32>,
    %252 = vector.extract_strided_slice %203 {offsets = [8, 0, 0], sizes = [1, 16, 4], strides = [1, 1, 1]} : vector<32x16x4xf32> to vector<1x16x4xf32>
    %253 = vector.shape_cast %252 : vector<1x16x4xf32> to vector<16x4xf32>
    %cst_181 = arith.constant dense<0.000000e+00> : vector<32x4xf32>
    %254 = tpu.matmul %1, %253, %cst_181 {dimension_numbers = #tpu.dot_dimension_numbers<[1], [0], [0], [1], [0, 0, 1, 1], [], []>} : vector<32x16xf32>, vector<16x4xf32>, vector<32x4xf32> -> vector<32x4xf32>
    %c1_182 = arith.constant 1 : index
    %c8_183 = arith.constant 8 : index
    %c0_184 = arith.constant 0 : index
    %c0_185 = arith.constant 0 : index
    %255 = vector.load %arg3[%c1_182, %c8_183, %c0_184, %c0_185] : memref<2x32x32x4xf32, #tpu.memory_space<vmem>>, vector<1x1x32x4xf32>
    %256 = vector.shape_cast %255 : vector<1x1x32x4xf32> to vector<32x4xf32>
    %257 = vector.shape_cast %254 : vector<32x4xf32> to vector<1x1x32x4xf32>
    tpu.vector_store %arg3[%c1_182, %c8_183, %c0_184, %c0_185], %257 {strides = array<i32>} : memref<2x32x32x4xf32, #tpu.memory_space<vmem>>, vector<1x1x32x4xf32>,
    %258 = vector.extract_strided_slice %203 {offsets = [9, 0, 0], sizes = [1, 16, 4], strides = [1, 1, 1]} : vector<32x16x4xf32> to vector<1x16x4xf32>
    %259 = vector.shape_cast %258 : vector<1x16x4xf32> to vector<16x4xf32>
    %cst_186 = arith.constant dense<0.000000e+00> : vector<32x4xf32>
    %260 = tpu.matmul %1, %259, %cst_186 {dimension_numbers = #tpu.dot_dimension_numbers<[1], [0], [0], [1], [0, 0, 1, 1], [], []>} : vector<32x16xf32>, vector<16x4xf32>, vector<32x4xf32> -> vector<32x4xf32>
    %c1_187 = arith.constant 1 : index
    %c9_188 = arith.constant 9 : index
    %c0_189 = arith.constant 0 : index
    %c0_190 = arith.constant 0 : index
    %261 = vector.load %arg3[%c1_187, %c9_188, %c0_189, %c0_190] : memref<2x32x32x4xf32, #tpu.memory_space<vmem>>, vector<1x1x32x4xf32>
    %262 = vector.shape_cast %261 : vector<1x1x32x4xf32> to vector<32x4xf32>
    %263 = vector.shape_cast %260 : vector<32x4xf32> to vector<1x1x32x4xf32>
    tpu.vector_store %arg3[%c1_187, %c9_188, %c0_189, %c0_190], %263 {strides = array<i32>} : memref<2x32x32x4xf32, #tpu.memory_space<vmem>>, vector<1x1x32x4xf32>,
    %264 = vector.extract_strided_slice %203 {offsets = [10, 0, 0], sizes = [1, 16, 4], strides = [1, 1, 1]} : vector<32x16x4xf32> to vector<1x16x4xf32>
    %265 = vector.shape_cast %264 : vector<1x16x4xf32> to vector<16x4xf32>
    %cst_191 = arith.constant dense<0.000000e+00> : vector<32x4xf32>
    %266 = tpu.matmul %1, %265, %cst_191 {dimension_numbers = #tpu.dot_dimension_numbers<[1], [0], [0], [1], [0, 0, 1, 1], [], []>} : vector<32x16xf32>, vector<16x4xf32>, vector<32x4xf32> -> vector<32x4xf32>
    %c1_192 = arith.constant 1 : index
    %c10_193 = arith.constant 10 : index
    %c0_194 = arith.constant 0 : index
    %c0_195 = arith.constant 0 : index
    %267 = vector.load %arg3[%c1_192, %c10_193, %c0_194, %c0_195] : memref<2x32x32x4xf32, #tpu.memory_space<vmem>>, vector<1x1x32x4xf32>
    %268 = vector.shape_cast %267 : vector<1x1x32x4xf32> to vector<32x4xf32>
    %269 = vector.shape_cast %266 : vector<32x4xf32> to vector<1x1x32x4xf32>
    tpu.vector_store %arg3[%c1_192, %c10_193, %c0_194, %c0_195], %269 {strides = array<i32>} : memref<2x32x32x4xf32, #tpu.memory_space<vmem>>, vector<1x1x32x4xf32>,
    %270 = vector.extract_strided_slice %203 {offsets = [11, 0, 0], sizes = [1, 16, 4], strides = [1, 1, 1]} : vector<32x16x4xf32> to vector<1x16x4xf32>
    %271 = vector.shape_cast %270 : vector<1x16x4xf32> to vector<16x4xf32>
    %cst_196 = arith.constant dense<0.000000e+00> : vector<32x4xf32>
    %272 = tpu.matmul %1, %271, %cst_196 {dimension_numbers = #tpu.dot_dimension_numbers<[1], [0], [0], [1], [0, 0, 1, 1], [], []>} : vector<32x16xf32>, vector<16x4xf32>, vector<32x4xf32> -> vector<32x4xf32>
    %c1_197 = arith.constant 1 : index
    %c11_198 = arith.constant 11 : index
    %c0_199 = arith.constant 0 : index
    %c0_200 = arith.constant 0 : index
    %273 = vector.load %arg3[%c1_197, %c11_198, %c0_199, %c0_200] : memref<2x32x32x4xf32, #tpu.memory_space<vmem>>, vector<1x1x32x4xf32>
    %274 = vector.shape_cast %273 : vector<1x1x32x4xf32> to vector<32x4xf32>
    %275 = vector.shape_cast %272 : vector<32x4xf32> to vector<1x1x32x4xf32>
    tpu.vector_store %arg3[%c1_197, %c11_198, %c0_199, %c0_200], %275 {strides = array<i32>} : memref<2x32x32x4xf32, #tpu.memory_space<vmem>>, vector<1x1x32x4xf32>,
    %276 = vector.extract_strided_slice %203 {offsets = [12, 0, 0], sizes = [1, 16, 4], strides = [1, 1, 1]} : vector<32x16x4xf32> to vector<1x16x4xf32>
    %277 = vector.shape_cast %276 : vector<1x16x4xf32> to vector<16x4xf32>
    %cst_201 = arith.constant dense<0.000000e+00> : vector<32x4xf32>
    %278 = tpu.matmul %1, %277, %cst_201 {dimension_numbers = #tpu.dot_dimension_numbers<[1], [0], [0], [1], [0, 0, 1, 1], [], []>} : vector<32x16xf32>, vector<16x4xf32>, vector<32x4xf32> -> vector<32x4xf32>
    %c1_202 = arith.constant 1 : index
    %c12_203 = arith.constant 12 : index
    %c0_204 = arith.constant 0 : index
    %c0_205 = arith.constant 0 : index
    %279 = vector.load %arg3[%c1_202, %c12_203, %c0_204, %c0_205] : memref<2x32x32x4xf32, #tpu.memory_space<vmem>>, vector<1x1x32x4xf32>
    %280 = vector.shape_cast %279 : vector<1x1x32x4xf32> to vector<32x4xf32>
    %281 = vector.shape_cast %278 : vector<32x4xf32> to vector<1x1x32x4xf32>
    tpu.vector_store %arg3[%c1_202, %c12_203, %c0_204, %c0_205], %281 {strides = array<i32>} : memref<2x32x32x4xf32, #tpu.memory_space<vmem>>, vector<1x1x32x4xf32>,
    %282 = vector.extract_strided_slice %203 {offsets = [13, 0, 0], sizes = [1, 16, 4], strides = [1, 1, 1]} : vector<32x16x4xf32> to vector<1x16x4xf32>
    %283 = vector.shape_cast %282 : vector<1x16x4xf32> to vector<16x4xf32>
    %cst_206 = arith.constant dense<0.000000e+00> : vector<32x4xf32>
    %284 = tpu.matmul %1, %283, %cst_206 {dimension_numbers = #tpu.dot_dimension_numbers<[1], [0], [0], [1], [0, 0, 1, 1], [], []>} : vector<32x16xf32>, vector<16x4xf32>, vector<32x4xf32> -> vector<32x4xf32>
    %c1_207 = arith.constant 1 : index
    %c13_208 = arith.constant 13 : index
    %c0_209 = arith.constant 0 : index
    %c0_210 = arith.constant 0 : index
    %285 = vector.load %arg3[%c1_207, %c13_208, %c0_209, %c0_210] : memref<2x32x32x4xf32, #tpu.memory_space<vmem>>, vector<1x1x32x4xf32>
    %286 = vector.shape_cast %285 : vector<1x1x32x4xf32> to vector<32x4xf32>
    %287 = vector.shape_cast %284 : vector<32x4xf32> to vector<1x1x32x4xf32>
    tpu.vector_store %arg3[%c1_207, %c13_208, %c0_209, %c0_210], %287 {strides = array<i32>} : memref<2x32x32x4xf32, #tpu.memory_space<vmem>>, vector<1x1x32x4xf32>,
    %288 = vector.extract_strided_slice %203 {offsets = [14, 0, 0], sizes = [1, 16, 4], strides = [1, 1, 1]} : vector<32x16x4xf32> to vector<1x16x4xf32>
    %289 = vector.shape_cast %288 : vector<1x16x4xf32> to vector<16x4xf32>
    %cst_211 = arith.constant dense<0.000000e+00> : vector<32x4xf32>
    %290 = tpu.matmul %1, %289, %cst_211 {dimension_numbers = #tpu.dot_dimension_numbers<[1], [0], [0], [1], [0, 0, 1, 1], [], []>} : vector<32x16xf32>, vector<16x4xf32>, vector<32x4xf32> -> vector<32x4xf32>
    %c1_212 = arith.constant 1 : index
    %c14_213 = arith.constant 14 : index
    %c0_214 = arith.constant 0 : index
    %c0_215 = arith.constant 0 : index
    %291 = vector.load %arg3[%c1_212, %c14_213, %c0_214, %c0_215] : memref<2x32x32x4xf32, #tpu.memory_space<vmem>>, vector<1x1x32x4xf32>
    %292 = vector.shape_cast %291 : vector<1x1x32x4xf32> to vector<32x4xf32>
    %293 = vector.shape_cast %290 : vector<32x4xf32> to vector<1x1x32x4xf32>
    tpu.vector_store %arg3[%c1_212, %c14_213, %c0_214, %c0_215], %293 {strides = array<i32>} : memref<2x32x32x4xf32, #tpu.memory_space<vmem>>, vector<1x1x32x4xf32>,
    %294 = vector.extract_strided_slice %203 {offsets = [15, 0, 0], sizes = [1, 16, 4], strides = [1, 1, 1]} : vector<32x16x4xf32> to vector<1x16x4xf32>
    %295 = vector.shape_cast %294 : vector<1x16x4xf32> to vector<16x4xf32>
    %cst_216 = arith.constant dense<0.000000e+00> : vector<32x4xf32>
    %296 = tpu.matmul %1, %295, %cst_216 {dimension_numbers = #tpu.dot_dimension_numbers<[1], [0], [0], [1], [0, 0, 1, 1], [], []>} : vector<32x16xf32>, vector<16x4xf32>, vector<32x4xf32> -> vector<32x4xf32>
    %c1_217 = arith.constant 1 : index
    %c15_218 = arith.constant 15 : index
    %c0_219 = arith.constant 0 : index
    %c0_220 = arith.constant 0 : index
    %297 = vector.load %arg3[%c1_217, %c15_218, %c0_219, %c0_220] : memref<2x32x32x4xf32, #tpu.memory_space<vmem>>, vector<1x1x32x4xf32>
    %298 = vector.shape_cast %297 : vector<1x1x32x4xf32> to vector<32x4xf32>
    %299 = vector.shape_cast %296 : vector<32x4xf32> to vector<1x1x32x4xf32>
    tpu.vector_store %arg3[%c1_217, %c15_218, %c0_219, %c0_220], %299 {strides = array<i32>} : memref<2x32x32x4xf32, #tpu.memory_space<vmem>>, vector<1x1x32x4xf32>,
    %300 = vector.extract_strided_slice %203 {offsets = [16, 0, 0], sizes = [1, 16, 4], strides = [1, 1, 1]} : vector<32x16x4xf32> to vector<1x16x4xf32>
    %301 = vector.shape_cast %300 : vector<1x16x4xf32> to vector<16x4xf32>
    %cst_221 = arith.constant dense<0.000000e+00> : vector<32x4xf32>
    %302 = tpu.matmul %1, %301, %cst_221 {dimension_numbers = #tpu.dot_dimension_numbers<[1], [0], [0], [1], [0, 0, 1, 1], [], []>} : vector<32x16xf32>, vector<16x4xf32>, vector<32x4xf32> -> vector<32x4xf32>
    %c1_222 = arith.constant 1 : index
    %c16_223 = arith.constant 16 : index
    %c0_224 = arith.constant 0 : index
    %c0_225 = arith.constant 0 : index
    %303 = vector.load %arg3[%c1_222, %c16_223, %c0_224, %c0_225] : memref<2x32x32x4xf32, #tpu.memory_space<vmem>>, vector<1x1x32x4xf32>
    %304 = vector.shape_cast %303 : vector<1x1x32x4xf32> to vector<32x4xf32>
    %305 = vector.shape_cast %302 : vector<32x4xf32> to vector<1x1x32x4xf32>
    tpu.vector_store %arg3[%c1_222, %c16_223, %c0_224, %c0_225], %305 {strides = array<i32>} : memref<2x32x32x4xf32, #tpu.memory_space<vmem>>, vector<1x1x32x4xf32>,
    %306 = vector.extract_strided_slice %203 {offsets = [17, 0, 0], sizes = [1, 16, 4], strides = [1, 1, 1]} : vector<32x16x4xf32> to vector<1x16x4xf32>
    %307 = vector.shape_cast %306 : vector<1x16x4xf32> to vector<16x4xf32>
    %cst_226 = arith.constant dense<0.000000e+00> : vector<32x4xf32>
    %308 = tpu.matmul %1, %307, %cst_226 {dimension_numbers = #tpu.dot_dimension_numbers<[1], [0], [0], [1], [0, 0, 1, 1], [], []>} : vector<32x16xf32>, vector<16x4xf32>, vector<32x4xf32> -> vector<32x4xf32>
    %c1_227 = arith.constant 1 : index
    %c17_228 = arith.constant 17 : index
    %c0_229 = arith.constant 0 : index
    %c0_230 = arith.constant 0 : index
    %309 = vector.load %arg3[%c1_227, %c17_228, %c0_229, %c0_230] : memref<2x32x32x4xf32, #tpu.memory_space<vmem>>, vector<1x1x32x4xf32>
    %310 = vector.shape_cast %309 : vector<1x1x32x4xf32> to vector<32x4xf32>
    %311 = vector.shape_cast %308 : vector<32x4xf32> to vector<1x1x32x4xf32>
    tpu.vector_store %arg3[%c1_227, %c17_228, %c0_229, %c0_230], %311 {strides = array<i32>} : memref<2x32x32x4xf32, #tpu.memory_space<vmem>>, vector<1x1x32x4xf32>,
    %312 = vector.extract_strided_slice %203 {offsets = [18, 0, 0], sizes = [1, 16, 4], strides = [1, 1, 1]} : vector<32x16x4xf32> to vector<1x16x4xf32>
    %313 = vector.shape_cast %312 : vector<1x16x4xf32> to vector<16x4xf32>
    %cst_231 = arith.constant dense<0.000000e+00> : vector<32x4xf32>
    %314 = tpu.matmul %1, %313, %cst_231 {dimension_numbers = #tpu.dot_dimension_numbers<[1], [0], [0], [1], [0, 0, 1, 1], [], []>} : vector<32x16xf32>, vector<16x4xf32>, vector<32x4xf32> -> vector<32x4xf32>
    %c1_232 = arith.constant 1 : index
    %c18_233 = arith.constant 18 : index
    %c0_234 = arith.constant 0 : index
    %c0_235 = arith.constant 0 : index
    %315 = vector.load %arg3[%c1_232, %c18_233, %c0_234, %c0_235] : memref<2x32x32x4xf32, #tpu.memory_space<vmem>>, vector<1x1x32x4xf32>
    %316 = vector.shape_cast %315 : vector<1x1x32x4xf32> to vector<32x4xf32>
    %317 = vector.shape_cast %314 : vector<32x4xf32> to vector<1x1x32x4xf32>
    tpu.vector_store %arg3[%c1_232, %c18_233, %c0_234, %c0_235], %317 {strides = array<i32>} : memref<2x32x32x4xf32, #tpu.memory_space<vmem>>, vector<1x1x32x4xf32>,
    %318 = vector.extract_strided_slice %203 {offsets = [19, 0, 0], sizes = [1, 16, 4], strides = [1, 1, 1]} : vector<32x16x4xf32> to vector<1x16x4xf32>
    %319 = vector.shape_cast %318 : vector<1x16x4xf32> to vector<16x4xf32>
    %cst_236 = arith.constant dense<0.000000e+00> : vector<32x4xf32>
    %320 = tpu.matmul %1, %319, %cst_236 {dimension_numbers = #tpu.dot_dimension_numbers<[1], [0], [0], [1], [0, 0, 1, 1], [], []>} : vector<32x16xf32>, vector<16x4xf32>, vector<32x4xf32> -> vector<32x4xf32>
    %c1_237 = arith.constant 1 : index
    %c19_238 = arith.constant 19 : index
    %c0_239 = arith.constant 0 : index
    %c0_240 = arith.constant 0 : index
    %321 = vector.load %arg3[%c1_237, %c19_238, %c0_239, %c0_240] : memref<2x32x32x4xf32, #tpu.memory_space<vmem>>, vector<1x1x32x4xf32>
    %322 = vector.shape_cast %321 : vector<1x1x32x4xf32> to vector<32x4xf32>
    %323 = vector.shape_cast %320 : vector<32x4xf32> to vector<1x1x32x4xf32>
    tpu.vector_store %arg3[%c1_237, %c19_238, %c0_239, %c0_240], %323 {strides = array<i32>} : memref<2x32x32x4xf32, #tpu.memory_space<vmem>>, vector<1x1x32x4xf32>,
    %324 = vector.extract_strided_slice %203 {offsets = [20, 0, 0], sizes = [1, 16, 4], strides = [1, 1, 1]} : vector<32x16x4xf32> to vector<1x16x4xf32>
    %325 = vector.shape_cast %324 : vector<1x16x4xf32> to vector<16x4xf32>
    %cst_241 = arith.constant dense<0.000000e+00> : vector<32x4xf32>
    %326 = tpu.matmul %1, %325, %cst_241 {dimension_numbers = #tpu.dot_dimension_numbers<[1], [0], [0], [1], [0, 0, 1, 1], [], []>} : vector<32x16xf32>, vector<16x4xf32>, vector<32x4xf32> -> vector<32x4xf32>
    %c1_242 = arith.constant 1 : index
    %c20_243 = arith.constant 20 : index
    %c0_244 = arith.constant 0 : index
    %c0_245 = arith.constant 0 : index
    %327 = vector.load %arg3[%c1_242, %c20_243, %c0_244, %c0_245] : memref<2x32x32x4xf32, #tpu.memory_space<vmem>>, vector<1x1x32x4xf32>
    %328 = vector.shape_cast %327 : vector<1x1x32x4xf32> to vector<32x4xf32>
    %329 = vector.shape_cast %326 : vector<32x4xf32> to vector<1x1x32x4xf32>
    tpu.vector_store %arg3[%c1_242, %c20_243, %c0_244, %c0_245], %329 {strides = array<i32>} : memref<2x32x32x4xf32, #tpu.memory_space<vmem>>, vector<1x1x32x4xf32>,
    %330 = vector.extract_strided_slice %203 {offsets = [21, 0, 0], sizes = [1, 16, 4], strides = [1, 1, 1]} : vector<32x16x4xf32> to vector<1x16x4xf32>
    %331 = vector.shape_cast %330 : vector<1x16x4xf32> to vector<16x4xf32>
    %cst_246 = arith.constant dense<0.000000e+00> : vector<32x4xf32>
    %332 = tpu.matmul %1, %331, %cst_246 {dimension_numbers = #tpu.dot_dimension_numbers<[1], [0], [0], [1], [0, 0, 1, 1], [], []>} : vector<32x16xf32>, vector<16x4xf32>, vector<32x4xf32> -> vector<32x4xf32>
    %c1_247 = arith.constant 1 : index
    %c21_248 = arith.constant 21 : index
    %c0_249 = arith.constant 0 : index
    %c0_250 = arith.constant 0 : index
    %333 = vector.load %arg3[%c1_247, %c21_248, %c0_249, %c0_250] : memref<2x32x32x4xf32, #tpu.memory_space<vmem>>, vector<1x1x32x4xf32>
    %334 = vector.shape_cast %333 : vector<1x1x32x4xf32> to vector<32x4xf32>
    %335 = vector.shape_cast %332 : vector<32x4xf32> to vector<1x1x32x4xf32>
    tpu.vector_store %arg3[%c1_247, %c21_248, %c0_249, %c0_250], %335 {strides = array<i32>} : memref<2x32x32x4xf32, #tpu.memory_space<vmem>>, vector<1x1x32x4xf32>,
    %336 = vector.extract_strided_slice %203 {offsets = [22, 0, 0], sizes = [1, 16, 4], strides = [1, 1, 1]} : vector<32x16x4xf32> to vector<1x16x4xf32>
    %337 = vector.shape_cast %336 : vector<1x16x4xf32> to vector<16x4xf32>
    %cst_251 = arith.constant dense<0.000000e+00> : vector<32x4xf32>
    %338 = tpu.matmul %1, %337, %cst_251 {dimension_numbers = #tpu.dot_dimension_numbers<[1], [0], [0], [1], [0, 0, 1, 1], [], []>} : vector<32x16xf32>, vector<16x4xf32>, vector<32x4xf32> -> vector<32x4xf32>
    %c1_252 = arith.constant 1 : index
    %c22_253 = arith.constant 22 : index
    %c0_254 = arith.constant 0 : index
    %c0_255 = arith.constant 0 : index
    %339 = vector.load %arg3[%c1_252, %c22_253, %c0_254, %c0_255] : memref<2x32x32x4xf32, #tpu.memory_space<vmem>>, vector<1x1x32x4xf32>
    %340 = vector.shape_cast %339 : vector<1x1x32x4xf32> to vector<32x4xf32>
    %341 = vector.shape_cast %338 : vector<32x4xf32> to vector<1x1x32x4xf32>
    tpu.vector_store %arg3[%c1_252, %c22_253, %c0_254, %c0_255], %341 {strides = array<i32>} : memref<2x32x32x4xf32, #tpu.memory_space<vmem>>, vector<1x1x32x4xf32>,
    %342 = vector.extract_strided_slice %203 {offsets = [23, 0, 0], sizes = [1, 16, 4], strides = [1, 1, 1]} : vector<32x16x4xf32> to vector<1x16x4xf32>
    %343 = vector.shape_cast %342 : vector<1x16x4xf32> to vector<16x4xf32>
    %cst_256 = arith.constant dense<0.000000e+00> : vector<32x4xf32>
    %344 = tpu.matmul %1, %343, %cst_256 {dimension_numbers = #tpu.dot_dimension_numbers<[1], [0], [0], [1], [0, 0, 1, 1], [], []>} : vector<32x16xf32>, vector<16x4xf32>, vector<32x4xf32> -> vector<32x4xf32>
    %c1_257 = arith.constant 1 : index
    %c23_258 = arith.constant 23 : index
    %c0_259 = arith.constant 0 : index
    %c0_260 = arith.constant 0 : index
    %345 = vector.load %arg3[%c1_257, %c23_258, %c0_259, %c0_260] : memref<2x32x32x4xf32, #tpu.memory_space<vmem>>, vector<1x1x32x4xf32>
    %346 = vector.shape_cast %345 : vector<1x1x32x4xf32> to vector<32x4xf32>
    %347 = vector.shape_cast %344 : vector<32x4xf32> to vector<1x1x32x4xf32>
    tpu.vector_store %arg3[%c1_257, %c23_258, %c0_259, %c0_260], %347 {strides = array<i32>} : memref<2x32x32x4xf32, #tpu.memory_space<vmem>>, vector<1x1x32x4xf32>,
    %348 = vector.extract_strided_slice %203 {offsets = [24, 0, 0], sizes = [1, 16, 4], strides = [1, 1, 1]} : vector<32x16x4xf32> to vector<1x16x4xf32>
    %349 = vector.shape_cast %348 : vector<1x16x4xf32> to vector<16x4xf32>
    %cst_261 = arith.constant dense<0.000000e+00> : vector<32x4xf32>
    %350 = tpu.matmul %1, %349, %cst_261 {dimension_numbers = #tpu.dot_dimension_numbers<[1], [0], [0], [1], [0, 0, 1, 1], [], []>} : vector<32x16xf32>, vector<16x4xf32>, vector<32x4xf32> -> vector<32x4xf32>
    %c1_262 = arith.constant 1 : index
    %c24_263 = arith.constant 24 : index
    %c0_264 = arith.constant 0 : index
    %c0_265 = arith.constant 0 : index
    %351 = vector.load %arg3[%c1_262, %c24_263, %c0_264, %c0_265] : memref<2x32x32x4xf32, #tpu.memory_space<vmem>>, vector<1x1x32x4xf32>
    %352 = vector.shape_cast %351 : vector<1x1x32x4xf32> to vector<32x4xf32>
    %353 = vector.shape_cast %350 : vector<32x4xf32> to vector<1x1x32x4xf32>
    tpu.vector_store %arg3[%c1_262, %c24_263, %c0_264, %c0_265], %353 {strides = array<i32>} : memref<2x32x32x4xf32, #tpu.memory_space<vmem>>, vector<1x1x32x4xf32>,
    %354 = vector.extract_strided_slice %203 {offsets = [25, 0, 0], sizes = [1, 16, 4], strides = [1, 1, 1]} : vector<32x16x4xf32> to vector<1x16x4xf32>
    %355 = vector.shape_cast %354 : vector<1x16x4xf32> to vector<16x4xf32>
    %cst_266 = arith.constant dense<0.000000e+00> : vector<32x4xf32>
    %356 = tpu.matmul %1, %355, %cst_266 {dimension_numbers = #tpu.dot_dimension_numbers<[1], [0], [0], [1], [0, 0, 1, 1], [], []>} : vector<32x16xf32>, vector<16x4xf32>, vector<32x4xf32> -> vector<32x4xf32>
    %c1_267 = arith.constant 1 : index
    %c25_268 = arith.constant 25 : index
    %c0_269 = arith.constant 0 : index
    %c0_270 = arith.constant 0 : index
    %357 = vector.load %arg3[%c1_267, %c25_268, %c0_269, %c0_270] : memref<2x32x32x4xf32, #tpu.memory_space<vmem>>, vector<1x1x32x4xf32>
    %358 = vector.shape_cast %357 : vector<1x1x32x4xf32> to vector<32x4xf32>
    %359 = vector.shape_cast %356 : vector<32x4xf32> to vector<1x1x32x4xf32>
    tpu.vector_store %arg3[%c1_267, %c25_268, %c0_269, %c0_270], %359 {strides = array<i32>} : memref<2x32x32x4xf32, #tpu.memory_space<vmem>>, vector<1x1x32x4xf32>,
    %360 = vector.extract_strided_slice %203 {offsets = [26, 0, 0], sizes = [1, 16, 4], strides = [1, 1, 1]} : vector<32x16x4xf32> to vector<1x16x4xf32>
    %361 = vector.shape_cast %360 : vector<1x16x4xf32> to vector<16x4xf32>
    %cst_271 = arith.constant dense<0.000000e+00> : vector<32x4xf32>
    %362 = tpu.matmul %1, %361, %cst_271 {dimension_numbers = #tpu.dot_dimension_numbers<[1], [0], [0], [1], [0, 0, 1, 1], [], []>} : vector<32x16xf32>, vector<16x4xf32>, vector<32x4xf32> -> vector<32x4xf32>
    %c1_272 = arith.constant 1 : index
    %c26_273 = arith.constant 26 : index
    %c0_274 = arith.constant 0 : index
    %c0_275 = arith.constant 0 : index
    %363 = vector.load %arg3[%c1_272, %c26_273, %c0_274, %c0_275] : memref<2x32x32x4xf32, #tpu.memory_space<vmem>>, vector<1x1x32x4xf32>
    %364 = vector.shape_cast %363 : vector<1x1x32x4xf32> to vector<32x4xf32>
    %365 = vector.shape_cast %362 : vector<32x4xf32> to vector<1x1x32x4xf32>
    tpu.vector_store %arg3[%c1_272, %c26_273, %c0_274, %c0_275], %365 {strides = array<i32>} : memref<2x32x32x4xf32, #tpu.memory_space<vmem>>, vector<1x1x32x4xf32>,
    %366 = vector.extract_strided_slice %203 {offsets = [27, 0, 0], sizes = [1, 16, 4], strides = [1, 1, 1]} : vector<32x16x4xf32> to vector<1x16x4xf32>
    %367 = vector.shape_cast %366 : vector<1x16x4xf32> to vector<16x4xf32>
    %cst_276 = arith.constant dense<0.000000e+00> : vector<32x4xf32>
    %368 = tpu.matmul %1, %367, %cst_276 {dimension_numbers = #tpu.dot_dimension_numbers<[1], [0], [0], [1], [0, 0, 1, 1], [], []>} : vector<32x16xf32>, vector<16x4xf32>, vector<32x4xf32> -> vector<32x4xf32>
    %c1_277 = arith.constant 1 : index
    %c27_278 = arith.constant 27 : index
    %c0_279 = arith.constant 0 : index
    %c0_280 = arith.constant 0 : index
    %369 = vector.load %arg3[%c1_277, %c27_278, %c0_279, %c0_280] : memref<2x32x32x4xf32, #tpu.memory_space<vmem>>, vector<1x1x32x4xf32>
    %370 = vector.shape_cast %369 : vector<1x1x32x4xf32> to vector<32x4xf32>
    %371 = vector.shape_cast %368 : vector<32x4xf32> to vector<1x1x32x4xf32>
    tpu.vector_store %arg3[%c1_277, %c27_278, %c0_279, %c0_280], %371 {strides = array<i32>} : memref<2x32x32x4xf32, #tpu.memory_space<vmem>>, vector<1x1x32x4xf32>,
    %372 = vector.extract_strided_slice %203 {offsets = [28, 0, 0], sizes = [1, 16, 4], strides = [1, 1, 1]} : vector<32x16x4xf32> to vector<1x16x4xf32>
    %373 = vector.shape_cast %372 : vector<1x16x4xf32> to vector<16x4xf32>
    %cst_281 = arith.constant dense<0.000000e+00> : vector<32x4xf32>
    %374 = tpu.matmul %1, %373, %cst_281 {dimension_numbers = #tpu.dot_dimension_numbers<[1], [0], [0], [1], [0, 0, 1, 1], [], []>} : vector<32x16xf32>, vector<16x4xf32>, vector<32x4xf32> -> vector<32x4xf32>
    %c1_282 = arith.constant 1 : index
    %c28_283 = arith.constant 28 : index
    %c0_284 = arith.constant 0 : index
    %c0_285 = arith.constant 0 : index
    %375 = vector.load %arg3[%c1_282, %c28_283, %c0_284, %c0_285] : memref<2x32x32x4xf32, #tpu.memory_space<vmem>>, vector<1x1x32x4xf32>
    %376 = vector.shape_cast %375 : vector<1x1x32x4xf32> to vector<32x4xf32>
    %377 = vector.shape_cast %374 : vector<32x4xf32> to vector<1x1x32x4xf32>
    tpu.vector_store %arg3[%c1_282, %c28_283, %c0_284, %c0_285], %377 {strides = array<i32>} : memref<2x32x32x4xf32, #tpu.memory_space<vmem>>, vector<1x1x32x4xf32>,
    %378 = vector.extract_strided_slice %203 {offsets = [29, 0, 0], sizes = [1, 16, 4], strides = [1, 1, 1]} : vector<32x16x4xf32> to vector<1x16x4xf32>
    %379 = vector.shape_cast %378 : vector<1x16x4xf32> to vector<16x4xf32>
    %cst_286 = arith.constant dense<0.000000e+00> : vector<32x4xf32>
    %380 = tpu.matmul %1, %379, %cst_286 {dimension_numbers = #tpu.dot_dimension_numbers<[1], [0], [0], [1], [0, 0, 1, 1], [], []>} : vector<32x16xf32>, vector<16x4xf32>, vector<32x4xf32> -> vector<32x4xf32>
    %c1_287 = arith.constant 1 : index
    %c29_288 = arith.constant 29 : index
    %c0_289 = arith.constant 0 : index
    %c0_290 = arith.constant 0 : index
    %381 = vector.load %arg3[%c1_287, %c29_288, %c0_289, %c0_290] : memref<2x32x32x4xf32, #tpu.memory_space<vmem>>, vector<1x1x32x4xf32>
    %382 = vector.shape_cast %381 : vector<1x1x32x4xf32> to vector<32x4xf32>
    %383 = vector.shape_cast %380 : vector<32x4xf32> to vector<1x1x32x4xf32>
    tpu.vector_store %arg3[%c1_287, %c29_288, %c0_289, %c0_290], %383 {strides = array<i32>} : memref<2x32x32x4xf32, #tpu.memory_space<vmem>>, vector<1x1x32x4xf32>,
    %384 = vector.extract_strided_slice %203 {offsets = [30, 0, 0], sizes = [1, 16, 4], strides = [1, 1, 1]} : vector<32x16x4xf32> to vector<1x16x4xf32>
    %385 = vector.shape_cast %384 : vector<1x16x4xf32> to vector<16x4xf32>
    %cst_291 = arith.constant dense<0.000000e+00> : vector<32x4xf32>
    %386 = tpu.matmul %1, %385, %cst_291 {dimension_numbers = #tpu.dot_dimension_numbers<[1], [0], [0], [1], [0, 0, 1, 1], [], []>} : vector<32x16xf32>, vector<16x4xf32>, vector<32x4xf32> -> vector<32x4xf32>
    %c1_292 = arith.constant 1 : index
    %c30_293 = arith.constant 30 : index
    %c0_294 = arith.constant 0 : index
    %c0_295 = arith.constant 0 : index
    %387 = vector.load %arg3[%c1_292, %c30_293, %c0_294, %c0_295] : memref<2x32x32x4xf32, #tpu.memory_space<vmem>>, vector<1x1x32x4xf32>
    %388 = vector.shape_cast %387 : vector<1x1x32x4xf32> to vector<32x4xf32>
    %389 = vector.shape_cast %386 : vector<32x4xf32> to vector<1x1x32x4xf32>
    tpu.vector_store %arg3[%c1_292, %c30_293, %c0_294, %c0_295], %389 {strides = array<i32>} : memref<2x32x32x4xf32, #tpu.memory_space<vmem>>, vector<1x1x32x4xf32>,
    %390 = vector.extract_strided_slice %203 {offsets = [31, 0, 0], sizes = [1, 16, 4], strides = [1, 1, 1]} : vector<32x16x4xf32> to vector<1x16x4xf32>
    %391 = vector.shape_cast %390 : vector<1x16x4xf32> to vector<16x4xf32>
    %cst_296 = arith.constant dense<0.000000e+00> : vector<32x4xf32>
    %392 = tpu.matmul %1, %391, %cst_296 {dimension_numbers = #tpu.dot_dimension_numbers<[1], [0], [0], [1], [0, 0, 1, 1], [], []>} : vector<32x16xf32>, vector<16x4xf32>, vector<32x4xf32> -> vector<32x4xf32>
    %c1_297 = arith.constant 1 : index
    %c31_298 = arith.constant 31 : index
    %c0_299 = arith.constant 0 : index
    %c0_300 = arith.constant 0 : index
    %393 = vector.load %arg3[%c1_297, %c31_298, %c0_299, %c0_300] : memref<2x32x32x4xf32, #tpu.memory_space<vmem>>, vector<1x1x32x4xf32>
    %394 = vector.shape_cast %393 : vector<1x1x32x4xf32> to vector<32x4xf32>
    %395 = vector.shape_cast %392 : vector<32x4xf32> to vector<1x1x32x4xf32>
    tpu.vector_store %arg3[%c1_297, %c31_298, %c0_299, %c0_300], %395 {strides = array<i32>} : memref<2x32x32x4xf32, #tpu.memory_space<vmem>>, vector<1x1x32x4xf32>,
    return
  }
}

</mosaic_0001>

<llo_original>
// kernel: tpu_custom_call.1
$region0: #{tpu_custom_call.1}
  #allocation0 [shape = 'u32[]', space=smem, size = 0x4, offset = 0x4, fixed_abs, tag = 'smem constant byte address 0x4 - core index']
  #allocation1 [shape = 'u32[144,128]{1,0:T(1,128)}', space=vmem, size = 0x12000, scoped, tag = 'internal scratch']
  %s0 = inlined_call_operand.vmem [shape: f32[2,16,16,4], index: 0, kind: input, shape index: {}]
  %s1 = inlined_call_operand.vmem [shape: f32[32,16], index: 1, kind: input, shape index: {}]
  %s2 = inlined_call_operand.vmem [shape: f32[32,16], index: 2, kind: input, shape index: {}]
  %s3 = inlined_call_operand.vmem [shape: f32[2,32,32,4], index: 3, kind: output, shape index: {}]
  %s4 = sld [smem:[#allocation0]]
  $region22: #{tpu_custom_call.1} parent=0
    _
  %s6 = ssub.s32 1, %s4
  %s7 = scalar_select 0, %s6, %s4
  // Predicated region
  $region2: #{tpu_custom_call.1} parent=0 // pred_check
    _
  $region3: #{tpu_custom_call.1} parent=0 // pred_check_branch
    %9 = sbr.rel (0) target = $region5
  $region4: #{tpu_custom_call.1} parent=0 // pred_region
    _
  $region5: #{tpu_custom_call.1} parent=0 // pred_fallthru
    _
  // Predicated region
  $region6: #{tpu_custom_call.1} parent=0 // pred_check
    _
  $region7: #{tpu_custom_call.1} parent=0 // pred_check_branch
    %11 = sbr.rel (0) target = $region9
  $region8: #{tpu_custom_call.1} parent=0 // pred_region
    _
  $region9: #{tpu_custom_call.1} parent=0 // pred_fallthru
    _
  // Predicated region
  $region10: #{tpu_custom_call.1} parent=0 // pred_check
    _
  $region11: #{tpu_custom_call.1} parent=0 // pred_check_branch
    %13 = sbr.rel (0) target = $region13
  $region12: #{tpu_custom_call.1} parent=0 // pred_region
    _
  $region13: #{tpu_custom_call.1} parent=0 // pred_fallthru
    _
  %v14 = vld [vmem:[%s1] sm:$0xff]
  %v15 = vld [vmem:[%s1 + $0x8] sm:$0xff]
  %v16 = vld [vmem:[%s1 + $0x10] sm:$0xff]
  %v17 = vld [vmem:[%s1 + $0x18] sm:$0xff]
  %v18 = vld [vmem:[%s2] sm:$0xff]
  %v19 = vld [vmem:[%s2 + $0x8] sm:$0xff]
  %v20 = vld [vmem:[%s2 + $0x10] sm:$0xff]
  %v21 = vld [vmem:[%s2 + $0x18] sm:$0xff]
  %v22 = vld [vmem:[%s0] sm:$0xff]
  %v23 = vld [vmem:[%s0 + $0x8] sm:$0xff]
  %v24 = vld [vmem:[%s0 + $0x10] sm:$0xff]
  %v25 = vld [vmem:[%s0 + $0x18] sm:$0xff]
  %v26 = vld [vmem:[%s0 + $0x20] sm:$0xff]
  %v27 = vld [vmem:[%s0 + $0x28] sm:$0xff]
  %v28 = vld [vmem:[%s0 + $0x30] sm:$0xff]
  %v29 = vld [vmem:[%s0 + $0x38] sm:$0xff]
  %v30 = vld [vmem:[%s0 + $0x40] sm:$0xff]
  %v31 = vld [vmem:[%s0 + $0x48] sm:$0xff]
  %v32 = vld [vmem:[%s0 + $0x50] sm:$0xff]
  %v33 = vld [vmem:[%s0 + $0x58] sm:$0xff]
  %v34 = vld [vmem:[%s0 + $0x60] sm:$0xff]
  %v35 = vld [vmem:[%s0 + $0x68] sm:$0xff]
  %v36 = vld [vmem:[%s0 + $0x70] sm:$0xff]
  %v37 = vld [vmem:[%s0 + $0x78] sm:$0xff]
  %v38 = vld [vmem:[%s0 + $0x80] sm:$0xff]
  %v39 = vld [vmem:[%s0 + $0x88] sm:$0xff]
  %v40 = vld [vmem:[%s0 + $0x90] sm:$0xff]
  %v41 = vld [vmem:[%s0 + $0x98] sm:$0xff]
  %v42 = vld [vmem:[%s0 + $0xa0] sm:$0xff]
  %v43 = vld [vmem:[%s0 + $0xa8] sm:$0xff]
  %v44 = vld [vmem:[%s0 + $0xb0] sm:$0xff]
  %v45 = vld [vmem:[%s0 + $0xb8] sm:$0xff]
  %v46 = vld [vmem:[%s0 + $0xc0] sm:$0xff]
  %v47 = vld [vmem:[%s0 + $0xc8] sm:$0xff]
  %v48 = vld [vmem:[%s0 + $0xd0] sm:$0xff]
  %v49 = vld [vmem:[%s0 + $0xd8] sm:$0xff]
  %v50 = vld [vmem:[%s0 + $0xe0] sm:$0xff]
  %v51 = vld [vmem:[%s0 + $0xe8] sm:$0xff]
  %v52 = vld [vmem:[%s0 + $0xf0] sm:$0xff]
  %v53 = vld [vmem:[%s0 + $0xf8] sm:$0xff]
  %v54 = vcombine.low %v22, %v26
  %v55 = vcombine.high %v22, %v26
  %v57 = vunpack.c.l.s4 1983009808
  %v58 = vunpack.c.0.s8 %v57
  %v59 = vlaneseq
  %v60 = vshrl.u32 %v59, 7
  %v61 = vsub.s32 %v58, %v60
  %v62 = vrot.slane %v54, %v61
  %v64 = vunpack.c.l.s4 1983009808
  %v65 = vunpack.c.0.s8 %v64
  %v66 = vlaneseq
  %v67 = vshrl.u32 %v66, 7
  %v68 = vsub.s32 %v65, %v67
  %v69 = vrot.slane %v55, %v68
  %v70 = vcombine.low %v24, %v28
  %v71 = vcombine.high %v24, %v28
  %v73 = vunpack.c.l.s4 1983009808
  %v74 = vunpack.c.0.s8 %v73
  %v75 = vlaneseq
  %v76 = vshrl.u32 %v75, 7
  %v77 = vsub.s32 %v74, %v76
  %v78 = vrot.slane %v70, %v77
  %v80 = vunpack.c.l.s4 1983009808
  %v81 = vunpack.c.0.s8 %v80
  %v82 = vlaneseq
  %v83 = vshrl.u32 %v82, 7
  %v84 = vsub.s32 %v81, %v83
  %v85 = vrot.slane %v71, %v84
  %v86 = vcombine.low %v30, %v34
  %v87 = vcombine.high %v30, %v34
  %v89 = vunpack.c.l.s4 1983009808
  %v90 = vunpack.c.0.s8 %v89
  %v91 = vlaneseq
  %v92 = vshrl.u32 %v91, 7
  %v93 = vsub.s32 %v90, %v92
  %v94 = vrot.slane %v86, %v93
  %v96 = vunpack.c.l.s4 1983009808
  %v97 = vunpack.c.0.s8 %v96
  %v98 = vlaneseq
  %v99 = vshrl.u32 %v98, 7
  %v100 = vsub.s32 %v97, %v99
  %v101 = vrot.slane %v87, %v100
  %v102 = vcombine.low %v32, %v36
  %v103 = vcombine.high %v32, %v36
  %v105 = vunpack.c.l.s4 1983009808
  %v106 = vunpack.c.0.s8 %v105
  %v107 = vlaneseq
  %v108 = vshrl.u32 %v107, 7
  %v109 = vsub.s32 %v106, %v108
  %v110 = vrot.slane %v102, %v109
  %v112 = vunpack.c.l.s4 1983009808
  %v113 = vunpack.c.0.s8 %v112
  %v114 = vlaneseq
  %v115 = vshrl.u32 %v114, 7
  %v116 = vsub.s32 %v113, %v115
  %v117 = vrot.slane %v103, %v116
  %v118 = vcombine.low %v62, %v78
  %v119 = vcombine.high %v62, %v78
  %v121 = vunpack.c.l.s4 1934713408
  %v122 = vunpack.c.0.s8 %v121
  %v123 = vlaneseq
  %v124 = vshrl.u32 %v123, 7
  %v125 = vsub.s32 %v122, %v124
  %v126 = vrot.slane %v118, %v125
  %v128 = vunpack.c.l.s4 1934713408
  %v129 = vunpack.c.0.s8 %v128
  %v130 = vlaneseq
  %v131 = vshrl.u32 %v130, 7
  %v132 = vsub.s32 %v129, %v131
  %v133 = vrot.slane %v119, %v132
  %v134 = vcombine.low %v69, %v85
  %v135 = vcombine.high %v69, %v85
  %v137 = vunpack.c.l.s4 1934713408
  %v138 = vunpack.c.0.s8 %v137
  %v139 = vlaneseq
  %v140 = vshrl.u32 %v139, 7
  %v141 = vsub.s32 %v138, %v140
  %v142 = vrot.slane %v134, %v141
  %v144 = vunpack.c.l.s4 1934713408
  %v145 = vunpack.c.0.s8 %v144
  %v146 = vlaneseq
  %v147 = vshrl.u32 %v146, 7
  %v148 = vsub.s32 %v145, %v147
  %v149 = vrot.slane %v135, %v148
  %v150 = vcombine.low %v94, %v110
  %v151 = vcombine.high %v94, %v110
  %v153 = vunpack.c.l.s4 1934713408
  %v154 = vunpack.c.0.s8 %v153
  %v155 = vlaneseq
  %v156 = vshrl.u32 %v155, 7
  %v157 = vsub.s32 %v154, %v156
  %v158 = vrot.slane %v150, %v157
  %v160 = vunpack.c.l.s4 1934713408
  %v161 = vunpack.c.0.s8 %v160
  %v162 = vlaneseq
  %v163 = vshrl.u32 %v162, 7
  %v164 = vsub.s32 %v161, %v163
  %v165 = vrot.slane %v151, %v164
  %v166 = vcombine.low %v101, %v117
  %v167 = vcombine.high %v101, %v117
  %v169 = vunpack.c.l.s4 1934713408
  %v170 = vunpack.c.0.s8 %v169
  %v171 = vlaneseq
  %v172 = vshrl.u32 %v171, 7
  %v173 = vsub.s32 %v170, %v172
  %v174 = vrot.slane %v166, %v173
  %v176 = vunpack.c.l.s4 1934713408
  %v177 = vunpack.c.0.s8 %v176
  %v178 = vlaneseq
  %v179 = vshrl.u32 %v178, 7
  %v180 = vsub.s32 %v177, %v179
  %v181 = vrot.slane %v167, %v180
  %v182 = vcombine.low %v126, %v158
  %v183 = vcombine.high %v126, %v158
  %v184 = vcombine.low %v133, %v165
  %v185 = vcombine.high %v133, %v165
  %v186 = vcombine.low %v142, %v174
  %v187 = vcombine.high %v142, %v174
  %v188 = vcombine.low %v149, %v181
  %v189 = vcombine.high %v149, %v181
  %v190 = vcombine.low %v38, %v42
  %v191 = vcombine.high %v38, %v42
  %v193 = vunpack.c.l.s4 1983009808
  %v194 = vunpack.c.0.s8 %v193
  %v195 = vlaneseq
  %v196 = vshrl.u32 %v195, 7
  %v197 = vsub.s32 %v194, %v196
  %v198 = vrot.slane %v190, %v197
  %v200 = vunpack.c.l.s4 1983009808
  %v201 = vunpack.c.0.s8 %v200
  %v202 = vlaneseq
  %v203 = vshrl.u32 %v202, 7
  %v204 = vsub.s32 %v201, %v203
  %v205 = vrot.slane %v191, %v204
  %v206 = vcombine.low %v40, %v44
  %v207 = vcombine.high %v40, %v44
  %v209 = vunpack.c.l.s4 1983009808
  %v210 = vunpack.c.0.s8 %v209
  %v211 = vlaneseq
  %v212 = vshrl.u32 %v211, 7
  %v213 = vsub.s32 %v210, %v212
  %v214 = vrot.slane %v206, %v213
  %v216 = vunpack.c.l.s4 1983009808
  %v217 = vunpack.c.0.s8 %v216
  %v218 = vlaneseq
  %v219 = vshrl.u32 %v218, 7
  %v220 = vsub.s32 %v217, %v219
  %v221 = vrot.slane %v207, %v220
  %v222 = vcombine.low %v46, %v50
  %v223 = vcombine.high %v46, %v50
  %v225 = vunpack.c.l.s4 1983009808
  %v226 = vunpack.c.0.s8 %v225
  %v227 = vlaneseq
  %v228 = vshrl.u32 %v227, 7
  %v229 = vsub.s32 %v226, %v228
  %v230 = vrot.slane %v222, %v229
  %v232 = vunpack.c.l.s4 1983009808
  %v233 = vunpack.c.0.s8 %v232
  %v234 = vlaneseq
  %v235 = vshrl.u32 %v234, 7
  %v236 = vsub.s32 %v233, %v235
  %v237 = vrot.slane %v223, %v236
  %v238 = vcombine.low %v48, %v52
  %v239 = vcombine.high %v48, %v52
  %v241 = vunpack.c.l.s4 1983009808
  %v242 = vunpack.c.0.s8 %v241
  %v243 = vlaneseq
  %v244 = vshrl.u32 %v243, 7
  %v245 = vsub.s32 %v242, %v244
  %v246 = vrot.slane %v238, %v245
  %v248 = vunpack.c.l.s4 1983009808
  %v249 = vunpack.c.0.s8 %v248
  %v250 = vlaneseq
  %v251 = vshrl.u32 %v250, 7
  %v252 = vsub.s32 %v249, %v251
  %v253 = vrot.slane %v239, %v252
  %v254 = vcombine.low %v198, %v214
  %v255 = vcombine.high %v198, %v214
  %v257 = vunpack.c.l.s4 1934713408
  %v258 = vunpack.c.0.s8 %v257
  %v259 = vlaneseq
  %v260 = vshrl.u32 %v259, 7
  %v261 = vsub.s32 %v258, %v260
  %v262 = vrot.slane %v254, %v261
  %v264 = vunpack.c.l.s4 1934713408
  %v265 = vunpack.c.0.s8 %v264
  %v266 = vlaneseq
  %v267 = vshrl.u32 %v266, 7
  %v268 = vsub.s32 %v265, %v267
  %v269 = vrot.slane %v255, %v268
  %v270 = vcombine.low %v205, %v221
  %v271 = vcombine.high %v205, %v221
  %v273 = vunpack.c.l.s4 1934713408
  %v274 = vunpack.c.0.s8 %v273
  %v275 = vlaneseq
  %v276 = vshrl.u32 %v275, 7
  %v277 = vsub.s32 %v274, %v276
  %v278 = vrot.slane %v270, %v277
  %v280 = vunpack.c.l.s4 1934713408
  %v281 = vunpack.c.0.s8 %v280
  %v282 = vlaneseq
  %v283 = vshrl.u32 %v282, 7
  %v284 = vsub.s32 %v281, %v283
  %v285 = vrot.slane %v271, %v284
  %v286 = vcombine.low %v230, %v246
  %v287 = vcombine.high %v230, %v246
  %v289 = vunpack.c.l.s4 1934713408
  %v290 = vunpack.c.0.s8 %v289
  %v291 = vlaneseq
  %v292 = vshrl.u32 %v291, 7
  %v293 = vsub.s32 %v290, %v292
  %v294 = vrot.slane %v286, %v293
  %v296 = vunpack.c.l.s4 1934713408
  %v297 = vunpack.c.0.s8 %v296
  %v298 = vlaneseq
  %v299 = vshrl.u32 %v298, 7
  %v300 = vsub.s32 %v297, %v299
  %v301 = vrot.slane %v287, %v300
  %v302 = vcombine.low %v237, %v253
  %v303 = vcombine.high %v237, %v253
  %v305 = vunpack.c.l.s4 1934713408
  %v306 = vunpack.c.0.s8 %v305
  %v307 = vlaneseq
  %v308 = vshrl.u32 %v307, 7
  %v309 = vsub.s32 %v306, %v308
  %v310 = vrot.slane %v302, %v309
  %v312 = vunpack.c.l.s4 1934713408
  %v313 = vunpack.c.0.s8 %v312
  %v314 = vlaneseq
  %v315 = vshrl.u32 %v314, 7
  %v316 = vsub.s32 %v313, %v315
  %v317 = vrot.slane %v303, %v316
  %v318 = vcombine.low %v262, %v294
  %v319 = vcombine.high %v262, %v294
  %v320 = vcombine.low %v269, %v301
  %v321 = vcombine.high %v269, %v301
  %v322 = vcombine.low %v278, %v310
  %v323 = vcombine.high %v278, %v310
  %v324 = vcombine.low %v285, %v317
  %v325 = vcombine.high %v285, %v317
  %v326 = vcombine.low %v23, %v27
  %v327 = vcombine.high %v23, %v27
  %v329 = vunpack.c.l.s4 1983009808
  %v330 = vunpack.c.0.s8 %v329
  %v331 = vlaneseq
  %v332 = vshrl.u32 %v331, 7
  %v333 = vsub.s32 %v330, %v332
  %v334 = vrot.slane %v326, %v333
  %v336 = vunpack.c.l.s4 1983009808
  %v337 = vunpack.c.0.s8 %v336
  %v338 = vlaneseq
  %v339 = vshrl.u32 %v338, 7
  %v340 = vsub.s32 %v337, %v339
  %v341 = vrot.slane %v327, %v340
  %v342 = vcombine.low %v25, %v29
  %v343 = vcombine.high %v25, %v29
  %v345 = vunpack.c.l.s4 1983009808
  %v346 = vunpack.c.0.s8 %v345
  %v347 = vlaneseq
  %v348 = vshrl.u32 %v347, 7
  %v349 = vsub.s32 %v346, %v348
  %v350 = vrot.slane %v342, %v349
  %v352 = vunpack.c.l.s4 1983009808
  %v353 = vunpack.c.0.s8 %v352
  %v354 = vlaneseq
  %v355 = vshrl.u32 %v354, 7
  %v356 = vsub.s32 %v353, %v355
  %v357 = vrot.slane %v343, %v356
  %v358 = vcombine.low %v31, %v35
  %v359 = vcombine.high %v31, %v35
  %v361 = vunpack.c.l.s4 1983009808
  %v362 = vunpack.c.0.s8 %v361
  %v363 = vlaneseq
  %v364 = vshrl.u32 %v363, 7
  %v365 = vsub.s32 %v362, %v364
  %v366 = vrot.slane %v358, %v365
  %v368 = vunpack.c.l.s4 1983009808
  %v369 = vunpack.c.0.s8 %v368
  %v370 = vlaneseq
  %v371 = vshrl.u32 %v370, 7
  %v372 = vsub.s32 %v369, %v371
  %v373 = vrot.slane %v359, %v372
  %v374 = vcombine.low %v33, %v37
  %v375 = vcombine.high %v33, %v37
  %v377 = vunpack.c.l.s4 1983009808
  %v378 = vunpack.c.0.s8 %v377
  %v379 = vlaneseq
  %v380 = vshrl.u32 %v379, 7
  %v381 = vsub.s32 %v378, %v380
  %v382 = vrot.slane %v374, %v381
  %v384 = vunpack.c.l.s4 1983009808
  %v385 = vunpack.c.0.s8 %v384
  %v386 = vlaneseq
  %v387 = vshrl.u32 %v386, 7
  %v388 = vsub.s32 %v385, %v387
  %v389 = vrot.slane %v375, %v388
  %v390 = vcombine.low %v334, %v350
  %v391 = vcombine.high %v334, %v350
  %v393 = vunpack.c.l.s4 1934713408
  %v394 = vunpack.c.0.s8 %v393
  %v395 = vlaneseq
  %v396 = vshrl.u32 %v395, 7
  %v397 = vsub.s32 %v394, %v396
  %v398 = vrot.slane %v390, %v397
  %v400 = vunpack.c.l.s4 1934713408
  %v401 = vunpack.c.0.s8 %v400
  %v402 = vlaneseq
  %v403 = vshrl.u32 %v402, 7
  %v404 = vsub.s32 %v401, %v403
  %v405 = vrot.slane %v391, %v404
  %v406 = vcombine.low %v341, %v357
  %v407 = vcombine.high %v341, %v357
  %v409 = vunpack.c.l.s4 1934713408
  %v410 = vunpack.c.0.s8 %v409
  %v411 = vlaneseq
  %v412 = vshrl.u32 %v411, 7
  %v413 = vsub.s32 %v410, %v412
  %v414 = vrot.slane %v406, %v413
  %v416 = vunpack.c.l.s4 1934713408
  %v417 = vunpack.c.0.s8 %v416
  %v418 = vlaneseq
  %v419 = vshrl.u32 %v418, 7
  %v420 = vsub.s32 %v417, %v419
  %v421 = vrot.slane %v407, %v420
  %v422 = vcombine.low %v366, %v382
  %v423 = vcombine.high %v366, %v382
  %v425 = vunpack.c.l.s4 1934713408
  %v426 = vunpack.c.0.s8 %v425
  %v427 = vlaneseq
  %v428 = vshrl.u32 %v427, 7
  %v429 = vsub.s32 %v426, %v428
  %v430 = vrot.slane %v422, %v429
  %v432 = vunpack.c.l.s4 1934713408
  %v433 = vunpack.c.0.s8 %v432
  %v434 = vlaneseq
  %v435 = vshrl.u32 %v434, 7
  %v436 = vsub.s32 %v433, %v435
  %v437 = vrot.slane %v423, %v436
  %v438 = vcombine.low %v373, %v389
  %v439 = vcombine.high %v373, %v389
  %v441 = vunpack.c.l.s4 1934713408
  %v442 = vunpack.c.0.s8 %v441
  %v443 = vlaneseq
  %v444 = vshrl.u32 %v443, 7
  %v445 = vsub.s32 %v442, %v444
  %v446 = vrot.slane %v438, %v445
  %v448 = vunpack.c.l.s4 1934713408
  %v449 = vunpack.c.0.s8 %v448
  %v450 = vlaneseq
  %v451 = vshrl.u32 %v450, 7
  %v452 = vsub.s32 %v449, %v451
  %v453 = vrot.slane %v439, %v452
  %v454 = vcombine.low %v398, %v430
  %v455 = vcombine.high %v398, %v430
  %v456 = vcombine.low %v405, %v437
  %v457 = vcombine.high %v405, %v437
  %v458 = vcombine.low %v414, %v446
  %v459 = vcombine.high %v414, %v446
  %v460 = vcombine.low %v421, %v453
  %v461 = vcombine.high %v421, %v453
  %v462 = vcombine.low %v39, %v43
  %v463 = vcombine.high %v39, %v43
  %v465 = vunpack.c.l.s4 1983009808
  %v466 = vunpack.c.0.s8 %v465
  %v467 = vlaneseq
  %v468 = vshrl.u32 %v467, 7
  %v469 = vsub.s32 %v466, %v468
  %v470 = vrot.slane %v462, %v469
  %v472 = vunpack.c.l.s4 1983009808
  %v473 = vunpack.c.0.s8 %v472
  %v474 = vlaneseq
  %v475 = vshrl.u32 %v474, 7
  %v476 = vsub.s32 %v473, %v475
  %v477 = vrot.slane %v463, %v476
  %v478 = vcombine.low %v41, %v45
  %v479 = vcombine.high %v41, %v45
  %v481 = vunpack.c.l.s4 1983009808
  %v482 = vunpack.c.0.s8 %v481
  %v483 = vlaneseq
  %v484 = vshrl.u32 %v483, 7
  %v485 = vsub.s32 %v482, %v484
  %v486 = vrot.slane %v478, %v485
  %v488 = vunpack.c.l.s4 1983009808
  %v489 = vunpack.c.0.s8 %v488
  %v490 = vlaneseq
  %v491 = vshrl.u32 %v490, 7
  %v492 = vsub.s32 %v489, %v491
  %v493 = vrot.slane %v479, %v492
  %v494 = vcombine.low %v47, %v51
  %v495 = vcombine.high %v47, %v51
  %v497 = vunpack.c.l.s4 1983009808
  %v498 = vunpack.c.0.s8 %v497
  %v499 = vlaneseq
  %v500 = vshrl.u32 %v499, 7
  %v501 = vsub.s32 %v498, %v500
  %v502 = vrot.slane %v494, %v501
  %v504 = vunpack.c.l.s4 1983009808
  %v505 = vunpack.c.0.s8 %v504
  %v506 = vlaneseq
  %v507 = vshrl.u32 %v506, 7
  %v508 = vsub.s32 %v505, %v507
  %v509 = vrot.slane %v495, %v508
  %v510 = vcombine.low %v49, %v53
  %v511 = vcombine.high %v49, %v53
  %v513 = vunpack.c.l.s4 1983009808
  %v514 = vunpack.c.0.s8 %v513
  %v515 = vlaneseq
  %v516 = vshrl.u32 %v515, 7
  %v517 = vsub.s32 %v514, %v516
  %v518 = vrot.slane %v510, %v517
  %v520 = vunpack.c.l.s4 1983009808
  %v521 = vunpack.c.0.s8 %v520
  %v522 = vlaneseq
  %v523 = vshrl.u32 %v522, 7
  %v524 = vsub.s32 %v521, %v523
  %v525 = vrot.slane %v511, %v524
  %v526 = vcombine.low %v470, %v486
  %v527 = vcombine.high %v470, %v486
  %v529 = vunpack.c.l.s4 1934713408
  %v530 = vunpack.c.0.s8 %v529
  %v531 = vlaneseq
  %v532 = vshrl.u32 %v531, 7
  %v533 = vsub.s32 %v530, %v532
  %v534 = vrot.slane %v526, %v533
  %v536 = vunpack.c.l.s4 1934713408
  %v537 = vunpack.c.0.s8 %v536
  %v538 = vlaneseq
  %v539 = vshrl.u32 %v538, 7
  %v540 = vsub.s32 %v537, %v539
  %v541 = vrot.slane %v527, %v540
  %v542 = vcombine.low %v477, %v493
  %v543 = vcombine.high %v477, %v493
  %v545 = vunpack.c.l.s4 1934713408
  %v546 = vunpack.c.0.s8 %v545
  %v547 = vlaneseq
  %v548 = vshrl.u32 %v547, 7
  %v549 = vsub.s32 %v546, %v548
  %v550 = vrot.slane %v542, %v549
  %v552 = vunpack.c.l.s4 1934713408
  %v553 = vunpack.c.0.s8 %v552
  %v554 = vlaneseq
  %v555 = vshrl.u32 %v554, 7
  %v556 = vsub.s32 %v553, %v555
  %v557 = vrot.slane %v543, %v556
  %v558 = vcombine.low %v502, %v518
  %v559 = vcombine.high %v502, %v518
  %v561 = vunpack.c.l.s4 1934713408
  %v562 = vunpack.c.0.s8 %v561
  %v563 = vlaneseq
  %v564 = vshrl.u32 %v563, 7
  %v565 = vsub.s32 %v562, %v564
  %v566 = vrot.slane %v558, %v565
  %v568 = vunpack.c.l.s4 1934713408
  %v569 = vunpack.c.0.s8 %v568
  %v570 = vlaneseq
  %v571 = vshrl.u32 %v570, 7
  %v572 = vsub.s32 %v569, %v571
  %v573 = vrot.slane %v559, %v572
  %v574 = vcombine.low %v509, %v525
  %v575 = vcombine.high %v509, %v525
  %v577 = vunpack.c.l.s4 1934713408
  %v578 = vunpack.c.0.s8 %v577
  %v579 = vlaneseq
  %v580 = vshrl.u32 %v579, 7
  %v581 = vsub.s32 %v578, %v580
  %v582 = vrot.slane %v574, %v581
  %v584 = vunpack.c.l.s4 1934713408
  %v585 = vunpack.c.0.s8 %v584
  %v586 = vlaneseq
  %v587 = vshrl.u32 %v586, 7
  %v588 = vsub.s32 %v585, %v587
  %v589 = vrot.slane %v575, %v588
  %v590 = vcombine.low %v534, %v566
  %v591 = vcombine.high %v534, %v566
  %v592 = vcombine.low %v541, %v573
  %v593 = vcombine.high %v541, %v573
  %v594 = vcombine.low %v550, %v582
  %v595 = vcombine.high %v550, %v582
  %v596 = vcombine.low %v557, %v589
  %v597 = vcombine.high %v557, %v589
  %600 = vrot.lane.b32.xlu0 %v183, 4
  %v601 = vpop.permute.xlu0 %600
  %602 = vrot.lane.b32.xlu0 %v319, 4
  %v603 = vpop.permute.xlu0 %602
  %608 = vrot.lane.b32.xlu0 %v184, 8
  %v609 = vpop.permute.xlu0 %608
  %610 = vrot.lane.b32.xlu0 %v320, 8
  %v611 = vpop.permute.xlu0 %610
  %616 = vrot.lane.b32.xlu0 %v185, 12
  %v617 = vpop.permute.xlu0 %616
  %618 = vrot.lane.b32.xlu0 %v321, 12
  %v619 = vpop.permute.xlu0 %618
  %624 = vrot.lane.b32.xlu0 %v186, 16
  %v625 = vpop.permute.xlu0 %624
  %626 = vrot.lane.b32.xlu0 %v322, 16
  %v627 = vpop.permute.xlu0 %626
  %632 = vrot.lane.b32.xlu0 %v187, 20
  %v633 = vpop.permute.xlu0 %632
  %634 = vrot.lane.b32.xlu0 %v323, 20
  %v635 = vpop.permute.xlu0 %634
  %640 = vrot.lane.b32.xlu0 %v188, 24
  %v641 = vpop.permute.xlu0 %640
  %642 = vrot.lane.b32.xlu0 %v324, 24
  %v643 = vpop.permute.xlu0 %642
  %648 = vrot.lane.b32.xlu0 %v189, 28
  %v649 = vpop.permute.xlu0 %648
  %650 = vrot.lane.b32.xlu0 %v325, 28
  %v651 = vpop.permute.xlu0 %650
  %656 = vrot.lane.b32.xlu0 %v454, 32
  %v657 = vpop.permute.xlu0 %656
  %658 = vrot.lane.b32.xlu0 %v590, 32
  %v659 = vpop.permute.xlu0 %658
  %664 = vrot.lane.b32.xlu0 %v455, 36
  %v665 = vpop.permute.xlu0 %664
  %666 = vrot.lane.b32.xlu0 %v591, 36
  %v667 = vpop.permute.xlu0 %666
  %672 = vrot.lane.b32.xlu0 %v456, 40
  %v673 = vpop.permute.xlu0 %672
  %674 = vrot.lane.b32.xlu0 %v592, 40
  %v675 = vpop.permute.xlu0 %674
  %680 = vrot.lane.b32.xlu0 %v457, 44
  %v681 = vpop.permute.xlu0 %680
  %682 = vrot.lane.b32.xlu0 %v593, 44
  %v683 = vpop.permute.xlu0 %682
  %688 = vrot.lane.b32.xlu0 %v458, 48
  %v689 = vpop.permute.xlu0 %688
  %690 = vrot.lane.b32.xlu0 %v594, 48
  %v691 = vpop.permute.xlu0 %690
  %696 = vrot.lane.b32.xlu0 %v459, 52
  %v697 = vpop.permute.xlu0 %696
  %698 = vrot.lane.b32.xlu0 %v595, 52
  %v699 = vpop.permute.xlu0 %698
  %704 = vrot.lane.b32.xlu0 %v460, 56
  %v705 = vpop.permute.xlu0 %704
  %706 = vrot.lane.b32.xlu0 %v596, 56
  %v707 = vpop.permute.xlu0 %706
  %712 = vrot.lane.b32.xlu0 %v461, 60
  %v713 = vpop.permute.xlu0 %712
  %714 = vrot.lane.b32.xlu0 %v597, 60
  %v715 = vpop.permute.xlu0 %714
  %vm718 = vcmask 31744
  %v719 = vsel %vm718, %v182, %v601
  %v720 = vsel %vm718, %v318, %v603
  %vm721 = vcmask 64512
  %v722 = vsel %vm721, %v719, %v609
  %v723 = vsel %vm721, %v720, %v611
  %vm724 = vcmask 97280
  %v725 = vsel %vm724, %v722, %v617
  %v726 = vsel %vm724, %v723, %v619
  %vm727 = vcmask 130048
  %v728 = vsel %vm727, %v725, %v625
  %v729 = vsel %vm727, %v726, %v627
  %vm730 = vcmask 162816
  %v731 = vsel %vm730, %v728, %v633
  %v732 = vsel %vm730, %v729, %v635
  %vm733 = vcmask 195584
  %v734 = vsel %vm733, %v731, %v641
  %v735 = vsel %vm733, %v732, %v643
  %vm736 = vcmask 228352
  %v737 = vsel %vm736, %v734, %v649
  %v738 = vsel %vm736, %v735, %v651
  %vm739 = vcmask 261120
  %v740 = vsel %vm739, %v737, %v657
  %v741 = vsel %vm739, %v738, %v659
  %vm742 = vcmask 293888
  %v743 = vsel %vm742, %v740, %v665
  %v744 = vsel %vm742, %v741, %v667
  %vm745 = vcmask 326656
  %v746 = vsel %vm745, %v743, %v673
  %v747 = vsel %vm745, %v744, %v675
  %vm748 = vcmask 359424
  %v749 = vsel %vm748, %v746, %v681
  %v750 = vsel %vm748, %v747, %v683
  %vm751 = vcmask 392192
  %v752 = vsel %vm751, %v749, %v689
  %v753 = vsel %vm751, %v750, %v691
  %vm754 = vcmask 424960
  %v755 = vsel %vm754, %v752, %v697
  %v756 = vsel %vm754, %v753, %v699
  %vm757 = vcmask 457728
  %v758 = vsel %vm757, %v755, %v705
  %v759 = vsel %vm757, %v756, %v707
  %vm760 = vcmask 490496
  %v761 = vsel %vm760, %v758, %v713
  %v762 = vsel %vm760, %v759, %v715
  %v764 = vsel %vm727, %v14, 0
  %v767 = vsel %vm727, %v15, 0
  %v770 = vsel %vm727, %v16, 0
  %v773 = vsel %vm727, %v17, 0
  %775 = vmatprep.subr.mxu0 0.0
  %776 = vmatpush1.msra.mxu0 %v761
  %777 = vmatprep.subr.mxu0 0.0
  %778 = vmatpush1.msra.mxu0 %v762
  %779 = vmatprep.subr.mxu0 0.0
  %780 = vmatpush1.msra.mxu0 0.0
  %781 = vmatprep.subr.mxu0 0.0
  %782 = vmatpush1.msra.mxu0 0.0
  %783 = vmatprep.subr.mxu0 0.0
  %784 = vmatpush1.msra.mxu0 0.0
  %785 = vmatprep.subr.mxu0 0.0
  %786 = vmatpush1.msra.mxu0 0.0
  %787 = vmatprep.subr.mxu0 0.0
  %788 = vmatpush1.msra.mxu0 0.0
  %789 = vmatprep.subr.mxu0 0.0
  %790 = vmatpush1.msra.mxu0 0.0
  %791 = vmatprep.subr.mxu0 0.0
  %792 = vmatpush1.msra.mxu0 0.0
  %793 = vmatprep.subr.mxu0 0.0
  %794 = vmatpush1.msra.mxu0 0.0
  %795 = vmatprep.subr.mxu0 0.0
  %796 = vmatpush1.msra.mxu0 0.0
  %797 = vmatprep.subr.mxu0 0.0
  %798 = vmatpush1.msra.mxu0 0.0
  %799 = vmatprep.subr.mxu0 0.0
  %800 = vmatpush1.msra.mxu0 0.0
  %801 = vmatprep.subr.mxu0 0.0
  %802 = vmatpush1.msra.mxu0 0.0
  %803 = vmatprep.subr.mxu0 0.0
  %804 = vmatpush1.msra.mxu0 0.0
  %805 = vmatprep.subr.mxu0 0.0
  %806 = vmatpush1.msra.mxu0 0.0
  %807 = vmatprep.subr.mxu0 0.0
  %808 = vmatpush1.msra.mxu0 0.0
  %809 = vmatprep.subr.mxu0 0.0
  %810 = vmatpush1.msra.mxu0 0.0
  %811 = vmatprep.subr.mxu0 0.0
  %812 = vmatpush1.msra.mxu0 0.0
  %813 = vmatprep.subr.mxu0 0.0
  %814 = vmatpush1.msra.mxu0 0.0
  %815 = vmatprep.subr.mxu0 0.0
  %816 = vmatpush1.msra.mxu0 0.0
  %817 = vmatprep.subr.mxu0 0.0
  %818 = vmatpush1.msra.mxu0 0.0
  %819 = vmatprep.subr.mxu0 0.0
  %820 = vmatpush1.msra.mxu0 0.0
  %821 = vmatprep.subr.mxu0 0.0
  %822 = vmatpush1.msra.mxu0 0.0
  %823 = vmatprep.subr.mxu0 0.0
  %824 = vmatpush1.msra.mxu0 0.0
  %825 = vmatprep.subr.mxu0 0.0
  %826 = vmatpush1.msra.mxu0 0.0
  %827 = vmatprep.subr.mxu0 0.0
  %828 = vmatpush1.msra.mxu0 0.0
  %829 = vmatprep.subr.mxu0 0.0
  %830 = vmatpush1.msra.mxu0 0.0
  %831 = vmatprep.subr.mxu0 0.0
  %832 = vmatpush1.msra.mxu0 0.0
  %833 = vmatprep.subr.mxu0 0.0
  %834 = vmatpush1.msra.mxu0 0.0
  %835 = vmatprep.subr.mxu0 0.0
  %836 = vmatpush1.msra.mxu0 0.0
  %837 = vmatprep.subr.mxu0 0.0
  %838 = vmatpush1.msra.mxu0 0.0
  %839 = vmatprep.mubr.f32.mxu0 0.0
  %840 = vmatmul.mubr.f32.gmra.mrb[0].mxu0 %v764
  %v841 = vpop.f32.mrb[0].mxu0
  %v842 = vadd.f32 0.0, %v841
  %v843 = vpop.f32.mrb[0].mxu0
  %844 = vmatprep.mubr.f32.mxu0 0.0
  %845 = vmatmul.mubr.f32.gmra.mrb[0].mxu0 %v767
  %v846 = vpop.f32.mrb[0].mxu0
  %v847 = vadd.f32 0.0, %v846
  %v848 = vpop.f32.mrb[0].mxu0
  %849 = vmatprep.mubr.f32.mxu0 0.0
  %850 = vmatmul.mubr.f32.gmra.mrb[0].mxu0 %v770
  %v851 = vpop.f32.mrb[0].mxu0
  %v852 = vadd.f32 0.0, %v851
  %v853 = vpop.f32.mrb[0].mxu0
  %854 = vmatprep.mubr.f32.mxu0 0.0
  %855 = vmatmul.mubr.f32.gmra.mrb[0].mxu0 %v773
  %v856 = vpop.f32.mrb[0].mxu0
  %v857 = vadd.f32 0.0, %v856
  %v858 = vpop.f32.mrb[0].mxu0
  %859 = vdwg.mxu0
  %864 = vrot.lane.b32.xlu0 %v842, 124
  %v865 = vpop.permute.xlu0 %864
  %866 = vrot.lane.b32.xlu0 %v847, 124
  %v867 = vpop.permute.xlu0 %866
  %868 = vrot.lane.b32.xlu0 %v852, 124
  %v869 = vpop.permute.xlu0 %868
  %870 = vrot.lane.b32.xlu0 %v857, 124
  %v871 = vpop.permute.xlu0 %870
  %876 = vrot.lane.b32.xlu0 %v842, 120
  %v877 = vpop.permute.xlu0 %876
  %878 = vrot.lane.b32.xlu0 %v847, 120
  %v879 = vpop.permute.xlu0 %878
  %880 = vrot.lane.b32.xlu0 %v852, 120
  %v881 = vpop.permute.xlu0 %880
  %882 = vrot.lane.b32.xlu0 %v857, 120
  %v883 = vpop.permute.xlu0 %882
  %888 = vrot.lane.b32.xlu0 %v842, 116
  %v889 = vpop.permute.xlu0 %888
  %890 = vrot.lane.b32.xlu0 %v847, 116
  %v891 = vpop.permute.xlu0 %890
  %892 = vrot.lane.b32.xlu0 %v852, 116
  %v893 = vpop.permute.xlu0 %892
  %894 = vrot.lane.b32.xlu0 %v857, 116
  %v895 = vpop.permute.xlu0 %894
  %900 = vrot.lane.b32.xlu0 %v842, 112
  %v901 = vpop.permute.xlu0 %900
  %902 = vrot.lane.b32.xlu0 %v847, 112
  %v903 = vpop.permute.xlu0 %902
  %904 = vrot.lane.b32.xlu0 %v852, 112
  %v905 = vpop.permute.xlu0 %904
  %906 = vrot.lane.b32.xlu0 %v857, 112
  %v907 = vpop.permute.xlu0 %906
  %912 = vrot.lane.b32.xlu0 %v842, 108
  %v913 = vpop.permute.xlu0 %912
  %914 = vrot.lane.b32.xlu0 %v847, 108
  %v915 = vpop.permute.xlu0 %914
  %916 = vrot.lane.b32.xlu0 %v852, 108
  %v917 = vpop.permute.xlu0 %916
  %918 = vrot.lane.b32.xlu0 %v857, 108
  %v919 = vpop.permute.xlu0 %918
  %924 = vrot.lane.b32.xlu0 %v842, 104
  %v925 = vpop.permute.xlu0 %924
  %926 = vrot.lane.b32.xlu0 %v847, 104
  %v927 = vpop.permute.xlu0 %926
  %928 = vrot.lane.b32.xlu0 %v852, 104
  %v929 = vpop.permute.xlu0 %928
  %930 = vrot.lane.b32.xlu0 %v857, 104
  %v931 = vpop.permute.xlu0 %930
  %936 = vrot.lane.b32.xlu0 %v842, 100
  %v937 = vpop.permute.xlu0 %936
  %938 = vrot.lane.b32.xlu0 %v847, 100
  %v939 = vpop.permute.xlu0 %938
  %940 = vrot.lane.b32.xlu0 %v852, 100
  %v941 = vpop.permute.xlu0 %940
  %942 = vrot.lane.b32.xlu0 %v857, 100
  %v943 = vpop.permute.xlu0 %942
  %948 = vrot.lane.b32.xlu0 %v842, 96
  %v949 = vpop.permute.xlu0 %948
  %950 = vrot.lane.b32.xlu0 %v847, 96
  %v951 = vpop.permute.xlu0 %950
  %952 = vrot.lane.b32.xlu0 %v852, 96
  %v953 = vpop.permute.xlu0 %952
  %954 = vrot.lane.b32.xlu0 %v857, 96
  %v955 = vpop.permute.xlu0 %954
  %960 = vrot.lane.b32.xlu0 %v842, 92
  %v961 = vpop.permute.xlu0 %960
  %962 = vrot.lane.b32.xlu0 %v847, 92
  %v963 = vpop.permute.xlu0 %962
  %964 = vrot.lane.b32.xlu0 %v852, 92
  %v965 = vpop.permute.xlu0 %964
  %966 = vrot.lane.b32.xlu0 %v857, 92
  %v967 = vpop.permute.xlu0 %966
  %972 = vrot.lane.b32.xlu0 %v842, 88
  %v973 = vpop.permute.xlu0 %972
  %974 = vrot.lane.b32.xlu0 %v847, 88
  %v975 = vpop.permute.xlu0 %974
  %976 = vrot.lane.b32.xlu0 %v852, 88
  %v977 = vpop.permute.xlu0 %976
  %978 = vrot.lane.b32.xlu0 %v857, 88
  %v979 = vpop.permute.xlu0 %978
  %984 = vrot.lane.b32.xlu0 %v842, 84
  %v985 = vpop.permute.xlu0 %984
  %986 = vrot.lane.b32.xlu0 %v847, 84
  %v987 = vpop.permute.xlu0 %986
  %988 = vrot.lane.b32.xlu0 %v852, 84
  %v989 = vpop.permute.xlu0 %988
  %990 = vrot.lane.b32.xlu0 %v857, 84
  %v991 = vpop.permute.xlu0 %990
  %996 = vrot.lane.b32.xlu0 %v842, 80
  %v997 = vpop.permute.xlu0 %996
  %998 = vrot.lane.b32.xlu0 %v847, 80
  %v999 = vpop.permute.xlu0 %998
  %1000 = vrot.lane.b32.xlu0 %v852, 80
  %v1001 = vpop.permute.xlu0 %1000
  %1002 = vrot.lane.b32.xlu0 %v857, 80
  %v1003 = vpop.permute.xlu0 %1002
  %1008 = vrot.lane.b32.xlu0 %v842, 76
  %v1009 = vpop.permute.xlu0 %1008
  %1010 = vrot.lane.b32.xlu0 %v847, 76
  %v1011 = vpop.permute.xlu0 %1010
  %1012 = vrot.lane.b32.xlu0 %v852, 76
  %v1013 = vpop.permute.xlu0 %1012
  %1014 = vrot.lane.b32.xlu0 %v857, 76
  %v1015 = vpop.permute.xlu0 %1014
  %1020 = vrot.lane.b32.xlu0 %v842, 72
  %v1021 = vpop.permute.xlu0 %1020
  %1022 = vrot.lane.b32.xlu0 %v847, 72
  %v1023 = vpop.permute.xlu0 %1022
  %1024 = vrot.lane.b32.xlu0 %v852, 72
  %v1025 = vpop.permute.xlu0 %1024
  %1026 = vrot.lane.b32.xlu0 %v857, 72
  %v1027 = vpop.permute.xlu0 %1026
  %1032 = vrot.lane.b32.xlu0 %v842, 68
  %v1033 = vpop.permute.xlu0 %1032
  %1034 = vrot.lane.b32.xlu0 %v847, 68
  %v1035 = vpop.permute.xlu0 %1034
  %1036 = vrot.lane.b32.xlu0 %v852, 68
  %v1037 = vpop.permute.xlu0 %1036
  %1038 = vrot.lane.b32.xlu0 %v857, 68
  %v1039 = vpop.permute.xlu0 %1038
  %v1044 = vcombine.low %v842, %v877
  %v1045 = vcombine.high %v842, %v877
  %v1047 = vunpack.c.l.s4 1983009808
  %v1048 = vunpack.c.0.s8 %v1047
  %v1049 = vlaneseq
  %v1050 = vshrl.u32 %v1049, 7
  %v1051 = vsub.s32 %v1048, %v1050
  %v1052 = vrot.slane %v1044, %v1051
  %v1054 = vunpack.c.l.s4 1983009808
  %v1055 = vunpack.c.0.s8 %v1054
  %v1056 = vlaneseq
  %v1057 = vshrl.u32 %v1056, 7
  %v1058 = vsub.s32 %v1055, %v1057
  %v1059 = vrot.slane %v1045, %v1058
  %v1060 = vcombine.low %v865, %v889
  %v1061 = vcombine.high %v865, %v889
  %v1063 = vunpack.c.l.s4 1983009808
  %v1064 = vunpack.c.0.s8 %v1063
  %v1065 = vlaneseq
  %v1066 = vshrl.u32 %v1065, 7
  %v1067 = vsub.s32 %v1064, %v1066
  %v1068 = vrot.slane %v1060, %v1067
  %v1070 = vunpack.c.l.s4 1983009808
  %v1071 = vunpack.c.0.s8 %v1070
  %v1072 = vlaneseq
  %v1073 = vshrl.u32 %v1072, 7
  %v1074 = vsub.s32 %v1071, %v1073
  %v1075 = vrot.slane %v1061, %v1074
  %v1076 = vcombine.low %v901, %v925
  %v1077 = vcombine.high %v901, %v925
  %v1079 = vunpack.c.l.s4 1983009808
  %v1080 = vunpack.c.0.s8 %v1079
  %v1081 = vlaneseq
  %v1082 = vshrl.u32 %v1081, 7
  %v1083 = vsub.s32 %v1080, %v1082
  %v1084 = vrot.slane %v1076, %v1083
  %v1086 = vunpack.c.l.s4 1983009808
  %v1087 = vunpack.c.0.s8 %v1086
  %v1088 = vlaneseq
  %v1089 = vshrl.u32 %v1088, 7
  %v1090 = vsub.s32 %v1087, %v1089
  %v1091 = vrot.slane %v1077, %v1090
  %v1092 = vcombine.low %v913, %v937
  %v1093 = vcombine.high %v913, %v937
  %v1095 = vunpack.c.l.s4 1983009808
  %v1096 = vunpack.c.0.s8 %v1095
  %v1097 = vlaneseq
  %v1098 = vshrl.u32 %v1097, 7
  %v1099 = vsub.s32 %v1096, %v1098
  %v1100 = vrot.slane %v1092, %v1099
  %v1102 = vunpack.c.l.s4 1983009808
  %v1103 = vunpack.c.0.s8 %v1102
  %v1104 = vlaneseq
  %v1105 = vshrl.u32 %v1104, 7
  %v1106 = vsub.s32 %v1103, %v1105
  %v1107 = vrot.slane %v1093, %v1106
  %v1108 = vcombine.low %v1052, %v1068
  %v1109 = vcombine.high %v1052, %v1068
  %v1111 = vunpack.c.l.s4 1934713408
  %v1112 = vunpack.c.0.s8 %v1111
  %v1113 = vlaneseq
  %v1114 = vshrl.u32 %v1113, 7
  %v1115 = vsub.s32 %v1112, %v1114
  %v1116 = vrot.slane %v1108, %v1115
  %v1118 = vunpack.c.l.s4 1934713408
  %v1119 = vunpack.c.0.s8 %v1118
  %v1120 = vlaneseq
  %v1121 = vshrl.u32 %v1120, 7
  %v1122 = vsub.s32 %v1119, %v1121
  %v1123 = vrot.slane %v1109, %v1122
  %v1124 = vcombine.low %v1059, %v1075
  %v1125 = vcombine.high %v1059, %v1075
  %v1127 = vunpack.c.l.s4 1934713408
  %v1128 = vunpack.c.0.s8 %v1127
  %v1129 = vlaneseq
  %v1130 = vshrl.u32 %v1129, 7
  %v1131 = vsub.s32 %v1128, %v1130
  %v1132 = vrot.slane %v1124, %v1131
  %v1134 = vunpack.c.l.s4 1934713408
  %v1135 = vunpack.c.0.s8 %v1134
  %v1136 = vlaneseq
  %v1137 = vshrl.u32 %v1136, 7
  %v1138 = vsub.s32 %v1135, %v1137
  %v1139 = vrot.slane %v1125, %v1138
  %v1140 = vcombine.low %v1084, %v1100
  %v1141 = vcombine.high %v1084, %v1100
  %v1143 = vunpack.c.l.s4 1934713408
  %v1144 = vunpack.c.0.s8 %v1143
  %v1145 = vlaneseq
  %v1146 = vshrl.u32 %v1145, 7
  %v1147 = vsub.s32 %v1144, %v1146
  %v1148 = vrot.slane %v1140, %v1147
  %v1150 = vunpack.c.l.s4 1934713408
  %v1151 = vunpack.c.0.s8 %v1150
  %v1152 = vlaneseq
  %v1153 = vshrl.u32 %v1152, 7
  %v1154 = vsub.s32 %v1151, %v1153
  %v1155 = vrot.slane %v1141, %v1154
  %v1156 = vcombine.low %v1091, %v1107
  %v1157 = vcombine.high %v1091, %v1107
  %v1159 = vunpack.c.l.s4 1934713408
  %v1160 = vunpack.c.0.s8 %v1159
  %v1161 = vlaneseq
  %v1162 = vshrl.u32 %v1161, 7
  %v1163 = vsub.s32 %v1160, %v1162
  %v1164 = vrot.slane %v1156, %v1163
  %v1166 = vunpack.c.l.s4 1934713408
  %v1167 = vunpack.c.0.s8 %v1166
  %v1168 = vlaneseq
  %v1169 = vshrl.u32 %v1168, 7
  %v1170 = vsub.s32 %v1167, %v1169
  %v1171 = vrot.slane %v1157, %v1170
  %v1172 = vcombine.low %v1116, %v1148
  %v1173 = vcombine.high %v1116, %v1148
  %v1174 = vcombine.low %v1123, %v1155
  %v1175 = vcombine.high %v1123, %v1155
  %v1176 = vcombine.low %v1132, %v1164
  %v1177 = vcombine.high %v1132, %v1164
  %v1178 = vcombine.low %v1139, %v1171
  %v1179 = vcombine.high %v1139, %v1171
  %v1180 = vcombine.low %v949, %v973
  %v1181 = vcombine.high %v949, %v973
  %v1183 = vunpack.c.l.s4 1983009808
  %v1184 = vunpack.c.0.s8 %v1183
  %v1185 = vlaneseq
  %v1186 = vshrl.u32 %v1185, 7
  %v1187 = vsub.s32 %v1184, %v1186
  %v1188 = vrot.slane %v1180, %v1187
  %v1190 = vunpack.c.l.s4 1983009808
  %v1191 = vunpack.c.0.s8 %v1190
  %v1192 = vlaneseq
  %v1193 = vshrl.u32 %v1192, 7
  %v1194 = vsub.s32 %v1191, %v1193
  %v1195 = vrot.slane %v1181, %v1194
  %v1196 = vcombine.low %v961, %v985
  %v1197 = vcombine.high %v961, %v985
  %v1199 = vunpack.c.l.s4 1983009808
  %v1200 = vunpack.c.0.s8 %v1199
  %v1201 = vlaneseq
  %v1202 = vshrl.u32 %v1201, 7
  %v1203 = vsub.s32 %v1200, %v1202
  %v1204 = vrot.slane %v1196, %v1203
  %v1206 = vunpack.c.l.s4 1983009808
  %v1207 = vunpack.c.0.s8 %v1206
  %v1208 = vlaneseq
  %v1209 = vshrl.u32 %v1208, 7
  %v1210 = vsub.s32 %v1207, %v1209
  %v1211 = vrot.slane %v1197, %v1210
  %v1212 = vcombine.low %v997, %v1021
  %v1213 = vcombine.high %v997, %v1021
  %v1215 = vunpack.c.l.s4 1983009808
  %v1216 = vunpack.c.0.s8 %v1215
  %v1217 = vlaneseq
  %v1218 = vshrl.u32 %v1217, 7
  %v1219 = vsub.s32 %v1216, %v1218
  %v1220 = vrot.slane %v1212, %v1219
  %v1222 = vunpack.c.l.s4 1983009808
  %v1223 = vunpack.c.0.s8 %v1222
  %v1224 = vlaneseq
  %v1225 = vshrl.u32 %v1224, 7
  %v1226 = vsub.s32 %v1223, %v1225
  %v1227 = vrot.slane %v1213, %v1226
  %v1228 = vcombine.low %v1009, %v1033
  %v1229 = vcombine.high %v1009, %v1033
  %v1231 = vunpack.c.l.s4 1983009808
  %v1232 = vunpack.c.0.s8 %v1231
  %v1233 = vlaneseq
  %v1234 = vshrl.u32 %v1233, 7
  %v1235 = vsub.s32 %v1232, %v1234
  %v1236 = vrot.slane %v1228, %v1235
  %v1238 = vunpack.c.l.s4 1983009808
  %v1239 = vunpack.c.0.s8 %v1238
  %v1240 = vlaneseq
  %v1241 = vshrl.u32 %v1240, 7
  %v1242 = vsub.s32 %v1239, %v1241
  %v1243 = vrot.slane %v1229, %v1242
  %v1244 = vcombine.low %v1188, %v1204
  %v1245 = vcombine.high %v1188, %v1204
  %v1247 = vunpack.c.l.s4 1934713408
  %v1248 = vunpack.c.0.s8 %v1247
  %v1249 = vlaneseq
  %v1250 = vshrl.u32 %v1249, 7
  %v1251 = vsub.s32 %v1248, %v1250
  %v1252 = vrot.slane %v1244, %v1251
  %v1254 = vunpack.c.l.s4 1934713408
  %v1255 = vunpack.c.0.s8 %v1254
  %v1256 = vlaneseq
  %v1257 = vshrl.u32 %v1256, 7
  %v1258 = vsub.s32 %v1255, %v1257
  %v1259 = vrot.slane %v1245, %v1258
  %v1260 = vcombine.low %v1195, %v1211
  %v1261 = vcombine.high %v1195, %v1211
  %v1263 = vunpack.c.l.s4 1934713408
  %v1264 = vunpack.c.0.s8 %v1263
  %v1265 = vlaneseq
  %v1266 = vshrl.u32 %v1265, 7
  %v1267 = vsub.s32 %v1264, %v1266
  %v1268 = vrot.slane %v1260, %v1267
  %v1270 = vunpack.c.l.s4 1934713408
  %v1271 = vunpack.c.0.s8 %v1270
  %v1272 = vlaneseq
  %v1273 = vshrl.u32 %v1272, 7
  %v1274 = vsub.s32 %v1271, %v1273
  %v1275 = vrot.slane %v1261, %v1274
  %v1276 = vcombine.low %v1220, %v1236
  %v1277 = vcombine.high %v1220, %v1236
  %v1279 = vunpack.c.l.s4 1934713408
  %v1280 = vunpack.c.0.s8 %v1279
  %v1281 = vlaneseq
  %v1282 = vshrl.u32 %v1281, 7
  %v1283 = vsub.s32 %v1280, %v1282
  %v1284 = vrot.slane %v1276, %v1283
  %v1286 = vunpack.c.l.s4 1934713408
  %v1287 = vunpack.c.0.s8 %v1286
  %v1288 = vlaneseq
  %v1289 = vshrl.u32 %v1288, 7
  %v1290 = vsub.s32 %v1287, %v1289
  %v1291 = vrot.slane %v1277, %v1290
  %v1292 = vcombine.low %v1227, %v1243
  %v1293 = vcombine.high %v1227, %v1243
  %v1295 = vunpack.c.l.s4 1934713408
  %v1296 = vunpack.c.0.s8 %v1295
  %v1297 = vlaneseq
  %v1298 = vshrl.u32 %v1297, 7
  %v1299 = vsub.s32 %v1296, %v1298
  %v1300 = vrot.slane %v1292, %v1299
  %v1302 = vunpack.c.l.s4 1934713408
  %v1303 = vunpack.c.0.s8 %v1302
  %v1304 = vlaneseq
  %v1305 = vshrl.u32 %v1304, 7
  %v1306 = vsub.s32 %v1303, %v1305
  %v1307 = vrot.slane %v1293, %v1306
  %v1308 = vcombine.low %v1252, %v1284
  %v1309 = vcombine.high %v1252, %v1284
  %v1310 = vcombine.low %v1259, %v1291
  %v1311 = vcombine.high %v1259, %v1291
  %v1312 = vcombine.low %v1268, %v1300
  %v1313 = vcombine.high %v1268, %v1300
  %v1314 = vcombine.low %v1275, %v1307
  %v1315 = vcombine.high %v1275, %v1307
  %v1316 = vcombine.low %v847, %v879
  %v1317 = vcombine.high %v847, %v879
  %v1319 = vunpack.c.l.s4 1983009808
  %v1320 = vunpack.c.0.s8 %v1319
  %v1321 = vlaneseq
  %v1322 = vshrl.u32 %v1321, 7
  %v1323 = vsub.s32 %v1320, %v1322
  %v1324 = vrot.slane %v1316, %v1323
  %v1326 = vunpack.c.l.s4 1983009808
  %v1327 = vunpack.c.0.s8 %v1326
  %v1328 = vlaneseq
  %v1329 = vshrl.u32 %v1328, 7
  %v1330 = vsub.s32 %v1327, %v1329
  %v1331 = vrot.slane %v1317, %v1330
  %v1332 = vcombine.low %v867, %v891
  %v1333 = vcombine.high %v867, %v891
  %v1335 = vunpack.c.l.s4 1983009808
  %v1336 = vunpack.c.0.s8 %v1335
  %v1337 = vlaneseq
  %v1338 = vshrl.u32 %v1337, 7
  %v1339 = vsub.s32 %v1336, %v1338
  %v1340 = vrot.slane %v1332, %v1339
  %v1342 = vunpack.c.l.s4 1983009808
  %v1343 = vunpack.c.0.s8 %v1342
  %v1344 = vlaneseq
  %v1345 = vshrl.u32 %v1344, 7
  %v1346 = vsub.s32 %v1343, %v1345
  %v1347 = vrot.slane %v1333, %v1346
  %v1348 = vcombine.low %v903, %v927
  %v1349 = vcombine.high %v903, %v927
  %v1351 = vunpack.c.l.s4 1983009808
  %v1352 = vunpack.c.0.s8 %v1351
  %v1353 = vlaneseq
  %v1354 = vshrl.u32 %v1353, 7
  %v1355 = vsub.s32 %v1352, %v1354
  %v1356 = vrot.slane %v1348, %v1355
  %v1358 = vunpack.c.l.s4 1983009808
  %v1359 = vunpack.c.0.s8 %v1358
  %v1360 = vlaneseq
  %v1361 = vshrl.u32 %v1360, 7
  %v1362 = vsub.s32 %v1359, %v1361
  %v1363 = vrot.slane %v1349, %v1362
  %v1364 = vcombine.low %v915, %v939
  %v1365 = vcombine.high %v915, %v939
  %v1367 = vunpack.c.l.s4 1983009808
  %v1368 = vunpack.c.0.s8 %v1367
  %v1369 = vlaneseq
  %v1370 = vshrl.u32 %v1369, 7
  %v1371 = vsub.s32 %v1368, %v1370
  %v1372 = vrot.slane %v1364, %v1371
  %v1374 = vunpack.c.l.s4 1983009808
  %v1375 = vunpack.c.0.s8 %v1374
  %v1376 = vlaneseq
  %v1377 = vshrl.u32 %v1376, 7
  %v1378 = vsub.s32 %v1375, %v1377
  %v1379 = vrot.slane %v1365, %v1378
  %v1380 = vcombine.low %v1324, %v1340
  %v1381 = vcombine.high %v1324, %v1340
  %v1383 = vunpack.c.l.s4 1934713408
  %v1384 = vunpack.c.0.s8 %v1383
  %v1385 = vlaneseq
  %v1386 = vshrl.u32 %v1385, 7
  %v1387 = vsub.s32 %v1384, %v1386
  %v1388 = vrot.slane %v1380, %v1387
  %v1390 = vunpack.c.l.s4 1934713408
  %v1391 = vunpack.c.0.s8 %v1390
  %v1392 = vlaneseq
  %v1393 = vshrl.u32 %v1392, 7
  %v1394 = vsub.s32 %v1391, %v1393
  %v1395 = vrot.slane %v1381, %v1394
  %v1396 = vcombine.low %v1331, %v1347
  %v1397 = vcombine.high %v1331, %v1347
  %v1399 = vunpack.c.l.s4 1934713408
  %v1400 = vunpack.c.0.s8 %v1399
  %v1401 = vlaneseq
  %v1402 = vshrl.u32 %v1401, 7
  %v1403 = vsub.s32 %v1400, %v1402
  %v1404 = vrot.slane %v1396, %v1403
  %v1406 = vunpack.c.l.s4 1934713408
  %v1407 = vunpack.c.0.s8 %v1406
  %v1408 = vlaneseq
  %v1409 = vshrl.u32 %v1408, 7
  %v1410 = vsub.s32 %v1407, %v1409
  %v1411 = vrot.slane %v1397, %v1410
  %v1412 = vcombine.low %v1356, %v1372
  %v1413 = vcombine.high %v1356, %v1372
  %v1415 = vunpack.c.l.s4 1934713408
  %v1416 = vunpack.c.0.s8 %v1415
  %v1417 = vlaneseq
  %v1418 = vshrl.u32 %v1417, 7
  %v1419 = vsub.s32 %v1416, %v1418
  %v1420 = vrot.slane %v1412, %v1419
  %v1422 = vunpack.c.l.s4 1934713408
  %v1423 = vunpack.c.0.s8 %v1422
  %v1424 = vlaneseq
  %v1425 = vshrl.u32 %v1424, 7
  %v1426 = vsub.s32 %v1423, %v1425
  %v1427 = vrot.slane %v1413, %v1426
  %v1428 = vcombine.low %v1363, %v1379
  %v1429 = vcombine.high %v1363, %v1379
  %v1431 = vunpack.c.l.s4 1934713408
  %v1432 = vunpack.c.0.s8 %v1431
  %v1433 = vlaneseq
  %v1434 = vshrl.u32 %v1433, 7
  %v1435 = vsub.s32 %v1432, %v1434
  %v1436 = vrot.slane %v1428, %v1435
  %v1438 = vunpack.c.l.s4 1934713408
  %v1439 = vunpack.c.0.s8 %v1438
  %v1440 = vlaneseq
  %v1441 = vshrl.u32 %v1440, 7
  %v1442 = vsub.s32 %v1439, %v1441
  %v1443 = vrot.slane %v1429, %v1442
  %v1444 = vcombine.low %v1388, %v1420
  %v1445 = vcombine.high %v1388, %v1420
  %v1446 = vcombine.low %v1395, %v1427
  %v1447 = vcombine.high %v1395, %v1427
  %v1448 = vcombine.low %v1404, %v1436
  %v1449 = vcombine.high %v1404, %v1436
  %v1450 = vcombine.low %v1411, %v1443
  %v1451 = vcombine.high %v1411, %v1443
  %v1452 = vcombine.low %v951, %v975
  %v1453 = vcombine.high %v951, %v975
  %v1455 = vunpack.c.l.s4 1983009808
  %v1456 = vunpack.c.0.s8 %v1455
  %v1457 = vlaneseq
  %v1458 = vshrl.u32 %v1457, 7
  %v1459 = vsub.s32 %v1456, %v1458
  %v1460 = vrot.slane %v1452, %v1459
  %v1462 = vunpack.c.l.s4 1983009808
  %v1463 = vunpack.c.0.s8 %v1462
  %v1464 = vlaneseq
  %v1465 = vshrl.u32 %v1464, 7
  %v1466 = vsub.s32 %v1463, %v1465
  %v1467 = vrot.slane %v1453, %v1466
  %v1468 = vcombine.low %v963, %v987
  %v1469 = vcombine.high %v963, %v987
  %v1471 = vunpack.c.l.s4 1983009808
  %v1472 = vunpack.c.0.s8 %v1471
  %v1473 = vlaneseq
  %v1474 = vshrl.u32 %v1473, 7
  %v1475 = vsub.s32 %v1472, %v1474
  %v1476 = vrot.slane %v1468, %v1475
  %v1478 = vunpack.c.l.s4 1983009808
  %v1479 = vunpack.c.0.s8 %v1478
  %v1480 = vlaneseq
  %v1481 = vshrl.u32 %v1480, 7
  %v1482 = vsub.s32 %v1479, %v1481
  %v1483 = vrot.slane %v1469, %v1482
  %v1484 = vcombine.low %v999, %v1023
  %v1485 = vcombine.high %v999, %v1023
  %v1487 = vunpack.c.l.s4 1983009808
  %v1488 = vunpack.c.0.s8 %v1487
  %v1489 = vlaneseq
  %v1490 = vshrl.u32 %v1489, 7
  %v1491 = vsub.s32 %v1488, %v1490
  %v1492 = vrot.slane %v1484, %v1491
  %v1494 = vunpack.c.l.s4 1983009808
  %v1495 = vunpack.c.0.s8 %v1494
  %v1496 = vlaneseq
  %v1497 = vshrl.u32 %v1496, 7
  %v1498 = vsub.s32 %v1495, %v1497
  %v1499 = vrot.slane %v1485, %v1498
  %v1500 = vcombine.low %v1011, %v1035
  %v1501 = vcombine.high %v1011, %v1035
  %v1503 = vunpack.c.l.s4 1983009808
  %v1504 = vunpack.c.0.s8 %v1503
  %v1505 = vlaneseq
  %v1506 = vshrl.u32 %v1505, 7
  %v1507 = vsub.s32 %v1504, %v1506
  %v1508 = vrot.slane %v1500, %v1507
  %v1510 = vunpack.c.l.s4 1983009808
  %v1511 = vunpack.c.0.s8 %v1510
  %v1512 = vlaneseq
  %v1513 = vshrl.u32 %v1512, 7
  %v1514 = vsub.s32 %v1511, %v1513
  %v1515 = vrot.slane %v1501, %v1514
  %v1516 = vcombine.low %v1460, %v1476
  %v1517 = vcombine.high %v1460, %v1476
  %v1519 = vunpack.c.l.s4 1934713408
  %v1520 = vunpack.c.0.s8 %v1519
  %v1521 = vlaneseq
  %v1522 = vshrl.u32 %v1521, 7
  %v1523 = vsub.s32 %v1520, %v1522
  %v1524 = vrot.slane %v1516, %v1523
  %v1526 = vunpack.c.l.s4 1934713408
  %v1527 = vunpack.c.0.s8 %v1526
  %v1528 = vlaneseq
  %v1529 = vshrl.u32 %v1528, 7
  %v1530 = vsub.s32 %v1527, %v1529
  %v1531 = vrot.slane %v1517, %v1530
  %v1532 = vcombine.low %v1467, %v1483
  %v1533 = vcombine.high %v1467, %v1483
  %v1535 = vunpack.c.l.s4 1934713408
  %v1536 = vunpack.c.0.s8 %v1535
  %v1537 = vlaneseq
  %v1538 = vshrl.u32 %v1537, 7
  %v1539 = vsub.s32 %v1536, %v1538
  %v1540 = vrot.slane %v1532, %v1539
  %v1542 = vunpack.c.l.s4 1934713408
  %v1543 = vunpack.c.0.s8 %v1542
  %v1544 = vlaneseq
  %v1545 = vshrl.u32 %v1544, 7
  %v1546 = vsub.s32 %v1543, %v1545
  %v1547 = vrot.slane %v1533, %v1546
  %v1548 = vcombine.low %v1492, %v1508
  %v1549 = vcombine.high %v1492, %v1508
  %v1551 = vunpack.c.l.s4 1934713408
  %v1552 = vunpack.c.0.s8 %v1551
  %v1553 = vlaneseq
  %v1554 = vshrl.u32 %v1553, 7
  %v1555 = vsub.s32 %v1552, %v1554
  %v1556 = vrot.slane %v1548, %v1555
  %v1558 = vunpack.c.l.s4 1934713408
  %v1559 = vunpack.c.0.s8 %v1558
  %v1560 = vlaneseq
  %v1561 = vshrl.u32 %v1560, 7
  %v1562 = vsub.s32 %v1559, %v1561
  %v1563 = vrot.slane %v1549, %v1562
  %v1564 = vcombine.low %v1499, %v1515
  %v1565 = vcombine.high %v1499, %v1515
  %v1567 = vunpack.c.l.s4 1934713408
  %v1568 = vunpack.c.0.s8 %v1567
  %v1569 = vlaneseq
  %v1570 = vshrl.u32 %v1569, 7
  %v1571 = vsub.s32 %v1568, %v1570
  %v1572 = vrot.slane %v1564, %v1571
  %v1574 = vunpack.c.l.s4 1934713408
  %v1575 = vunpack.c.0.s8 %v1574
  %v1576 = vlaneseq
  %v1577 = vshrl.u32 %v1576, 7
  %v1578 = vsub.s32 %v1575, %v1577
  %v1579 = vrot.slane %v1565, %v1578
  %v1580 = vcombine.low %v1524, %v1556
  %v1581 = vcombine.high %v1524, %v1556
  %v1582 = vcombine.low %v1531, %v1563
  %v1583 = vcombine.high %v1531, %v1563
  %v1584 = vcombine.low %v1540, %v1572
  %v1585 = vcombine.high %v1540, %v1572
  %v1586 = vcombine.low %v1547, %v1579
  %v1587 = vcombine.high %v1547, %v1579
  %v1588 = vcombine.low %v852, %v881
  %v1589 = vcombine.high %v852, %v881
  %v1591 = vunpack.c.l.s4 1983009808
  %v1592 = vunpack.c.0.s8 %v1591
  %v1593 = vlaneseq
  %v1594 = vshrl.u32 %v1593, 7
  %v1595 = vsub.s32 %v1592, %v1594
  %v1596 = vrot.slane %v1588, %v1595
  %v1598 = vunpack.c.l.s4 1983009808
  %v1599 = vunpack.c.0.s8 %v1598
  %v1600 = vlaneseq
  %v1601 = vshrl.u32 %v1600, 7
  %v1602 = vsub.s32 %v1599, %v1601
  %v1603 = vrot.slane %v1589, %v1602
  %v1604 = vcombine.low %v869, %v893
  %v1605 = vcombine.high %v869, %v893
  %v1607 = vunpack.c.l.s4 1983009808
  %v1608 = vunpack.c.0.s8 %v1607
  %v1609 = vlaneseq
  %v1610 = vshrl.u32 %v1609, 7
  %v1611 = vsub.s32 %v1608, %v1610
  %v1612 = vrot.slane %v1604, %v1611
  %v1614 = vunpack.c.l.s4 1983009808
  %v1615 = vunpack.c.0.s8 %v1614
  %v1616 = vlaneseq
  %v1617 = vshrl.u32 %v1616, 7
  %v1618 = vsub.s32 %v1615, %v1617
  %v1619 = vrot.slane %v1605, %v1618
  %v1620 = vcombine.low %v905, %v929
  %v1621 = vcombine.high %v905, %v929
  %v1623 = vunpack.c.l.s4 1983009808
  %v1624 = vunpack.c.0.s8 %v1623
  %v1625 = vlaneseq
  %v1626 = vshrl.u32 %v1625, 7
  %v1627 = vsub.s32 %v1624, %v1626
  %v1628 = vrot.slane %v1620, %v1627
  %v1630 = vunpack.c.l.s4 1983009808
  %v1631 = vunpack.c.0.s8 %v1630
  %v1632 = vlaneseq
  %v1633 = vshrl.u32 %v1632, 7
  %v1634 = vsub.s32 %v1631, %v1633
  %v1635 = vrot.slane %v1621, %v1634
  %v1636 = vcombine.low %v917, %v941
  %v1637 = vcombine.high %v917, %v941
  %v1639 = vunpack.c.l.s4 1983009808
  %v1640 = vunpack.c.0.s8 %v1639
  %v1641 = vlaneseq
  %v1642 = vshrl.u32 %v1641, 7
  %v1643 = vsub.s32 %v1640, %v1642
  %v1644 = vrot.slane %v1636, %v1643
  %v1646 = vunpack.c.l.s4 1983009808
  %v1647 = vunpack.c.0.s8 %v1646
  %v1648 = vlaneseq
  %v1649 = vshrl.u32 %v1648, 7
  %v1650 = vsub.s32 %v1647, %v1649
  %v1651 = vrot.slane %v1637, %v1650
  %v1652 = vcombine.low %v1596, %v1612
  %v1653 = vcombine.high %v1596, %v1612
  %v1655 = vunpack.c.l.s4 1934713408
  %v1656 = vunpack.c.0.s8 %v1655
  %v1657 = vlaneseq
  %v1658 = vshrl.u32 %v1657, 7
  %v1659 = vsub.s32 %v1656, %v1658
  %v1660 = vrot.slane %v1652, %v1659
  %v1662 = vunpack.c.l.s4 1934713408
  %v1663 = vunpack.c.0.s8 %v1662
  %v1664 = vlaneseq
  %v1665 = vshrl.u32 %v1664, 7
  %v1666 = vsub.s32 %v1663, %v1665
  %v1667 = vrot.slane %v1653, %v1666
  %v1668 = vcombine.low %v1603, %v1619
  %v1669 = vcombine.high %v1603, %v1619
  %v1671 = vunpack.c.l.s4 1934713408
  %v1672 = vunpack.c.0.s8 %v1671
  %v1673 = vlaneseq
  %v1674 = vshrl.u32 %v1673, 7
  %v1675 = vsub.s32 %v1672, %v1674
  %v1676 = vrot.slane %v1668, %v1675
  %v1678 = vunpack.c.l.s4 1934713408
  %v1679 = vunpack.c.0.s8 %v1678
  %v1680 = vlaneseq
  %v1681 = vshrl.u32 %v1680, 7
  %v1682 = vsub.s32 %v1679, %v1681
  %v1683 = vrot.slane %v1669, %v1682
  %v1684 = vcombine.low %v1628, %v1644
  %v1685 = vcombine.high %v1628, %v1644
  %v1687 = vunpack.c.l.s4 1934713408
  %v1688 = vunpack.c.0.s8 %v1687
  %v1689 = vlaneseq
  %v1690 = vshrl.u32 %v1689, 7
  %v1691 = vsub.s32 %v1688, %v1690
  %v1692 = vrot.slane %v1684, %v1691
  %v1694 = vunpack.c.l.s4 1934713408
  %v1695 = vunpack.c.0.s8 %v1694
  %v1696 = vlaneseq
  %v1697 = vshrl.u32 %v1696, 7
  %v1698 = vsub.s32 %v1695, %v1697
  %v1699 = vrot.slane %v1685, %v1698
  %v1700 = vcombine.low %v1635, %v1651
  %v1701 = vcombine.high %v1635, %v1651
  %v1703 = vunpack.c.l.s4 1934713408
  %v1704 = vunpack.c.0.s8 %v1703
  %v1705 = vlaneseq
  %v1706 = vshrl.u32 %v1705, 7
  %v1707 = vsub.s32 %v1704, %v1706
  %v1708 = vrot.slane %v1700, %v1707
  %v1710 = vunpack.c.l.s4 1934713408
  %v1711 = vunpack.c.0.s8 %v1710
  %v1712 = vlaneseq
  %v1713 = vshrl.u32 %v1712, 7
  %v1714 = vsub.s32 %v1711, %v1713
  %v1715 = vrot.slane %v1701, %v1714
  %v1716 = vcombine.low %v1660, %v1692
  %v1717 = vcombine.high %v1660, %v1692
  %v1718 = vcombine.low %v1667, %v1699
  %v1719 = vcombine.high %v1667, %v1699
  %v1720 = vcombine.low %v1676, %v1708
  %v1721 = vcombine.high %v1676, %v1708
  %v1722 = vcombine.low %v1683, %v1715
  %v1723 = vcombine.high %v1683, %v1715
  %v1724 = vcombine.low %v953, %v977
  %v1725 = vcombine.high %v953, %v977
  %v1727 = vunpack.c.l.s4 1983009808
  %v1728 = vunpack.c.0.s8 %v1727
  %v1729 = vlaneseq
  %v1730 = vshrl.u32 %v1729, 7
  %v1731 = vsub.s32 %v1728, %v1730
  %v1732 = vrot.slane %v1724, %v1731
  %v1734 = vunpack.c.l.s4 1983009808
  %v1735 = vunpack.c.0.s8 %v1734
  %v1736 = vlaneseq
  %v1737 = vshrl.u32 %v1736, 7
  %v1738 = vsub.s32 %v1735, %v1737
  %v1739 = vrot.slane %v1725, %v1738
  %v1740 = vcombine.low %v965, %v989
  %v1741 = vcombine.high %v965, %v989
  %v1743 = vunpack.c.l.s4 1983009808
  %v1744 = vunpack.c.0.s8 %v1743
  %v1745 = vlaneseq
  %v1746 = vshrl.u32 %v1745, 7
  %v1747 = vsub.s32 %v1744, %v1746
  %v1748 = vrot.slane %v1740, %v1747
  %v1750 = vunpack.c.l.s4 1983009808
  %v1751 = vunpack.c.0.s8 %v1750
  %v1752 = vlaneseq
  %v1753 = vshrl.u32 %v1752, 7
  %v1754 = vsub.s32 %v1751, %v1753
  %v1755 = vrot.slane %v1741, %v1754
  %v1756 = vcombine.low %v1001, %v1025
  %v1757 = vcombine.high %v1001, %v1025
  %v1759 = vunpack.c.l.s4 1983009808
  %v1760 = vunpack.c.0.s8 %v1759
  %v1761 = vlaneseq
  %v1762 = vshrl.u32 %v1761, 7
  %v1763 = vsub.s32 %v1760, %v1762
  %v1764 = vrot.slane %v1756, %v1763
  %v1766 = vunpack.c.l.s4 1983009808
  %v1767 = vunpack.c.0.s8 %v1766
  %v1768 = vlaneseq
  %v1769 = vshrl.u32 %v1768, 7
  %v1770 = vsub.s32 %v1767, %v1769
  %v1771 = vrot.slane %v1757, %v1770
  %v1772 = vcombine.low %v1013, %v1037
  %v1773 = vcombine.high %v1013, %v1037
  %v1775 = vunpack.c.l.s4 1983009808
  %v1776 = vunpack.c.0.s8 %v1775
  %v1777 = vlaneseq
  %v1778 = vshrl.u32 %v1777, 7
  %v1779 = vsub.s32 %v1776, %v1778
  %v1780 = vrot.slane %v1772, %v1779
  %v1782 = vunpack.c.l.s4 1983009808
  %v1783 = vunpack.c.0.s8 %v1782
  %v1784 = vlaneseq
  %v1785 = vshrl.u32 %v1784, 7
  %v1786 = vsub.s32 %v1783, %v1785
  %v1787 = vrot.slane %v1773, %v1786
  %v1788 = vcombine.low %v1732, %v1748
  %v1789 = vcombine.high %v1732, %v1748
  %v1791 = vunpack.c.l.s4 1934713408
  %v1792 = vunpack.c.0.s8 %v1791
  %v1793 = vlaneseq
  %v1794 = vshrl.u32 %v1793, 7
  %v1795 = vsub.s32 %v1792, %v1794
  %v1796 = vrot.slane %v1788, %v1795
  %v1798 = vunpack.c.l.s4 1934713408
  %v1799 = vunpack.c.0.s8 %v1798
  %v1800 = vlaneseq
  %v1801 = vshrl.u32 %v1800, 7
  %v1802 = vsub.s32 %v1799, %v1801
  %v1803 = vrot.slane %v1789, %v1802
  %v1804 = vcombine.low %v1739, %v1755
  %v1805 = vcombine.high %v1739, %v1755
  %v1807 = vunpack.c.l.s4 1934713408
  %v1808 = vunpack.c.0.s8 %v1807
  %v1809 = vlaneseq
  %v1810 = vshrl.u32 %v1809, 7
  %v1811 = vsub.s32 %v1808, %v1810
  %v1812 = vrot.slane %v1804, %v1811
  %v1814 = vunpack.c.l.s4 1934713408
  %v1815 = vunpack.c.0.s8 %v1814
  %v1816 = vlaneseq
  %v1817 = vshrl.u32 %v1816, 7
  %v1818 = vsub.s32 %v1815, %v1817
  %v1819 = vrot.slane %v1805, %v1818
  %v1820 = vcombine.low %v1764, %v1780
  %v1821 = vcombine.high %v1764, %v1780
  %v1823 = vunpack.c.l.s4 1934713408
  %v1824 = vunpack.c.0.s8 %v1823
  %v1825 = vlaneseq
  %v1826 = vshrl.u32 %v1825, 7
  %v1827 = vsub.s32 %v1824, %v1826
  %v1828 = vrot.slane %v1820, %v1827
  %v1830 = vunpack.c.l.s4 1934713408
  %v1831 = vunpack.c.0.s8 %v1830
  %v1832 = vlaneseq
  %v1833 = vshrl.u32 %v1832, 7
  %v1834 = vsub.s32 %v1831, %v1833
  %v1835 = vrot.slane %v1821, %v1834
  %v1836 = vcombine.low %v1771, %v1787
  %v1837 = vcombine.high %v1771, %v1787
  %v1839 = vunpack.c.l.s4 1934713408
  %v1840 = vunpack.c.0.s8 %v1839
  %v1841 = vlaneseq
  %v1842 = vshrl.u32 %v1841, 7
  %v1843 = vsub.s32 %v1840, %v1842
  %v1844 = vrot.slane %v1836, %v1843
  %v1846 = vunpack.c.l.s4 1934713408
  %v1847 = vunpack.c.0.s8 %v1846
  %v1848 = vlaneseq
  %v1849 = vshrl.u32 %v1848, 7
  %v1850 = vsub.s32 %v1847, %v1849
  %v1851 = vrot.slane %v1837, %v1850
  %v1852 = vcombine.low %v1796, %v1828
  %v1853 = vcombine.high %v1796, %v1828
  %v1854 = vcombine.low %v1803, %v1835
  %v1855 = vcombine.high %v1803, %v1835
  %v1856 = vcombine.low %v1812, %v1844
  %v1857 = vcombine.high %v1812, %v1844
  %v1858 = vcombine.low %v1819, %v1851
  %v1859 = vcombine.high %v1819, %v1851
  %v1860 = vcombine.low %v857, %v883
  %v1861 = vcombine.high %v857, %v883
  %v1863 = vunpack.c.l.s4 1983009808
  %v1864 = vunpack.c.0.s8 %v1863
  %v1865 = vlaneseq
  %v1866 = vshrl.u32 %v1865, 7
  %v1867 = vsub.s32 %v1864, %v1866
  %v1868 = vrot.slane %v1860, %v1867
  %v1870 = vunpack.c.l.s4 1983009808
  %v1871 = vunpack.c.0.s8 %v1870
  %v1872 = vlaneseq
  %v1873 = vshrl.u32 %v1872, 7
  %v1874 = vsub.s32 %v1871, %v1873
  %v1875 = vrot.slane %v1861, %v1874
  %v1876 = vcombine.low %v871, %v895
  %v1877 = vcombine.high %v871, %v895
  %v1879 = vunpack.c.l.s4 1983009808
  %v1880 = vunpack.c.0.s8 %v1879
  %v1881 = vlaneseq
  %v1882 = vshrl.u32 %v1881, 7
  %v1883 = vsub.s32 %v1880, %v1882
  %v1884 = vrot.slane %v1876, %v1883
  %v1886 = vunpack.c.l.s4 1983009808
  %v1887 = vunpack.c.0.s8 %v1886
  %v1888 = vlaneseq
  %v1889 = vshrl.u32 %v1888, 7
  %v1890 = vsub.s32 %v1887, %v1889
  %v1891 = vrot.slane %v1877, %v1890
  %v1892 = vcombine.low %v907, %v931
  %v1893 = vcombine.high %v907, %v931
  %v1895 = vunpack.c.l.s4 1983009808
  %v1896 = vunpack.c.0.s8 %v1895
  %v1897 = vlaneseq
  %v1898 = vshrl.u32 %v1897, 7
  %v1899 = vsub.s32 %v1896, %v1898
  %v1900 = vrot.slane %v1892, %v1899
  %v1902 = vunpack.c.l.s4 1983009808
  %v1903 = vunpack.c.0.s8 %v1902
  %v1904 = vlaneseq
  %v1905 = vshrl.u32 %v1904, 7
  %v1906 = vsub.s32 %v1903, %v1905
  %v1907 = vrot.slane %v1893, %v1906
  %v1908 = vcombine.low %v919, %v943
  %v1909 = vcombine.high %v919, %v943
  %v1911 = vunpack.c.l.s4 1983009808
  %v1912 = vunpack.c.0.s8 %v1911
  %v1913 = vlaneseq
  %v1914 = vshrl.u32 %v1913, 7
  %v1915 = vsub.s32 %v1912, %v1914
  %v1916 = vrot.slane %v1908, %v1915
  %v1918 = vunpack.c.l.s4 1983009808
  %v1919 = vunpack.c.0.s8 %v1918
  %v1920 = vlaneseq
  %v1921 = vshrl.u32 %v1920, 7
  %v1922 = vsub.s32 %v1919, %v1921
  %v1923 = vrot.slane %v1909, %v1922
  %v1924 = vcombine.low %v1868, %v1884
  %v1925 = vcombine.high %v1868, %v1884
  %v1927 = vunpack.c.l.s4 1934713408
  %v1928 = vunpack.c.0.s8 %v1927
  %v1929 = vlaneseq
  %v1930 = vshrl.u32 %v1929, 7
  %v1931 = vsub.s32 %v1928, %v1930
  %v1932 = vrot.slane %v1924, %v1931
  %v1934 = vunpack.c.l.s4 1934713408
  %v1935 = vunpack.c.0.s8 %v1934
  %v1936 = vlaneseq
  %v1937 = vshrl.u32 %v1936, 7
  %v1938 = vsub.s32 %v1935, %v1937
  %v1939 = vrot.slane %v1925, %v1938
  %v1940 = vcombine.low %v1875, %v1891
  %v1941 = vcombine.high %v1875, %v1891
  %v1943 = vunpack.c.l.s4 1934713408
  %v1944 = vunpack.c.0.s8 %v1943
  %v1945 = vlaneseq
  %v1946 = vshrl.u32 %v1945, 7
  %v1947 = vsub.s32 %v1944, %v1946
  %v1948 = vrot.slane %v1940, %v1947
  %v1950 = vunpack.c.l.s4 1934713408
  %v1951 = vunpack.c.0.s8 %v1950
  %v1952 = vlaneseq
  %v1953 = vshrl.u32 %v1952, 7
  %v1954 = vsub.s32 %v1951, %v1953
  %v1955 = vrot.slane %v1941, %v1954
  %v1956 = vcombine.low %v1900, %v1916
  %v1957 = vcombine.high %v1900, %v1916
  %v1959 = vunpack.c.l.s4 1934713408
  %v1960 = vunpack.c.0.s8 %v1959
  %v1961 = vlaneseq
  %v1962 = vshrl.u32 %v1961, 7
  %v1963 = vsub.s32 %v1960, %v1962
  %v1964 = vrot.slane %v1956, %v1963
  %v1966 = vunpack.c.l.s4 1934713408
  %v1967 = vunpack.c.0.s8 %v1966
  %v1968 = vlaneseq
  %v1969 = vshrl.u32 %v1968, 7
  %v1970 = vsub.s32 %v1967, %v1969
  %v1971 = vrot.slane %v1957, %v1970
  %v1972 = vcombine.low %v1907, %v1923
  %v1973 = vcombine.high %v1907, %v1923
  %v1975 = vunpack.c.l.s4 1934713408
  %v1976 = vunpack.c.0.s8 %v1975
  %v1977 = vlaneseq
  %v1978 = vshrl.u32 %v1977, 7
  %v1979 = vsub.s32 %v1976, %v1978
  %v1980 = vrot.slane %v1972, %v1979
  %v1982 = vunpack.c.l.s4 1934713408
  %v1983 = vunpack.c.0.s8 %v1982
  %v1984 = vlaneseq
  %v1985 = vshrl.u32 %v1984, 7
  %v1986 = vsub.s32 %v1983, %v1985
  %v1987 = vrot.slane %v1973, %v1986
  %v1988 = vcombine.low %v1932, %v1964
  %v1989 = vcombine.high %v1932, %v1964
  %v1990 = vcombine.low %v1939, %v1971
  %v1991 = vcombine.high %v1939, %v1971
  %v1992 = vcombine.low %v1948, %v1980
  %v1993 = vcombine.high %v1948, %v1980
  %v1994 = vcombine.low %v1955, %v1987
  %v1995 = vcombine.high %v1955, %v1987
  %v1996 = vcombine.low %v955, %v979
  %v1997 = vcombine.high %v955, %v979
  %v1999 = vunpack.c.l.s4 1983009808
  %v2000 = vunpack.c.0.s8 %v1999
  %v2001 = vlaneseq
  %v2002 = vshrl.u32 %v2001, 7
  %v2003 = vsub.s32 %v2000, %v2002
  %v2004 = vrot.slane %v1996, %v2003
  %v2006 = vunpack.c.l.s4 1983009808
  %v2007 = vunpack.c.0.s8 %v2006
  %v2008 = vlaneseq
  %v2009 = vshrl.u32 %v2008, 7
  %v2010 = vsub.s32 %v2007, %v2009
  %v2011 = vrot.slane %v1997, %v2010
  %v2012 = vcombine.low %v967, %v991
  %v2013 = vcombine.high %v967, %v991
  %v2015 = vunpack.c.l.s4 1983009808
  %v2016 = vunpack.c.0.s8 %v2015
  %v2017 = vlaneseq
  %v2018 = vshrl.u32 %v2017, 7
  %v2019 = vsub.s32 %v2016, %v2018
  %v2020 = vrot.slane %v2012, %v2019
  %v2022 = vunpack.c.l.s4 1983009808
  %v2023 = vunpack.c.0.s8 %v2022
  %v2024 = vlaneseq
  %v2025 = vshrl.u32 %v2024, 7
  %v2026 = vsub.s32 %v2023, %v2025
  %v2027 = vrot.slane %v2013, %v2026
  %v2028 = vcombine.low %v1003, %v1027
  %v2029 = vcombine.high %v1003, %v1027
  %v2031 = vunpack.c.l.s4 1983009808
  %v2032 = vunpack.c.0.s8 %v2031
  %v2033 = vlaneseq
  %v2034 = vshrl.u32 %v2033, 7
  %v2035 = vsub.s32 %v2032, %v2034
  %v2036 = vrot.slane %v2028, %v2035
  %v2038 = vunpack.c.l.s4 1983009808
  %v2039 = vunpack.c.0.s8 %v2038
  %v2040 = vlaneseq
  %v2041 = vshrl.u32 %v2040, 7
  %v2042 = vsub.s32 %v2039, %v2041
  %v2043 = vrot.slane %v2029, %v2042
  %v2044 = vcombine.low %v1015, %v1039
  %v2045 = vcombine.high %v1015, %v1039
  %v2047 = vunpack.c.l.s4 1983009808
  %v2048 = vunpack.c.0.s8 %v2047
  %v2049 = vlaneseq
  %v2050 = vshrl.u32 %v2049, 7
  %v2051 = vsub.s32 %v2048, %v2050
  %v2052 = vrot.slane %v2044, %v2051
  %v2054 = vunpack.c.l.s4 1983009808
  %v2055 = vunpack.c.0.s8 %v2054
  %v2056 = vlaneseq
  %v2057 = vshrl.u32 %v2056, 7
  %v2058 = vsub.s32 %v2055, %v2057
  %v2059 = vrot.slane %v2045, %v2058
  %v2060 = vcombine.low %v2004, %v2020
  %v2061 = vcombine.high %v2004, %v2020
  %v2063 = vunpack.c.l.s4 1934713408
  %v2064 = vunpack.c.0.s8 %v2063
  %v2065 = vlaneseq
  %v2066 = vshrl.u32 %v2065, 7
  %v2067 = vsub.s32 %v2064, %v2066
  %v2068 = vrot.slane %v2060, %v2067
  %v2070 = vunpack.c.l.s4 1934713408
  %v2071 = vunpack.c.0.s8 %v2070
  %v2072 = vlaneseq
  %v2073 = vshrl.u32 %v2072, 7
  %v2074 = vsub.s32 %v2071, %v2073
  %v2075 = vrot.slane %v2061, %v2074
  %v2076 = vcombine.low %v2011, %v2027
  %v2077 = vcombine.high %v2011, %v2027
  %v2079 = vunpack.c.l.s4 1934713408
  %v2080 = vunpack.c.0.s8 %v2079
  %v2081 = vlaneseq
  %v2082 = vshrl.u32 %v2081, 7
  %v2083 = vsub.s32 %v2080, %v2082
  %v2084 = vrot.slane %v2076, %v2083
  %v2086 = vunpack.c.l.s4 1934713408
  %v2087 = vunpack.c.0.s8 %v2086
  %v2088 = vlaneseq
  %v2089 = vshrl.u32 %v2088, 7
  %v2090 = vsub.s32 %v2087, %v2089
  %v2091 = vrot.slane %v2077, %v2090
  %v2092 = vcombine.low %v2036, %v2052
  %v2093 = vcombine.high %v2036, %v2052
  %v2095 = vunpack.c.l.s4 1934713408
  %v2096 = vunpack.c.0.s8 %v2095
  %v2097 = vlaneseq
  %v2098 = vshrl.u32 %v2097, 7
  %v2099 = vsub.s32 %v2096, %v2098
  %v2100 = vrot.slane %v2092, %v2099
  %v2102 = vunpack.c.l.s4 1934713408
  %v2103 = vunpack.c.0.s8 %v2102
  %v2104 = vlaneseq
  %v2105 = vshrl.u32 %v2104, 7
  %v2106 = vsub.s32 %v2103, %v2105
  %v2107 = vrot.slane %v2093, %v2106
  %v2108 = vcombine.low %v2043, %v2059
  %v2109 = vcombine.high %v2043, %v2059
  %v2111 = vunpack.c.l.s4 1934713408
  %v2112 = vunpack.c.0.s8 %v2111
  %v2113 = vlaneseq
  %v2114 = vshrl.u32 %v2113, 7
  %v2115 = vsub.s32 %v2112, %v2114
  %v2116 = vrot.slane %v2108, %v2115
  %v2118 = vunpack.c.l.s4 1934713408
  %v2119 = vunpack.c.0.s8 %v2118
  %v2120 = vlaneseq
  %v2121 = vshrl.u32 %v2120, 7
  %v2122 = vsub.s32 %v2119, %v2121
  %v2123 = vrot.slane %v2109, %v2122
  %v2124 = vcombine.low %v2068, %v2100
  %v2125 = vcombine.high %v2068, %v2100
  %v2126 = vcombine.low %v2075, %v2107
  %v2127 = vcombine.high %v2075, %v2107
  %v2128 = vcombine.low %v2084, %v2116
  %v2129 = vcombine.high %v2084, %v2116
  %v2130 = vcombine.low %v2091, %v2123
  %v2131 = vcombine.high %v2091, %v2123
  %v2133 = vsel %vm727, %v18, 0
  %v2136 = vsel %vm727, %v19, 0
  %v2139 = vsel %vm727, %v20, 0
  %v2142 = vsel %vm727, %v21, 0
  %2144 = vmatprep.subr.mxu0 0.0
  %2145 = vmatpush1.msra.mxu0 %v1172
  %2146 = vmatprep.subr.mxu0 0.0
  %2147 = vmatpush1.msra.mxu0 %v1308
  %2148 = vmatprep.subr.mxu0 0.0
  %2149 = vmatpush1.msra.mxu0 0.0
  %2150 = vmatprep.subr.mxu0 0.0
  %2151 = vmatpush1.msra.mxu0 0.0
  %2152 = vmatprep.subr.mxu0 0.0
  %2153 = vmatpush1.msra.mxu0 0.0
  %2154 = vmatprep.subr.mxu0 0.0
  %2155 = vmatpush1.msra.mxu0 0.0
  %2156 = vmatprep.subr.mxu0 0.0
  %2157 = vmatpush1.msra.mxu0 0.0
  %2158 = vmatprep.subr.mxu0 0.0
  %2159 = vmatpush1.msra.mxu0 0.0
  %2160 = vmatprep.subr.mxu0 0.0
  %2161 = vmatpush1.msra.mxu0 0.0
  %2162 = vmatprep.subr.mxu0 0.0
  %2163 = vmatpush1.msra.mxu0 0.0
  %2164 = vmatprep.subr.mxu0 0.0
  %2165 = vmatpush1.msra.mxu0 0.0
  %2166 = vmatprep.subr.mxu0 0.0
  %2167 = vmatpush1.msra.mxu0 0.0
  %2168 = vmatprep.subr.mxu0 0.0
  %2169 = vmatpush1.msra.mxu0 0.0
  %2170 = vmatprep.subr.mxu0 0.0
  %2171 = vmatpush1.msra.mxu0 0.0
  %2172 = vmatprep.subr.mxu0 0.0
  %2173 = vmatpush1.msra.mxu0 0.0
  %2174 = vmatprep.subr.mxu0 0.0
  %2175 = vmatpush1.msra.mxu0 0.0
  %2176 = vmatprep.subr.mxu0 0.0
  %2177 = vmatpush1.msra.mxu0 0.0
  %2178 = vmatprep.subr.mxu0 0.0
  %2179 = vmatpush1.msra.mxu0 0.0
  %2180 = vmatprep.subr.mxu0 0.0
  %2181 = vmatpush1.msra.mxu0 0.0
  %2182 = vmatprep.subr.mxu0 0.0
  %2183 = vmatpush1.msra.mxu0 0.0
  %2184 = vmatprep.subr.mxu0 0.0
  %2185 = vmatpush1.msra.mxu0 0.0
  %2186 = vmatprep.subr.mxu0 0.0
  %2187 = vmatpush1.msra.mxu0 0.0
  %2188 = vmatprep.subr.mxu0 0.0
  %2189 = vmatpush1.msra.mxu0 0.0
  %2190 = vmatprep.subr.mxu0 0.0
  %2191 = vmatpush1.msra.mxu0 0.0
  %2192 = vmatprep.subr.mxu0 0.0
  %2193 = vmatpush1.msra.mxu0 0.0
  %2194 = vmatprep.subr.mxu0 0.0
  %2195 = vmatpush1.msra.mxu0 0.0
  %2196 = vmatprep.subr.mxu0 0.0
  %2197 = vmatpush1.msra.mxu0 0.0
  %2198 = vmatprep.subr.mxu0 0.0
  %2199 = vmatpush1.msra.mxu0 0.0
  %2200 = vmatprep.subr.mxu0 0.0
  %2201 = vmatpush1.msra.mxu0 0.0
  %2202 = vmatprep.subr.mxu0 0.0
  %2203 = vmatpush1.msra.mxu0 0.0
  %2204 = vmatprep.subr.mxu0 0.0
  %2205 = vmatpush1.msra.mxu0 0.0
  %2206 = vmatprep.subr.mxu0 0.0
  %2207 = vmatpush1.msra.mxu0 0.0
  %2208 = vmatprep.mubr.f32.mxu0 0.0
  %2209 = vmatmul.mubr.f32.gmra.mrb[0].mxu0 %v2133
  %v2210 = vpop.f32.mrb[0].mxu0
  %v2211 = vadd.f32 0.0, %v2210
  %v2212 = vpop.f32.mrb[0].mxu0
  %2213 = vmatprep.mubr.f32.mxu0 0.0
  %2214 = vmatmul.mubr.f32.gmra.mrb[0].mxu0 %v2136
  %v2215 = vpop.f32.mrb[0].mxu0
  %v2216 = vadd.f32 0.0, %v2215
  %v2217 = vpop.f32.mrb[0].mxu0
  %2218 = vmatprep.mubr.f32.mxu0 0.0
  %2219 = vmatmul.mubr.f32.gmra.mrb[0].mxu0 %v2139
  %v2220 = vpop.f32.mrb[0].mxu0
  %v2221 = vadd.f32 0.0, %v2220
  %v2222 = vpop.f32.mrb[0].mxu0
  %2223 = vmatprep.mubr.f32.mxu0 0.0
  %2224 = vmatmul.mubr.f32.gmra.mrb[0].mxu0 %v2142
  %v2225 = vpop.f32.mrb[0].mxu0
  %v2226 = vadd.f32 0.0, %v2225
  %v2227 = vpop.f32.mrb[0].mxu0
  %2228 = vdwg.mxu0
  %2229 = vst.msk [vmem:[%s3] sm:$0xff] %vm718, %v2211
  %2230 = vst.msk [vmem:[%s3 + $0x8] sm:$0xff] %vm718, %v2216
  %2231 = vst.msk [vmem:[%s3 + $0x10] sm:$0xff] %vm718, %v2221
  %2232 = vst.msk [vmem:[%s3 + $0x18] sm:$0xff] %vm718, %v2226
  %2233 = vmatprep.subr.mxu0 0.0
  %2234 = vmatpush1.msra.mxu0 %v1173
  %2235 = vmatprep.subr.mxu0 0.0
  %2236 = vmatpush1.msra.mxu0 %v1309
  %2237 = vmatprep.subr.mxu0 0.0
  %2238 = vmatpush1.msra.mxu0 0.0
  %2239 = vmatprep.subr.mxu0 0.0
  %2240 = vmatpush1.msra.mxu0 0.0
  %2241 = vmatprep.subr.mxu0 0.0
  %2242 = vmatpush1.msra.mxu0 0.0
  %2243 = vmatprep.subr.mxu0 0.0
  %2244 = vmatpush1.msra.mxu0 0.0
  %2245 = vmatprep.subr.mxu0 0.0
  %2246 = vmatpush1.msra.mxu0 0.0
  %2247 = vmatprep.subr.mxu0 0.0
  %2248 = vmatpush1.msra.mxu0 0.0
  %2249 = vmatprep.subr.mxu0 0.0
  %2250 = vmatpush1.msra.mxu0 0.0
  %2251 = vmatprep.subr.mxu0 0.0
  %2252 = vmatpush1.msra.mxu0 0.0
  %2253 = vmatprep.subr.mxu0 0.0
  %2254 = vmatpush1.msra.mxu0 0.0
  %2255 = vmatprep.subr.mxu0 0.0
  %2256 = vmatpush1.msra.mxu0 0.0
  %2257 = vmatprep.subr.mxu0 0.0
  %2258 = vmatpush1.msra.mxu0 0.0
  %2259 = vmatprep.subr.mxu0 0.0
  %2260 = vmatpush1.msra.mxu0 0.0
  %2261 = vmatprep.subr.mxu0 0.0
  %2262 = vmatpush1.msra.mxu0 0.0
  %2263 = vmatprep.subr.mxu0 0.0
  %2264 = vmatpush1.msra.mxu0 0.0
  %2265 = vmatprep.subr.mxu0 0.0
  %2266 = vmatpush1.msra.mxu0 0.0
  %2267 = vmatprep.subr.mxu0 0.0
  %2268 = vmatpush1.msra.mxu0 0.0
  %2269 = vmatprep.subr.mxu0 0.0
  %2270 = vmatpush1.msra.mxu0 0.0
  %2271 = vmatprep.subr.mxu0 0.0
  %2272 = vmatpush1.msra.mxu0 0.0
  %2273 = vmatprep.subr.mxu0 0.0
  %2274 = vmatpush1.msra.mxu0 0.0
  %2275 = vmatprep.subr.mxu0 0.0
  %2276 = vmatpush1.msra.mxu0 0.0
  %2277 = vmatprep.subr.mxu0 0.0
  %2278 = vmatpush1.msra.mxu0 0.0
  %2279 = vmatprep.subr.mxu0 0.0
  %2280 = vmatpush1.msra.mxu0 0.0
  %2281 = vmatprep.subr.mxu0 0.0
  %2282 = vmatpush1.msra.mxu0 0.0
  %2283 = vmatprep.subr.mxu0 0.0
  %2284 = vmatpush1.msra.mxu0 0.0
  %2285 = vmatprep.subr.mxu0 0.0
  %2286 = vmatpush1.msra.mxu0 0.0
  %2287 = vmatprep.subr.mxu0 0.0
  %2288 = vmatpush1.msra.mxu0 0.0
  %2289 = vmatprep.subr.mxu0 0.0
  %2290 = vmatpush1.msra.mxu0 0.0
  %2291 = vmatprep.subr.mxu0 0.0
  %2292 = vmatpush1.msra.mxu0 0.0
  %2293 = vmatprep.subr.mxu0 0.0
  %2294 = vmatpush1.msra.mxu0 0.0
  %2295 = vmatprep.subr.mxu0 0.0
  %2296 = vmatpush1.msra.mxu0 0.0
  %2297 = vmatprep.mubr.f32.mxu0 0.0
  %2298 = vmatmul.mubr.f32.gmra.mrb[0].mxu0 %v2133
  %v2299 = vpop.f32.mrb[0].mxu0
  %v2300 = vadd.f32 0.0, %v2299
  %v2301 = vpop.f32.mrb[0].mxu0
  %2302 = vmatprep.mubr.f32.mxu0 0.0
  %2303 = vmatmul.mubr.f32.gmra.mrb[0].mxu0 %v2136
  %v2304 = vpop.f32.mrb[0].mxu0
  %v2305 = vadd.f32 0.0, %v2304
  %v2306 = vpop.f32.mrb[0].mxu0
  %2307 = vmatprep.mubr.f32.mxu0 0.0
  %2308 = vmatmul.mubr.f32.gmra.mrb[0].mxu0 %v2139
  %v2309 = vpop.f32.mrb[0].mxu0
  %v2310 = vadd.f32 0.0, %v2309
  %v2311 = vpop.f32.mrb[0].mxu0
  %2312 = vmatprep.mubr.f32.mxu0 0.0
  %2313 = vmatmul.mubr.f32.gmra.mrb[0].mxu0 %v2142
  %v2314 = vpop.f32.mrb[0].mxu0
  %v2315 = vadd.f32 0.0, %v2314
  %v2316 = vpop.f32.mrb[0].mxu0
  %2317 = vdwg.mxu0
  %s2318 = scalar_lea.vmem %s3, 32
  %2319 = vst.msk [vmem:[%s2318] sm:$0xff] %vm718, %v2300
  %2320 = vst.msk [vmem:[%s2318 + $0x8] sm:$0xff] %vm718, %v2305
  %2321 = vst.msk [vmem:[%s2318 + $0x10] sm:$0xff] %vm718, %v2310
  %2322 = vst.msk [vmem:[%s2318 + $0x18] sm:$0xff] %vm718, %v2315
  %2323 = vmatprep.subr.mxu0 0.0
  %2324 = vmatpush1.msra.mxu0 %v1174
  %2325 = vmatprep.subr.mxu0 0.0
  %2326 = vmatpush1.msra.mxu0 %v1310
  %2327 = vmatprep.subr.mxu0 0.0
  %2328 = vmatpush1.msra.mxu0 0.0
  %2329 = vmatprep.subr.mxu0 0.0
  %2330 = vmatpush1.msra.mxu0 0.0
  %2331 = vmatprep.subr.mxu0 0.0
  %2332 = vmatpush1.msra.mxu0 0.0
  %2333 = vmatprep.subr.mxu0 0.0
  %2334 = vmatpush1.msra.mxu0 0.0
  %2335 = vmatprep.subr.mxu0 0.0
  %2336 = vmatpush1.msra.mxu0 0.0
  %2337 = vmatprep.subr.mxu0 0.0
  %2338 = vmatpush1.msra.mxu0 0.0
  %2339 = vmatprep.subr.mxu0 0.0
  %2340 = vmatpush1.msra.mxu0 0.0
  %2341 = vmatprep.subr.mxu0 0.0
  %2342 = vmatpush1.msra.mxu0 0.0
  %2343 = vmatprep.subr.mxu0 0.0
  %2344 = vmatpush1.msra.mxu0 0.0
  %2345 = vmatprep.subr.mxu0 0.0
  %2346 = vmatpush1.msra.mxu0 0.0
  %2347 = vmatprep.subr.mxu0 0.0
  %2348 = vmatpush1.msra.mxu0 0.0
  %2349 = vmatprep.subr.mxu0 0.0
  %2350 = vmatpush1.msra.mxu0 0.0
  %2351 = vmatprep.subr.mxu0 0.0
  %2352 = vmatpush1.msra.mxu0 0.0
  %2353 = vmatprep.subr.mxu0 0.0
  %2354 = vmatpush1.msra.mxu0 0.0
  %2355 = vmatprep.subr.mxu0 0.0
  %2356 = vmatpush1.msra.mxu0 0.0
  %2357 = vmatprep.subr.mxu0 0.0
  %2358 = vmatpush1.msra.mxu0 0.0
  %2359 = vmatprep.subr.mxu0 0.0
  %2360 = vmatpush1.msra.mxu0 0.0
  %2361 = vmatprep.subr.mxu0 0.0
  %2362 = vmatpush1.msra.mxu0 0.0
  %2363 = vmatprep.subr.mxu0 0.0
  %2364 = vmatpush1.msra.mxu0 0.0
  %2365 = vmatprep.subr.mxu0 0.0
  %2366 = vmatpush1.msra.mxu0 0.0
  %2367 = vmatprep.subr.mxu0 0.0
  %2368 = vmatpush1.msra.mxu0 0.0
  %2369 = vmatprep.subr.mxu0 0.0
  %2370 = vmatpush1.msra.mxu0 0.0
  %2371 = vmatprep.subr.mxu0 0.0
  %2372 = vmatpush1.msra.mxu0 0.0
  %2373 = vmatprep.subr.mxu0 0.0
  %2374 = vmatpush1.msra.mxu0 0.0
  %2375 = vmatprep.subr.mxu0 0.0
  %2376 = vmatpush1.msra.mxu0 0.0
  %2377 = vmatprep.subr.mxu0 0.0
  %2378 = vmatpush1.msra.mxu0 0.0
  %2379 = vmatprep.subr.mxu0 0.0
  %2380 = vmatpush1.msra.mxu0 0.0
  %2381 = vmatprep.subr.mxu0 0.0
  %2382 = vmatpush1.msra.mxu0 0.0
  %2383 = vmatprep.subr.mxu0 0.0
  %2384 = vmatpush1.msra.mxu0 0.0
  %2385 = vmatprep.subr.mxu0 0.0
  %2386 = vmatpush1.msra.mxu0 0.0
  %2387 = vmatprep.mubr.f32.mxu0 0.0
  %2388 = vmatmul.mubr.f32.gmra.mrb[0].mxu0 %v2133
  %v2389 = vpop.f32.mrb[0].mxu0
  %v2390 = vadd.f32 0.0, %v2389
  %v2391 = vpop.f32.mrb[0].mxu0
  %2392 = vmatprep.mubr.f32.mxu0 0.0
  %2393 = vmatmul.mubr.f32.gmra.mrb[0].mxu0 %v2136
  %v2394 = vpop.f32.mrb[0].mxu0
  %v2395 = vadd.f32 0.0, %v2394
  %v2396 = vpop.f32.mrb[0].mxu0
  %2397 = vmatprep.mubr.f32.mxu0 0.0
  %2398 = vmatmul.mubr.f32.gmra.mrb[0].mxu0 %v2139
  %v2399 = vpop.f32.mrb[0].mxu0
  %v2400 = vadd.f32 0.0, %v2399
  %v2401 = vpop.f32.mrb[0].mxu0
  %2402 = vmatprep.mubr.f32.mxu0 0.0
  %2403 = vmatmul.mubr.f32.gmra.mrb[0].mxu0 %v2142
  %v2404 = vpop.f32.mrb[0].mxu0
  %v2405 = vadd.f32 0.0, %v2404
  %v2406 = vpop.f32.mrb[0].mxu0
  %2407 = vdwg.mxu0
  %s2408 = scalar_lea.vmem %s3, 64
  %2409 = vst.msk [vmem:[%s2408] sm:$0xff] %vm718, %v2390
  %2410 = vst.msk [vmem:[%s2408 + $0x8] sm:$0xff] %vm718, %v2395
  %2411 = vst.msk [vmem:[%s2408 + $0x10] sm:$0xff] %vm718, %v2400
  %2412 = vst.msk [vmem:[%s2408 + $0x18] sm:$0xff] %vm718, %v2405
  %2413 = vmatprep.subr.mxu0 0.0
  %2414 = vmatpush1.msra.mxu0 %v1175
  %2415 = vmatprep.subr.mxu0 0.0
  %2416 = vmatpush1.msra.mxu0 %v1311
  %2417 = vmatprep.subr.mxu0 0.0
  %2418 = vmatpush1.msra.mxu0 0.0
  %2419 = vmatprep.subr.mxu0 0.0
  %2420 = vmatpush1.msra.mxu0 0.0
  %2421 = vmatprep.subr.mxu0 0.0
  %2422 = vmatpush1.msra.mxu0 0.0
  %2423 = vmatprep.subr.mxu0 0.0
  %2424 = vmatpush1.msra.mxu0 0.0
  %2425 = vmatprep.subr.mxu0 0.0
  %2426 = vmatpush1.msra.mxu0 0.0
  %2427 = vmatprep.subr.mxu0 0.0
  %2428 = vmatpush1.msra.mxu0 0.0
  %2429 = vmatprep.subr.mxu0 0.0
  %2430 = vmatpush1.msra.mxu0 0.0
  %2431 = vmatprep.subr.mxu0 0.0
  %2432 = vmatpush1.msra.mxu0 0.0
  %2433 = vmatprep.subr.mxu0 0.0
  %2434 = vmatpush1.msra.mxu0 0.0
  %2435 = vmatprep.subr.mxu0 0.0
  %2436 = vmatpush1.msra.mxu0 0.0
  %2437 = vmatprep.subr.mxu0 0.0
  %2438 = vmatpush1.msra.mxu0 0.0
  %2439 = vmatprep.subr.mxu0 0.0
  %2440 = vmatpush1.msra.mxu0 0.0
  %2441 = vmatprep.subr.mxu0 0.0
  %2442 = vmatpush1.msra.mxu0 0.0
  %2443 = vmatprep.subr.mxu0 0.0
  %2444 = vmatpush1.msra.mxu0 0.0
  %2445 = vmatprep.subr.mxu0 0.0
  %2446 = vmatpush1.msra.mxu0 0.0
  %2447 = vmatprep.subr.mxu0 0.0
  %2448 = vmatpush1.msra.mxu0 0.0
  %2449 = vmatprep.subr.mxu0 0.0
  %2450 = vmatpush1.msra.mxu0 0.0
  %2451 = vmatprep.subr.mxu0 0.0
  %2452 = vmatpush1.msra.mxu0 0.0
  %2453 = vmatprep.subr.mxu0 0.0
  %2454 = vmatpush1.msra.mxu0 0.0
  %2455 = vmatprep.subr.mxu0 0.0
  %2456 = vmatpush1.msra.mxu0 0.0
  %2457 = vmatprep.subr.mxu0 0.0
  %2458 = vmatpush1.msra.mxu0 0.0
  %2459 = vmatprep.subr.mxu0 0.0
  %2460 = vmatpush1.msra.mxu0 0.0
  %2461 = vmatprep.subr.mxu0 0.0
  %2462 = vmatpush1.msra.mxu0 0.0
  %2463 = vmatprep.subr.mxu0 0.0
  %2464 = vmatpush1.msra.mxu0 0.0
  %2465 = vmatprep.subr.mxu0 0.0
  %2466 = vmatpush1.msra.mxu0 0.0
  %2467 = vmatprep.subr.mxu0 0.0
  %2468 = vmatpush1.msra.mxu0 0.0
  %2469 = vmatprep.subr.mxu0 0.0
  %2470 = vmatpush1.msra.mxu0 0.0
  %2471 = vmatprep.subr.mxu0 0.0
  %2472 = vmatpush1.msra.mxu0 0.0
  %2473 = vmatprep.subr.mxu0 0.0
  %2474 = vmatpush1.msra.mxu0 0.0
  %2475 = vmatprep.subr.mxu0 0.0
  %2476 = vmatpush1.msra.mxu0 0.0
  %2477 = vmatprep.mubr.f32.mxu0 0.0
  %2478 = vmatmul.mubr.f32.gmra.mrb[0].mxu0 %v2133
  %v2479 = vpop.f32.mrb[0].mxu0
  %v2480 = vadd.f32 0.0, %v2479
  %v2481 = vpop.f32.mrb[0].mxu0
  %2482 = vmatprep.mubr.f32.mxu0 0.0
  %2483 = vmatmul.mubr.f32.gmra.mrb[0].mxu0 %v2136
  %v2484 = vpop.f32.mrb[0].mxu0
  %v2485 = vadd.f32 0.0, %v2484
  %v2486 = vpop.f32.mrb[0].mxu0
  %2487 = vmatprep.mubr.f32.mxu0 0.0
  %2488 = vmatmul.mubr.f32.gmra.mrb[0].mxu0 %v2139
  %v2489 = vpop.f32.mrb[0].mxu0
  %v2490 = vadd.f32 0.0, %v2489
  %v2491 = vpop.f32.mrb[0].mxu0
  %2492 = vmatprep.mubr.f32.mxu0 0.0
  %2493 = vmatmul.mubr.f32.gmra.mrb[0].mxu0 %v2142
  %v2494 = vpop.f32.mrb[0].mxu0
  %v2495 = vadd.f32 0.0, %v2494
  %v2496 = vpop.f32.mrb[0].mxu0
  %2497 = vdwg.mxu0
  %s2498 = scalar_lea.vmem %s3, 96
  %2499 = vst.msk [vmem:[%s2498] sm:$0xff] %vm718, %v2480
  %2500 = vst.msk [vmem:[%s2498 + $0x8] sm:$0xff] %vm718, %v2485
  %2501 = vst.msk [vmem:[%s2498 + $0x10] sm:$0xff] %vm718, %v2490
  %2502 = vst.msk [vmem:[%s2498 + $0x18] sm:$0xff] %vm718, %v2495
  %2503 = vmatprep.subr.mxu0 0.0
  %2504 = vmatpush1.msra.mxu0 %v1176
  %2505 = vmatprep.subr.mxu0 0.0
  %2506 = vmatpush1.msra.mxu0 %v1312
  %2507 = vmatprep.subr.mxu0 0.0
  %2508 = vmatpush1.msra.mxu0 0.0
  %2509 = vmatprep.subr.mxu0 0.0
  %2510 = vmatpush1.msra.mxu0 0.0
  %2511 = vmatprep.subr.mxu0 0.0
  %2512 = vmatpush1.msra.mxu0 0.0
  %2513 = vmatprep.subr.mxu0 0.0
  %2514 = vmatpush1.msra.mxu0 0.0
  %2515 = vmatprep.subr.mxu0 0.0
  %2516 = vmatpush1.msra.mxu0 0.0
  %2517 = vmatprep.subr.mxu0 0.0
  %2518 = vmatpush1.msra.mxu0 0.0
  %2519 = vmatprep.subr.mxu0 0.0
  %2520 = vmatpush1.msra.mxu0 0.0
  %2521 = vmatprep.subr.mxu0 0.0
  %2522 = vmatpush1.msra.mxu0 0.0
  %2523 = vmatprep.subr.mxu0 0.0
  %2524 = vmatpush1.msra.mxu0 0.0
  %2525 = vmatprep.subr.mxu0 0.0
  %2526 = vmatpush1.msra.mxu0 0.0
  %2527 = vmatprep.subr.mxu0 0.0
  %2528 = vmatpush1.msra.mxu0 0.0
  %2529 = vmatprep.subr.mxu0 0.0
  %2530 = vmatpush1.msra.mxu0 0.0
  %2531 = vmatprep.subr.mxu0 0.0
  %2532 = vmatpush1.msra.mxu0 0.0
  %2533 = vmatprep.subr.mxu0 0.0
  %2534 = vmatpush1.msra.mxu0 0.0
  %2535 = vmatprep.subr.mxu0 0.0
  %2536 = vmatpush1.msra.mxu0 0.0
  %2537 = vmatprep.subr.mxu0 0.0
  %2538 = vmatpush1.msra.mxu0 0.0
  %2539 = vmatprep.subr.mxu0 0.0
  %2540 = vmatpush1.msra.mxu0 0.0
  %2541 = vmatprep.subr.mxu0 0.0
  %2542 = vmatpush1.msra.mxu0 0.0
  %2543 = vmatprep.subr.mxu0 0.0
  %2544 = vmatpush1.msra.mxu0 0.0
  %2545 = vmatprep.subr.mxu0 0.0
  %2546 = vmatpush1.msra.mxu0 0.0
  %2547 = vmatprep.subr.mxu0 0.0
  %2548 = vmatpush1.msra.mxu0 0.0
  %2549 = vmatprep.subr.mxu0 0.0
  %2550 = vmatpush1.msra.mxu0 0.0
  %2551 = vmatprep.subr.mxu0 0.0
  %2552 = vmatpush1.msra.mxu0 0.0
  %2553 = vmatprep.subr.mxu0 0.0
  %2554 = vmatpush1.msra.mxu0 0.0
  %2555 = vmatprep.subr.mxu0 0.0
  %2556 = vmatpush1.msra.mxu0 0.0
  %2557 = vmatprep.subr.mxu0 0.0
  %2558 = vmatpush1.msra.mxu0 0.0
  %2559 = vmatprep.subr.mxu0 0.0
  %2560 = vmatpush1.msra.mxu0 0.0
  %2561 = vmatprep.subr.mxu0 0.0
  %2562 = vmatpush1.msra.mxu0 0.0
  %2563 = vmatprep.subr.mxu0 0.0
  %2564 = vmatpush1.msra.mxu0 0.0
  %2565 = vmatprep.subr.mxu0 0.0
  %2566 = vmatpush1.msra.mxu0 0.0
  %2567 = vmatprep.mubr.f32.mxu0 0.0
  %2568 = vmatmul.mubr.f32.gmra.mrb[0].mxu0 %v2133
  %v2569 = vpop.f32.mrb[0].mxu0
  %v2570 = vadd.f32 0.0, %v2569
  %v2571 = vpop.f32.mrb[0].mxu0
  %2572 = vmatprep.mubr.f32.mxu0 0.0
  %2573 = vmatmul.mubr.f32.gmra.mrb[0].mxu0 %v2136
  %v2574 = vpop.f32.mrb[0].mxu0
  %v2575 = vadd.f32 0.0, %v2574
  %v2576 = vpop.f32.mrb[0].mxu0
  %2577 = vmatprep.mubr.f32.mxu0 0.0
  %2578 = vmatmul.mubr.f32.gmra.mrb[0].mxu0 %v2139
  %v2579 = vpop.f32.mrb[0].mxu0
  %v2580 = vadd.f32 0.0, %v2579
  %v2581 = vpop.f32.mrb[0].mxu0
  %2582 = vmatprep.mubr.f32.mxu0 0.0
  %2583 = vmatmul.mubr.f32.gmra.mrb[0].mxu0 %v2142
  %v2584 = vpop.f32.mrb[0].mxu0
  %v2585 = vadd.f32 0.0, %v2584
  %v2586 = vpop.f32.mrb[0].mxu0
  %2587 = vdwg.mxu0
  %s2588 = scalar_lea.vmem %s3, 128
  %2589 = vst.msk [vmem:[%s2588] sm:$0xff] %vm718, %v2570
  %2590 = vst.msk [vmem:[%s2588 + $0x8] sm:$0xff] %vm718, %v2575
  %2591 = vst.msk [vmem:[%s2588 + $0x10] sm:$0xff] %vm718, %v2580
  %2592 = vst.msk [vmem:[%s2588 + $0x18] sm:$0xff] %vm718, %v2585
  %2593 = vmatprep.subr.mxu0 0.0
  %2594 = vmatpush1.msra.mxu0 %v1177
  %2595 = vmatprep.subr.mxu0 0.0
  %2596 = vmatpush1.msra.mxu0 %v1313
  %2597 = vmatprep.subr.mxu0 0.0
  %2598 = vmatpush1.msra.mxu0 0.0
  %2599 = vmatprep.subr.mxu0 0.0
  %2600 = vmatpush1.msra.mxu0 0.0
  %2601 = vmatprep.subr.mxu0 0.0
  %2602 = vmatpush1.msra.mxu0 0.0
  %2603 = vmatprep.subr.mxu0 0.0
  %2604 = vmatpush1.msra.mxu0 0.0
  %2605 = vmatprep.subr.mxu0 0.0
  %2606 = vmatpush1.msra.mxu0 0.0
  %2607 = vmatprep.subr.mxu0 0.0
  %2608 = vmatpush1.msra.mxu0 0.0
  %2609 = vmatprep.subr.mxu0 0.0
  %2610 = vmatpush1.msra.mxu0 0.0
  %2611 = vmatprep.subr.mxu0 0.0
  %2612 = vmatpush1.msra.mxu0 0.0
  %2613 = vmatprep.subr.mxu0 0.0
  %2614 = vmatpush1.msra.mxu0 0.0
  %2615 = vmatprep.subr.mxu0 0.0
  %2616 = vmatpush1.msra.mxu0 0.0
  %2617 = vmatprep.subr.mxu0 0.0
  %2618 = vmatpush1.msra.mxu0 0.0
  %2619 = vmatprep.subr.mxu0 0.0
  %2620 = vmatpush1.msra.mxu0 0.0
  %2621 = vmatprep.subr.mxu0 0.0
  %2622 = vmatpush1.msra.mxu0 0.0
  %2623 = vmatprep.subr.mxu0 0.0
  %2624 = vmatpush1.msra.mxu0 0.0
  %2625 = vmatprep.subr.mxu0 0.0
  %2626 = vmatpush1.msra.mxu0 0.0
  %2627 = vmatprep.subr.mxu0 0.0
  %2628 = vmatpush1.msra.mxu0 0.0
  %2629 = vmatprep.subr.mxu0 0.0
  %2630 = vmatpush1.msra.mxu0 0.0
  %2631 = vmatprep.subr.mxu0 0.0
  %2632 = vmatpush1.msra.mxu0 0.0
  %2633 = vmatprep.subr.mxu0 0.0
  %2634 = vmatpush1.msra.mxu0 0.0
  %2635 = vmatprep.subr.mxu0 0.0
  %2636 = vmatpush1.msra.mxu0 0.0
  %2637 = vmatprep.subr.mxu0 0.0
  %2638 = vmatpush1.msra.mxu0 0.0
  %2639 = vmatprep.subr.mxu0 0.0
  %2640 = vmatpush1.msra.mxu0 0.0
  %2641 = vmatprep.subr.mxu0 0.0
  %2642 = vmatpush1.msra.mxu0 0.0
  %2643 = vmatprep.subr.mxu0 0.0
  %2644 = vmatpush1.msra.mxu0 0.0
  %2645 = vmatprep.subr.mxu0 0.0
  %2646 = vmatpush1.msra.mxu0 0.0
  %2647 = vmatprep.subr.mxu0 0.0
  %2648 = vmatpush1.msra.mxu0 0.0
  %2649 = vmatprep.subr.mxu0 0.0
  %2650 = vmatpush1.msra.mxu0 0.0
  %2651 = vmatprep.subr.mxu0 0.0
  %2652 = vmatpush1.msra.mxu0 0.0
  %2653 = vmatprep.subr.mxu0 0.0
  %2654 = vmatpush1.msra.mxu0 0.0
  %2655 = vmatprep.subr.mxu0 0.0
  %2656 = vmatpush1.msra.mxu0 0.0
  %2657 = vmatprep.mubr.f32.mxu0 0.0
  %2658 = vmatmul.mubr.f32.gmra.mrb[0].mxu0 %v2133
  %v2659 = vpop.f32.mrb[0].mxu0
  %v2660 = vadd.f32 0.0, %v2659
  %v2661 = vpop.f32.mrb[0].mxu0
  %2662 = vmatprep.mubr.f32.mxu0 0.0
  %2663 = vmatmul.mubr.f32.gmra.mrb[0].mxu0 %v2136
  %v2664 = vpop.f32.mrb[0].mxu0
  %v2665 = vadd.f32 0.0, %v2664
  %v2666 = vpop.f32.mrb[0].mxu0
  %2667 = vmatprep.mubr.f32.mxu0 0.0
  %2668 = vmatmul.mubr.f32.gmra.mrb[0].mxu0 %v2139
  %v2669 = vpop.f32.mrb[0].mxu0
  %v2670 = vadd.f32 0.0, %v2669
  %v2671 = vpop.f32.mrb[0].mxu0
  %2672 = vmatprep.mubr.f32.mxu0 0.0
  %2673 = vmatmul.mubr.f32.gmra.mrb[0].mxu0 %v2142
  %v2674 = vpop.f32.mrb[0].mxu0
  %v2675 = vadd.f32 0.0, %v2674
  %v2676 = vpop.f32.mrb[0].mxu0
  %2677 = vdwg.mxu0
  %s2678 = scalar_lea.vmem %s3, 160
  %2679 = vst.msk [vmem:[%s2678] sm:$0xff] %vm718, %v2660
  %2680 = vst.msk [vmem:[%s2678 + $0x8] sm:$0xff] %vm718, %v2665
  %2681 = vst.msk [vmem:[%s2678 + $0x10] sm:$0xff] %vm718, %v2670
  %2682 = vst.msk [vmem:[%s2678 + $0x18] sm:$0xff] %vm718, %v2675
  %2683 = vmatprep.subr.mxu0 0.0
  %2684 = vmatpush1.msra.mxu0 %v1178
  %2685 = vmatprep.subr.mxu0 0.0
  %2686 = vmatpush1.msra.mxu0 %v1314
  %2687 = vmatprep.subr.mxu0 0.0
  %2688 = vmatpush1.msra.mxu0 0.0
  %2689 = vmatprep.subr.mxu0 0.0
  %2690 = vmatpush1.msra.mxu0 0.0
  %2691 = vmatprep.subr.mxu0 0.0
  %2692 = vmatpush1.msra.mxu0 0.0
  %2693 = vmatprep.subr.mxu0 0.0
  %2694 = vmatpush1.msra.mxu0 0.0
  %2695 = vmatprep.subr.mxu0 0.0
  %2696 = vmatpush1.msra.mxu0 0.0
  %2697 = vmatprep.subr.mxu0 0.0
  %2698 = vmatpush1.msra.mxu0 0.0
  %2699 = vmatprep.subr.mxu0 0.0
  %2700 = vmatpush1.msra.mxu0 0.0
  %2701 = vmatprep.subr.mxu0 0.0
  %2702 = vmatpush1.msra.mxu0 0.0
  %2703 = vmatprep.subr.mxu0 0.0
  %2704 = vmatpush1.msra.mxu0 0.0
  %2705 = vmatprep.subr.mxu0 0.0
  %2706 = vmatpush1.msra.mxu0 0.0
  %2707 = vmatprep.subr.mxu0 0.0
  %2708 = vmatpush1.msra.mxu0 0.0
  %2709 = vmatprep.subr.mxu0 0.0
  %2710 = vmatpush1.msra.mxu0 0.0
  %2711 = vmatprep.subr.mxu0 0.0
  %2712 = vmatpush1.msra.mxu0 0.0
  %2713 = vmatprep.subr.mxu0 0.0
  %2714 = vmatpush1.msra.mxu0 0.0
  %2715 = vmatprep.subr.mxu0 0.0
  %2716 = vmatpush1.msra.mxu0 0.0
  %2717 = vmatprep.subr.mxu0 0.0
  %2718 = vmatpush1.msra.mxu0 0.0
  %2719 = vmatprep.subr.mxu0 0.0
  %2720 = vmatpush1.msra.mxu0 0.0
  %2721 = vmatprep.subr.mxu0 0.0
  %2722 = vmatpush1.msra.mxu0 0.0
  %2723 = vmatprep.subr.mxu0 0.0
  %2724 = vmatpush1.msra.mxu0 0.0
  %2725 = vmatprep.subr.mxu0 0.0
  %2726 = vmatpush1.msra.mxu0 0.0
  %2727 = vmatprep.subr.mxu0 0.0
  %2728 = vmatpush1.msra.mxu0 0.0
  %2729 = vmatprep.subr.mxu0 0.0
  %2730 = vmatpush1.msra.mxu0 0.0
  %2731 = vmatprep.subr.mxu0 0.0
  %2732 = vmatpush1.msra.mxu0 0.0
  %2733 = vmatprep.subr.mxu0 0.0
  %2734 = vmatpush1.msra.mxu0 0.0
  %2735 = vmatprep.subr.mxu0 0.0
  %2736 = vmatpush1.msra.mxu0 0.0
  %2737 = vmatprep.subr.mxu0 0.0
  %2738 = vmatpush1.msra.mxu0 0.0
  %2739 = vmatprep.subr.mxu0 0.0
  %2740 = vmatpush1.msra.mxu0 0.0
  %2741 = vmatprep.subr.mxu0 0.0
  %2742 = vmatpush1.msra.mxu0 0.0
  %2743 = vmatprep.subr.mxu0 0.0
  %2744 = vmatpush1.msra.mxu0 0.0
  %2745 = vmatprep.subr.mxu0 0.0
  %2746 = vmatpush1.msra.mxu0 0.0
  %2747 = vmatprep.mubr.f32.mxu0 0.0
  %2748 = vmatmul.mubr.f32.gmra.mrb[0].mxu0 %v2133
  %v2749 = vpop.f32.mrb[0].mxu0
  %v2750 = vadd.f32 0.0, %v2749
  %v2751 = vpop.f32.mrb[0].mxu0
  %2752 = vmatprep.mubr.f32.mxu0 0.0
  %2753 = vmatmul.mubr.f32.gmra.mrb[0].mxu0 %v2136
  %v2754 = vpop.f32.mrb[0].mxu0
  %v2755 = vadd.f32 0.0, %v2754
  %v2756 = vpop.f32.mrb[0].mxu0
  %2757 = vmatprep.mubr.f32.mxu0 0.0
  %2758 = vmatmul.mubr.f32.gmra.mrb[0].mxu0 %v2139
  %v2759 = vpop.f32.mrb[0].mxu0
  %v2760 = vadd.f32 0.0, %v2759
  %v2761 = vpop.f32.mrb[0].mxu0
  %2762 = vmatprep.mubr.f32.mxu0 0.0
  %2763 = vmatmul.mubr.f32.gmra.mrb[0].mxu0 %v2142
  %v2764 = vpop.f32.mrb[0].mxu0
  %v2765 = vadd.f32 0.0, %v2764
  %v2766 = vpop.f32.mrb[0].mxu0
  %2767 = vdwg.mxu0
  %s2768 = scalar_lea.vmem %s3, 192
  %2769 = vst.msk [vmem:[%s2768] sm:$0xff] %vm718, %v2750
  %2770 = vst.msk [vmem:[%s2768 + $0x8] sm:$0xff] %vm718, %v2755
  %2771 = vst.msk [vmem:[%s2768 + $0x10] sm:$0xff] %vm718, %v2760
  %2772 = vst.msk [vmem:[%s2768 + $0x18] sm:$0xff] %vm718, %v2765
  %2773 = vmatprep.subr.mxu0 0.0
  %2774 = vmatpush1.msra.mxu0 %v1179
  %2775 = vmatprep.subr.mxu0 0.0
  %2776 = vmatpush1.msra.mxu0 %v1315
  %2777 = vmatprep.subr.mxu0 0.0
  %2778 = vmatpush1.msra.mxu0 0.0
  %2779 = vmatprep.subr.mxu0 0.0
  %2780 = vmatpush1.msra.mxu0 0.0
  %2781 = vmatprep.subr.mxu0 0.0
  %2782 = vmatpush1.msra.mxu0 0.0
  %2783 = vmatprep.subr.mxu0 0.0
  %2784 = vmatpush1.msra.mxu0 0.0
  %2785 = vmatprep.subr.mxu0 0.0
  %2786 = vmatpush1.msra.mxu0 0.0
  %2787 = vmatprep.subr.mxu0 0.0
  %2788 = vmatpush1.msra.mxu0 0.0
  %2789 = vmatprep.subr.mxu0 0.0
  %2790 = vmatpush1.msra.mxu0 0.0
  %2791 = vmatprep.subr.mxu0 0.0
  %2792 = vmatpush1.msra.mxu0 0.0
  %2793 = vmatprep.subr.mxu0 0.0
  %2794 = vmatpush1.msra.mxu0 0.0
  %2795 = vmatprep.subr.mxu0 0.0
  %2796 = vmatpush1.msra.mxu0 0.0
  %2797 = vmatprep.subr.mxu0 0.0
  %2798 = vmatpush1.msra.mxu0 0.0
  %2799 = vmatprep.subr.mxu0 0.0
  %2800 = vmatpush1.msra.mxu0 0.0
  %2801 = vmatprep.subr.mxu0 0.0
  %2802 = vmatpush1.msra.mxu0 0.0
  %2803 = vmatprep.subr.mxu0 0.0
  %2804 = vmatpush1.msra.mxu0 0.0
  %2805 = vmatprep.subr.mxu0 0.0
  %2806 = vmatpush1.msra.mxu0 0.0
  %2807 = vmatprep.subr.mxu0 0.0
  %2808 = vmatpush1.msra.mxu0 0.0
  %2809 = vmatprep.subr.mxu0 0.0
  %2810 = vmatpush1.msra.mxu0 0.0
  %2811 = vmatprep.subr.mxu0 0.0
  %2812 = vmatpush1.msra.mxu0 0.0
  %2813 = vmatprep.subr.mxu0 0.0
  %2814 = vmatpush1.msra.mxu0 0.0
  %2815 = vmatprep.subr.mxu0 0.0
  %2816 = vmatpush1.msra.mxu0 0.0
  %2817 = vmatprep.subr.mxu0 0.0
  %2818 = vmatpush1.msra.mxu0 0.0
  %2819 = vmatprep.subr.mxu0 0.0
  %2820 = vmatpush1.msra.mxu0 0.0
  %2821 = vmatprep.subr.mxu0 0.0
  %2822 = vmatpush1.msra.mxu0 0.0
  %2823 = vmatprep.subr.mxu0 0.0
  %2824 = vmatpush1.msra.mxu0 0.0
  %2825 = vmatprep.subr.mxu0 0.0
  %2826 = vmatpush1.msra.mxu0 0.0
  %2827 = vmatprep.subr.mxu0 0.0
  %2828 = vmatpush1.msra.mxu0 0.0
  %2829 = vmatprep.subr.mxu0 0.0
  %2830 = vmatpush1.msra.mxu0 0.0
  %2831 = vmatprep.subr.mxu0 0.0
  %2832 = vmatpush1.msra.mxu0 0.0
  %2833 = vmatprep.subr.mxu0 0.0
  %2834 = vmatpush1.msra.mxu0 0.0
  %2835 = vmatprep.subr.mxu0 0.0
  %2836 = vmatpush1.msra.mxu0 0.0
  %2837 = vmatprep.mubr.f32.mxu0 0.0
  %2838 = vmatmul.mubr.f32.gmra.mrb[0].mxu0 %v2133
  %v2839 = vpop.f32.mrb[0].mxu0
  %v2840 = vadd.f32 0.0, %v2839
  %v2841 = vpop.f32.mrb[0].mxu0
  %2842 = vmatprep.mubr.f32.mxu0 0.0
  %2843 = vmatmul.mubr.f32.gmra.mrb[0].mxu0 %v2136
  %v2844 = vpop.f32.mrb[0].mxu0
  %v2845 = vadd.f32 0.0, %v2844
  %v2846 = vpop.f32.mrb[0].mxu0
  %2847 = vmatprep.mubr.f32.mxu0 0.0
  %2848 = vmatmul.mubr.f32.gmra.mrb[0].mxu0 %v2139
  %v2849 = vpop.f32.mrb[0].mxu0
  %v2850 = vadd.f32 0.0, %v2849
  %v2851 = vpop.f32.mrb[0].mxu0
  %2852 = vmatprep.mubr.f32.mxu0 0.0
  %2853 = vmatmul.mubr.f32.gmra.mrb[0].mxu0 %v2142
  %v2854 = vpop.f32.mrb[0].mxu0
  %v2855 = vadd.f32 0.0, %v2854
  %v2856 = vpop.f32.mrb[0].mxu0
  %2857 = vdwg.mxu0
  %s2858 = scalar_lea.vmem %s3, 224
  %2859 = vst.msk [vmem:[%s2858] sm:$0xff] %vm718, %v2840
  %2860 = vst.msk [vmem:[%s2858 + $0x8] sm:$0xff] %vm718, %v2845
  %2861 = vst.msk [vmem:[%s2858 + $0x10] sm:$0xff] %vm718, %v2850
  %2862 = vst.msk [vmem:[%s2858 + $0x18] sm:$0xff] %vm718, %v2855
  %2863 = vmatprep.subr.mxu0 0.0
  %2864 = vmatpush1.msra.mxu0 %v1444
  %2865 = vmatprep.subr.mxu0 0.0
  %2866 = vmatpush1.msra.mxu0 %v1580
  %2867 = vmatprep.subr.mxu0 0.0
  %2868 = vmatpush1.msra.mxu0 0.0
  %2869 = vmatprep.subr.mxu0 0.0
  %2870 = vmatpush1.msra.mxu0 0.0
  %2871 = vmatprep.subr.mxu0 0.0
  %2872 = vmatpush1.msra.mxu0 0.0
  %2873 = vmatprep.subr.mxu0 0.0
  %2874 = vmatpush1.msra.mxu0 0.0
  %2875 = vmatprep.subr.mxu0 0.0
  %2876 = vmatpush1.msra.mxu0 0.0
  %2877 = vmatprep.subr.mxu0 0.0
  %2878 = vmatpush1.msra.mxu0 0.0
  %2879 = vmatprep.subr.mxu0 0.0
  %2880 = vmatpush1.msra.mxu0 0.0
  %2881 = vmatprep.subr.mxu0 0.0
  %2882 = vmatpush1.msra.mxu0 0.0
  %2883 = vmatprep.subr.mxu0 0.0
  %2884 = vmatpush1.msra.mxu0 0.0
  %2885 = vmatprep.subr.mxu0 0.0
  %2886 = vmatpush1.msra.mxu0 0.0
  %2887 = vmatprep.subr.mxu0 0.0
  %2888 = vmatpush1.msra.mxu0 0.0
  %2889 = vmatprep.subr.mxu0 0.0
  %2890 = vmatpush1.msra.mxu0 0.0
  %2891 = vmatprep.subr.mxu0 0.0
  %2892 = vmatpush1.msra.mxu0 0.0
  %2893 = vmatprep.subr.mxu0 0.0
  %2894 = vmatpush1.msra.mxu0 0.0
  %2895 = vmatprep.subr.mxu0 0.0
  %2896 = vmatpush1.msra.mxu0 0.0
  %2897 = vmatprep.subr.mxu0 0.0
  %2898 = vmatpush1.msra.mxu0 0.0
  %2899 = vmatprep.subr.mxu0 0.0
  %2900 = vmatpush1.msra.mxu0 0.0
  %2901 = vmatprep.subr.mxu0 0.0
  %2902 = vmatpush1.msra.mxu0 0.0
  %2903 = vmatprep.subr.mxu0 0.0
  %2904 = vmatpush1.msra.mxu0 0.0
  %2905 = vmatprep.subr.mxu0 0.0
  %2906 = vmatpush1.msra.mxu0 0.0
  %2907 = vmatprep.subr.mxu0 0.0
  %2908 = vmatpush1.msra.mxu0 0.0
  %2909 = vmatprep.subr.mxu0 0.0
  %2910 = vmatpush1.msra.mxu0 0.0
  %2911 = vmatprep.subr.mxu0 0.0
  %2912 = vmatpush1.msra.mxu0 0.0
  %2913 = vmatprep.subr.mxu0 0.0
  %2914 = vmatpush1.msra.mxu0 0.0
  %2915 = vmatprep.subr.mxu0 0.0
  %2916 = vmatpush1.msra.mxu0 0.0
  %2917 = vmatprep.subr.mxu0 0.0
  %2918 = vmatpush1.msra.mxu0 0.0
  %2919 = vmatprep.subr.mxu0 0.0
  %2920 = vmatpush1.msra.mxu0 0.0
  %2921 = vmatprep.subr.mxu0 0.0
  %2922 = vmatpush1.msra.mxu0 0.0
  %2923 = vmatprep.subr.mxu0 0.0
  %2924 = vmatpush1.msra.mxu0 0.0
  %2925 = vmatprep.subr.mxu0 0.0
  %2926 = vmatpush1.msra.mxu0 0.0
  %2927 = vmatprep.mubr.f32.mxu0 0.0
  %2928 = vmatmul.mubr.f32.gmra.mrb[0].mxu0 %v2133
  %v2929 = vpop.f32.mrb[0].mxu0
  %v2930 = vadd.f32 0.0, %v2929
  %v2931 = vpop.f32.mrb[0].mxu0
  %2932 = vmatprep.mubr.f32.mxu0 0.0
  %2933 = vmatmul.mubr.f32.gmra.mrb[0].mxu0 %v2136
  %v2934 = vpop.f32.mrb[0].mxu0
  %v2935 = vadd.f32 0.0, %v2934
  %v2936 = vpop.f32.mrb[0].mxu0
  %2937 = vmatprep.mubr.f32.mxu0 0.0
  %2938 = vmatmul.mubr.f32.gmra.mrb[0].mxu0 %v2139
  %v2939 = vpop.f32.mrb[0].mxu0
  %v2940 = vadd.f32 0.0, %v2939
  %v2941 = vpop.f32.mrb[0].mxu0
  %2942 = vmatprep.mubr.f32.mxu0 0.0
  %2943 = vmatmul.mubr.f32.gmra.mrb[0].mxu0 %v2142
  %v2944 = vpop.f32.mrb[0].mxu0
  %v2945 = vadd.f32 0.0, %v2944
  %v2946 = vpop.f32.mrb[0].mxu0
  %2947 = vdwg.mxu0
  %s2948 = scalar_lea.vmem %s3, 256
  %2949 = vst.msk [vmem:[%s2948] sm:$0xff] %vm718, %v2930
  %2950 = vst.msk [vmem:[%s2948 + $0x8] sm:$0xff] %vm718, %v2935
  %2951 = vst.msk [vmem:[%s2948 + $0x10] sm:$0xff] %vm718, %v2940
  %2952 = vst.msk [vmem:[%s2948 + $0x18] sm:$0xff] %vm718, %v2945
  %2953 = vmatprep.subr.mxu0 0.0
  %2954 = vmatpush1.msra.mxu0 %v1445
  %2955 = vmatprep.subr.mxu0 0.0
  %2956 = vmatpush1.msra.mxu0 %v1581
  %2957 = vmatprep.subr.mxu0 0.0
  %2958 = vmatpush1.msra.mxu0 0.0
  %2959 = vmatprep.subr.mxu0 0.0
  %2960 = vmatpush1.msra.mxu0 0.0
  %2961 = vmatprep.subr.mxu0 0.0
  %2962 = vmatpush1.msra.mxu0 0.0
  %2963 = vmatprep.subr.mxu0 0.0
  %2964 = vmatpush1.msra.mxu0 0.0
  %2965 = vmatprep.subr.mxu0 0.0
  %2966 = vmatpush1.msra.mxu0 0.0
  %2967 = vmatprep.subr.mxu0 0.0
  %2968 = vmatpush1.msra.mxu0 0.0
  %2969 = vmatprep.subr.mxu0 0.0
  %2970 = vmatpush1.msra.mxu0 0.0
  %2971 = vmatprep.subr.mxu0 0.0
  %2972 = vmatpush1.msra.mxu0 0.0
  %2973 = vmatprep.subr.mxu0 0.0
  %2974 = vmatpush1.msra.mxu0 0.0
  %2975 = vmatprep.subr.mxu0 0.0
  %2976 = vmatpush1.msra.mxu0 0.0
  %2977 = vmatprep.subr.mxu0 0.0
  %2978 = vmatpush1.msra.mxu0 0.0
  %2979 = vmatprep.subr.mxu0 0.0
  %2980 = vmatpush1.msra.mxu0 0.0
  %2981 = vmatprep.subr.mxu0 0.0
  %2982 = vmatpush1.msra.mxu0 0.0
  %2983 = vmatprep.subr.mxu0 0.0
  %2984 = vmatpush1.msra.mxu0 0.0
  %2985 = vmatprep.subr.mxu0 0.0
  %2986 = vmatpush1.msra.mxu0 0.0
  %2987 = vmatprep.subr.mxu0 0.0
  %2988 = vmatpush1.msra.mxu0 0.0
  %2989 = vmatprep.subr.mxu0 0.0
  %2990 = vmatpush1.msra.mxu0 0.0
  %2991 = vmatprep.subr.mxu0 0.0
  %2992 = vmatpush1.msra.mxu0 0.0
  %2993 = vmatprep.subr.mxu0 0.0
  %2994 = vmatpush1.msra.mxu0 0.0
  %2995 = vmatprep.subr.mxu0 0.0
  %2996 = vmatpush1.msra.mxu0 0.0
  %2997 = vmatprep.subr.mxu0 0.0
  %2998 = vmatpush1.msra.mxu0 0.0
  %2999 = vmatprep.subr.mxu0 0.0
  %3000 = vmatpush1.msra.mxu0 0.0
  %3001 = vmatprep.subr.mxu0 0.0
  %3002 = vmatpush1.msra.mxu0 0.0
  %3003 = vmatprep.subr.mxu0 0.0
  %3004 = vmatpush1.msra.mxu0 0.0
  %3005 = vmatprep.subr.mxu0 0.0
  %3006 = vmatpush1.msra.mxu0 0.0
  %3007 = vmatprep.subr.mxu0 0.0
  %3008 = vmatpush1.msra.mxu0 0.0
  %3009 = vmatprep.subr.mxu0 0.0
  %3010 = vmatpush1.msra.mxu0 0.0
  %3011 = vmatprep.subr.mxu0 0.0
  %3012 = vmatpush1.msra.mxu0 0.0
  %3013 = vmatprep.subr.mxu0 0.0
  %3014 = vmatpush1.msra.mxu0 0.0
  %3015 = vmatprep.subr.mxu0 0.0
  %3016 = vmatpush1.msra.mxu0 0.0
  %3017 = vmatprep.mubr.f32.mxu0 0.0
  %3018 = vmatmul.mubr.f32.gmra.mrb[0].mxu0 %v2133
  %v3019 = vpop.f32.mrb[0].mxu0
  %v3020 = vadd.f32 0.0, %v3019
  %v3021 = vpop.f32.mrb[0].mxu0
  %3022 = vmatprep.mubr.f32.mxu0 0.0
  %3023 = vmatmul.mubr.f32.gmra.mrb[0].mxu0 %v2136
  %v3024 = vpop.f32.mrb[0].mxu0
  %v3025 = vadd.f32 0.0, %v3024
  %v3026 = vpop.f32.mrb[0].mxu0
  %3027 = vmatprep.mubr.f32.mxu0 0.0
  %3028 = vmatmul.mubr.f32.gmra.mrb[0].mxu0 %v2139
  %v3029 = vpop.f32.mrb[0].mxu0
  %v3030 = vadd.f32 0.0, %v3029
  %v3031 = vpop.f32.mrb[0].mxu0
  %3032 = vmatprep.mubr.f32.mxu0 0.0
  %3033 = vmatmul.mubr.f32.gmra.mrb[0].mxu0 %v2142
  %v3034 = vpop.f32.mrb[0].mxu0
  %v3035 = vadd.f32 0.0, %v3034
  %v3036 = vpop.f32.mrb[0].mxu0
  %3037 = vdwg.mxu0
  %s3038 = scalar_lea.vmem %s3, 288
  %3039 = vst.msk [vmem:[%s3038] sm:$0xff] %vm718, %v3020
  %3040 = vst.msk [vmem:[%s3038 + $0x8] sm:$0xff] %vm718, %v3025
  %3041 = vst.msk [vmem:[%s3038 + $0x10] sm:$0xff] %vm718, %v3030
  %3042 = vst.msk [vmem:[%s3038 + $0x18] sm:$0xff] %vm718, %v3035
  %3043 = vmatprep.subr.mxu0 0.0
  %3044 = vmatpush1.msra.mxu0 %v1446
  %3045 = vmatprep.subr.mxu0 0.0
  %3046 = vmatpush1.msra.mxu0 %v1582
  %3047 = vmatprep.subr.mxu0 0.0
  %3048 = vmatpush1.msra.mxu0 0.0
  %3049 = vmatprep.subr.mxu0 0.0
  %3050 = vmatpush1.msra.mxu0 0.0
  %3051 = vmatprep.subr.mxu0 0.0
  %3052 = vmatpush1.msra.mxu0 0.0
  %3053 = vmatprep.subr.mxu0 0.0
  %3054 = vmatpush1.msra.mxu0 0.0
  %3055 = vmatprep.subr.mxu0 0.0
  %3056 = vmatpush1.msra.mxu0 0.0
  %3057 = vmatprep.subr.mxu0 0.0
  %3058 = vmatpush1.msra.mxu0 0.0
  %3059 = vmatprep.subr.mxu0 0.0
  %3060 = vmatpush1.msra.mxu0 0.0
  %3061 = vmatprep.subr.mxu0 0.0
  %3062 = vmatpush1.msra.mxu0 0.0
  %3063 = vmatprep.subr.mxu0 0.0
  %3064 = vmatpush1.msra.mxu0 0.0
  %3065 = vmatprep.subr.mxu0 0.0
  %3066 = vmatpush1.msra.mxu0 0.0
  %3067 = vmatprep.subr.mxu0 0.0
  %3068 = vmatpush1.msra.mxu0 0.0
  %3069 = vmatprep.subr.mxu0 0.0
  %3070 = vmatpush1.msra.mxu0 0.0
  %3071 = vmatprep.subr.mxu0 0.0
  %3072 = vmatpush1.msra.mxu0 0.0
  %3073 = vmatprep.subr.mxu0 0.0
  %3074 = vmatpush1.msra.mxu0 0.0
  %3075 = vmatprep.subr.mxu0 0.0
  %3076 = vmatpush1.msra.mxu0 0.0
  %3077 = vmatprep.subr.mxu0 0.0
  %3078 = vmatpush1.msra.mxu0 0.0
  %3079 = vmatprep.subr.mxu0 0.0
  %3080 = vmatpush1.msra.mxu0 0.0
  %3081 = vmatprep.subr.mxu0 0.0
  %3082 = vmatpush1.msra.mxu0 0.0
  %3083 = vmatprep.subr.mxu0 0.0
  %3084 = vmatpush1.msra.mxu0 0.0
  %3085 = vmatprep.subr.mxu0 0.0
  %3086 = vmatpush1.msra.mxu0 0.0
  %3087 = vmatprep.subr.mxu0 0.0
  %3088 = vmatpush1.msra.mxu0 0.0
  %3089 = vmatprep.subr.mxu0 0.0
  %3090 = vmatpush1.msra.mxu0 0.0
  %3091 = vmatprep.subr.mxu0 0.0
  %3092 = vmatpush1.msra.mxu0 0.0
  %3093 = vmatprep.subr.mxu0 0.0
  %3094 = vmatpush1.msra.mxu0 0.0
  %3095 = vmatprep.subr.mxu0 0.0
  %3096 = vmatpush1.msra.mxu0 0.0
  %3097 = vmatprep.subr.mxu0 0.0
  %3098 = vmatpush1.msra.mxu0 0.0
  %3099 = vmatprep.subr.mxu0 0.0
  %3100 = vmatpush1.msra.mxu0 0.0
  %3101 = vmatprep.subr.mxu0 0.0
  %3102 = vmatpush1.msra.mxu0 0.0
  %3103 = vmatprep.subr.mxu0 0.0
  %3104 = vmatpush1.msra.mxu0 0.0
  %3105 = vmatprep.subr.mxu0 0.0
  %3106 = vmatpush1.msra.mxu0 0.0
  %3107 = vmatprep.mubr.f32.mxu0 0.0
  %3108 = vmatmul.mubr.f32.gmra.mrb[0].mxu0 %v2133
  %v3109 = vpop.f32.mrb[0].mxu0
  %v3110 = vadd.f32 0.0, %v3109
  %v3111 = vpop.f32.mrb[0].mxu0
  %3112 = vmatprep.mubr.f32.mxu0 0.0
  %3113 = vmatmul.mubr.f32.gmra.mrb[0].mxu0 %v2136
  %v3114 = vpop.f32.mrb[0].mxu0
  %v3115 = vadd.f32 0.0, %v3114
  %v3116 = vpop.f32.mrb[0].mxu0
  %3117 = vmatprep.mubr.f32.mxu0 0.0
  %3118 = vmatmul.mubr.f32.gmra.mrb[0].mxu0 %v2139
  %v3119 = vpop.f32.mrb[0].mxu0
  %v3120 = vadd.f32 0.0, %v3119
  %v3121 = vpop.f32.mrb[0].mxu0
  %3122 = vmatprep.mubr.f32.mxu0 0.0
  %3123 = vmatmul.mubr.f32.gmra.mrb[0].mxu0 %v2142
  %v3124 = vpop.f32.mrb[0].mxu0
  %v3125 = vadd.f32 0.0, %v3124
  %v3126 = vpop.f32.mrb[0].mxu0
  %3127 = vdwg.mxu0
  %s3128 = scalar_lea.vmem %s3, 320
  %3129 = vst.msk [vmem:[%s3128] sm:$0xff] %vm718, %v3110
  %3130 = vst.msk [vmem:[%s3128 + $0x8] sm:$0xff] %vm718, %v3115
  %3131 = vst.msk [vmem:[%s3128 + $0x10] sm:$0xff] %vm718, %v3120
  %3132 = vst.msk [vmem:[%s3128 + $0x18] sm:$0xff] %vm718, %v3125
  %3133 = vmatprep.subr.mxu0 0.0
  %3134 = vmatpush1.msra.mxu0 %v1447
  %3135 = vmatprep.subr.mxu0 0.0
  %3136 = vmatpush1.msra.mxu0 %v1583
  %3137 = vmatprep.subr.mxu0 0.0
  %3138 = vmatpush1.msra.mxu0 0.0
  %3139 = vmatprep.subr.mxu0 0.0
  %3140 = vmatpush1.msra.mxu0 0.0
  %3141 = vmatprep.subr.mxu0 0.0
  %3142 = vmatpush1.msra.mxu0 0.0
  %3143 = vmatprep.subr.mxu0 0.0
  %3144 = vmatpush1.msra.mxu0 0.0
  %3145 = vmatprep.subr.mxu0 0.0
  %3146 = vmatpush1.msra.mxu0 0.0
  %3147 = vmatprep.subr.mxu0 0.0
  %3148 = vmatpush1.msra.mxu0 0.0
  %3149 = vmatprep.subr.mxu0 0.0
  %3150 = vmatpush1.msra.mxu0 0.0
  %3151 = vmatprep.subr.mxu0 0.0
  %3152 = vmatpush1.msra.mxu0 0.0
  %3153 = vmatprep.subr.mxu0 0.0
  %3154 = vmatpush1.msra.mxu0 0.0
  %3155 = vmatprep.subr.mxu0 0.0
  %3156 = vmatpush1.msra.mxu0 0.0
  %3157 = vmatprep.subr.mxu0 0.0
  %3158 = vmatpush1.msra.mxu0 0.0
  %3159 = vmatprep.subr.mxu0 0.0
  %3160 = vmatpush1.msra.mxu0 0.0
  %3161 = vmatprep.subr.mxu0 0.0
  %3162 = vmatpush1.msra.mxu0 0.0
  %3163 = vmatprep.subr.mxu0 0.0
  %3164 = vmatpush1.msra.mxu0 0.0
  %3165 = vmatprep.subr.mxu0 0.0
  %3166 = vmatpush1.msra.mxu0 0.0
  %3167 = vmatprep.subr.mxu0 0.0
  %3168 = vmatpush1.msra.mxu0 0.0
  %3169 = vmatprep.subr.mxu0 0.0
  %3170 = vmatpush1.msra.mxu0 0.0
  %3171 = vmatprep.subr.mxu0 0.0
  %3172 = vmatpush1.msra.mxu0 0.0
  %3173 = vmatprep.subr.mxu0 0.0
  %3174 = vmatpush1.msra.mxu0 0.0
  %3175 = vmatprep.subr.mxu0 0.0
  %3176 = vmatpush1.msra.mxu0 0.0
  %3177 = vmatprep.subr.mxu0 0.0
  %3178 = vmatpush1.msra.mxu0 0.0
  %3179 = vmatprep.subr.mxu0 0.0
  %3180 = vmatpush1.msra.mxu0 0.0
  %3181 = vmatprep.subr.mxu0 0.0
  %3182 = vmatpush1.msra.mxu0 0.0
  %3183 = vmatprep.subr.mxu0 0.0
  %3184 = vmatpush1.msra.mxu0 0.0
  %3185 = vmatprep.subr.mxu0 0.0
  %3186 = vmatpush1.msra.mxu0 0.0
  %3187 = vmatprep.subr.mxu0 0.0
  %3188 = vmatpush1.msra.mxu0 0.0
  %3189 = vmatprep.subr.mxu0 0.0
  %3190 = vmatpush1.msra.mxu0 0.0
  %3191 = vmatprep.subr.mxu0 0.0
  %3192 = vmatpush1.msra.mxu0 0.0
  %3193 = vmatprep.subr.mxu0 0.0
  %3194 = vmatpush1.msra.mxu0 0.0
  %3195 = vmatprep.subr.mxu0 0.0
  %3196 = vmatpush1.msra.mxu0 0.0
  %3197 = vmatprep.mubr.f32.mxu0 0.0
  %3198 = vmatmul.mubr.f32.gmra.mrb[0].mxu0 %v2133
  %v3199 = vpop.f32.mrb[0].mxu0
  %v3200 = vadd.f32 0.0, %v3199
  %v3201 = vpop.f32.mrb[0].mxu0
  %3202 = vmatprep.mubr.f32.mxu0 0.0
  %3203 = vmatmul.mubr.f32.gmra.mrb[0].mxu0 %v2136
  %v3204 = vpop.f32.mrb[0].mxu0
  %v3205 = vadd.f32 0.0, %v3204
  %v3206 = vpop.f32.mrb[0].mxu0
  %3207 = vmatprep.mubr.f32.mxu0 0.0
  %3208 = vmatmul.mubr.f32.gmra.mrb[0].mxu0 %v2139
  %v3209 = vpop.f32.mrb[0].mxu0
  %v3210 = vadd.f32 0.0, %v3209
  %v3211 = vpop.f32.mrb[0].mxu0
  %3212 = vmatprep.mubr.f32.mxu0 0.0
  %3213 = vmatmul.mubr.f32.gmra.mrb[0].mxu0 %v2142
  %v3214 = vpop.f32.mrb[0].mxu0
  %v3215 = vadd.f32 0.0, %v3214
  %v3216 = vpop.f32.mrb[0].mxu0
  %3217 = vdwg.mxu0
  %s3218 = scalar_lea.vmem %s3, 352
  %3219 = vst.msk [vmem:[%s3218] sm:$0xff] %vm718, %v3200
  %3220 = vst.msk [vmem:[%s3218 + $0x8] sm:$0xff] %vm718, %v3205
  %3221 = vst.msk [vmem:[%s3218 + $0x10] sm:$0xff] %vm718, %v3210
  %3222 = vst.msk [vmem:[%s3218 + $0x18] sm:$0xff] %vm718, %v3215
  %3223 = vmatprep.subr.mxu0 0.0
  %3224 = vmatpush1.msra.mxu0 %v1448
  %3225 = vmatprep.subr.mxu0 0.0
  %3226 = vmatpush1.msra.mxu0 %v1584
  %3227 = vmatprep.subr.mxu0 0.0
  %3228 = vmatpush1.msra.mxu0 0.0
  %3229 = vmatprep.subr.mxu0 0.0
  %3230 = vmatpush1.msra.mxu0 0.0
  %3231 = vmatprep.subr.mxu0 0.0
  %3232 = vmatpush1.msra.mxu0 0.0
  %3233 = vmatprep.subr.mxu0 0.0
  %3234 = vmatpush1.msra.mxu0 0.0
  %3235 = vmatprep.subr.mxu0 0.0
  %3236 = vmatpush1.msra.mxu0 0.0
  %3237 = vmatprep.subr.mxu0 0.0
  %3238 = vmatpush1.msra.mxu0 0.0
  %3239 = vmatprep.subr.mxu0 0.0
  %3240 = vmatpush1.msra.mxu0 0.0
  %3241 = vmatprep.subr.mxu0 0.0
  %3242 = vmatpush1.msra.mxu0 0.0
  %3243 = vmatprep.subr.mxu0 0.0
  %3244 = vmatpush1.msra.mxu0 0.0
  %3245 = vmatprep.subr.mxu0 0.0
  %3246 = vmatpush1.msra.mxu0 0.0
  %3247 = vmatprep.subr.mxu0 0.0
  %3248 = vmatpush1.msra.mxu0 0.0
  %3249 = vmatprep.subr.mxu0 0.0
  %3250 = vmatpush1.msra.mxu0 0.0
  %3251 = vmatprep.subr.mxu0 0.0
  %3252 = vmatpush1.msra.mxu0 0.0
  %3253 = vmatprep.subr.mxu0 0.0
  %3254 = vmatpush1.msra.mxu0 0.0
  %3255 = vmatprep.subr.mxu0 0.0
  %3256 = vmatpush1.msra.mxu0 0.0
  %3257 = vmatprep.subr.mxu0 0.0
  %3258 = vmatpush1.msra.mxu0 0.0
  %3259 = vmatprep.subr.mxu0 0.0
  %3260 = vmatpush1.msra.mxu0 0.0
  %3261 = vmatprep.subr.mxu0 0.0
  %3262 = vmatpush1.msra.mxu0 0.0
  %3263 = vmatprep.subr.mxu0 0.0
  %3264 = vmatpush1.msra.mxu0 0.0
  %3265 = vmatprep.subr.mxu0 0.0
  %3266 = vmatpush1.msra.mxu0 0.0
  %3267 = vmatprep.subr.mxu0 0.0
  %3268 = vmatpush1.msra.mxu0 0.0
  %3269 = vmatprep.subr.mxu0 0.0
  %3270 = vmatpush1.msra.mxu0 0.0
  %3271 = vmatprep.subr.mxu0 0.0
  %3272 = vmatpush1.msra.mxu0 0.0
  %3273 = vmatprep.subr.mxu0 0.0
  %3274 = vmatpush1.msra.mxu0 0.0
  %3275 = vmatprep.subr.mxu0 0.0
  %3276 = vmatpush1.msra.mxu0 0.0
  %3277 = vmatprep.subr.mxu0 0.0
  %3278 = vmatpush1.msra.mxu0 0.0
  %3279 = vmatprep.subr.mxu0 0.0
  %3280 = vmatpush1.msra.mxu0 0.0
  %3281 = vmatprep.subr.mxu0 0.0
  %3282 = vmatpush1.msra.mxu0 0.0
  %3283 = vmatprep.subr.mxu0 0.0
  %3284 = vmatpush1.msra.mxu0 0.0
  %3285 = vmatprep.subr.mxu0 0.0
  %3286 = vmatpush1.msra.mxu0 0.0
  %3287 = vmatprep.mubr.f32.mxu0 0.0
  %3288 = vmatmul.mubr.f32.gmra.mrb[0].mxu0 %v2133
  %v3289 = vpop.f32.mrb[0].mxu0
  %v3290 = vadd.f32 0.0, %v3289
  %v3291 = vpop.f32.mrb[0].mxu0
  %3292 = vmatprep.mubr.f32.mxu0 0.0
  %3293 = vmatmul.mubr.f32.gmra.mrb[0].mxu0 %v2136
  %v3294 = vpop.f32.mrb[0].mxu0
  %v3295 = vadd.f32 0.0, %v3294
  %v3296 = vpop.f32.mrb[0].mxu0
  %3297 = vmatprep.mubr.f32.mxu0 0.0
  %3298 = vmatmul.mubr.f32.gmra.mrb[0].mxu0 %v2139
  %v3299 = vpop.f32.mrb[0].mxu0
  %v3300 = vadd.f32 0.0, %v3299
  %v3301 = vpop.f32.mrb[0].mxu0
  %3302 = vmatprep.mubr.f32.mxu0 0.0
  %3303 = vmatmul.mubr.f32.gmra.mrb[0].mxu0 %v2142
  %v3304 = vpop.f32.mrb[0].mxu0
  %v3305 = vadd.f32 0.0, %v3304
  %v3306 = vpop.f32.mrb[0].mxu0
  %3307 = vdwg.mxu0
  %s3308 = scalar_lea.vmem %s3, 384
  %3309 = vst.msk [vmem:[%s3308] sm:$0xff] %vm718, %v3290
  %3310 = vst.msk [vmem:[%s3308 + $0x8] sm:$0xff] %vm718, %v3295
  %3311 = vst.msk [vmem:[%s3308 + $0x10] sm:$0xff] %vm718, %v3300
  %3312 = vst.msk [vmem:[%s3308 + $0x18] sm:$0xff] %vm718, %v3305
  %3313 = vmatprep.subr.mxu0 0.0
  %3314 = vmatpush1.msra.mxu0 %v1449
  %3315 = vmatprep.subr.mxu0 0.0
  %3316 = vmatpush1.msra.mxu0 %v1585
  %3317 = vmatprep.subr.mxu0 0.0
  %3318 = vmatpush1.msra.mxu0 0.0
  %3319 = vmatprep.subr.mxu0 0.0
  %3320 = vmatpush1.msra.mxu0 0.0
  %3321 = vmatprep.subr.mxu0 0.0
  %3322 = vmatpush1.msra.mxu0 0.0
  %3323 = vmatprep.subr.mxu0 0.0
  %3324 = vmatpush1.msra.mxu0 0.0
  %3325 = vmatprep.subr.mxu0 0.0
  %3326 = vmatpush1.msra.mxu0 0.0
  %3327 = vmatprep.subr.mxu0 0.0
  %3328 = vmatpush1.msra.mxu0 0.0
  %3329 = vmatprep.subr.mxu0 0.0
  %3330 = vmatpush1.msra.mxu0 0.0
  %3331 = vmatprep.subr.mxu0 0.0
  %3332 = vmatpush1.msra.mxu0 0.0
  %3333 = vmatprep.subr.mxu0 0.0
  %3334 = vmatpush1.msra.mxu0 0.0
  %3335 = vmatprep.subr.mxu0 0.0
  %3336 = vmatpush1.msra.mxu0 0.0
  %3337 = vmatprep.subr.mxu0 0.0
  %3338 = vmatpush1.msra.mxu0 0.0
  %3339 = vmatprep.subr.mxu0 0.0
  %3340 = vmatpush1.msra.mxu0 0.0
  %3341 = vmatprep.subr.mxu0 0.0
  %3342 = vmatpush1.msra.mxu0 0.0
  %3343 = vmatprep.subr.mxu0 0.0
  %3344 = vmatpush1.msra.mxu0 0.0
  %3345 = vmatprep.subr.mxu0 0.0
  %3346 = vmatpush1.msra.mxu0 0.0
  %3347 = vmatprep.subr.mxu0 0.0
  %3348 = vmatpush1.msra.mxu0 0.0
  %3349 = vmatprep.subr.mxu0 0.0
  %3350 = vmatpush1.msra.mxu0 0.0
  %3351 = vmatprep.subr.mxu0 0.0
  %3352 = vmatpush1.msra.mxu0 0.0
  %3353 = vmatprep.subr.mxu0 0.0
  %3354 = vmatpush1.msra.mxu0 0.0
  %3355 = vmatprep.subr.mxu0 0.0
  %3356 = vmatpush1.msra.mxu0 0.0
  %3357 = vmatprep.subr.mxu0 0.0
  %3358 = vmatpush1.msra.mxu0 0.0
  %3359 = vmatprep.subr.mxu0 0.0
  %3360 = vmatpush1.msra.mxu0 0.0
  %3361 = vmatprep.subr.mxu0 0.0
  %3362 = vmatpush1.msra.mxu0 0.0
  %3363 = vmatprep.subr.mxu0 0.0
  %3364 = vmatpush1.msra.mxu0 0.0
  %3365 = vmatprep.subr.mxu0 0.0
  %3366 = vmatpush1.msra.mxu0 0.0
  %3367 = vmatprep.subr.mxu0 0.0
  %3368 = vmatpush1.msra.mxu0 0.0
  %3369 = vmatprep.subr.mxu0 0.0
  %3370 = vmatpush1.msra.mxu0 0.0
  %3371 = vmatprep.subr.mxu0 0.0
  %3372 = vmatpush1.msra.mxu0 0.0
  %3373 = vmatprep.subr.mxu0 0.0
  %3374 = vmatpush1.msra.mxu0 0.0
  %3375 = vmatprep.subr.mxu0 0.0
  %3376 = vmatpush1.msra.mxu0 0.0
  %3377 = vmatprep.mubr.f32.mxu0 0.0
  %3378 = vmatmul.mubr.f32.gmra.mrb[0].mxu0 %v2133
  %v3379 = vpop.f32.mrb[0].mxu0
  %v3380 = vadd.f32 0.0, %v3379
  %v3381 = vpop.f32.mrb[0].mxu0
  %3382 = vmatprep.mubr.f32.mxu0 0.0
  %3383 = vmatmul.mubr.f32.gmra.mrb[0].mxu0 %v2136
  %v3384 = vpop.f32.mrb[0].mxu0
  %v3385 = vadd.f32 0.0, %v3384
  %v3386 = vpop.f32.mrb[0].mxu0
  %3387 = vmatprep.mubr.f32.mxu0 0.0
  %3388 = vmatmul.mubr.f32.gmra.mrb[0].mxu0 %v2139
  %v3389 = vpop.f32.mrb[0].mxu0
  %v3390 = vadd.f32 0.0, %v3389
  %v3391 = vpop.f32.mrb[0].mxu0
  %3392 = vmatprep.mubr.f32.mxu0 0.0
  %3393 = vmatmul.mubr.f32.gmra.mrb[0].mxu0 %v2142
  %v3394 = vpop.f32.mrb[0].mxu0
  %v3395 = vadd.f32 0.0, %v3394
  %v3396 = vpop.f32.mrb[0].mxu0
  %3397 = vdwg.mxu0
  %s3398 = scalar_lea.vmem %s3, 416
  %3399 = vst.msk [vmem:[%s3398] sm:$0xff] %vm718, %v3380
  %3400 = vst.msk [vmem:[%s3398 + $0x8] sm:$0xff] %vm718, %v3385
  %3401 = vst.msk [vmem:[%s3398 + $0x10] sm:$0xff] %vm718, %v3390
  %3402 = vst.msk [vmem:[%s3398 + $0x18] sm:$0xff] %vm718, %v3395
  %3403 = vmatprep.subr.mxu0 0.0
  %3404 = vmatpush1.msra.mxu0 %v1450
  %3405 = vmatprep.subr.mxu0 0.0
  %3406 = vmatpush1.msra.mxu0 %v1586
  %3407 = vmatprep.subr.mxu0 0.0
  %3408 = vmatpush1.msra.mxu0 0.0
  %3409 = vmatprep.subr.mxu0 0.0
  %3410 = vmatpush1.msra.mxu0 0.0
  %3411 = vmatprep.subr.mxu0 0.0
  %3412 = vmatpush1.msra.mxu0 0.0
  %3413 = vmatprep.subr.mxu0 0.0
  %3414 = vmatpush1.msra.mxu0 0.0
  %3415 = vmatprep.subr.mxu0 0.0
  %3416 = vmatpush1.msra.mxu0 0.0
  %3417 = vmatprep.subr.mxu0 0.0
  %3418 = vmatpush1.msra.mxu0 0.0
  %3419 = vmatprep.subr.mxu0 0.0
  %3420 = vmatpush1.msra.mxu0 0.0
  %3421 = vmatprep.subr.mxu0 0.0
  %3422 = vmatpush1.msra.mxu0 0.0
  %3423 = vmatprep.subr.mxu0 0.0
  %3424 = vmatpush1.msra.mxu0 0.0
  %3425 = vmatprep.subr.mxu0 0.0
  %3426 = vmatpush1.msra.mxu0 0.0
  %3427 = vmatprep.subr.mxu0 0.0
  %3428 = vmatpush1.msra.mxu0 0.0
  %3429 = vmatprep.subr.mxu0 0.0
  %3430 = vmatpush1.msra.mxu0 0.0
  %3431 = vmatprep.subr.mxu0 0.0
  %3432 = vmatpush1.msra.mxu0 0.0
  %3433 = vmatprep.subr.mxu0 0.0
  %3434 = vmatpush1.msra.mxu0 0.0
  %3435 = vmatprep.subr.mxu0 0.0
  %3436 = vmatpush1.msra.mxu0 0.0
  %3437 = vmatprep.subr.mxu0 0.0
  %3438 = vmatpush1.msra.mxu0 0.0
  %3439 = vmatprep.subr.mxu0 0.0
  %3440 = vmatpush1.msra.mxu0 0.0
  %3441 = vmatprep.subr.mxu0 0.0
  %3442 = vmatpush1.msra.mxu0 0.0
  %3443 = vmatprep.subr.mxu0 0.0
  %3444 = vmatpush1.msra.mxu0 0.0
  %3445 = vmatprep.subr.mxu0 0.0
  %3446 = vmatpush1.msra.mxu0 0.0
  %3447 = vmatprep.subr.mxu0 0.0
  %3448 = vmatpush1.msra.mxu0 0.0
  %3449 = vmatprep.subr.mxu0 0.0
  %3450 = vmatpush1.msra.mxu0 0.0
  %3451 = vmatprep.subr.mxu0 0.0
  %3452 = vmatpush1.msra.mxu0 0.0
  %3453 = vmatprep.subr.mxu0 0.0
  %3454 = vmatpush1.msra.mxu0 0.0
  %3455 = vmatprep.subr.mxu0 0.0
  %3456 = vmatpush1.msra.mxu0 0.0
  %3457 = vmatprep.subr.mxu0 0.0
  %3458 = vmatpush1.msra.mxu0 0.0
  %3459 = vmatprep.subr.mxu0 0.0
  %3460 = vmatpush1.msra.mxu0 0.0
  %3461 = vmatprep.subr.mxu0 0.0
  %3462 = vmatpush1.msra.mxu0 0.0
  %3463 = vmatprep.subr.mxu0 0.0
  %3464 = vmatpush1.msra.mxu0 0.0
  %3465 = vmatprep.subr.mxu0 0.0
  %3466 = vmatpush1.msra.mxu0 0.0
  %3467 = vmatprep.mubr.f32.mxu0 0.0
  %3468 = vmatmul.mubr.f32.gmra.mrb[0].mxu0 %v2133
  %v3469 = vpop.f32.mrb[0].mxu0
  %v3470 = vadd.f32 0.0, %v3469
  %v3471 = vpop.f32.mrb[0].mxu0
  %3472 = vmatprep.mubr.f32.mxu0 0.0
  %3473 = vmatmul.mubr.f32.gmra.mrb[0].mxu0 %v2136
  %v3474 = vpop.f32.mrb[0].mxu0
  %v3475 = vadd.f32 0.0, %v3474
  %v3476 = vpop.f32.mrb[0].mxu0
  %3477 = vmatprep.mubr.f32.mxu0 0.0
  %3478 = vmatmul.mubr.f32.gmra.mrb[0].mxu0 %v2139
  %v3479 = vpop.f32.mrb[0].mxu0
  %v3480 = vadd.f32 0.0, %v3479
  %v3481 = vpop.f32.mrb[0].mxu0
  %3482 = vmatprep.mubr.f32.mxu0 0.0
  %3483 = vmatmul.mubr.f32.gmra.mrb[0].mxu0 %v2142
  %v3484 = vpop.f32.mrb[0].mxu0
  %v3485 = vadd.f32 0.0, %v3484
  %v3486 = vpop.f32.mrb[0].mxu0
  %3487 = vdwg.mxu0
  %s3488 = scalar_lea.vmem %s3, 448
  %3489 = vst.msk [vmem:[%s3488] sm:$0xff] %vm718, %v3470
  %3490 = vst.msk [vmem:[%s3488 + $0x8] sm:$0xff] %vm718, %v3475
  %3491 = vst.msk [vmem:[%s3488 + $0x10] sm:$0xff] %vm718, %v3480
  %3492 = vst.msk [vmem:[%s3488 + $0x18] sm:$0xff] %vm718, %v3485
  %3493 = vmatprep.subr.mxu0 0.0
  %3494 = vmatpush1.msra.mxu0 %v1451
  %3495 = vmatprep.subr.mxu0 0.0
  %3496 = vmatpush1.msra.mxu0 %v1587
  %3497 = vmatprep.subr.mxu0 0.0
  %3498 = vmatpush1.msra.mxu0 0.0
  %3499 = vmatprep.subr.mxu0 0.0
  %3500 = vmatpush1.msra.mxu0 0.0
  %3501 = vmatprep.subr.mxu0 0.0
  %3502 = vmatpush1.msra.mxu0 0.0
  %3503 = vmatprep.subr.mxu0 0.0
  %3504 = vmatpush1.msra.mxu0 0.0
  %3505 = vmatprep.subr.mxu0 0.0
  %3506 = vmatpush1.msra.mxu0 0.0
  %3507 = vmatprep.subr.mxu0 0.0
  %3508 = vmatpush1.msra.mxu0 0.0
  %3509 = vmatprep.subr.mxu0 0.0
  %3510 = vmatpush1.msra.mxu0 0.0
  %3511 = vmatprep.subr.mxu0 0.0
  %3512 = vmatpush1.msra.mxu0 0.0
  %3513 = vmatprep.subr.mxu0 0.0
  %3514 = vmatpush1.msra.mxu0 0.0
  %3515 = vmatprep.subr.mxu0 0.0
  %3516 = vmatpush1.msra.mxu0 0.0
  %3517 = vmatprep.subr.mxu0 0.0
  %3518 = vmatpush1.msra.mxu0 0.0
  %3519 = vmatprep.subr.mxu0 0.0
  %3520 = vmatpush1.msra.mxu0 0.0
  %3521 = vmatprep.subr.mxu0 0.0
  %3522 = vmatpush1.msra.mxu0 0.0
  %3523 = vmatprep.subr.mxu0 0.0
  %3524 = vmatpush1.msra.mxu0 0.0
  %3525 = vmatprep.subr.mxu0 0.0
  %3526 = vmatpush1.msra.mxu0 0.0
  %3527 = vmatprep.subr.mxu0 0.0
  %3528 = vmatpush1.msra.mxu0 0.0
  %3529 = vmatprep.subr.mxu0 0.0
  %3530 = vmatpush1.msra.mxu0 0.0
  %3531 = vmatprep.subr.mxu0 0.0
  %3532 = vmatpush1.msra.mxu0 0.0
  %3533 = vmatprep.subr.mxu0 0.0
  %3534 = vmatpush1.msra.mxu0 0.0
  %3535 = vmatprep.subr.mxu0 0.0
  %3536 = vmatpush1.msra.mxu0 0.0
  %3537 = vmatprep.subr.mxu0 0.0
  %3538 = vmatpush1.msra.mxu0 0.0
  %3539 = vmatprep.subr.mxu0 0.0
  %3540 = vmatpush1.msra.mxu0 0.0
  %3541 = vmatprep.subr.mxu0 0.0
  %3542 = vmatpush1.msra.mxu0 0.0
  %3543 = vmatprep.subr.mxu0 0.0
  %3544 = vmatpush1.msra.mxu0 0.0
  %3545 = vmatprep.subr.mxu0 0.0
  %3546 = vmatpush1.msra.mxu0 0.0
  %3547 = vmatprep.subr.mxu0 0.0
  %3548 = vmatpush1.msra.mxu0 0.0
  %3549 = vmatprep.subr.mxu0 0.0
  %3550 = vmatpush1.msra.mxu0 0.0
  %3551 = vmatprep.subr.mxu0 0.0
  %3552 = vmatpush1.msra.mxu0 0.0
  %3553 = vmatprep.subr.mxu0 0.0
  %3554 = vmatpush1.msra.mxu0 0.0
  %3555 = vmatprep.subr.mxu0 0.0
  %3556 = vmatpush1.msra.mxu0 0.0
  %3557 = vmatprep.mubr.f32.mxu0 0.0
  %3558 = vmatmul.mubr.f32.gmra.mrb[0].mxu0 %v2133
  %v3559 = vpop.f32.mrb[0].mxu0
  %v3560 = vadd.f32 0.0, %v3559
  %v3561 = vpop.f32.mrb[0].mxu0
  %3562 = vmatprep.mubr.f32.mxu0 0.0
  %3563 = vmatmul.mubr.f32.gmra.mrb[0].mxu0 %v2136
  %v3564 = vpop.f32.mrb[0].mxu0
  %v3565 = vadd.f32 0.0, %v3564
  %v3566 = vpop.f32.mrb[0].mxu0
  %3567 = vmatprep.mubr.f32.mxu0 0.0
  %3568 = vmatmul.mubr.f32.gmra.mrb[0].mxu0 %v2139
  %v3569 = vpop.f32.mrb[0].mxu0
  %v3570 = vadd.f32 0.0, %v3569
  %v3571 = vpop.f32.mrb[0].mxu0
  %3572 = vmatprep.mubr.f32.mxu0 0.0
  %3573 = vmatmul.mubr.f32.gmra.mrb[0].mxu0 %v2142
  %v3574 = vpop.f32.mrb[0].mxu0
  %v3575 = vadd.f32 0.0, %v3574
  %v3576 = vpop.f32.mrb[0].mxu0
  %3577 = vdwg.mxu0
  %s3578 = scalar_lea.vmem %s3, 480
  %3579 = vst.msk [vmem:[%s3578] sm:$0xff] %vm718, %v3560
  %3580 = vst.msk [vmem:[%s3578 + $0x8] sm:$0xff] %vm718, %v3565
  %3581 = vst.msk [vmem:[%s3578 + $0x10] sm:$0xff] %vm718, %v3570
  %3582 = vst.msk [vmem:[%s3578 + $0x18] sm:$0xff] %vm718, %v3575
  %3583 = vmatprep.subr.mxu0 0.0
  %3584 = vmatpush1.msra.mxu0 %v1716
  %3585 = vmatprep.subr.mxu0 0.0
  %3586 = vmatpush1.msra.mxu0 %v1852
  %3587 = vmatprep.subr.mxu0 0.0
  %3588 = vmatpush1.msra.mxu0 0.0
  %3589 = vmatprep.subr.mxu0 0.0
  %3590 = vmatpush1.msra.mxu0 0.0
  %3591 = vmatprep.subr.mxu0 0.0
  %3592 = vmatpush1.msra.mxu0 0.0
  %3593 = vmatprep.subr.mxu0 0.0
  %3594 = vmatpush1.msra.mxu0 0.0
  %3595 = vmatprep.subr.mxu0 0.0
  %3596 = vmatpush1.msra.mxu0 0.0
  %3597 = vmatprep.subr.mxu0 0.0
  %3598 = vmatpush1.msra.mxu0 0.0
  %3599 = vmatprep.subr.mxu0 0.0
  %3600 = vmatpush1.msra.mxu0 0.0
  %3601 = vmatprep.subr.mxu0 0.0
  %3602 = vmatpush1.msra.mxu0 0.0
  %3603 = vmatprep.subr.mxu0 0.0
  %3604 = vmatpush1.msra.mxu0 0.0
  %3605 = vmatprep.subr.mxu0 0.0
  %3606 = vmatpush1.msra.mxu0 0.0
  %3607 = vmatprep.subr.mxu0 0.0
  %3608 = vmatpush1.msra.mxu0 0.0
  %3609 = vmatprep.subr.mxu0 0.0
  %3610 = vmatpush1.msra.mxu0 0.0
  %3611 = vmatprep.subr.mxu0 0.0
  %3612 = vmatpush1.msra.mxu0 0.0
  %3613 = vmatprep.subr.mxu0 0.0
  %3614 = vmatpush1.msra.mxu0 0.0
  %3615 = vmatprep.subr.mxu0 0.0
  %3616 = vmatpush1.msra.mxu0 0.0
  %3617 = vmatprep.subr.mxu0 0.0
  %3618 = vmatpush1.msra.mxu0 0.0
  %3619 = vmatprep.subr.mxu0 0.0
  %3620 = vmatpush1.msra.mxu0 0.0
  %3621 = vmatprep.subr.mxu0 0.0
  %3622 = vmatpush1.msra.mxu0 0.0
  %3623 = vmatprep.subr.mxu0 0.0
  %3624 = vmatpush1.msra.mxu0 0.0
  %3625 = vmatprep.subr.mxu0 0.0
  %3626 = vmatpush1.msra.mxu0 0.0
  %3627 = vmatprep.subr.mxu0 0.0
  %3628 = vmatpush1.msra.mxu0 0.0
  %3629 = vmatprep.subr.mxu0 0.0
  %3630 = vmatpush1.msra.mxu0 0.0
  %3631 = vmatprep.subr.mxu0 0.0
  %3632 = vmatpush1.msra.mxu0 0.0
  %3633 = vmatprep.subr.mxu0 0.0
  %3634 = vmatpush1.msra.mxu0 0.0
  %3635 = vmatprep.subr.mxu0 0.0
  %3636 = vmatpush1.msra.mxu0 0.0
  %3637 = vmatprep.subr.mxu0 0.0
  %3638 = vmatpush1.msra.mxu0 0.0
  %3639 = vmatprep.subr.mxu0 0.0
  %3640 = vmatpush1.msra.mxu0 0.0
  %3641 = vmatprep.subr.mxu0 0.0
  %3642 = vmatpush1.msra.mxu0 0.0
  %3643 = vmatprep.subr.mxu0 0.0
  %3644 = vmatpush1.msra.mxu0 0.0
  %3645 = vmatprep.subr.mxu0 0.0
  %3646 = vmatpush1.msra.mxu0 0.0
  %3647 = vmatprep.mubr.f32.mxu0 0.0
  %3648 = vmatmul.mubr.f32.gmra.mrb[0].mxu0 %v2133
  %v3649 = vpop.f32.mrb[0].mxu0
  %v3650 = vadd.f32 0.0, %v3649
  %v3651 = vpop.f32.mrb[0].mxu0
  %3652 = vmatprep.mubr.f32.mxu0 0.0
  %3653 = vmatmul.mubr.f32.gmra.mrb[0].mxu0 %v2136
  %v3654 = vpop.f32.mrb[0].mxu0
  %v3655 = vadd.f32 0.0, %v3654
  %v3656 = vpop.f32.mrb[0].mxu0
  %3657 = vmatprep.mubr.f32.mxu0 0.0
  %3658 = vmatmul.mubr.f32.gmra.mrb[0].mxu0 %v2139
  %v3659 = vpop.f32.mrb[0].mxu0
  %v3660 = vadd.f32 0.0, %v3659
  %v3661 = vpop.f32.mrb[0].mxu0
  %3662 = vmatprep.mubr.f32.mxu0 0.0
  %3663 = vmatmul.mubr.f32.gmra.mrb[0].mxu0 %v2142
  %v3664 = vpop.f32.mrb[0].mxu0
  %v3665 = vadd.f32 0.0, %v3664
  %v3666 = vpop.f32.mrb[0].mxu0
  %3667 = vdwg.mxu0
  %s3668 = scalar_lea.vmem %s3, 512
  %3669 = vst.msk [vmem:[%s3668] sm:$0xff] %vm718, %v3650
  %3670 = vst.msk [vmem:[%s3668 + $0x8] sm:$0xff] %vm718, %v3655
  %3671 = vst.msk [vmem:[%s3668 + $0x10] sm:$0xff] %vm718, %v3660
  %3672 = vst.msk [vmem:[%s3668 + $0x18] sm:$0xff] %vm718, %v3665
  %3673 = vmatprep.subr.mxu0 0.0
  %3674 = vmatpush1.msra.mxu0 %v1717
  %3675 = vmatprep.subr.mxu0 0.0
  %3676 = vmatpush1.msra.mxu0 %v1853
  %3677 = vmatprep.subr.mxu0 0.0
  %3678 = vmatpush1.msra.mxu0 0.0
  %3679 = vmatprep.subr.mxu0 0.0
  %3680 = vmatpush1.msra.mxu0 0.0
  %3681 = vmatprep.subr.mxu0 0.0
  %3682 = vmatpush1.msra.mxu0 0.0
  %3683 = vmatprep.subr.mxu0 0.0
  %3684 = vmatpush1.msra.mxu0 0.0
  %3685 = vmatprep.subr.mxu0 0.0
  %3686 = vmatpush1.msra.mxu0 0.0
  %3687 = vmatprep.subr.mxu0 0.0
  %3688 = vmatpush1.msra.mxu0 0.0
  %3689 = vmatprep.subr.mxu0 0.0
  %3690 = vmatpush1.msra.mxu0 0.0
  %3691 = vmatprep.subr.mxu0 0.0
  %3692 = vmatpush1.msra.mxu0 0.0
  %3693 = vmatprep.subr.mxu0 0.0
  %3694 = vmatpush1.msra.mxu0 0.0
  %3695 = vmatprep.subr.mxu0 0.0
  %3696 = vmatpush1.msra.mxu0 0.0
  %3697 = vmatprep.subr.mxu0 0.0
  %3698 = vmatpush1.msra.mxu0 0.0
  %3699 = vmatprep.subr.mxu0 0.0
  %3700 = vmatpush1.msra.mxu0 0.0
  %3701 = vmatprep.subr.mxu0 0.0
  %3702 = vmatpush1.msra.mxu0 0.0
  %3703 = vmatprep.subr.mxu0 0.0
  %3704 = vmatpush1.msra.mxu0 0.0
  %3705 = vmatprep.subr.mxu0 0.0
  %3706 = vmatpush1.msra.mxu0 0.0
  %3707 = vmatprep.subr.mxu0 0.0
  %3708 = vmatpush1.msra.mxu0 0.0
  %3709 = vmatprep.subr.mxu0 0.0
  %3710 = vmatpush1.msra.mxu0 0.0
  %3711 = vmatprep.subr.mxu0 0.0
  %3712 = vmatpush1.msra.mxu0 0.0
  %3713 = vmatprep.subr.mxu0 0.0
  %3714 = vmatpush1.msra.mxu0 0.0
  %3715 = vmatprep.subr.mxu0 0.0
  %3716 = vmatpush1.msra.mxu0 0.0
  %3717 = vmatprep.subr.mxu0 0.0
  %3718 = vmatpush1.msra.mxu0 0.0
  %3719 = vmatprep.subr.mxu0 0.0
  %3720 = vmatpush1.msra.mxu0 0.0
  %3721 = vmatprep.subr.mxu0 0.0
  %3722 = vmatpush1.msra.mxu0 0.0
  %3723 = vmatprep.subr.mxu0 0.0
  %3724 = vmatpush1.msra.mxu0 0.0
  %3725 = vmatprep.subr.mxu0 0.0
  %3726 = vmatpush1.msra.mxu0 0.0
  %3727 = vmatprep.subr.mxu0 0.0
  %3728 = vmatpush1.msra.mxu0 0.0
  %3729 = vmatprep.subr.mxu0 0.0
  %3730 = vmatpush1.msra.mxu0 0.0
  %3731 = vmatprep.subr.mxu0 0.0
  %3732 = vmatpush1.msra.mxu0 0.0
  %3733 = vmatprep.subr.mxu0 0.0
  %3734 = vmatpush1.msra.mxu0 0.0
  %3735 = vmatprep.subr.mxu0 0.0
  %3736 = vmatpush1.msra.mxu0 0.0
  %3737 = vmatprep.mubr.f32.mxu0 0.0
  %3738 = vmatmul.mubr.f32.gmra.mrb[0].mxu0 %v2133
  %v3739 = vpop.f32.mrb[0].mxu0
  %v3740 = vadd.f32 0.0, %v3739
  %v3741 = vpop.f32.mrb[0].mxu0
  %3742 = vmatprep.mubr.f32.mxu0 0.0
  %3743 = vmatmul.mubr.f32.gmra.mrb[0].mxu0 %v2136
  %v3744 = vpop.f32.mrb[0].mxu0
  %v3745 = vadd.f32 0.0, %v3744
  %v3746 = vpop.f32.mrb[0].mxu0
  %3747 = vmatprep.mubr.f32.mxu0 0.0
  %3748 = vmatmul.mubr.f32.gmra.mrb[0].mxu0 %v2139
  %v3749 = vpop.f32.mrb[0].mxu0
  %v3750 = vadd.f32 0.0, %v3749
  %v3751 = vpop.f32.mrb[0].mxu0
  %3752 = vmatprep.mubr.f32.mxu0 0.0
  %3753 = vmatmul.mubr.f32.gmra.mrb[0].mxu0 %v2142
  %v3754 = vpop.f32.mrb[0].mxu0
  %v3755 = vadd.f32 0.0, %v3754
  %v3756 = vpop.f32.mrb[0].mxu0
  %3757 = vdwg.mxu0
  %s3758 = scalar_lea.vmem %s3, 544
  %3759 = vst.msk [vmem:[%s3758] sm:$0xff] %vm718, %v3740
  %3760 = vst.msk [vmem:[%s3758 + $0x8] sm:$0xff] %vm718, %v3745
  %3761 = vst.msk [vmem:[%s3758 + $0x10] sm:$0xff] %vm718, %v3750
  %3762 = vst.msk [vmem:[%s3758 + $0x18] sm:$0xff] %vm718, %v3755
  %3763 = vmatprep.subr.mxu0 0.0
  %3764 = vmatpush1.msra.mxu0 %v1718
  %3765 = vmatprep.subr.mxu0 0.0
  %3766 = vmatpush1.msra.mxu0 %v1854
  %3767 = vmatprep.subr.mxu0 0.0
  %3768 = vmatpush1.msra.mxu0 0.0
  %3769 = vmatprep.subr.mxu0 0.0
  %3770 = vmatpush1.msra.mxu0 0.0
  %3771 = vmatprep.subr.mxu0 0.0
  %3772 = vmatpush1.msra.mxu0 0.0
  %3773 = vmatprep.subr.mxu0 0.0
  %3774 = vmatpush1.msra.mxu0 0.0
  %3775 = vmatprep.subr.mxu0 0.0
  %3776 = vmatpush1.msra.mxu0 0.0
  %3777 = vmatprep.subr.mxu0 0.0
  %3778 = vmatpush1.msra.mxu0 0.0
  %3779 = vmatprep.subr.mxu0 0.0
  %3780 = vmatpush1.msra.mxu0 0.0
  %3781 = vmatprep.subr.mxu0 0.0
  %3782 = vmatpush1.msra.mxu0 0.0
  %3783 = vmatprep.subr.mxu0 0.0
  %3784 = vmatpush1.msra.mxu0 0.0
  %3785 = vmatprep.subr.mxu0 0.0
  %3786 = vmatpush1.msra.mxu0 0.0
  %3787 = vmatprep.subr.mxu0 0.0
  %3788 = vmatpush1.msra.mxu0 0.0
  %3789 = vmatprep.subr.mxu0 0.0
  %3790 = vmatpush1.msra.mxu0 0.0
  %3791 = vmatprep.subr.mxu0 0.0
  %3792 = vmatpush1.msra.mxu0 0.0
  %3793 = vmatprep.subr.mxu0 0.0
  %3794 = vmatpush1.msra.mxu0 0.0
  %3795 = vmatprep.subr.mxu0 0.0
  %3796 = vmatpush1.msra.mxu0 0.0
  %3797 = vmatprep.subr.mxu0 0.0
  %3798 = vmatpush1.msra.mxu0 0.0
  %3799 = vmatprep.subr.mxu0 0.0
  %3800 = vmatpush1.msra.mxu0 0.0
  %3801 = vmatprep.subr.mxu0 0.0
  %3802 = vmatpush1.msra.mxu0 0.0
  %3803 = vmatprep.subr.mxu0 0.0
  %3804 = vmatpush1.msra.mxu0 0.0
  %3805 = vmatprep.subr.mxu0 0.0
  %3806 = vmatpush1.msra.mxu0 0.0
  %3807 = vmatprep.subr.mxu0 0.0
  %3808 = vmatpush1.msra.mxu0 0.0
  %3809 = vmatprep.subr.mxu0 0.0
  %3810 = vmatpush1.msra.mxu0 0.0
  %3811 = vmatprep.subr.mxu0 0.0
  %3812 = vmatpush1.msra.mxu0 0.0
  %3813 = vmatprep.subr.mxu0 0.0
  %3814 = vmatpush1.msra.mxu0 0.0
  %3815 = vmatprep.subr.mxu0 0.0
  %3816 = vmatpush1.msra.mxu0 0.0
  %3817 = vmatprep.subr.mxu0 0.0
  %3818 = vmatpush1.msra.mxu0 0.0
  %3819 = vmatprep.subr.mxu0 0.0
  %3820 = vmatpush1.msra.mxu0 0.0
  %3821 = vmatprep.subr.mxu0 0.0
  %3822 = vmatpush1.msra.mxu0 0.0
  %3823 = vmatprep.subr.mxu0 0.0
  %3824 = vmatpush1.msra.mxu0 0.0
  %3825 = vmatprep.subr.mxu0 0.0
  %3826 = vmatpush1.msra.mxu0 0.0
  %3827 = vmatprep.mubr.f32.mxu0 0.0
  %3828 = vmatmul.mubr.f32.gmra.mrb[0].mxu0 %v2133
  %v3829 = vpop.f32.mrb[0].mxu0
  %v3830 = vadd.f32 0.0, %v3829
  %v3831 = vpop.f32.mrb[0].mxu0
  %3832 = vmatprep.mubr.f32.mxu0 0.0
  %3833 = vmatmul.mubr.f32.gmra.mrb[0].mxu0 %v2136
  %v3834 = vpop.f32.mrb[0].mxu0
  %v3835 = vadd.f32 0.0, %v3834
  %v3836 = vpop.f32.mrb[0].mxu0
  %3837 = vmatprep.mubr.f32.mxu0 0.0
  %3838 = vmatmul.mubr.f32.gmra.mrb[0].mxu0 %v2139
  %v3839 = vpop.f32.mrb[0].mxu0
  %v3840 = vadd.f32 0.0, %v3839
  %v3841 = vpop.f32.mrb[0].mxu0
  %3842 = vmatprep.mubr.f32.mxu0 0.0
  %3843 = vmatmul.mubr.f32.gmra.mrb[0].mxu0 %v2142
  %v3844 = vpop.f32.mrb[0].mxu0
  %v3845 = vadd.f32 0.0, %v3844
  %v3846 = vpop.f32.mrb[0].mxu0
  %3847 = vdwg.mxu0
  %s3848 = scalar_lea.vmem %s3, 576
  %3849 = vst.msk [vmem:[%s3848] sm:$0xff] %vm718, %v3830
  %3850 = vst.msk [vmem:[%s3848 + $0x8] sm:$0xff] %vm718, %v3835
  %3851 = vst.msk [vmem:[%s3848 + $0x10] sm:$0xff] %vm718, %v3840
  %3852 = vst.msk [vmem:[%s3848 + $0x18] sm:$0xff] %vm718, %v3845
  %3853 = vmatprep.subr.mxu0 0.0
  %3854 = vmatpush1.msra.mxu0 %v1719
  %3855 = vmatprep.subr.mxu0 0.0
  %3856 = vmatpush1.msra.mxu0 %v1855
  %3857 = vmatprep.subr.mxu0 0.0
  %3858 = vmatpush1.msra.mxu0 0.0
  %3859 = vmatprep.subr.mxu0 0.0
  %3860 = vmatpush1.msra.mxu0 0.0
  %3861 = vmatprep.subr.mxu0 0.0
  %3862 = vmatpush1.msra.mxu0 0.0
  %3863 = vmatprep.subr.mxu0 0.0
  %3864 = vmatpush1.msra.mxu0 0.0
  %3865 = vmatprep.subr.mxu0 0.0
  %3866 = vmatpush1.msra.mxu0 0.0
  %3867 = vmatprep.subr.mxu0 0.0
  %3868 = vmatpush1.msra.mxu0 0.0
  %3869 = vmatprep.subr.mxu0 0.0
  %3870 = vmatpush1.msra.mxu0 0.0
  %3871 = vmatprep.subr.mxu0 0.0
  %3872 = vmatpush1.msra.mxu0 0.0
  %3873 = vmatprep.subr.mxu0 0.0
  %3874 = vmatpush1.msra.mxu0 0.0
  %3875 = vmatprep.subr.mxu0 0.0
  %3876 = vmatpush1.msra.mxu0 0.0
  %3877 = vmatprep.subr.mxu0 0.0
  %3878 = vmatpush1.msra.mxu0 0.0
  %3879 = vmatprep.subr.mxu0 0.0
  %3880 = vmatpush1.msra.mxu0 0.0
  %3881 = vmatprep.subr.mxu0 0.0
  %3882 = vmatpush1.msra.mxu0 0.0
  %3883 = vmatprep.subr.mxu0 0.0
  %3884 = vmatpush1.msra.mxu0 0.0
  %3885 = vmatprep.subr.mxu0 0.0
  %3886 = vmatpush1.msra.mxu0 0.0
  %3887 = vmatprep.subr.mxu0 0.0
  %3888 = vmatpush1.msra.mxu0 0.0
  %3889 = vmatprep.subr.mxu0 0.0
  %3890 = vmatpush1.msra.mxu0 0.0
  %3891 = vmatprep.subr.mxu0 0.0
  %3892 = vmatpush1.msra.mxu0 0.0
  %3893 = vmatprep.subr.mxu0 0.0
  %3894 = vmatpush1.msra.mxu0 0.0
  %3895 = vmatprep.subr.mxu0 0.0
  %3896 = vmatpush1.msra.mxu0 0.0
  %3897 = vmatprep.subr.mxu0 0.0
  %3898 = vmatpush1.msra.mxu0 0.0
  %3899 = vmatprep.subr.mxu0 0.0
  %3900 = vmatpush1.msra.mxu0 0.0
  %3901 = vmatprep.subr.mxu0 0.0
  %3902 = vmatpush1.msra.mxu0 0.0
  %3903 = vmatprep.subr.mxu0 0.0
  %3904 = vmatpush1.msra.mxu0 0.0
  %3905 = vmatprep.subr.mxu0 0.0
  %3906 = vmatpush1.msra.mxu0 0.0
  %3907 = vmatprep.subr.mxu0 0.0
  %3908 = vmatpush1.msra.mxu0 0.0
  %3909 = vmatprep.subr.mxu0 0.0
  %3910 = vmatpush1.msra.mxu0 0.0
  %3911 = vmatprep.subr.mxu0 0.0
  %3912 = vmatpush1.msra.mxu0 0.0
  %3913 = vmatprep.subr.mxu0 0.0
  %3914 = vmatpush1.msra.mxu0 0.0
  %3915 = vmatprep.subr.mxu0 0.0
  %3916 = vmatpush1.msra.mxu0 0.0
  %3917 = vmatprep.mubr.f32.mxu0 0.0
  %3918 = vmatmul.mubr.f32.gmra.mrb[0].mxu0 %v2133
  %v3919 = vpop.f32.mrb[0].mxu0
  %v3920 = vadd.f32 0.0, %v3919
  %v3921 = vpop.f32.mrb[0].mxu0
  %3922 = vmatprep.mubr.f32.mxu0 0.0
  %3923 = vmatmul.mubr.f32.gmra.mrb[0].mxu0 %v2136
  %v3924 = vpop.f32.mrb[0].mxu0
  %v3925 = vadd.f32 0.0, %v3924
  %v3926 = vpop.f32.mrb[0].mxu0
  %3927 = vmatprep.mubr.f32.mxu0 0.0
  %3928 = vmatmul.mubr.f32.gmra.mrb[0].mxu0 %v2139
  %v3929 = vpop.f32.mrb[0].mxu0
  %v3930 = vadd.f32 0.0, %v3929
  %v3931 = vpop.f32.mrb[0].mxu0
  %3932 = vmatprep.mubr.f32.mxu0 0.0
  %3933 = vmatmul.mubr.f32.gmra.mrb[0].mxu0 %v2142
  %v3934 = vpop.f32.mrb[0].mxu0
  %v3935 = vadd.f32 0.0, %v3934
  %v3936 = vpop.f32.mrb[0].mxu0
  %3937 = vdwg.mxu0
  %s3938 = scalar_lea.vmem %s3, 608
  %3939 = vst.msk [vmem:[%s3938] sm:$0xff] %vm718, %v3920
  %3940 = vst.msk [vmem:[%s3938 + $0x8] sm:$0xff] %vm718, %v3925
  %3941 = vst.msk [vmem:[%s3938 + $0x10] sm:$0xff] %vm718, %v3930
  %3942 = vst.msk [vmem:[%s3938 + $0x18] sm:$0xff] %vm718, %v3935
  %3943 = vmatprep.subr.mxu0 0.0
  %3944 = vmatpush1.msra.mxu0 %v1720
  %3945 = vmatprep.subr.mxu0 0.0
  %3946 = vmatpush1.msra.mxu0 %v1856
  %3947 = vmatprep.subr.mxu0 0.0
  %3948 = vmatpush1.msra.mxu0 0.0
  %3949 = vmatprep.subr.mxu0 0.0
  %3950 = vmatpush1.msra.mxu0 0.0
  %3951 = vmatprep.subr.mxu0 0.0
  %3952 = vmatpush1.msra.mxu0 0.0
  %3953 = vmatprep.subr.mxu0 0.0
  %3954 = vmatpush1.msra.mxu0 0.0
  %3955 = vmatprep.subr.mxu0 0.0
  %3956 = vmatpush1.msra.mxu0 0.0
  %3957 = vmatprep.subr.mxu0 0.0
  %3958 = vmatpush1.msra.mxu0 0.0
  %3959 = vmatprep.subr.mxu0 0.0
  %3960 = vmatpush1.msra.mxu0 0.0
  %3961 = vmatprep.subr.mxu0 0.0
  %3962 = vmatpush1.msra.mxu0 0.0
  %3963 = vmatprep.subr.mxu0 0.0
  %3964 = vmatpush1.msra.mxu0 0.0
  %3965 = vmatprep.subr.mxu0 0.0
  %3966 = vmatpush1.msra.mxu0 0.0
  %3967 = vmatprep.subr.mxu0 0.0
  %3968 = vmatpush1.msra.mxu0 0.0
  %3969 = vmatprep.subr.mxu0 0.0
  %3970 = vmatpush1.msra.mxu0 0.0
  %3971 = vmatprep.subr.mxu0 0.0
  %3972 = vmatpush1.msra.mxu0 0.0
  %3973 = vmatprep.subr.mxu0 0.0
  %3974 = vmatpush1.msra.mxu0 0.0
  %3975 = vmatprep.subr.mxu0 0.0
  %3976 = vmatpush1.msra.mxu0 0.0
  %3977 = vmatprep.subr.mxu0 0.0
  %3978 = vmatpush1.msra.mxu0 0.0
  %3979 = vmatprep.subr.mxu0 0.0
  %3980 = vmatpush1.msra.mxu0 0.0
  %3981 = vmatprep.subr.mxu0 0.0
  %3982 = vmatpush1.msra.mxu0 0.0
  %3983 = vmatprep.subr.mxu0 0.0
  %3984 = vmatpush1.msra.mxu0 0.0
  %3985 = vmatprep.subr.mxu0 0.0
  %3986 = vmatpush1.msra.mxu0 0.0
  %3987 = vmatprep.subr.mxu0 0.0
  %3988 = vmatpush1.msra.mxu0 0.0
  %3989 = vmatprep.subr.mxu0 0.0
  %3990 = vmatpush1.msra.mxu0 0.0
  %3991 = vmatprep.subr.mxu0 0.0
  %3992 = vmatpush1.msra.mxu0 0.0
  %3993 = vmatprep.subr.mxu0 0.0
  %3994 = vmatpush1.msra.mxu0 0.0
  %3995 = vmatprep.subr.mxu0 0.0
  %3996 = vmatpush1.msra.mxu0 0.0
  %3997 = vmatprep.subr.mxu0 0.0
  %3998 = vmatpush1.msra.mxu0 0.0
  %3999 = vmatprep.subr.mxu0 0.0
  %4000 = vmatpush1.msra.mxu0 0.0
  %4001 = vmatprep.subr.mxu0 0.0
  %4002 = vmatpush1.msra.mxu0 0.0
  %4003 = vmatprep.subr.mxu0 0.0
  %4004 = vmatpush1.msra.mxu0 0.0
  %4005 = vmatprep.subr.mxu0 0.0
  %4006 = vmatpush1.msra.mxu0 0.0
  %4007 = vmatprep.mubr.f32.mxu0 0.0
  %4008 = vmatmul.mubr.f32.gmra.mrb[0].mxu0 %v2133
  %v4009 = vpop.f32.mrb[0].mxu0
  %v4010 = vadd.f32 0.0, %v4009
  %v4011 = vpop.f32.mrb[0].mxu0
  %4012 = vmatprep.mubr.f32.mxu0 0.0
  %4013 = vmatmul.mubr.f32.gmra.mrb[0].mxu0 %v2136
  %v4014 = vpop.f32.mrb[0].mxu0
  %v4015 = vadd.f32 0.0, %v4014
  %v4016 = vpop.f32.mrb[0].mxu0
  %4017 = vmatprep.mubr.f32.mxu0 0.0
  %4018 = vmatmul.mubr.f32.gmra.mrb[0].mxu0 %v2139
  %v4019 = vpop.f32.mrb[0].mxu0
  %v4020 = vadd.f32 0.0, %v4019
  %v4021 = vpop.f32.mrb[0].mxu0
  %4022 = vmatprep.mubr.f32.mxu0 0.0
  %4023 = vmatmul.mubr.f32.gmra.mrb[0].mxu0 %v2142
  %v4024 = vpop.f32.mrb[0].mxu0
  %v4025 = vadd.f32 0.0, %v4024
  %v4026 = vpop.f32.mrb[0].mxu0
  %4027 = vdwg.mxu0
  %s4028 = scalar_lea.vmem %s3, 640
  %4029 = vst.msk [vmem:[%s4028] sm:$0xff] %vm718, %v4010
  %4030 = vst.msk [vmem:[%s4028 + $0x8] sm:$0xff] %vm718, %v4015
  %4031 = vst.msk [vmem:[%s4028 + $0x10] sm:$0xff] %vm718, %v4020
  %4032 = vst.msk [vmem:[%s4028 + $0x18] sm:$0xff] %vm718, %v4025
  %4033 = vmatprep.subr.mxu0 0.0
  %4034 = vmatpush1.msra.mxu0 %v1721
  %4035 = vmatprep.subr.mxu0 0.0
  %4036 = vmatpush1.msra.mxu0 %v1857
  %4037 = vmatprep.subr.mxu0 0.0
  %4038 = vmatpush1.msra.mxu0 0.0
  %4039 = vmatprep.subr.mxu0 0.0
  %4040 = vmatpush1.msra.mxu0 0.0
  %4041 = vmatprep.subr.mxu0 0.0
  %4042 = vmatpush1.msra.mxu0 0.0
  %4043 = vmatprep.subr.mxu0 0.0
  %4044 = vmatpush1.msra.mxu0 0.0
  %4045 = vmatprep.subr.mxu0 0.0
  %4046 = vmatpush1.msra.mxu0 0.0
  %4047 = vmatprep.subr.mxu0 0.0
  %4048 = vmatpush1.msra.mxu0 0.0
  %4049 = vmatprep.subr.mxu0 0.0
  %4050 = vmatpush1.msra.mxu0 0.0
  %4051 = vmatprep.subr.mxu0 0.0
  %4052 = vmatpush1.msra.mxu0 0.0
  %4053 = vmatprep.subr.mxu0 0.0
  %4054 = vmatpush1.msra.mxu0 0.0
  %4055 = vmatprep.subr.mxu0 0.0
  %4056 = vmatpush1.msra.mxu0 0.0
  %4057 = vmatprep.subr.mxu0 0.0
  %4058 = vmatpush1.msra.mxu0 0.0
  %4059 = vmatprep.subr.mxu0 0.0
  %4060 = vmatpush1.msra.mxu0 0.0
  %4061 = vmatprep.subr.mxu0 0.0
  %4062 = vmatpush1.msra.mxu0 0.0
  %4063 = vmatprep.subr.mxu0 0.0
  %4064 = vmatpush1.msra.mxu0 0.0
  %4065 = vmatprep.subr.mxu0 0.0
  %4066 = vmatpush1.msra.mxu0 0.0
  %4067 = vmatprep.subr.mxu0 0.0
  %4068 = vmatpush1.msra.mxu0 0.0
  %4069 = vmatprep.subr.mxu0 0.0
  %4070 = vmatpush1.msra.mxu0 0.0
  %4071 = vmatprep.subr.mxu0 0.0
  %4072 = vmatpush1.msra.mxu0 0.0
  %4073 = vmatprep.subr.mxu0 0.0
  %4074 = vmatpush1.msra.mxu0 0.0
  %4075 = vmatprep.subr.mxu0 0.0
  %4076 = vmatpush1.msra.mxu0 0.0
  %4077 = vmatprep.subr.mxu0 0.0
  %4078 = vmatpush1.msra.mxu0 0.0
  %4079 = vmatprep.subr.mxu0 0.0
  %4080 = vmatpush1.msra.mxu0 0.0
  %4081 = vmatprep.subr.mxu0 0.0
  %4082 = vmatpush1.msra.mxu0 0.0
  %4083 = vmatprep.subr.mxu0 0.0
  %4084 = vmatpush1.msra.mxu0 0.0
  %4085 = vmatprep.subr.mxu0 0.0
  %4086 = vmatpush1.msra.mxu0 0.0
  %4087 = vmatprep.subr.mxu0 0.0
  %4088 = vmatpush1.msra.mxu0 0.0
  %4089 = vmatprep.subr.mxu0 0.0
  %4090 = vmatpush1.msra.mxu0 0.0
  %4091 = vmatprep.subr.mxu0 0.0
  %4092 = vmatpush1.msra.mxu0 0.0
  %4093 = vmatprep.subr.mxu0 0.0
  %4094 = vmatpush1.msra.mxu0 0.0
  %4095 = vmatprep.subr.mxu0 0.0
  %4096 = vmatpush1.msra.mxu0 0.0
  %4097 = vmatprep.mubr.f32.mxu0 0.0
  %4098 = vmatmul.mubr.f32.gmra.mrb[0].mxu0 %v2133
  %v4099 = vpop.f32.mrb[0].mxu0
  %v4100 = vadd.f32 0.0, %v4099
  %v4101 = vpop.f32.mrb[0].mxu0
  %4102 = vmatprep.mubr.f32.mxu0 0.0
  %4103 = vmatmul.mubr.f32.gmra.mrb[0].mxu0 %v2136
  %v4104 = vpop.f32.mrb[0].mxu0
  %v4105 = vadd.f32 0.0, %v4104
  %v4106 = vpop.f32.mrb[0].mxu0
  %4107 = vmatprep.mubr.f32.mxu0 0.0
  %4108 = vmatmul.mubr.f32.gmra.mrb[0].mxu0 %v2139
  %v4109 = vpop.f32.mrb[0].mxu0
  %v4110 = vadd.f32 0.0, %v4109
  %v4111 = vpop.f32.mrb[0].mxu0
  %4112 = vmatprep.mubr.f32.mxu0 0.0
  %4113 = vmatmul.mubr.f32.gmra.mrb[0].mxu0 %v2142
  %v4114 = vpop.f32.mrb[0].mxu0
  %v4115 = vadd.f32 0.0, %v4114
  %v4116 = vpop.f32.mrb[0].mxu0
  %4117 = vdwg.mxu0
  %s4118 = scalar_lea.vmem %s3, 672
  %4119 = vst.msk [vmem:[%s4118] sm:$0xff] %vm718, %v4100
  %4120 = vst.msk [vmem:[%s4118 + $0x8] sm:$0xff] %vm718, %v4105
  %4121 = vst.msk [vmem:[%s4118 + $0x10] sm:$0xff] %vm718, %v4110
  %4122 = vst.msk [vmem:[%s4118 + $0x18] sm:$0xff] %vm718, %v4115
  %4123 = vmatprep.subr.mxu0 0.0
  %4124 = vmatpush1.msra.mxu0 %v1722
  %4125 = vmatprep.subr.mxu0 0.0
  %4126 = vmatpush1.msra.mxu0 %v1858
  %4127 = vmatprep.subr.mxu0 0.0
  %4128 = vmatpush1.msra.mxu0 0.0
  %4129 = vmatprep.subr.mxu0 0.0
  %4130 = vmatpush1.msra.mxu0 0.0
  %4131 = vmatprep.subr.mxu0 0.0
  %4132 = vmatpush1.msra.mxu0 0.0
  %4133 = vmatprep.subr.mxu0 0.0
  %4134 = vmatpush1.msra.mxu0 0.0
  %4135 = vmatprep.subr.mxu0 0.0
  %4136 = vmatpush1.msra.mxu0 0.0
  %4137 = vmatprep.subr.mxu0 0.0
  %4138 = vmatpush1.msra.mxu0 0.0
  %4139 = vmatprep.subr.mxu0 0.0
  %4140 = vmatpush1.msra.mxu0 0.0
  %4141 = vmatprep.subr.mxu0 0.0
  %4142 = vmatpush1.msra.mxu0 0.0
  %4143 = vmatprep.subr.mxu0 0.0
  %4144 = vmatpush1.msra.mxu0 0.0
  %4145 = vmatprep.subr.mxu0 0.0
  %4146 = vmatpush1.msra.mxu0 0.0
  %4147 = vmatprep.subr.mxu0 0.0
  %4148 = vmatpush1.msra.mxu0 0.0
  %4149 = vmatprep.subr.mxu0 0.0
  %4150 = vmatpush1.msra.mxu0 0.0
  %4151 = vmatprep.subr.mxu0 0.0
  %4152 = vmatpush1.msra.mxu0 0.0
  %4153 = vmatprep.subr.mxu0 0.0
  %4154 = vmatpush1.msra.mxu0 0.0
  %4155 = vmatprep.subr.mxu0 0.0
  %4156 = vmatpush1.msra.mxu0 0.0
  %4157 = vmatprep.subr.mxu0 0.0
  %4158 = vmatpush1.msra.mxu0 0.0
  %4159 = vmatprep.subr.mxu0 0.0
  %4160 = vmatpush1.msra.mxu0 0.0
  %4161 = vmatprep.subr.mxu0 0.0
  %4162 = vmatpush1.msra.mxu0 0.0
  %4163 = vmatprep.subr.mxu0 0.0
  %4164 = vmatpush1.msra.mxu0 0.0
  %4165 = vmatprep.subr.mxu0 0.0
  %4166 = vmatpush1.msra.mxu0 0.0
  %4167 = vmatprep.subr.mxu0 0.0
  %4168 = vmatpush1.msra.mxu0 0.0
  %4169 = vmatprep.subr.mxu0 0.0
  %4170 = vmatpush1.msra.mxu0 0.0
  %4171 = vmatprep.subr.mxu0 0.0
  %4172 = vmatpush1.msra.mxu0 0.0
  %4173 = vmatprep.subr.mxu0 0.0
  %4174 = vmatpush1.msra.mxu0 0.0
  %4175 = vmatprep.subr.mxu0 0.0
  %4176 = vmatpush1.msra.mxu0 0.0
  %4177 = vmatprep.subr.mxu0 0.0
  %4178 = vmatpush1.msra.mxu0 0.0
  %4179 = vmatprep.subr.mxu0 0.0
  %4180 = vmatpush1.msra.mxu0 0.0
  %4181 = vmatprep.subr.mxu0 0.0
  %4182 = vmatpush1.msra.mxu0 0.0
  %4183 = vmatprep.subr.mxu0 0.0
  %4184 = vmatpush1.msra.mxu0 0.0
  %4185 = vmatprep.subr.mxu0 0.0
  %4186 = vmatpush1.msra.mxu0 0.0
  %4187 = vmatprep.mubr.f32.mxu0 0.0
  %4188 = vmatmul.mubr.f32.gmra.mrb[0].mxu0 %v2133
  %v4189 = vpop.f32.mrb[0].mxu0
  %v4190 = vadd.f32 0.0, %v4189
  %v4191 = vpop.f32.mrb[0].mxu0
  %4192 = vmatprep.mubr.f32.mxu0 0.0
  %4193 = vmatmul.mubr.f32.gmra.mrb[0].mxu0 %v2136
  %v4194 = vpop.f32.mrb[0].mxu0
  %v4195 = vadd.f32 0.0, %v4194
  %v4196 = vpop.f32.mrb[0].mxu0
  %4197 = vmatprep.mubr.f32.mxu0 0.0
  %4198 = vmatmul.mubr.f32.gmra.mrb[0].mxu0 %v2139
  %v4199 = vpop.f32.mrb[0].mxu0
  %v4200 = vadd.f32 0.0, %v4199
  %v4201 = vpop.f32.mrb[0].mxu0
  %4202 = vmatprep.mubr.f32.mxu0 0.0
  %4203 = vmatmul.mubr.f32.gmra.mrb[0].mxu0 %v2142
  %v4204 = vpop.f32.mrb[0].mxu0
  %v4205 = vadd.f32 0.0, %v4204
  %v4206 = vpop.f32.mrb[0].mxu0
  %4207 = vdwg.mxu0
  %s4208 = scalar_lea.vmem %s3, 704
  %4209 = vst.msk [vmem:[%s4208] sm:$0xff] %vm718, %v4190
  %4210 = vst.msk [vmem:[%s4208 + $0x8] sm:$0xff] %vm718, %v4195
  %4211 = vst.msk [vmem:[%s4208 + $0x10] sm:$0xff] %vm718, %v4200
  %4212 = vst.msk [vmem:[%s4208 + $0x18] sm:$0xff] %vm718, %v4205
  %4213 = vmatprep.subr.mxu0 0.0
  %4214 = vmatpush1.msra.mxu0 %v1723
  %4215 = vmatprep.subr.mxu0 0.0
  %4216 = vmatpush1.msra.mxu0 %v1859
  %4217 = vmatprep.subr.mxu0 0.0
  %4218 = vmatpush1.msra.mxu0 0.0
  %4219 = vmatprep.subr.mxu0 0.0
  %4220 = vmatpush1.msra.mxu0 0.0
  %4221 = vmatprep.subr.mxu0 0.0
  %4222 = vmatpush1.msra.mxu0 0.0
  %4223 = vmatprep.subr.mxu0 0.0
  %4224 = vmatpush1.msra.mxu0 0.0
  %4225 = vmatprep.subr.mxu0 0.0
  %4226 = vmatpush1.msra.mxu0 0.0
  %4227 = vmatprep.subr.mxu0 0.0
  %4228 = vmatpush1.msra.mxu0 0.0
  %4229 = vmatprep.subr.mxu0 0.0
  %4230 = vmatpush1.msra.mxu0 0.0
  %4231 = vmatprep.subr.mxu0 0.0
  %4232 = vmatpush1.msra.mxu0 0.0
  %4233 = vmatprep.subr.mxu0 0.0
  %4234 = vmatpush1.msra.mxu0 0.0
  %4235 = vmatprep.subr.mxu0 0.0
  %4236 = vmatpush1.msra.mxu0 0.0
  %4237 = vmatprep.subr.mxu0 0.0
  %4238 = vmatpush1.msra.mxu0 0.0
  %4239 = vmatprep.subr.mxu0 0.0
  %4240 = vmatpush1.msra.mxu0 0.0
  %4241 = vmatprep.subr.mxu0 0.0
  %4242 = vmatpush1.msra.mxu0 0.0
  %4243 = vmatprep.subr.mxu0 0.0
  %4244 = vmatpush1.msra.mxu0 0.0
  %4245 = vmatprep.subr.mxu0 0.0
  %4246 = vmatpush1.msra.mxu0 0.0
  %4247 = vmatprep.subr.mxu0 0.0
  %4248 = vmatpush1.msra.mxu0 0.0
  %4249 = vmatprep.subr.mxu0 0.0
  %4250 = vmatpush1.msra.mxu0 0.0
  %4251 = vmatprep.subr.mxu0 0.0
  %4252 = vmatpush1.msra.mxu0 0.0
  %4253 = vmatprep.subr.mxu0 0.0
  %4254 = vmatpush1.msra.mxu0 0.0
  %4255 = vmatprep.subr.mxu0 0.0
  %4256 = vmatpush1.msra.mxu0 0.0
  %4257 = vmatprep.subr.mxu0 0.0
  %4258 = vmatpush1.msra.mxu0 0.0
  %4259 = vmatprep.subr.mxu0 0.0
  %4260 = vmatpush1.msra.mxu0 0.0
  %4261 = vmatprep.subr.mxu0 0.0
  %4262 = vmatpush1.msra.mxu0 0.0
  %4263 = vmatprep.subr.mxu0 0.0
  %4264 = vmatpush1.msra.mxu0 0.0
  %4265 = vmatprep.subr.mxu0 0.0
  %4266 = vmatpush1.msra.mxu0 0.0
  %4267 = vmatprep.subr.mxu0 0.0
  %4268 = vmatpush1.msra.mxu0 0.0
  %4269 = vmatprep.subr.mxu0 0.0
  %4270 = vmatpush1.msra.mxu0 0.0
  %4271 = vmatprep.subr.mxu0 0.0
  %4272 = vmatpush1.msra.mxu0 0.0
  %4273 = vmatprep.subr.mxu0 0.0
  %4274 = vmatpush1.msra.mxu0 0.0
  %4275 = vmatprep.subr.mxu0 0.0
  %4276 = vmatpush1.msra.mxu0 0.0
  %4277 = vmatprep.mubr.f32.mxu0 0.0
  %4278 = vmatmul.mubr.f32.gmra.mrb[0].mxu0 %v2133
  %v4279 = vpop.f32.mrb[0].mxu0
  %v4280 = vadd.f32 0.0, %v4279
  %v4281 = vpop.f32.mrb[0].mxu0
  %4282 = vmatprep.mubr.f32.mxu0 0.0
  %4283 = vmatmul.mubr.f32.gmra.mrb[0].mxu0 %v2136
  %v4284 = vpop.f32.mrb[0].mxu0
  %v4285 = vadd.f32 0.0, %v4284
  %v4286 = vpop.f32.mrb[0].mxu0
  %4287 = vmatprep.mubr.f32.mxu0 0.0
  %4288 = vmatmul.mubr.f32.gmra.mrb[0].mxu0 %v2139
  %v4289 = vpop.f32.mrb[0].mxu0
  %v4290 = vadd.f32 0.0, %v4289
  %v4291 = vpop.f32.mrb[0].mxu0
  %4292 = vmatprep.mubr.f32.mxu0 0.0
  %4293 = vmatmul.mubr.f32.gmra.mrb[0].mxu0 %v2142
  %v4294 = vpop.f32.mrb[0].mxu0
  %v4295 = vadd.f32 0.0, %v4294
  %v4296 = vpop.f32.mrb[0].mxu0
  %4297 = vdwg.mxu0
  %s4298 = scalar_lea.vmem %s3, 736
  %4299 = vst.msk [vmem:[%s4298] sm:$0xff] %vm718, %v4280
  %4300 = vst.msk [vmem:[%s4298 + $0x8] sm:$0xff] %vm718, %v4285
  %4301 = vst.msk [vmem:[%s4298 + $0x10] sm:$0xff] %vm718, %v4290
  %4302 = vst.msk [vmem:[%s4298 + $0x18] sm:$0xff] %vm718, %v4295
  %4303 = vmatprep.subr.mxu0 0.0
  %4304 = vmatpush1.msra.mxu0 %v1988
  %4305 = vmatprep.subr.mxu0 0.0
  %4306 = vmatpush1.msra.mxu0 %v2124
  %4307 = vmatprep.subr.mxu0 0.0
  %4308 = vmatpush1.msra.mxu0 0.0
  %4309 = vmatprep.subr.mxu0 0.0
  %4310 = vmatpush1.msra.mxu0 0.0
  %4311 = vmatprep.subr.mxu0 0.0
  %4312 = vmatpush1.msra.mxu0 0.0
  %4313 = vmatprep.subr.mxu0 0.0
  %4314 = vmatpush1.msra.mxu0 0.0
  %4315 = vmatprep.subr.mxu0 0.0
  %4316 = vmatpush1.msra.mxu0 0.0
  %4317 = vmatprep.subr.mxu0 0.0
  %4318 = vmatpush1.msra.mxu0 0.0
  %4319 = vmatprep.subr.mxu0 0.0
  %4320 = vmatpush1.msra.mxu0 0.0
  %4321 = vmatprep.subr.mxu0 0.0
  %4322 = vmatpush1.msra.mxu0 0.0
  %4323 = vmatprep.subr.mxu0 0.0
  %4324 = vmatpush1.msra.mxu0 0.0
  %4325 = vmatprep.subr.mxu0 0.0
  %4326 = vmatpush1.msra.mxu0 0.0
  %4327 = vmatprep.subr.mxu0 0.0
  %4328 = vmatpush1.msra.mxu0 0.0
  %4329 = vmatprep.subr.mxu0 0.0
  %4330 = vmatpush1.msra.mxu0 0.0
  %4331 = vmatprep.subr.mxu0 0.0
  %4332 = vmatpush1.msra.mxu0 0.0
  %4333 = vmatprep.subr.mxu0 0.0
  %4334 = vmatpush1.msra.mxu0 0.0
  %4335 = vmatprep.subr.mxu0 0.0
  %4336 = vmatpush1.msra.mxu0 0.0
  %4337 = vmatprep.subr.mxu0 0.0
  %4338 = vmatpush1.msra.mxu0 0.0
  %4339 = vmatprep.subr.mxu0 0.0
  %4340 = vmatpush1.msra.mxu0 0.0
  %4341 = vmatprep.subr.mxu0 0.0
  %4342 = vmatpush1.msra.mxu0 0.0
  %4343 = vmatprep.subr.mxu0 0.0
  %4344 = vmatpush1.msra.mxu0 0.0
  %4345 = vmatprep.subr.mxu0 0.0
  %4346 = vmatpush1.msra.mxu0 0.0
  %4347 = vmatprep.subr.mxu0 0.0
  %4348 = vmatpush1.msra.mxu0 0.0
  %4349 = vmatprep.subr.mxu0 0.0
  %4350 = vmatpush1.msra.mxu0 0.0
  %4351 = vmatprep.subr.mxu0 0.0
  %4352 = vmatpush1.msra.mxu0 0.0
  %4353 = vmatprep.subr.mxu0 0.0
  %4354 = vmatpush1.msra.mxu0 0.0
  %4355 = vmatprep.subr.mxu0 0.0
  %4356 = vmatpush1.msra.mxu0 0.0
  %4357 = vmatprep.subr.mxu0 0.0
  %4358 = vmatpush1.msra.mxu0 0.0
  %4359 = vmatprep.subr.mxu0 0.0
  %4360 = vmatpush1.msra.mxu0 0.0
  %4361 = vmatprep.subr.mxu0 0.0
  %4362 = vmatpush1.msra.mxu0 0.0
  %4363 = vmatprep.subr.mxu0 0.0
  %4364 = vmatpush1.msra.mxu0 0.0
  %4365 = vmatprep.subr.mxu0 0.0
  %4366 = vmatpush1.msra.mxu0 0.0
  %4367 = vmatprep.mubr.f32.mxu0 0.0
  %4368 = vmatmul.mubr.f32.gmra.mrb[0].mxu0 %v2133
  %v4369 = vpop.f32.mrb[0].mxu0
  %v4370 = vadd.f32 0.0, %v4369
  %v4371 = vpop.f32.mrb[0].mxu0
  %4372 = vmatprep.mubr.f32.mxu0 0.0
  %4373 = vmatmul.mubr.f32.gmra.mrb[0].mxu0 %v2136
  %v4374 = vpop.f32.mrb[0].mxu0
  %v4375 = vadd.f32 0.0, %v4374
  %v4376 = vpop.f32.mrb[0].mxu0
  %4377 = vmatprep.mubr.f32.mxu0 0.0
  %4378 = vmatmul.mubr.f32.gmra.mrb[0].mxu0 %v2139
  %v4379 = vpop.f32.mrb[0].mxu0
  %v4380 = vadd.f32 0.0, %v4379
  %v4381 = vpop.f32.mrb[0].mxu0
  %4382 = vmatprep.mubr.f32.mxu0 0.0
  %4383 = vmatmul.mubr.f32.gmra.mrb[0].mxu0 %v2142
  %v4384 = vpop.f32.mrb[0].mxu0
  %v4385 = vadd.f32 0.0, %v4384
  %v4386 = vpop.f32.mrb[0].mxu0
  %4387 = vdwg.mxu0
  %s4388 = scalar_lea.vmem %s3, 768
  %4389 = vst.msk [vmem:[%s4388] sm:$0xff] %vm718, %v4370
  %4390 = vst.msk [vmem:[%s4388 + $0x8] sm:$0xff] %vm718, %v4375
  %4391 = vst.msk [vmem:[%s4388 + $0x10] sm:$0xff] %vm718, %v4380
  %4392 = vst.msk [vmem:[%s4388 + $0x18] sm:$0xff] %vm718, %v4385
  %4393 = vmatprep.subr.mxu0 0.0
  %4394 = vmatpush1.msra.mxu0 %v1989
  %4395 = vmatprep.subr.mxu0 0.0
  %4396 = vmatpush1.msra.mxu0 %v2125
  %4397 = vmatprep.subr.mxu0 0.0
  %4398 = vmatpush1.msra.mxu0 0.0
  %4399 = vmatprep.subr.mxu0 0.0
  %4400 = vmatpush1.msra.mxu0 0.0
  %4401 = vmatprep.subr.mxu0 0.0
  %4402 = vmatpush1.msra.mxu0 0.0
  %4403 = vmatprep.subr.mxu0 0.0
  %4404 = vmatpush1.msra.mxu0 0.0
  %4405 = vmatprep.subr.mxu0 0.0
  %4406 = vmatpush1.msra.mxu0 0.0
  %4407 = vmatprep.subr.mxu0 0.0
  %4408 = vmatpush1.msra.mxu0 0.0
  %4409 = vmatprep.subr.mxu0 0.0
  %4410 = vmatpush1.msra.mxu0 0.0
  %4411 = vmatprep.subr.mxu0 0.0
  %4412 = vmatpush1.msra.mxu0 0.0
  %4413 = vmatprep.subr.mxu0 0.0
  %4414 = vmatpush1.msra.mxu0 0.0
  %4415 = vmatprep.subr.mxu0 0.0
  %4416 = vmatpush1.msra.mxu0 0.0
  %4417 = vmatprep.subr.mxu0 0.0
  %4418 = vmatpush1.msra.mxu0 0.0
  %4419 = vmatprep.subr.mxu0 0.0
  %4420 = vmatpush1.msra.mxu0 0.0
  %4421 = vmatprep.subr.mxu0 0.0
  %4422 = vmatpush1.msra.mxu0 0.0
  %4423 = vmatprep.subr.mxu0 0.0
  %4424 = vmatpush1.msra.mxu0 0.0
  %4425 = vmatprep.subr.mxu0 0.0
  %4426 = vmatpush1.msra.mxu0 0.0
  %4427 = vmatprep.subr.mxu0 0.0
  %4428 = vmatpush1.msra.mxu0 0.0
  %4429 = vmatprep.subr.mxu0 0.0
  %4430 = vmatpush1.msra.mxu0 0.0
  %4431 = vmatprep.subr.mxu0 0.0
  %4432 = vmatpush1.msra.mxu0 0.0
  %4433 = vmatprep.subr.mxu0 0.0
  %4434 = vmatpush1.msra.mxu0 0.0
  %4435 = vmatprep.subr.mxu0 0.0
  %4436 = vmatpush1.msra.mxu0 0.0
  %4437 = vmatprep.subr.mxu0 0.0
  %4438 = vmatpush1.msra.mxu0 0.0
  %4439 = vmatprep.subr.mxu0 0.0
  %4440 = vmatpush1.msra.mxu0 0.0
  %4441 = vmatprep.subr.mxu0 0.0
  %4442 = vmatpush1.msra.mxu0 0.0
  %4443 = vmatprep.subr.mxu0 0.0
  %4444 = vmatpush1.msra.mxu0 0.0
  %4445 = vmatprep.subr.mxu0 0.0
  %4446 = vmatpush1.msra.mxu0 0.0
  %4447 = vmatprep.subr.mxu0 0.0
  %4448 = vmatpush1.msra.mxu0 0.0
  %4449 = vmatprep.subr.mxu0 0.0
  %4450 = vmatpush1.msra.mxu0 0.0
  %4451 = vmatprep.subr.mxu0 0.0
  %4452 = vmatpush1.msra.mxu0 0.0
  %4453 = vmatprep.subr.mxu0 0.0
  %4454 = vmatpush1.msra.mxu0 0.0
  %4455 = vmatprep.subr.mxu0 0.0
  %4456 = vmatpush1.msra.mxu0 0.0
  %4457 = vmatprep.mubr.f32.mxu0 0.0
  %4458 = vmatmul.mubr.f32.gmra.mrb[0].mxu0 %v2133
  %v4459 = vpop.f32.mrb[0].mxu0
  %v4460 = vadd.f32 0.0, %v4459
  %v4461 = vpop.f32.mrb[0].mxu0
  %4462 = vmatprep.mubr.f32.mxu0 0.0
  %4463 = vmatmul.mubr.f32.gmra.mrb[0].mxu0 %v2136
  %v4464 = vpop.f32.mrb[0].mxu0
  %v4465 = vadd.f32 0.0, %v4464
  %v4466 = vpop.f32.mrb[0].mxu0
  %4467 = vmatprep.mubr.f32.mxu0 0.0
  %4468 = vmatmul.mubr.f32.gmra.mrb[0].mxu0 %v2139
  %v4469 = vpop.f32.mrb[0].mxu0
  %v4470 = vadd.f32 0.0, %v4469
  %v4471 = vpop.f32.mrb[0].mxu0
  %4472 = vmatprep.mubr.f32.mxu0 0.0
  %4473 = vmatmul.mubr.f32.gmra.mrb[0].mxu0 %v2142
  %v4474 = vpop.f32.mrb[0].mxu0
  %v4475 = vadd.f32 0.0, %v4474
  %v4476 = vpop.f32.mrb[0].mxu0
  %4477 = vdwg.mxu0
  %s4478 = scalar_lea.vmem %s3, 800
  %4479 = vst.msk [vmem:[%s4478] sm:$0xff] %vm718, %v4460
  %4480 = vst.msk [vmem:[%s4478 + $0x8] sm:$0xff] %vm718, %v4465
  %4481 = vst.msk [vmem:[%s4478 + $0x10] sm:$0xff] %vm718, %v4470
  %4482 = vst.msk [vmem:[%s4478 + $0x18] sm:$0xff] %vm718, %v4475
  %4483 = vmatprep.subr.mxu0 0.0
  %4484 = vmatpush1.msra.mxu0 %v1990
  %4485 = vmatprep.subr.mxu0 0.0
  %4486 = vmatpush1.msra.mxu0 %v2126
  %4487 = vmatprep.subr.mxu0 0.0
  %4488 = vmatpush1.msra.mxu0 0.0
  %4489 = vmatprep.subr.mxu0 0.0
  %4490 = vmatpush1.msra.mxu0 0.0
  %4491 = vmatprep.subr.mxu0 0.0
  %4492 = vmatpush1.msra.mxu0 0.0
  %4493 = vmatprep.subr.mxu0 0.0
  %4494 = vmatpush1.msra.mxu0 0.0
  %4495 = vmatprep.subr.mxu0 0.0
  %4496 = vmatpush1.msra.mxu0 0.0
  %4497 = vmatprep.subr.mxu0 0.0
  %4498 = vmatpush1.msra.mxu0 0.0
  %4499 = vmatprep.subr.mxu0 0.0
  %4500 = vmatpush1.msra.mxu0 0.0
  %4501 = vmatprep.subr.mxu0 0.0
  %4502 = vmatpush1.msra.mxu0 0.0
  %4503 = vmatprep.subr.mxu0 0.0
  %4504 = vmatpush1.msra.mxu0 0.0
  %4505 = vmatprep.subr.mxu0 0.0
  %4506 = vmatpush1.msra.mxu0 0.0
  %4507 = vmatprep.subr.mxu0 0.0
  %4508 = vmatpush1.msra.mxu0 0.0
  %4509 = vmatprep.subr.mxu0 0.0
  %4510 = vmatpush1.msra.mxu0 0.0
  %4511 = vmatprep.subr.mxu0 0.0
  %4512 = vmatpush1.msra.mxu0 0.0
  %4513 = vmatprep.subr.mxu0 0.0
  %4514 = vmatpush1.msra.mxu0 0.0
  %4515 = vmatprep.subr.mxu0 0.0
  %4516 = vmatpush1.msra.mxu0 0.0
  %4517 = vmatprep.subr.mxu0 0.0
  %4518 = vmatpush1.msra.mxu0 0.0
  %4519 = vmatprep.subr.mxu0 0.0
  %4520 = vmatpush1.msra.mxu0 0.0
  %4521 = vmatprep.subr.mxu0 0.0
  %4522 = vmatpush1.msra.mxu0 0.0
  %4523 = vmatprep.subr.mxu0 0.0
  %4524 = vmatpush1.msra.mxu0 0.0
  %4525 = vmatprep.subr.mxu0 0.0
  %4526 = vmatpush1.msra.mxu0 0.0
  %4527 = vmatprep.subr.mxu0 0.0
  %4528 = vmatpush1.msra.mxu0 0.0
  %4529 = vmatprep.subr.mxu0 0.0
  %4530 = vmatpush1.msra.mxu0 0.0
  %4531 = vmatprep.subr.mxu0 0.0
  %4532 = vmatpush1.msra.mxu0 0.0
  %4533 = vmatprep.subr.mxu0 0.0
  %4534 = vmatpush1.msra.mxu0 0.0
  %4535 = vmatprep.subr.mxu0 0.0
  %4536 = vmatpush1.msra.mxu0 0.0
  %4537 = vmatprep.subr.mxu0 0.0
  %4538 = vmatpush1.msra.mxu0 0.0
  %4539 = vmatprep.subr.mxu0 0.0
  %4540 = vmatpush1.msra.mxu0 0.0
  %4541 = vmatprep.subr.mxu0 0.0
  %4542 = vmatpush1.msra.mxu0 0.0
  %4543 = vmatprep.subr.mxu0 0.0
  %4544 = vmatpush1.msra.mxu0 0.0
  %4545 = vmatprep.subr.mxu0 0.0
  %4546 = vmatpush1.msra.mxu0 0.0
  %4547 = vmatprep.mubr.f32.mxu0 0.0
  %4548 = vmatmul.mubr.f32.gmra.mrb[0].mxu0 %v2133
  %v4549 = vpop.f32.mrb[0].mxu0
  %v4550 = vadd.f32 0.0, %v4549
  %v4551 = vpop.f32.mrb[0].mxu0
  %4552 = vmatprep.mubr.f32.mxu0 0.0
  %4553 = vmatmul.mubr.f32.gmra.mrb[0].mxu0 %v2136
  %v4554 = vpop.f32.mrb[0].mxu0
  %v4555 = vadd.f32 0.0, %v4554
  %v4556 = vpop.f32.mrb[0].mxu0
  %4557 = vmatprep.mubr.f32.mxu0 0.0
  %4558 = vmatmul.mubr.f32.gmra.mrb[0].mxu0 %v2139
  %v4559 = vpop.f32.mrb[0].mxu0
  %v4560 = vadd.f32 0.0, %v4559
  %v4561 = vpop.f32.mrb[0].mxu0
  %4562 = vmatprep.mubr.f32.mxu0 0.0
  %4563 = vmatmul.mubr.f32.gmra.mrb[0].mxu0 %v2142
  %v4564 = vpop.f32.mrb[0].mxu0
  %v4565 = vadd.f32 0.0, %v4564
  %v4566 = vpop.f32.mrb[0].mxu0
  %4567 = vdwg.mxu0
  %s4568 = scalar_lea.vmem %s3, 832
  %4569 = vst.msk [vmem:[%s4568] sm:$0xff] %vm718, %v4550
  %4570 = vst.msk [vmem:[%s4568 + $0x8] sm:$0xff] %vm718, %v4555
  %4571 = vst.msk [vmem:[%s4568 + $0x10] sm:$0xff] %vm718, %v4560
  %4572 = vst.msk [vmem:[%s4568 + $0x18] sm:$0xff] %vm718, %v4565
  %4573 = vmatprep.subr.mxu0 0.0
  %4574 = vmatpush1.msra.mxu0 %v1991
  %4575 = vmatprep.subr.mxu0 0.0
  %4576 = vmatpush1.msra.mxu0 %v2127
  %4577 = vmatprep.subr.mxu0 0.0
  %4578 = vmatpush1.msra.mxu0 0.0
  %4579 = vmatprep.subr.mxu0 0.0
  %4580 = vmatpush1.msra.mxu0 0.0
  %4581 = vmatprep.subr.mxu0 0.0
  %4582 = vmatpush1.msra.mxu0 0.0
  %4583 = vmatprep.subr.mxu0 0.0
  %4584 = vmatpush1.msra.mxu0 0.0
  %4585 = vmatprep.subr.mxu0 0.0
  %4586 = vmatpush1.msra.mxu0 0.0
  %4587 = vmatprep.subr.mxu0 0.0
  %4588 = vmatpush1.msra.mxu0 0.0
  %4589 = vmatprep.subr.mxu0 0.0
  %4590 = vmatpush1.msra.mxu0 0.0
  %4591 = vmatprep.subr.mxu0 0.0
  %4592 = vmatpush1.msra.mxu0 0.0
  %4593 = vmatprep.subr.mxu0 0.0
  %4594 = vmatpush1.msra.mxu0 0.0
  %4595 = vmatprep.subr.mxu0 0.0
  %4596 = vmatpush1.msra.mxu0 0.0
  %4597 = vmatprep.subr.mxu0 0.0
  %4598 = vmatpush1.msra.mxu0 0.0
  %4599 = vmatprep.subr.mxu0 0.0
  %4600 = vmatpush1.msra.mxu0 0.0
  %4601 = vmatprep.subr.mxu0 0.0
  %4602 = vmatpush1.msra.mxu0 0.0
  %4603 = vmatprep.subr.mxu0 0.0
  %4604 = vmatpush1.msra.mxu0 0.0
  %4605 = vmatprep.subr.mxu0 0.0
  %4606 = vmatpush1.msra.mxu0 0.0
  %4607 = vmatprep.subr.mxu0 0.0
  %4608 = vmatpush1.msra.mxu0 0.0
  %4609 = vmatprep.subr.mxu0 0.0
  %4610 = vmatpush1.msra.mxu0 0.0
  %4611 = vmatprep.subr.mxu0 0.0
  %4612 = vmatpush1.msra.mxu0 0.0
  %4613 = vmatprep.subr.mxu0 0.0
  %4614 = vmatpush1.msra.mxu0 0.0
  %4615 = vmatprep.subr.mxu0 0.0
  %4616 = vmatpush1.msra.mxu0 0.0
  %4617 = vmatprep.subr.mxu0 0.0
  %4618 = vmatpush1.msra.mxu0 0.0
  %4619 = vmatprep.subr.mxu0 0.0
  %4620 = vmatpush1.msra.mxu0 0.0
  %4621 = vmatprep.subr.mxu0 0.0
  %4622 = vmatpush1.msra.mxu0 0.0
  %4623 = vmatprep.subr.mxu0 0.0
  %4624 = vmatpush1.msra.mxu0 0.0
  %4625 = vmatprep.subr.mxu0 0.0
  %4626 = vmatpush1.msra.mxu0 0.0
  %4627 = vmatprep.subr.mxu0 0.0
  %4628 = vmatpush1.msra.mxu0 0.0
  %4629 = vmatprep.subr.mxu0 0.0
  %4630 = vmatpush1.msra.mxu0 0.0
  %4631 = vmatprep.subr.mxu0 0.0
  %4632 = vmatpush1.msra.mxu0 0.0
  %4633 = vmatprep.subr.mxu0 0.0
  %4634 = vmatpush1.msra.mxu0 0.0
  %4635 = vmatprep.subr.mxu0 0.0
  %4636 = vmatpush1.msra.mxu0 0.0
  %4637 = vmatprep.mubr.f32.mxu0 0.0
  %4638 = vmatmul.mubr.f32.gmra.mrb[0].mxu0 %v2133
  %v4639 = vpop.f32.mrb[0].mxu0
  %v4640 = vadd.f32 0.0, %v4639
  %v4641 = vpop.f32.mrb[0].mxu0
  %4642 = vmatprep.mubr.f32.mxu0 0.0
  %4643 = vmatmul.mubr.f32.gmra.mrb[0].mxu0 %v2136
  %v4644 = vpop.f32.mrb[0].mxu0
  %v4645 = vadd.f32 0.0, %v4644
  %v4646 = vpop.f32.mrb[0].mxu0
  %4647 = vmatprep.mubr.f32.mxu0 0.0
  %4648 = vmatmul.mubr.f32.gmra.mrb[0].mxu0 %v2139
  %v4649 = vpop.f32.mrb[0].mxu0
  %v4650 = vadd.f32 0.0, %v4649
  %v4651 = vpop.f32.mrb[0].mxu0
  %4652 = vmatprep.mubr.f32.mxu0 0.0
  %4653 = vmatmul.mubr.f32.gmra.mrb[0].mxu0 %v2142
  %v4654 = vpop.f32.mrb[0].mxu0
  %v4655 = vadd.f32 0.0, %v4654
  %v4656 = vpop.f32.mrb[0].mxu0
  %4657 = vdwg.mxu0
  %s4658 = scalar_lea.vmem %s3, 864
  %4659 = vst.msk [vmem:[%s4658] sm:$0xff] %vm718, %v4640
  %4660 = vst.msk [vmem:[%s4658 + $0x8] sm:$0xff] %vm718, %v4645
  %4661 = vst.msk [vmem:[%s4658 + $0x10] sm:$0xff] %vm718, %v4650
  %4662 = vst.msk [vmem:[%s4658 + $0x18] sm:$0xff] %vm718, %v4655
  %4663 = vmatprep.subr.mxu0 0.0
  %4664 = vmatpush1.msra.mxu0 %v1992
  %4665 = vmatprep.subr.mxu0 0.0
  %4666 = vmatpush1.msra.mxu0 %v2128
  %4667 = vmatprep.subr.mxu0 0.0
  %4668 = vmatpush1.msra.mxu0 0.0
  %4669 = vmatprep.subr.mxu0 0.0
  %4670 = vmatpush1.msra.mxu0 0.0
  %4671 = vmatprep.subr.mxu0 0.0
  %4672 = vmatpush1.msra.mxu0 0.0
  %4673 = vmatprep.subr.mxu0 0.0
  %4674 = vmatpush1.msra.mxu0 0.0
  %4675 = vmatprep.subr.mxu0 0.0
  %4676 = vmatpush1.msra.mxu0 0.0
  %4677 = vmatprep.subr.mxu0 0.0
  %4678 = vmatpush1.msra.mxu0 0.0
  %4679 = vmatprep.subr.mxu0 0.0
  %4680 = vmatpush1.msra.mxu0 0.0
  %4681 = vmatprep.subr.mxu0 0.0
  %4682 = vmatpush1.msra.mxu0 0.0
  %4683 = vmatprep.subr.mxu0 0.0
  %4684 = vmatpush1.msra.mxu0 0.0
  %4685 = vmatprep.subr.mxu0 0.0
  %4686 = vmatpush1.msra.mxu0 0.0
  %4687 = vmatprep.subr.mxu0 0.0
  %4688 = vmatpush1.msra.mxu0 0.0
  %4689 = vmatprep.subr.mxu0 0.0
  %4690 = vmatpush1.msra.mxu0 0.0
  %4691 = vmatprep.subr.mxu0 0.0
  %4692 = vmatpush1.msra.mxu0 0.0
  %4693 = vmatprep.subr.mxu0 0.0
  %4694 = vmatpush1.msra.mxu0 0.0
  %4695 = vmatprep.subr.mxu0 0.0
  %4696 = vmatpush1.msra.mxu0 0.0
  %4697 = vmatprep.subr.mxu0 0.0
  %4698 = vmatpush1.msra.mxu0 0.0
  %4699 = vmatprep.subr.mxu0 0.0
  %4700 = vmatpush1.msra.mxu0 0.0
  %4701 = vmatprep.subr.mxu0 0.0
  %4702 = vmatpush1.msra.mxu0 0.0
  %4703 = vmatprep.subr.mxu0 0.0
  %4704 = vmatpush1.msra.mxu0 0.0
  %4705 = vmatprep.subr.mxu0 0.0
  %4706 = vmatpush1.msra.mxu0 0.0
  %4707 = vmatprep.subr.mxu0 0.0
  %4708 = vmatpush1.msra.mxu0 0.0
  %4709 = vmatprep.subr.mxu0 0.0
  %4710 = vmatpush1.msra.mxu0 0.0
  %4711 = vmatprep.subr.mxu0 0.0
  %4712 = vmatpush1.msra.mxu0 0.0
  %4713 = vmatprep.subr.mxu0 0.0
  %4714 = vmatpush1.msra.mxu0 0.0
  %4715 = vmatprep.subr.mxu0 0.0
  %4716 = vmatpush1.msra.mxu0 0.0
  %4717 = vmatprep.subr.mxu0 0.0
  %4718 = vmatpush1.msra.mxu0 0.0
  %4719 = vmatprep.subr.mxu0 0.0
  %4720 = vmatpush1.msra.mxu0 0.0
  %4721 = vmatprep.subr.mxu0 0.0
  %4722 = vmatpush1.msra.mxu0 0.0
  %4723 = vmatprep.subr.mxu0 0.0
  %4724 = vmatpush1.msra.mxu0 0.0
  %4725 = vmatprep.subr.mxu0 0.0
  %4726 = vmatpush1.msra.mxu0 0.0
  %4727 = vmatprep.mubr.f32.mxu0 0.0
  %4728 = vmatmul.mubr.f32.gmra.mrb[0].mxu0 %v2133
  %v4729 = vpop.f32.mrb[0].mxu0
  %v4730 = vadd.f32 0.0, %v4729
  %v4731 = vpop.f32.mrb[0].mxu0
  %4732 = vmatprep.mubr.f32.mxu0 0.0
  %4733 = vmatmul.mubr.f32.gmra.mrb[0].mxu0 %v2136
  %v4734 = vpop.f32.mrb[0].mxu0
  %v4735 = vadd.f32 0.0, %v4734
  %v4736 = vpop.f32.mrb[0].mxu0
  %4737 = vmatprep.mubr.f32.mxu0 0.0
  %4738 = vmatmul.mubr.f32.gmra.mrb[0].mxu0 %v2139
  %v4739 = vpop.f32.mrb[0].mxu0
  %v4740 = vadd.f32 0.0, %v4739
  %v4741 = vpop.f32.mrb[0].mxu0
  %4742 = vmatprep.mubr.f32.mxu0 0.0
  %4743 = vmatmul.mubr.f32.gmra.mrb[0].mxu0 %v2142
  %v4744 = vpop.f32.mrb[0].mxu0
  %v4745 = vadd.f32 0.0, %v4744
  %v4746 = vpop.f32.mrb[0].mxu0
  %4747 = vdwg.mxu0
  %s4748 = scalar_lea.vmem %s3, 896
  %4749 = vst.msk [vmem:[%s4748] sm:$0xff] %vm718, %v4730
  %4750 = vst.msk [vmem:[%s4748 + $0x8] sm:$0xff] %vm718, %v4735
  %4751 = vst.msk [vmem:[%s4748 + $0x10] sm:$0xff] %vm718, %v4740
  %4752 = vst.msk [vmem:[%s4748 + $0x18] sm:$0xff] %vm718, %v4745
  %4753 = vmatprep.subr.mxu0 0.0
  %4754 = vmatpush1.msra.mxu0 %v1993
  %4755 = vmatprep.subr.mxu0 0.0
  %4756 = vmatpush1.msra.mxu0 %v2129
  %4757 = vmatprep.subr.mxu0 0.0
  %4758 = vmatpush1.msra.mxu0 0.0
  %4759 = vmatprep.subr.mxu0 0.0
  %4760 = vmatpush1.msra.mxu0 0.0
  %4761 = vmatprep.subr.mxu0 0.0
  %4762 = vmatpush1.msra.mxu0 0.0
  %4763 = vmatprep.subr.mxu0 0.0
  %4764 = vmatpush1.msra.mxu0 0.0
  %4765 = vmatprep.subr.mxu0 0.0
  %4766 = vmatpush1.msra.mxu0 0.0
  %4767 = vmatprep.subr.mxu0 0.0
  %4768 = vmatpush1.msra.mxu0 0.0
  %4769 = vmatprep.subr.mxu0 0.0
  %4770 = vmatpush1.msra.mxu0 0.0
  %4771 = vmatprep.subr.mxu0 0.0
  %4772 = vmatpush1.msra.mxu0 0.0
  %4773 = vmatprep.subr.mxu0 0.0
  %4774 = vmatpush1.msra.mxu0 0.0
  %4775 = vmatprep.subr.mxu0 0.0
  %4776 = vmatpush1.msra.mxu0 0.0
  %4777 = vmatprep.subr.mxu0 0.0
  %4778 = vmatpush1.msra.mxu0 0.0
  %4779 = vmatprep.subr.mxu0 0.0
  %4780 = vmatpush1.msra.mxu0 0.0
  %4781 = vmatprep.subr.mxu0 0.0
  %4782 = vmatpush1.msra.mxu0 0.0
  %4783 = vmatprep.subr.mxu0 0.0
  %4784 = vmatpush1.msra.mxu0 0.0
  %4785 = vmatprep.subr.mxu0 0.0
  %4786 = vmatpush1.msra.mxu0 0.0
  %4787 = vmatprep.subr.mxu0 0.0
  %4788 = vmatpush1.msra.mxu0 0.0
  %4789 = vmatprep.subr.mxu0 0.0
  %4790 = vmatpush1.msra.mxu0 0.0
  %4791 = vmatprep.subr.mxu0 0.0
  %4792 = vmatpush1.msra.mxu0 0.0
  %4793 = vmatprep.subr.mxu0 0.0
  %4794 = vmatpush1.msra.mxu0 0.0
  %4795 = vmatprep.subr.mxu0 0.0
  %4796 = vmatpush1.msra.mxu0 0.0
  %4797 = vmatprep.subr.mxu0 0.0
  %4798 = vmatpush1.msra.mxu0 0.0
  %4799 = vmatprep.subr.mxu0 0.0
  %4800 = vmatpush1.msra.mxu0 0.0
  %4801 = vmatprep.subr.mxu0 0.0
  %4802 = vmatpush1.msra.mxu0 0.0
  %4803 = vmatprep.subr.mxu0 0.0
  %4804 = vmatpush1.msra.mxu0 0.0
  %4805 = vmatprep.subr.mxu0 0.0
  %4806 = vmatpush1.msra.mxu0 0.0
  %4807 = vmatprep.subr.mxu0 0.0
  %4808 = vmatpush1.msra.mxu0 0.0
  %4809 = vmatprep.subr.mxu0 0.0
  %4810 = vmatpush1.msra.mxu0 0.0
  %4811 = vmatprep.subr.mxu0 0.0
  %4812 = vmatpush1.msra.mxu0 0.0
  %4813 = vmatprep.subr.mxu0 0.0
  %4814 = vmatpush1.msra.mxu0 0.0
  %4815 = vmatprep.subr.mxu0 0.0
  %4816 = vmatpush1.msra.mxu0 0.0
  %4817 = vmatprep.mubr.f32.mxu0 0.0
  %4818 = vmatmul.mubr.f32.gmra.mrb[0].mxu0 %v2133
  %v4819 = vpop.f32.mrb[0].mxu0
  %v4820 = vadd.f32 0.0, %v4819
  %v4821 = vpop.f32.mrb[0].mxu0
  %4822 = vmatprep.mubr.f32.mxu0 0.0
  %4823 = vmatmul.mubr.f32.gmra.mrb[0].mxu0 %v2136
  %v4824 = vpop.f32.mrb[0].mxu0
  %v4825 = vadd.f32 0.0, %v4824
  %v4826 = vpop.f32.mrb[0].mxu0
  %4827 = vmatprep.mubr.f32.mxu0 0.0
  %4828 = vmatmul.mubr.f32.gmra.mrb[0].mxu0 %v2139
  %v4829 = vpop.f32.mrb[0].mxu0
  %v4830 = vadd.f32 0.0, %v4829
  %v4831 = vpop.f32.mrb[0].mxu0
  %4832 = vmatprep.mubr.f32.mxu0 0.0
  %4833 = vmatmul.mubr.f32.gmra.mrb[0].mxu0 %v2142
  %v4834 = vpop.f32.mrb[0].mxu0
  %v4835 = vadd.f32 0.0, %v4834
  %v4836 = vpop.f32.mrb[0].mxu0
  %4837 = vdwg.mxu0
  %s4838 = scalar_lea.vmem %s3, 928
  %4839 = vst.msk [vmem:[%s4838] sm:$0xff] %vm718, %v4820
  %4840 = vst.msk [vmem:[%s4838 + $0x8] sm:$0xff] %vm718, %v4825
  %4841 = vst.msk [vmem:[%s4838 + $0x10] sm:$0xff] %vm718, %v4830
  %4842 = vst.msk [vmem:[%s4838 + $0x18] sm:$0xff] %vm718, %v4835
  %4843 = vmatprep.subr.mxu0 0.0
  %4844 = vmatpush1.msra.mxu0 %v1994
  %4845 = vmatprep.subr.mxu0 0.0
  %4846 = vmatpush1.msra.mxu0 %v2130
  %4847 = vmatprep.subr.mxu0 0.0
  %4848 = vmatpush1.msra.mxu0 0.0
  %4849 = vmatprep.subr.mxu0 0.0
  %4850 = vmatpush1.msra.mxu0 0.0
  %4851 = vmatprep.subr.mxu0 0.0
  %4852 = vmatpush1.msra.mxu0 0.0
  %4853 = vmatprep.subr.mxu0 0.0
  %4854 = vmatpush1.msra.mxu0 0.0
  %4855 = vmatprep.subr.mxu0 0.0
  %4856 = vmatpush1.msra.mxu0 0.0
  %4857 = vmatprep.subr.mxu0 0.0
  %4858 = vmatpush1.msra.mxu0 0.0
  %4859 = vmatprep.subr.mxu0 0.0
  %4860 = vmatpush1.msra.mxu0 0.0
  %4861 = vmatprep.subr.mxu0 0.0
  %4862 = vmatpush1.msra.mxu0 0.0
  %4863 = vmatprep.subr.mxu0 0.0
  %4864 = vmatpush1.msra.mxu0 0.0
  %4865 = vmatprep.subr.mxu0 0.0
  %4866 = vmatpush1.msra.mxu0 0.0
  %4867 = vmatprep.subr.mxu0 0.0
  %4868 = vmatpush1.msra.mxu0 0.0
  %4869 = vmatprep.subr.mxu0 0.0
  %4870 = vmatpush1.msra.mxu0 0.0
  %4871 = vmatprep.subr.mxu0 0.0
  %4872 = vmatpush1.msra.mxu0 0.0
  %4873 = vmatprep.subr.mxu0 0.0
  %4874 = vmatpush1.msra.mxu0 0.0
  %4875 = vmatprep.subr.mxu0 0.0
  %4876 = vmatpush1.msra.mxu0 0.0
  %4877 = vmatprep.subr.mxu0 0.0
  %4878 = vmatpush1.msra.mxu0 0.0
  %4879 = vmatprep.subr.mxu0 0.0
  %4880 = vmatpush1.msra.mxu0 0.0
  %4881 = vmatprep.subr.mxu0 0.0
  %4882 = vmatpush1.msra.mxu0 0.0
  %4883 = vmatprep.subr.mxu0 0.0
  %4884 = vmatpush1.msra.mxu0 0.0
  %4885 = vmatprep.subr.mxu0 0.0
  %4886 = vmatpush1.msra.mxu0 0.0
  %4887 = vmatprep.subr.mxu0 0.0
  %4888 = vmatpush1.msra.mxu0 0.0
  %4889 = vmatprep.subr.mxu0 0.0
  %4890 = vmatpush1.msra.mxu0 0.0
  %4891 = vmatprep.subr.mxu0 0.0
  %4892 = vmatpush1.msra.mxu0 0.0
  %4893 = vmatprep.subr.mxu0 0.0
  %4894 = vmatpush1.msra.mxu0 0.0
  %4895 = vmatprep.subr.mxu0 0.0
  %4896 = vmatpush1.msra.mxu0 0.0
  %4897 = vmatprep.subr.mxu0 0.0
  %4898 = vmatpush1.msra.mxu0 0.0
  %4899 = vmatprep.subr.mxu0 0.0
  %4900 = vmatpush1.msra.mxu0 0.0
  %4901 = vmatprep.subr.mxu0 0.0
  %4902 = vmatpush1.msra.mxu0 0.0
  %4903 = vmatprep.subr.mxu0 0.0
  %4904 = vmatpush1.msra.mxu0 0.0
  %4905 = vmatprep.subr.mxu0 0.0
  %4906 = vmatpush1.msra.mxu0 0.0
  %4907 = vmatprep.mubr.f32.mxu0 0.0
  %4908 = vmatmul.mubr.f32.gmra.mrb[0].mxu0 %v2133
  %v4909 = vpop.f32.mrb[0].mxu0
  %v4910 = vadd.f32 0.0, %v4909
  %v4911 = vpop.f32.mrb[0].mxu0
  %4912 = vmatprep.mubr.f32.mxu0 0.0
  %4913 = vmatmul.mubr.f32.gmra.mrb[0].mxu0 %v2136
  %v4914 = vpop.f32.mrb[0].mxu0
  %v4915 = vadd.f32 0.0, %v4914
  %v4916 = vpop.f32.mrb[0].mxu0
  %4917 = vmatprep.mubr.f32.mxu0 0.0
  %4918 = vmatmul.mubr.f32.gmra.mrb[0].mxu0 %v2139
  %v4919 = vpop.f32.mrb[0].mxu0
  %v4920 = vadd.f32 0.0, %v4919
  %v4921 = vpop.f32.mrb[0].mxu0
  %4922 = vmatprep.mubr.f32.mxu0 0.0
  %4923 = vmatmul.mubr.f32.gmra.mrb[0].mxu0 %v2142
  %v4924 = vpop.f32.mrb[0].mxu0
  %v4925 = vadd.f32 0.0, %v4924
  %v4926 = vpop.f32.mrb[0].mxu0
  %4927 = vdwg.mxu0
  %s4928 = scalar_lea.vmem %s3, 960
  %4929 = vst.msk [vmem:[%s4928] sm:$0xff] %vm718, %v4910
  %4930 = vst.msk [vmem:[%s4928 + $0x8] sm:$0xff] %vm718, %v4915
  %4931 = vst.msk [vmem:[%s4928 + $0x10] sm:$0xff] %vm718, %v4920
  %4932 = vst.msk [vmem:[%s4928 + $0x18] sm:$0xff] %vm718, %v4925
  %4933 = vmatprep.subr.mxu0 0.0
  %4934 = vmatpush1.msra.mxu0 %v1995
  %4935 = vmatprep.subr.mxu0 0.0
  %4936 = vmatpush1.msra.mxu0 %v2131
  %4937 = vmatprep.subr.mxu0 0.0
  %4938 = vmatpush1.msra.mxu0 0.0
  %4939 = vmatprep.subr.mxu0 0.0
  %4940 = vmatpush1.msra.mxu0 0.0
  %4941 = vmatprep.subr.mxu0 0.0
  %4942 = vmatpush1.msra.mxu0 0.0
  %4943 = vmatprep.subr.mxu0 0.0
  %4944 = vmatpush1.msra.mxu0 0.0
  %4945 = vmatprep.subr.mxu0 0.0
  %4946 = vmatpush1.msra.mxu0 0.0
  %4947 = vmatprep.subr.mxu0 0.0
  %4948 = vmatpush1.msra.mxu0 0.0
  %4949 = vmatprep.subr.mxu0 0.0
  %4950 = vmatpush1.msra.mxu0 0.0
  %4951 = vmatprep.subr.mxu0 0.0
  %4952 = vmatpush1.msra.mxu0 0.0
  %4953 = vmatprep.subr.mxu0 0.0
  %4954 = vmatpush1.msra.mxu0 0.0
  %4955 = vmatprep.subr.mxu0 0.0
  %4956 = vmatpush1.msra.mxu0 0.0
  %4957 = vmatprep.subr.mxu0 0.0
  %4958 = vmatpush1.msra.mxu0 0.0
  %4959 = vmatprep.subr.mxu0 0.0
  %4960 = vmatpush1.msra.mxu0 0.0
  %4961 = vmatprep.subr.mxu0 0.0
  %4962 = vmatpush1.msra.mxu0 0.0
  %4963 = vmatprep.subr.mxu0 0.0
  %4964 = vmatpush1.msra.mxu0 0.0
  %4965 = vmatprep.subr.mxu0 0.0
  %4966 = vmatpush1.msra.mxu0 0.0
  %4967 = vmatprep.subr.mxu0 0.0
  %4968 = vmatpush1.msra.mxu0 0.0
  %4969 = vmatprep.subr.mxu0 0.0
  %4970 = vmatpush1.msra.mxu0 0.0
  %4971 = vmatprep.subr.mxu0 0.0
  %4972 = vmatpush1.msra.mxu0 0.0
  %4973 = vmatprep.subr.mxu0 0.0
  %4974 = vmatpush1.msra.mxu0 0.0
  %4975 = vmatprep.subr.mxu0 0.0
  %4976 = vmatpush1.msra.mxu0 0.0
  %4977 = vmatprep.subr.mxu0 0.0
  %4978 = vmatpush1.msra.mxu0 0.0
  %4979 = vmatprep.subr.mxu0 0.0
  %4980 = vmatpush1.msra.mxu0 0.0
  %4981 = vmatprep.subr.mxu0 0.0
  %4982 = vmatpush1.msra.mxu0 0.0
  %4983 = vmatprep.subr.mxu0 0.0
  %4984 = vmatpush1.msra.mxu0 0.0
  %4985 = vmatprep.subr.mxu0 0.0
  %4986 = vmatpush1.msra.mxu0 0.0
  %4987 = vmatprep.subr.mxu0 0.0
  %4988 = vmatpush1.msra.mxu0 0.0
  %4989 = vmatprep.subr.mxu0 0.0
  %4990 = vmatpush1.msra.mxu0 0.0
  %4991 = vmatprep.subr.mxu0 0.0
  %4992 = vmatpush1.msra.mxu0 0.0
  %4993 = vmatprep.subr.mxu0 0.0
  %4994 = vmatpush1.msra.mxu0 0.0
  %4995 = vmatprep.subr.mxu0 0.0
  %4996 = vmatpush1.msra.mxu0 0.0
  %4997 = vmatprep.mubr.f32.mxu0 0.0
  %4998 = vmatmul.mubr.f32.gmra.mrb[0].mxu0 %v2133
  %v4999 = vpop.f32.mrb[0].mxu0
  %v5000 = vadd.f32 0.0, %v4999
  %v5001 = vpop.f32.mrb[0].mxu0
  %5002 = vmatprep.mubr.f32.mxu0 0.0
  %5003 = vmatmul.mubr.f32.gmra.mrb[0].mxu0 %v2136
  %v5004 = vpop.f32.mrb[0].mxu0
  %v5005 = vadd.f32 0.0, %v5004
  %v5006 = vpop.f32.mrb[0].mxu0
  %5007 = vmatprep.mubr.f32.mxu0 0.0
  %5008 = vmatmul.mubr.f32.gmra.mrb[0].mxu0 %v2139
  %v5009 = vpop.f32.mrb[0].mxu0
  %v5010 = vadd.f32 0.0, %v5009
  %v5011 = vpop.f32.mrb[0].mxu0
  %5012 = vmatprep.mubr.f32.mxu0 0.0
  %5013 = vmatmul.mubr.f32.gmra.mrb[0].mxu0 %v2142
  %v5014 = vpop.f32.mrb[0].mxu0
  %v5015 = vadd.f32 0.0, %v5014
  %v5016 = vpop.f32.mrb[0].mxu0
  %5017 = vdwg.mxu0
  %s5018 = scalar_lea.vmem %s3, 992
  %5019 = vst.msk [vmem:[%s5018] sm:$0xff] %vm718, %v5000
  %5020 = vst.msk [vmem:[%s5018 + $0x8] sm:$0xff] %vm718, %v5005
  %5021 = vst.msk [vmem:[%s5018 + $0x10] sm:$0xff] %vm718, %v5010
  %5022 = vst.msk [vmem:[%s5018 + $0x18] sm:$0xff] %vm718, %v5015
  %s5023 = scalar_lea.vmem %s0, 256
  %v5024 = vld [vmem:[%s5023] sm:$0xff]
  %v5025 = vld [vmem:[%s5023 + $0x8] sm:$0xff]
  %v5026 = vld [vmem:[%s5023 + $0x10] sm:$0xff]
  %v5027 = vld [vmem:[%s5023 + $0x18] sm:$0xff]
  %v5028 = vld [vmem:[%s5023 + $0x20] sm:$0xff]
  %v5029 = vld [vmem:[%s5023 + $0x28] sm:$0xff]
  %v5030 = vld [vmem:[%s5023 + $0x30] sm:$0xff]
  %v5031 = vld [vmem:[%s5023 + $0x38] sm:$0xff]
  %v5032 = vld [vmem:[%s5023 + $0x40] sm:$0xff]
  %v5033 = vld [vmem:[%s5023 + $0x48] sm:$0xff]
  %v5034 = vld [vmem:[%s5023 + $0x50] sm:$0xff]
  %v5035 = vld [vmem:[%s5023 + $0x58] sm:$0xff]
  %v5036 = vld [vmem:[%s5023 + $0x60] sm:$0xff]
  %v5037 = vld [vmem:[%s5023 + $0x68] sm:$0xff]
  %v5038 = vld [vmem:[%s5023 + $0x70] sm:$0xff]
  %v5039 = vld [vmem:[%s5023 + $0x78] sm:$0xff]
  %v5040 = vld [vmem:[%s5023 + $0x80] sm:$0xff]
  %v5041 = vld [vmem:[%s5023 + $0x88] sm:$0xff]
  %v5042 = vld [vmem:[%s5023 + $0x90] sm:$0xff]
  %v5043 = vld [vmem:[%s5023 + $0x98] sm:$0xff]
  %v5044 = vld [vmem:[%s5023 + $0xa0] sm:$0xff]
  %v5045 = vld [vmem:[%s5023 + $0xa8] sm:$0xff]
  %v5046 = vld [vmem:[%s5023 + $0xb0] sm:$0xff]
  %v5047 = vld [vmem:[%s5023 + $0xb8] sm:$0xff]
  %v5048 = vld [vmem:[%s5023 + $0xc0] sm:$0xff]
  %v5049 = vld [vmem:[%s5023 + $0xc8] sm:$0xff]
  %v5050 = vld [vmem:[%s5023 + $0xd0] sm:$0xff]
  %v5051 = vld [vmem:[%s5023 + $0xd8] sm:$0xff]
  %v5052 = vld [vmem:[%s5023 + $0xe0] sm:$0xff]
  %v5053 = vld [vmem:[%s5023 + $0xe8] sm:$0xff]
  %v5054 = vld [vmem:[%s5023 + $0xf0] sm:$0xff]
  %v5055 = vld [vmem:[%s5023 + $0xf8] sm:$0xff]
  %v5056 = vcombine.low %v5024, %v5028
  %v5057 = vcombine.high %v5024, %v5028
  %v5059 = vunpack.c.l.s4 1983009808
  %v5060 = vunpack.c.0.s8 %v5059
  %v5061 = vlaneseq
  %v5062 = vshrl.u32 %v5061, 7
  %v5063 = vsub.s32 %v5060, %v5062
  %v5064 = vrot.slane %v5056, %v5063
  %v5066 = vunpack.c.l.s4 1983009808
  %v5067 = vunpack.c.0.s8 %v5066
  %v5068 = vlaneseq
  %v5069 = vshrl.u32 %v5068, 7
  %v5070 = vsub.s32 %v5067, %v5069
  %v5071 = vrot.slane %v5057, %v5070
  %v5072 = vcombine.low %v5026, %v5030
  %v5073 = vcombine.high %v5026, %v5030
  %v5075 = vunpack.c.l.s4 1983009808
  %v5076 = vunpack.c.0.s8 %v5075
  %v5077 = vlaneseq
  %v5078 = vshrl.u32 %v5077, 7
  %v5079 = vsub.s32 %v5076, %v5078
  %v5080 = vrot.slane %v5072, %v5079
  %v5082 = vunpack.c.l.s4 1983009808
  %v5083 = vunpack.c.0.s8 %v5082
  %v5084 = vlaneseq
  %v5085 = vshrl.u32 %v5084, 7
  %v5086 = vsub.s32 %v5083, %v5085
  %v5087 = vrot.slane %v5073, %v5086
  %v5088 = vcombine.low %v5032, %v5036
  %v5089 = vcombine.high %v5032, %v5036
  %v5091 = vunpack.c.l.s4 1983009808
  %v5092 = vunpack.c.0.s8 %v5091
  %v5093 = vlaneseq
  %v5094 = vshrl.u32 %v5093, 7
  %v5095 = vsub.s32 %v5092, %v5094
  %v5096 = vrot.slane %v5088, %v5095
  %v5098 = vunpack.c.l.s4 1983009808
  %v5099 = vunpack.c.0.s8 %v5098
  %v5100 = vlaneseq
  %v5101 = vshrl.u32 %v5100, 7
  %v5102 = vsub.s32 %v5099, %v5101
  %v5103 = vrot.slane %v5089, %v5102
  %v5104 = vcombine.low %v5034, %v5038
  %v5105 = vcombine.high %v5034, %v5038
  %v5107 = vunpack.c.l.s4 1983009808
  %v5108 = vunpack.c.0.s8 %v5107
  %v5109 = vlaneseq
  %v5110 = vshrl.u32 %v5109, 7
  %v5111 = vsub.s32 %v5108, %v5110
  %v5112 = vrot.slane %v5104, %v5111
  %v5114 = vunpack.c.l.s4 1983009808
  %v5115 = vunpack.c.0.s8 %v5114
  %v5116 = vlaneseq
  %v5117 = vshrl.u32 %v5116, 7
  %v5118 = vsub.s32 %v5115, %v5117
  %v5119 = vrot.slane %v5105, %v5118
  %v5120 = vcombine.low %v5064, %v5080
  %v5121 = vcombine.high %v5064, %v5080
  %v5123 = vunpack.c.l.s4 1934713408
  %v5124 = vunpack.c.0.s8 %v5123
  %v5125 = vlaneseq
  %v5126 = vshrl.u32 %v5125, 7
  %v5127 = vsub.s32 %v5124, %v5126
  %v5128 = vrot.slane %v5120, %v5127
  %v5130 = vunpack.c.l.s4 1934713408
  %v5131 = vunpack.c.0.s8 %v5130
  %v5132 = vlaneseq
  %v5133 = vshrl.u32 %v5132, 7
  %v5134 = vsub.s32 %v5131, %v5133
  %v5135 = vrot.slane %v5121, %v5134
  %v5136 = vcombine.low %v5071, %v5087
  %v5137 = vcombine.high %v5071, %v5087
  %v5139 = vunpack.c.l.s4 1934713408
  %v5140 = vunpack.c.0.s8 %v5139
  %v5141 = vlaneseq
  %v5142 = vshrl.u32 %v5141, 7
  %v5143 = vsub.s32 %v5140, %v5142
  %v5144 = vrot.slane %v5136, %v5143
  %v5146 = vunpack.c.l.s4 1934713408
  %v5147 = vunpack.c.0.s8 %v5146
  %v5148 = vlaneseq
  %v5149 = vshrl.u32 %v5148, 7
  %v5150 = vsub.s32 %v5147, %v5149
  %v5151 = vrot.slane %v5137, %v5150
  %v5152 = vcombine.low %v5096, %v5112
  %v5153 = vcombine.high %v5096, %v5112
  %v5155 = vunpack.c.l.s4 1934713408
  %v5156 = vunpack.c.0.s8 %v5155
  %v5157 = vlaneseq
  %v5158 = vshrl.u32 %v5157, 7
  %v5159 = vsub.s32 %v5156, %v5158
  %v5160 = vrot.slane %v5152, %v5159
  %v5162 = vunpack.c.l.s4 1934713408
  %v5163 = vunpack.c.0.s8 %v5162
  %v5164 = vlaneseq
  %v5165 = vshrl.u32 %v5164, 7
  %v5166 = vsub.s32 %v5163, %v5165
  %v5167 = vrot.slane %v5153, %v5166
  %v5168 = vcombine.low %v5103, %v5119
  %v5169 = vcombine.high %v5103, %v5119
  %v5171 = vunpack.c.l.s4 1934713408
  %v5172 = vunpack.c.0.s8 %v5171
  %v5173 = vlaneseq
  %v5174 = vshrl.u32 %v5173, 7
  %v5175 = vsub.s32 %v5172, %v5174
  %v5176 = vrot.slane %v5168, %v5175
  %v5178 = vunpack.c.l.s4 1934713408
  %v5179 = vunpack.c.0.s8 %v5178
  %v5180 = vlaneseq
  %v5181 = vshrl.u32 %v5180, 7
  %v5182 = vsub.s32 %v5179, %v5181
  %v5183 = vrot.slane %v5169, %v5182
  %v5184 = vcombine.low %v5128, %v5160
  %v5185 = vcombine.high %v5128, %v5160
  %v5186 = vcombine.low %v5135, %v5167
  %v5187 = vcombine.high %v5135, %v5167
  %v5188 = vcombine.low %v5144, %v5176
  %v5189 = vcombine.high %v5144, %v5176
  %v5190 = vcombine.low %v5151, %v5183
  %v5191 = vcombine.high %v5151, %v5183
  %v5192 = vcombine.low %v5040, %v5044
  %v5193 = vcombine.high %v5040, %v5044
  %v5195 = vunpack.c.l.s4 1983009808
  %v5196 = vunpack.c.0.s8 %v5195
  %v5197 = vlaneseq
  %v5198 = vshrl.u32 %v5197, 7
  %v5199 = vsub.s32 %v5196, %v5198
  %v5200 = vrot.slane %v5192, %v5199
  %v5202 = vunpack.c.l.s4 1983009808
  %v5203 = vunpack.c.0.s8 %v5202
  %v5204 = vlaneseq
  %v5205 = vshrl.u32 %v5204, 7
  %v5206 = vsub.s32 %v5203, %v5205
  %v5207 = vrot.slane %v5193, %v5206
  %v5208 = vcombine.low %v5042, %v5046
  %v5209 = vcombine.high %v5042, %v5046
  %v5211 = vunpack.c.l.s4 1983009808
  %v5212 = vunpack.c.0.s8 %v5211
  %v5213 = vlaneseq
  %v5214 = vshrl.u32 %v5213, 7
  %v5215 = vsub.s32 %v5212, %v5214
  %v5216 = vrot.slane %v5208, %v5215
  %v5218 = vunpack.c.l.s4 1983009808
  %v5219 = vunpack.c.0.s8 %v5218
  %v5220 = vlaneseq
  %v5221 = vshrl.u32 %v5220, 7
  %v5222 = vsub.s32 %v5219, %v5221
  %v5223 = vrot.slane %v5209, %v5222
  %v5224 = vcombine.low %v5048, %v5052
  %v5225 = vcombine.high %v5048, %v5052
  %v5227 = vunpack.c.l.s4 1983009808
  %v5228 = vunpack.c.0.s8 %v5227
  %v5229 = vlaneseq
  %v5230 = vshrl.u32 %v5229, 7
  %v5231 = vsub.s32 %v5228, %v5230
  %v5232 = vrot.slane %v5224, %v5231
  %v5234 = vunpack.c.l.s4 1983009808
  %v5235 = vunpack.c.0.s8 %v5234
  %v5236 = vlaneseq
  %v5237 = vshrl.u32 %v5236, 7
  %v5238 = vsub.s32 %v5235, %v5237
  %v5239 = vrot.slane %v5225, %v5238
  %v5240 = vcombine.low %v5050, %v5054
  %v5241 = vcombine.high %v5050, %v5054
  %v5243 = vunpack.c.l.s4 1983009808
  %v5244 = vunpack.c.0.s8 %v5243
  %v5245 = vlaneseq
  %v5246 = vshrl.u32 %v5245, 7
  %v5247 = vsub.s32 %v5244, %v5246
  %v5248 = vrot.slane %v5240, %v5247
  %v5250 = vunpack.c.l.s4 1983009808
  %v5251 = vunpack.c.0.s8 %v5250
  %v5252 = vlaneseq
  %v5253 = vshrl.u32 %v5252, 7
  %v5254 = vsub.s32 %v5251, %v5253
  %v5255 = vrot.slane %v5241, %v5254
  %v5256 = vcombine.low %v5200, %v5216
  %v5257 = vcombine.high %v5200, %v5216
  %v5259 = vunpack.c.l.s4 1934713408
  %v5260 = vunpack.c.0.s8 %v5259
  %v5261 = vlaneseq
  %v5262 = vshrl.u32 %v5261, 7
  %v5263 = vsub.s32 %v5260, %v5262
  %v5264 = vrot.slane %v5256, %v5263
  %v5266 = vunpack.c.l.s4 1934713408
  %v5267 = vunpack.c.0.s8 %v5266
  %v5268 = vlaneseq
  %v5269 = vshrl.u32 %v5268, 7
  %v5270 = vsub.s32 %v5267, %v5269
  %v5271 = vrot.slane %v5257, %v5270
  %v5272 = vcombine.low %v5207, %v5223
  %v5273 = vcombine.high %v5207, %v5223
  %v5275 = vunpack.c.l.s4 1934713408
  %v5276 = vunpack.c.0.s8 %v5275
  %v5277 = vlaneseq
  %v5278 = vshrl.u32 %v5277, 7
  %v5279 = vsub.s32 %v5276, %v5278
  %v5280 = vrot.slane %v5272, %v5279
  %v5282 = vunpack.c.l.s4 1934713408
  %v5283 = vunpack.c.0.s8 %v5282
  %v5284 = vlaneseq
  %v5285 = vshrl.u32 %v5284, 7
  %v5286 = vsub.s32 %v5283, %v5285
  %v5287 = vrot.slane %v5273, %v5286
  %v5288 = vcombine.low %v5232, %v5248
  %v5289 = vcombine.high %v5232, %v5248
  %v5291 = vunpack.c.l.s4 1934713408
  %v5292 = vunpack.c.0.s8 %v5291
  %v5293 = vlaneseq
  %v5294 = vshrl.u32 %v5293, 7
  %v5295 = vsub.s32 %v5292, %v5294
  %v5296 = vrot.slane %v5288, %v5295
  %v5298 = vunpack.c.l.s4 1934713408
  %v5299 = vunpack.c.0.s8 %v5298
  %v5300 = vlaneseq
  %v5301 = vshrl.u32 %v5300, 7
  %v5302 = vsub.s32 %v5299, %v5301
  %v5303 = vrot.slane %v5289, %v5302
  %v5304 = vcombine.low %v5239, %v5255
  %v5305 = vcombine.high %v5239, %v5255
  %v5307 = vunpack.c.l.s4 1934713408
  %v5308 = vunpack.c.0.s8 %v5307
  %v5309 = vlaneseq
  %v5310 = vshrl.u32 %v5309, 7
  %v5311 = vsub.s32 %v5308, %v5310
  %v5312 = vrot.slane %v5304, %v5311
  %v5314 = vunpack.c.l.s4 1934713408
  %v5315 = vunpack.c.0.s8 %v5314
  %v5316 = vlaneseq
  %v5317 = vshrl.u32 %v5316, 7
  %v5318 = vsub.s32 %v5315, %v5317
  %v5319 = vrot.slane %v5305, %v5318
  %v5320 = vcombine.low %v5264, %v5296
  %v5321 = vcombine.high %v5264, %v5296
  %v5322 = vcombine.low %v5271, %v5303
  %v5323 = vcombine.high %v5271, %v5303
  %v5324 = vcombine.low %v5280, %v5312
  %v5325 = vcombine.high %v5280, %v5312
  %v5326 = vcombine.low %v5287, %v5319
  %v5327 = vcombine.high %v5287, %v5319
  %v5328 = vcombine.low %v5025, %v5029
  %v5329 = vcombine.high %v5025, %v5029
  %v5331 = vunpack.c.l.s4 1983009808
  %v5332 = vunpack.c.0.s8 %v5331
  %v5333 = vlaneseq
  %v5334 = vshrl.u32 %v5333, 7
  %v5335 = vsub.s32 %v5332, %v5334
  %v5336 = vrot.slane %v5328, %v5335
  %v5338 = vunpack.c.l.s4 1983009808
  %v5339 = vunpack.c.0.s8 %v5338
  %v5340 = vlaneseq
  %v5341 = vshrl.u32 %v5340, 7
  %v5342 = vsub.s32 %v5339, %v5341
  %v5343 = vrot.slane %v5329, %v5342
  %v5344 = vcombine.low %v5027, %v5031
  %v5345 = vcombine.high %v5027, %v5031
  %v5347 = vunpack.c.l.s4 1983009808
  %v5348 = vunpack.c.0.s8 %v5347
  %v5349 = vlaneseq
  %v5350 = vshrl.u32 %v5349, 7
  %v5351 = vsub.s32 %v5348, %v5350
  %v5352 = vrot.slane %v5344, %v5351
  %v5354 = vunpack.c.l.s4 1983009808
  %v5355 = vunpack.c.0.s8 %v5354
  %v5356 = vlaneseq
  %v5357 = vshrl.u32 %v5356, 7
  %v5358 = vsub.s32 %v5355, %v5357
  %v5359 = vrot.slane %v5345, %v5358
  %v5360 = vcombine.low %v5033, %v5037
  %v5361 = vcombine.high %v5033, %v5037
  %v5363 = vunpack.c.l.s4 1983009808
  %v5364 = vunpack.c.0.s8 %v5363
  %v5365 = vlaneseq
  %v5366 = vshrl.u32 %v5365, 7
  %v5367 = vsub.s32 %v5364, %v5366
  %v5368 = vrot.slane %v5360, %v5367
  %v5370 = vunpack.c.l.s4 1983009808
  %v5371 = vunpack.c.0.s8 %v5370
  %v5372 = vlaneseq
  %v5373 = vshrl.u32 %v5372, 7
  %v5374 = vsub.s32 %v5371, %v5373
  %v5375 = vrot.slane %v5361, %v5374
  %v5376 = vcombine.low %v5035, %v5039
  %v5377 = vcombine.high %v5035, %v5039
  %v5379 = vunpack.c.l.s4 1983009808
  %v5380 = vunpack.c.0.s8 %v5379
  %v5381 = vlaneseq
  %v5382 = vshrl.u32 %v5381, 7
  %v5383 = vsub.s32 %v5380, %v5382
  %v5384 = vrot.slane %v5376, %v5383
  %v5386 = vunpack.c.l.s4 1983009808
  %v5387 = vunpack.c.0.s8 %v5386
  %v5388 = vlaneseq
  %v5389 = vshrl.u32 %v5388, 7
  %v5390 = vsub.s32 %v5387, %v5389
  %v5391 = vrot.slane %v5377, %v5390
  %v5392 = vcombine.low %v5336, %v5352
  %v5393 = vcombine.high %v5336, %v5352
  %v5395 = vunpack.c.l.s4 1934713408
  %v5396 = vunpack.c.0.s8 %v5395
  %v5397 = vlaneseq
  %v5398 = vshrl.u32 %v5397, 7
  %v5399 = vsub.s32 %v5396, %v5398
  %v5400 = vrot.slane %v5392, %v5399
  %v5402 = vunpack.c.l.s4 1934713408
  %v5403 = vunpack.c.0.s8 %v5402
  %v5404 = vlaneseq
  %v5405 = vshrl.u32 %v5404, 7
  %v5406 = vsub.s32 %v5403, %v5405
  %v5407 = vrot.slane %v5393, %v5406
  %v5408 = vcombine.low %v5343, %v5359
  %v5409 = vcombine.high %v5343, %v5359
  %v5411 = vunpack.c.l.s4 1934713408
  %v5412 = vunpack.c.0.s8 %v5411
  %v5413 = vlaneseq
  %v5414 = vshrl.u32 %v5413, 7
  %v5415 = vsub.s32 %v5412, %v5414
  %v5416 = vrot.slane %v5408, %v5415
  %v5418 = vunpack.c.l.s4 1934713408
  %v5419 = vunpack.c.0.s8 %v5418
  %v5420 = vlaneseq
  %v5421 = vshrl.u32 %v5420, 7
  %v5422 = vsub.s32 %v5419, %v5421
  %v5423 = vrot.slane %v5409, %v5422
  %v5424 = vcombine.low %v5368, %v5384
  %v5425 = vcombine.high %v5368, %v5384
  %v5427 = vunpack.c.l.s4 1934713408
  %v5428 = vunpack.c.0.s8 %v5427
  %v5429 = vlaneseq
  %v5430 = vshrl.u32 %v5429, 7
  %v5431 = vsub.s32 %v5428, %v5430
  %v5432 = vrot.slane %v5424, %v5431
  %v5434 = vunpack.c.l.s4 1934713408
  %v5435 = vunpack.c.0.s8 %v5434
  %v5436 = vlaneseq
  %v5437 = vshrl.u32 %v5436, 7
  %v5438 = vsub.s32 %v5435, %v5437
  %v5439 = vrot.slane %v5425, %v5438
  %v5440 = vcombine.low %v5375, %v5391
  %v5441 = vcombine.high %v5375, %v5391
  %v5443 = vunpack.c.l.s4 1934713408
  %v5444 = vunpack.c.0.s8 %v5443
  %v5445 = vlaneseq
  %v5446 = vshrl.u32 %v5445, 7
  %v5447 = vsub.s32 %v5444, %v5446
  %v5448 = vrot.slane %v5440, %v5447
  %v5450 = vunpack.c.l.s4 1934713408
  %v5451 = vunpack.c.0.s8 %v5450
  %v5452 = vlaneseq
  %v5453 = vshrl.u32 %v5452, 7
  %v5454 = vsub.s32 %v5451, %v5453
  %v5455 = vrot.slane %v5441, %v5454
  %v5456 = vcombine.low %v5400, %v5432
  %v5457 = vcombine.high %v5400, %v5432
  %v5458 = vcombine.low %v5407, %v5439
  %v5459 = vcombine.high %v5407, %v5439
  %v5460 = vcombine.low %v5416, %v5448
  %v5461 = vcombine.high %v5416, %v5448
  %v5462 = vcombine.low %v5423, %v5455
  %v5463 = vcombine.high %v5423, %v5455
  %v5464 = vcombine.low %v5041, %v5045
  %v5465 = vcombine.high %v5041, %v5045
  %v5467 = vunpack.c.l.s4 1983009808
  %v5468 = vunpack.c.0.s8 %v5467
  %v5469 = vlaneseq
  %v5470 = vshrl.u32 %v5469, 7
  %v5471 = vsub.s32 %v5468, %v5470
  %v5472 = vrot.slane %v5464, %v5471
  %v5474 = vunpack.c.l.s4 1983009808
  %v5475 = vunpack.c.0.s8 %v5474
  %v5476 = vlaneseq
  %v5477 = vshrl.u32 %v5476, 7
  %v5478 = vsub.s32 %v5475, %v5477
  %v5479 = vrot.slane %v5465, %v5478
  %v5480 = vcombine.low %v5043, %v5047
  %v5481 = vcombine.high %v5043, %v5047
  %v5483 = vunpack.c.l.s4 1983009808
  %v5484 = vunpack.c.0.s8 %v5483
  %v5485 = vlaneseq
  %v5486 = vshrl.u32 %v5485, 7
  %v5487 = vsub.s32 %v5484, %v5486
  %v5488 = vrot.slane %v5480, %v5487
  %v5490 = vunpack.c.l.s4 1983009808
  %v5491 = vunpack.c.0.s8 %v5490
  %v5492 = vlaneseq
  %v5493 = vshrl.u32 %v5492, 7
  %v5494 = vsub.s32 %v5491, %v5493
  %v5495 = vrot.slane %v5481, %v5494
  %v5496 = vcombine.low %v5049, %v5053
  %v5497 = vcombine.high %v5049, %v5053
  %v5499 = vunpack.c.l.s4 1983009808
  %v5500 = vunpack.c.0.s8 %v5499
  %v5501 = vlaneseq
  %v5502 = vshrl.u32 %v5501, 7
  %v5503 = vsub.s32 %v5500, %v5502
  %v5504 = vrot.slane %v5496, %v5503
  %v5506 = vunpack.c.l.s4 1983009808
  %v5507 = vunpack.c.0.s8 %v5506
  %v5508 = vlaneseq
  %v5509 = vshrl.u32 %v5508, 7
  %v5510 = vsub.s32 %v5507, %v5509
  %v5511 = vrot.slane %v5497, %v5510
  %v5512 = vcombine.low %v5051, %v5055
  %v5513 = vcombine.high %v5051, %v5055
  %v5515 = vunpack.c.l.s4 1983009808
  %v5516 = vunpack.c.0.s8 %v5515
  %v5517 = vlaneseq
  %v5518 = vshrl.u32 %v5517, 7
  %v5519 = vsub.s32 %v5516, %v5518
  %v5520 = vrot.slane %v5512, %v5519
  %v5522 = vunpack.c.l.s4 1983009808
  %v5523 = vunpack.c.0.s8 %v5522
  %v5524 = vlaneseq
  %v5525 = vshrl.u32 %v5524, 7
  %v5526 = vsub.s32 %v5523, %v5525
  %v5527 = vrot.slane %v5513, %v5526
  %v5528 = vcombine.low %v5472, %v5488
  %v5529 = vcombine.high %v5472, %v5488
  %v5531 = vunpack.c.l.s4 1934713408
  %v5532 = vunpack.c.0.s8 %v5531
  %v5533 = vlaneseq
  %v5534 = vshrl.u32 %v5533, 7
  %v5535 = vsub.s32 %v5532, %v5534
  %v5536 = vrot.slane %v5528, %v5535
  %v5538 = vunpack.c.l.s4 1934713408
  %v5539 = vunpack.c.0.s8 %v5538
  %v5540 = vlaneseq
  %v5541 = vshrl.u32 %v5540, 7
  %v5542 = vsub.s32 %v5539, %v5541
  %v5543 = vrot.slane %v5529, %v5542
  %v5544 = vcombine.low %v5479, %v5495
  %v5545 = vcombine.high %v5479, %v5495
  %v5547 = vunpack.c.l.s4 1934713408
  %v5548 = vunpack.c.0.s8 %v5547
  %v5549 = vlaneseq
  %v5550 = vshrl.u32 %v5549, 7
  %v5551 = vsub.s32 %v5548, %v5550
  %v5552 = vrot.slane %v5544, %v5551
  %v5554 = vunpack.c.l.s4 1934713408
  %v5555 = vunpack.c.0.s8 %v5554
  %v5556 = vlaneseq
  %v5557 = vshrl.u32 %v5556, 7
  %v5558 = vsub.s32 %v5555, %v5557
  %v5559 = vrot.slane %v5545, %v5558
  %v5560 = vcombine.low %v5504, %v5520
  %v5561 = vcombine.high %v5504, %v5520
  %v5563 = vunpack.c.l.s4 1934713408
  %v5564 = vunpack.c.0.s8 %v5563
  %v5565 = vlaneseq
  %v5566 = vshrl.u32 %v5565, 7
  %v5567 = vsub.s32 %v5564, %v5566
  %v5568 = vrot.slane %v5560, %v5567
  %v5570 = vunpack.c.l.s4 1934713408
  %v5571 = vunpack.c.0.s8 %v5570
  %v5572 = vlaneseq
  %v5573 = vshrl.u32 %v5572, 7
  %v5574 = vsub.s32 %v5571, %v5573
  %v5575 = vrot.slane %v5561, %v5574
  %v5576 = vcombine.low %v5511, %v5527
  %v5577 = vcombine.high %v5511, %v5527
  %v5579 = vunpack.c.l.s4 1934713408
  %v5580 = vunpack.c.0.s8 %v5579
  %v5581 = vlaneseq
  %v5582 = vshrl.u32 %v5581, 7
  %v5583 = vsub.s32 %v5580, %v5582
  %v5584 = vrot.slane %v5576, %v5583
  %v5586 = vunpack.c.l.s4 1934713408
  %v5587 = vunpack.c.0.s8 %v5586
  %v5588 = vlaneseq
  %v5589 = vshrl.u32 %v5588, 7
  %v5590 = vsub.s32 %v5587, %v5589
  %v5591 = vrot.slane %v5577, %v5590
  %v5592 = vcombine.low %v5536, %v5568
  %v5593 = vcombine.high %v5536, %v5568
  %v5594 = vcombine.low %v5543, %v5575
  %v5595 = vcombine.high %v5543, %v5575
  %v5596 = vcombine.low %v5552, %v5584
  %v5597 = vcombine.high %v5552, %v5584
  %v5598 = vcombine.low %v5559, %v5591
  %v5599 = vcombine.high %v5559, %v5591
  %5602 = vrot.lane.b32.xlu0 %v5185, 4
  %v5603 = vpop.permute.xlu0 %5602
  %5604 = vrot.lane.b32.xlu0 %v5321, 4
  %v5605 = vpop.permute.xlu0 %5604
  %5610 = vrot.lane.b32.xlu0 %v5186, 8
  %v5611 = vpop.permute.xlu0 %5610
  %5612 = vrot.lane.b32.xlu0 %v5322, 8
  %v5613 = vpop.permute.xlu0 %5612
  %5618 = vrot.lane.b32.xlu0 %v5187, 12
  %v5619 = vpop.permute.xlu0 %5618
  %5620 = vrot.lane.b32.xlu0 %v5323, 12
  %v5621 = vpop.permute.xlu0 %5620
  %5626 = vrot.lane.b32.xlu0 %v5188, 16
  %v5627 = vpop.permute.xlu0 %5626
  %5628 = vrot.lane.b32.xlu0 %v5324, 16
  %v5629 = vpop.permute.xlu0 %5628
  %5634 = vrot.lane.b32.xlu0 %v5189, 20
  %v5635 = vpop.permute.xlu0 %5634
  %5636 = vrot.lane.b32.xlu0 %v5325, 20
  %v5637 = vpop.permute.xlu0 %5636
  %5642 = vrot.lane.b32.xlu0 %v5190, 24
  %v5643 = vpop.permute.xlu0 %5642
  %5644 = vrot.lane.b32.xlu0 %v5326, 24
  %v5645 = vpop.permute.xlu0 %5644
  %5650 = vrot.lane.b32.xlu0 %v5191, 28
  %v5651 = vpop.permute.xlu0 %5650
  %5652 = vrot.lane.b32.xlu0 %v5327, 28
  %v5653 = vpop.permute.xlu0 %5652
  %5658 = vrot.lane.b32.xlu0 %v5456, 32
  %v5659 = vpop.permute.xlu0 %5658
  %5660 = vrot.lane.b32.xlu0 %v5592, 32
  %v5661 = vpop.permute.xlu0 %5660
  %5666 = vrot.lane.b32.xlu0 %v5457, 36
  %v5667 = vpop.permute.xlu0 %5666
  %5668 = vrot.lane.b32.xlu0 %v5593, 36
  %v5669 = vpop.permute.xlu0 %5668
  %5674 = vrot.lane.b32.xlu0 %v5458, 40
  %v5675 = vpop.permute.xlu0 %5674
  %5676 = vrot.lane.b32.xlu0 %v5594, 40
  %v5677 = vpop.permute.xlu0 %5676
  %5682 = vrot.lane.b32.xlu0 %v5459, 44
  %v5683 = vpop.permute.xlu0 %5682
  %5684 = vrot.lane.b32.xlu0 %v5595, 44
  %v5685 = vpop.permute.xlu0 %5684
  %5690 = vrot.lane.b32.xlu0 %v5460, 48
  %v5691 = vpop.permute.xlu0 %5690
  %5692 = vrot.lane.b32.xlu0 %v5596, 48
  %v5693 = vpop.permute.xlu0 %5692
  %5698 = vrot.lane.b32.xlu0 %v5461, 52
  %v5699 = vpop.permute.xlu0 %5698
  %5700 = vrot.lane.b32.xlu0 %v5597, 52
  %v5701 = vpop.permute.xlu0 %5700
  %5706 = vrot.lane.b32.xlu0 %v5462, 56
  %v5707 = vpop.permute.xlu0 %5706
  %5708 = vrot.lane.b32.xlu0 %v5598, 56
  %v5709 = vpop.permute.xlu0 %5708
  %5714 = vrot.lane.b32.xlu0 %v5463, 60
  %v5715 = vpop.permute.xlu0 %5714
  %5716 = vrot.lane.b32.xlu0 %v5599, 60
  %v5717 = vpop.permute.xlu0 %5716
  %v5720 = vsel %vm718, %v5184, %v5603
  %v5721 = vsel %vm718, %v5320, %v5605
  %v5722 = vsel %vm721, %v5720, %v5611
  %v5723 = vsel %vm721, %v5721, %v5613
  %v5724 = vsel %vm724, %v5722, %v5619
  %v5725 = vsel %vm724, %v5723, %v5621
  %v5726 = vsel %vm727, %v5724, %v5627
  %v5727 = vsel %vm727, %v5725, %v5629
  %v5728 = vsel %vm730, %v5726, %v5635
  %v5729 = vsel %vm730, %v5727, %v5637
  %v5730 = vsel %vm733, %v5728, %v5643
  %v5731 = vsel %vm733, %v5729, %v5645
  %v5732 = vsel %vm736, %v5730, %v5651
  %v5733 = vsel %vm736, %v5731, %v5653
  %v5734 = vsel %vm739, %v5732, %v5659
  %v5735 = vsel %vm739, %v5733, %v5661
  %v5736 = vsel %vm742, %v5734, %v5667
  %v5737 = vsel %vm742, %v5735, %v5669
  %v5738 = vsel %vm745, %v5736, %v5675
  %v5739 = vsel %vm745, %v5737, %v5677
  %v5740 = vsel %vm748, %v5738, %v5683
  %v5741 = vsel %vm748, %v5739, %v5685
  %v5742 = vsel %vm751, %v5740, %v5691
  %v5743 = vsel %vm751, %v5741, %v5693
  %v5744 = vsel %vm754, %v5742, %v5699
  %v5745 = vsel %vm754, %v5743, %v5701
  %v5746 = vsel %vm757, %v5744, %v5707
  %v5747 = vsel %vm757, %v5745, %v5709
  %v5748 = vsel %vm760, %v5746, %v5715
  %v5749 = vsel %vm760, %v5747, %v5717
  %5750 = vmatprep.subr.mxu0 0.0
  %5751 = vmatpush1.msra.mxu0 %v5748
  %5752 = vmatprep.subr.mxu0 0.0
  %5753 = vmatpush1.msra.mxu0 %v5749
  %5754 = vmatprep.subr.mxu0 0.0
  %5755 = vmatpush1.msra.mxu0 0.0
  %5756 = vmatprep.subr.mxu0 0.0
  %5757 = vmatpush1.msra.mxu0 0.0
  %5758 = vmatprep.subr.mxu0 0.0
  %5759 = vmatpush1.msra.mxu0 0.0
  %5760 = vmatprep.subr.mxu0 0.0
  %5761 = vmatpush1.msra.mxu0 0.0
  %5762 = vmatprep.subr.mxu0 0.0
  %5763 = vmatpush1.msra.mxu0 0.0
  %5764 = vmatprep.subr.mxu0 0.0
  %5765 = vmatpush1.msra.mxu0 0.0
  %5766 = vmatprep.subr.mxu0 0.0
  %5767 = vmatpush1.msra.mxu0 0.0
  %5768 = vmatprep.subr.mxu0 0.0
  %5769 = vmatpush1.msra.mxu0 0.0
  %5770 = vmatprep.subr.mxu0 0.0
  %5771 = vmatpush1.msra.mxu0 0.0
  %5772 = vmatprep.subr.mxu0 0.0
  %5773 = vmatpush1.msra.mxu0 0.0
  %5774 = vmatprep.subr.mxu0 0.0
  %5775 = vmatpush1.msra.mxu0 0.0
  %5776 = vmatprep.subr.mxu0 0.0
  %5777 = vmatpush1.msra.mxu0 0.0
  %5778 = vmatprep.subr.mxu0 0.0
  %5779 = vmatpush1.msra.mxu0 0.0
  %5780 = vmatprep.subr.mxu0 0.0
  %5781 = vmatpush1.msra.mxu0 0.0
  %5782 = vmatprep.subr.mxu0 0.0
  %5783 = vmatpush1.msra.mxu0 0.0
  %5784 = vmatprep.subr.mxu0 0.0
  %5785 = vmatpush1.msra.mxu0 0.0
  %5786 = vmatprep.subr.mxu0 0.0
  %5787 = vmatpush1.msra.mxu0 0.0
  %5788 = vmatprep.subr.mxu0 0.0
  %5789 = vmatpush1.msra.mxu0 0.0
  %5790 = vmatprep.subr.mxu0 0.0
  %5791 = vmatpush1.msra.mxu0 0.0
  %5792 = vmatprep.subr.mxu0 0.0
  %5793 = vmatpush1.msra.mxu0 0.0
  %5794 = vmatprep.subr.mxu0 0.0
  %5795 = vmatpush1.msra.mxu0 0.0
  %5796 = vmatprep.subr.mxu0 0.0
  %5797 = vmatpush1.msra.mxu0 0.0
  %5798 = vmatprep.subr.mxu0 0.0
  %5799 = vmatpush1.msra.mxu0 0.0
  %5800 = vmatprep.subr.mxu0 0.0
  %5801 = vmatpush1.msra.mxu0 0.0
  %5802 = vmatprep.subr.mxu0 0.0
  %5803 = vmatpush1.msra.mxu0 0.0
  %5804 = vmatprep.subr.mxu0 0.0
  %5805 = vmatpush1.msra.mxu0 0.0
  %5806 = vmatprep.subr.mxu0 0.0
  %5807 = vmatpush1.msra.mxu0 0.0
  %5808 = vmatprep.subr.mxu0 0.0
  %5809 = vmatpush1.msra.mxu0 0.0
  %5810 = vmatprep.subr.mxu0 0.0
  %5811 = vmatpush1.msra.mxu0 0.0
  %5812 = vmatprep.subr.mxu0 0.0
  %5813 = vmatpush1.msra.mxu0 0.0
  %5814 = vmatprep.mubr.f32.mxu0 0.0
  %5815 = vmatmul.mubr.f32.gmra.mrb[0].mxu0 %v764
  %v5816 = vpop.f32.mrb[0].mxu0
  %v5817 = vadd.f32 0.0, %v5816
  %v5818 = vpop.f32.mrb[0].mxu0
  %5819 = vmatprep.mubr.f32.mxu0 0.0
  %5820 = vmatmul.mubr.f32.gmra.mrb[0].mxu0 %v767
  %v5821 = vpop.f32.mrb[0].mxu0
  %v5822 = vadd.f32 0.0, %v5821
  %v5823 = vpop.f32.mrb[0].mxu0
  %5824 = vmatprep.mubr.f32.mxu0 0.0
  %5825 = vmatmul.mubr.f32.gmra.mrb[0].mxu0 %v770
  %v5826 = vpop.f32.mrb[0].mxu0
  %v5827 = vadd.f32 0.0, %v5826
  %v5828 = vpop.f32.mrb[0].mxu0
  %5829 = vmatprep.mubr.f32.mxu0 0.0
  %5830 = vmatmul.mubr.f32.gmra.mrb[0].mxu0 %v773
  %v5831 = vpop.f32.mrb[0].mxu0
  %v5832 = vadd.f32 0.0, %v5831
  %v5833 = vpop.f32.mrb[0].mxu0
  %5834 = vdwg.mxu0
  %5839 = vrot.lane.b32.xlu0 %v5817, 124
  %v5840 = vpop.permute.xlu0 %5839
  %5841 = vrot.lane.b32.xlu0 %v5822, 124
  %v5842 = vpop.permute.xlu0 %5841
  %5843 = vrot.lane.b32.xlu0 %v5827, 124
  %v5844 = vpop.permute.xlu0 %5843
  %5845 = vrot.lane.b32.xlu0 %v5832, 124
  %v5846 = vpop.permute.xlu0 %5845
  %5851 = vrot.lane.b32.xlu0 %v5817, 120
  %v5852 = vpop.permute.xlu0 %5851
  %5853 = vrot.lane.b32.xlu0 %v5822, 120
  %v5854 = vpop.permute.xlu0 %5853
  %5855 = vrot.lane.b32.xlu0 %v5827, 120
  %v5856 = vpop.permute.xlu0 %5855
  %5857 = vrot.lane.b32.xlu0 %v5832, 120
  %v5858 = vpop.permute.xlu0 %5857
  %5863 = vrot.lane.b32.xlu0 %v5817, 116
  %v5864 = vpop.permute.xlu0 %5863
  %5865 = vrot.lane.b32.xlu0 %v5822, 116
  %v5866 = vpop.permute.xlu0 %5865
  %5867 = vrot.lane.b32.xlu0 %v5827, 116
  %v5868 = vpop.permute.xlu0 %5867
  %5869 = vrot.lane.b32.xlu0 %v5832, 116
  %v5870 = vpop.permute.xlu0 %5869
  %5875 = vrot.lane.b32.xlu0 %v5817, 112
  %v5876 = vpop.permute.xlu0 %5875
  %5877 = vrot.lane.b32.xlu0 %v5822, 112
  %v5878 = vpop.permute.xlu0 %5877
  %5879 = vrot.lane.b32.xlu0 %v5827, 112
  %v5880 = vpop.permute.xlu0 %5879
  %5881 = vrot.lane.b32.xlu0 %v5832, 112
  %v5882 = vpop.permute.xlu0 %5881
  %5887 = vrot.lane.b32.xlu0 %v5817, 108
  %v5888 = vpop.permute.xlu0 %5887
  %5889 = vrot.lane.b32.xlu0 %v5822, 108
  %v5890 = vpop.permute.xlu0 %5889
  %5891 = vrot.lane.b32.xlu0 %v5827, 108
  %v5892 = vpop.permute.xlu0 %5891
  %5893 = vrot.lane.b32.xlu0 %v5832, 108
  %v5894 = vpop.permute.xlu0 %5893
  %5899 = vrot.lane.b32.xlu0 %v5817, 104
  %v5900 = vpop.permute.xlu0 %5899
  %5901 = vrot.lane.b32.xlu0 %v5822, 104
  %v5902 = vpop.permute.xlu0 %5901
  %5903 = vrot.lane.b32.xlu0 %v5827, 104
  %v5904 = vpop.permute.xlu0 %5903
  %5905 = vrot.lane.b32.xlu0 %v5832, 104
  %v5906 = vpop.permute.xlu0 %5905
  %5911 = vrot.lane.b32.xlu0 %v5817, 100
  %v5912 = vpop.permute.xlu0 %5911
  %5913 = vrot.lane.b32.xlu0 %v5822, 100
  %v5914 = vpop.permute.xlu0 %5913
  %5915 = vrot.lane.b32.xlu0 %v5827, 100
  %v5916 = vpop.permute.xlu0 %5915
  %5917 = vrot.lane.b32.xlu0 %v5832, 100
  %v5918 = vpop.permute.xlu0 %5917
  %5923 = vrot.lane.b32.xlu0 %v5817, 96
  %v5924 = vpop.permute.xlu0 %5923
  %5925 = vrot.lane.b32.xlu0 %v5822, 96
  %v5926 = vpop.permute.xlu0 %5925
  %5927 = vrot.lane.b32.xlu0 %v5827, 96
  %v5928 = vpop.permute.xlu0 %5927
  %5929 = vrot.lane.b32.xlu0 %v5832, 96
  %v5930 = vpop.permute.xlu0 %5929
  %5935 = vrot.lane.b32.xlu0 %v5817, 92
  %v5936 = vpop.permute.xlu0 %5935
  %5937 = vrot.lane.b32.xlu0 %v5822, 92
  %v5938 = vpop.permute.xlu0 %5937
  %5939 = vrot.lane.b32.xlu0 %v5827, 92
  %v5940 = vpop.permute.xlu0 %5939
  %5941 = vrot.lane.b32.xlu0 %v5832, 92
  %v5942 = vpop.permute.xlu0 %5941
  %5947 = vrot.lane.b32.xlu0 %v5817, 88
  %v5948 = vpop.permute.xlu0 %5947
  %5949 = vrot.lane.b32.xlu0 %v5822, 88
  %v5950 = vpop.permute.xlu0 %5949
  %5951 = vrot.lane.b32.xlu0 %v5827, 88
  %v5952 = vpop.permute.xlu0 %5951
  %5953 = vrot.lane.b32.xlu0 %v5832, 88
  %v5954 = vpop.permute.xlu0 %5953
  %5959 = vrot.lane.b32.xlu0 %v5817, 84
  %v5960 = vpop.permute.xlu0 %5959
  %5961 = vrot.lane.b32.xlu0 %v5822, 84
  %v5962 = vpop.permute.xlu0 %5961
  %5963 = vrot.lane.b32.xlu0 %v5827, 84
  %v5964 = vpop.permute.xlu0 %5963
  %5965 = vrot.lane.b32.xlu0 %v5832, 84
  %v5966 = vpop.permute.xlu0 %5965
  %5971 = vrot.lane.b32.xlu0 %v5817, 80
  %v5972 = vpop.permute.xlu0 %5971
  %5973 = vrot.lane.b32.xlu0 %v5822, 80
  %v5974 = vpop.permute.xlu0 %5973
  %5975 = vrot.lane.b32.xlu0 %v5827, 80
  %v5976 = vpop.permute.xlu0 %5975
  %5977 = vrot.lane.b32.xlu0 %v5832, 80
  %v5978 = vpop.permute.xlu0 %5977
  %5983 = vrot.lane.b32.xlu0 %v5817, 76
  %v5984 = vpop.permute.xlu0 %5983
  %5985 = vrot.lane.b32.xlu0 %v5822, 76
  %v5986 = vpop.permute.xlu0 %5985
  %5987 = vrot.lane.b32.xlu0 %v5827, 76
  %v5988 = vpop.permute.xlu0 %5987
  %5989 = vrot.lane.b32.xlu0 %v5832, 76
  %v5990 = vpop.permute.xlu0 %5989
  %5995 = vrot.lane.b32.xlu0 %v5817, 72
  %v5996 = vpop.permute.xlu0 %5995
  %5997 = vrot.lane.b32.xlu0 %v5822, 72
  %v5998 = vpop.permute.xlu0 %5997
  %5999 = vrot.lane.b32.xlu0 %v5827, 72
  %v6000 = vpop.permute.xlu0 %5999
  %6001 = vrot.lane.b32.xlu0 %v5832, 72
  %v6002 = vpop.permute.xlu0 %6001
  %6007 = vrot.lane.b32.xlu0 %v5817, 68
  %v6008 = vpop.permute.xlu0 %6007
  %6009 = vrot.lane.b32.xlu0 %v5822, 68
  %v6010 = vpop.permute.xlu0 %6009
  %6011 = vrot.lane.b32.xlu0 %v5827, 68
  %v6012 = vpop.permute.xlu0 %6011
  %6013 = vrot.lane.b32.xlu0 %v5832, 68
  %v6014 = vpop.permute.xlu0 %6013
  %v6019 = vcombine.low %v5817, %v5852
  %v6020 = vcombine.high %v5817, %v5852
  %v6022 = vunpack.c.l.s4 1983009808
  %v6023 = vunpack.c.0.s8 %v6022
  %v6024 = vlaneseq
  %v6025 = vshrl.u32 %v6024, 7
  %v6026 = vsub.s32 %v6023, %v6025
  %v6027 = vrot.slane %v6019, %v6026
  %v6029 = vunpack.c.l.s4 1983009808
  %v6030 = vunpack.c.0.s8 %v6029
  %v6031 = vlaneseq
  %v6032 = vshrl.u32 %v6031, 7
  %v6033 = vsub.s32 %v6030, %v6032
  %v6034 = vrot.slane %v6020, %v6033
  %v6035 = vcombine.low %v5840, %v5864
  %v6036 = vcombine.high %v5840, %v5864
  %v6038 = vunpack.c.l.s4 1983009808
  %v6039 = vunpack.c.0.s8 %v6038
  %v6040 = vlaneseq
  %v6041 = vshrl.u32 %v6040, 7
  %v6042 = vsub.s32 %v6039, %v6041
  %v6043 = vrot.slane %v6035, %v6042
  %v6045 = vunpack.c.l.s4 1983009808
  %v6046 = vunpack.c.0.s8 %v6045
  %v6047 = vlaneseq
  %v6048 = vshrl.u32 %v6047, 7
  %v6049 = vsub.s32 %v6046, %v6048
  %v6050 = vrot.slane %v6036, %v6049
  %v6051 = vcombine.low %v5876, %v5900
  %v6052 = vcombine.high %v5876, %v5900
  %v6054 = vunpack.c.l.s4 1983009808
  %v6055 = vunpack.c.0.s8 %v6054
  %v6056 = vlaneseq
  %v6057 = vshrl.u32 %v6056, 7
  %v6058 = vsub.s32 %v6055, %v6057
  %v6059 = vrot.slane %v6051, %v6058
  %v6061 = vunpack.c.l.s4 1983009808
  %v6062 = vunpack.c.0.s8 %v6061
  %v6063 = vlaneseq
  %v6064 = vshrl.u32 %v6063, 7
  %v6065 = vsub.s32 %v6062, %v6064
  %v6066 = vrot.slane %v6052, %v6065
  %v6067 = vcombine.low %v5888, %v5912
  %v6068 = vcombine.high %v5888, %v5912
  %v6070 = vunpack.c.l.s4 1983009808
  %v6071 = vunpack.c.0.s8 %v6070
  %v6072 = vlaneseq
  %v6073 = vshrl.u32 %v6072, 7
  %v6074 = vsub.s32 %v6071, %v6073
  %v6075 = vrot.slane %v6067, %v6074
  %v6077 = vunpack.c.l.s4 1983009808
  %v6078 = vunpack.c.0.s8 %v6077
  %v6079 = vlaneseq
  %v6080 = vshrl.u32 %v6079, 7
  %v6081 = vsub.s32 %v6078, %v6080
  %v6082 = vrot.slane %v6068, %v6081
  %v6083 = vcombine.low %v6027, %v6043
  %v6084 = vcombine.high %v6027, %v6043
  %v6086 = vunpack.c.l.s4 1934713408
  %v6087 = vunpack.c.0.s8 %v6086
  %v6088 = vlaneseq
  %v6089 = vshrl.u32 %v6088, 7
  %v6090 = vsub.s32 %v6087, %v6089
  %v6091 = vrot.slane %v6083, %v6090
  %v6093 = vunpack.c.l.s4 1934713408
  %v6094 = vunpack.c.0.s8 %v6093
  %v6095 = vlaneseq
  %v6096 = vshrl.u32 %v6095, 7
  %v6097 = vsub.s32 %v6094, %v6096
  %v6098 = vrot.slane %v6084, %v6097
  %v6099 = vcombine.low %v6034, %v6050
  %v6100 = vcombine.high %v6034, %v6050
  %v6102 = vunpack.c.l.s4 1934713408
  %v6103 = vunpack.c.0.s8 %v6102
  %v6104 = vlaneseq
  %v6105 = vshrl.u32 %v6104, 7
  %v6106 = vsub.s32 %v6103, %v6105
  %v6107 = vrot.slane %v6099, %v6106
  %v6109 = vunpack.c.l.s4 1934713408
  %v6110 = vunpack.c.0.s8 %v6109
  %v6111 = vlaneseq
  %v6112 = vshrl.u32 %v6111, 7
  %v6113 = vsub.s32 %v6110, %v6112
  %v6114 = vrot.slane %v6100, %v6113
  %v6115 = vcombine.low %v6059, %v6075
  %v6116 = vcombine.high %v6059, %v6075
  %v6118 = vunpack.c.l.s4 1934713408
  %v6119 = vunpack.c.0.s8 %v6118
  %v6120 = vlaneseq
  %v6121 = vshrl.u32 %v6120, 7
  %v6122 = vsub.s32 %v6119, %v6121
  %v6123 = vrot.slane %v6115, %v6122
  %v6125 = vunpack.c.l.s4 1934713408
  %v6126 = vunpack.c.0.s8 %v6125
  %v6127 = vlaneseq
  %v6128 = vshrl.u32 %v6127, 7
  %v6129 = vsub.s32 %v6126, %v6128
  %v6130 = vrot.slane %v6116, %v6129
  %v6131 = vcombine.low %v6066, %v6082
  %v6132 = vcombine.high %v6066, %v6082
  %v6134 = vunpack.c.l.s4 1934713408
  %v6135 = vunpack.c.0.s8 %v6134
  %v6136 = vlaneseq
  %v6137 = vshrl.u32 %v6136, 7
  %v6138 = vsub.s32 %v6135, %v6137
  %v6139 = vrot.slane %v6131, %v6138
  %v6141 = vunpack.c.l.s4 1934713408
  %v6142 = vunpack.c.0.s8 %v6141
  %v6143 = vlaneseq
  %v6144 = vshrl.u32 %v6143, 7
  %v6145 = vsub.s32 %v6142, %v6144
  %v6146 = vrot.slane %v6132, %v6145
  %v6147 = vcombine.low %v6091, %v6123
  %v6148 = vcombine.high %v6091, %v6123
  %v6149 = vcombine.low %v6098, %v6130
  %v6150 = vcombine.high %v6098, %v6130
  %v6151 = vcombine.low %v6107, %v6139
  %v6152 = vcombine.high %v6107, %v6139
  %v6153 = vcombine.low %v6114, %v6146
  %v6154 = vcombine.high %v6114, %v6146
  %v6155 = vcombine.low %v5924, %v5948
  %v6156 = vcombine.high %v5924, %v5948
  %v6158 = vunpack.c.l.s4 1983009808
  %v6159 = vunpack.c.0.s8 %v6158
  %v6160 = vlaneseq
  %v6161 = vshrl.u32 %v6160, 7
  %v6162 = vsub.s32 %v6159, %v6161
  %v6163 = vrot.slane %v6155, %v6162
  %v6165 = vunpack.c.l.s4 1983009808
  %v6166 = vunpack.c.0.s8 %v6165
  %v6167 = vlaneseq
  %v6168 = vshrl.u32 %v6167, 7
  %v6169 = vsub.s32 %v6166, %v6168
  %v6170 = vrot.slane %v6156, %v6169
  %v6171 = vcombine.low %v5936, %v5960
  %v6172 = vcombine.high %v5936, %v5960
  %v6174 = vunpack.c.l.s4 1983009808
  %v6175 = vunpack.c.0.s8 %v6174
  %v6176 = vlaneseq
  %v6177 = vshrl.u32 %v6176, 7
  %v6178 = vsub.s32 %v6175, %v6177
  %v6179 = vrot.slane %v6171, %v6178
  %v6181 = vunpack.c.l.s4 1983009808
  %v6182 = vunpack.c.0.s8 %v6181
  %v6183 = vlaneseq
  %v6184 = vshrl.u32 %v6183, 7
  %v6185 = vsub.s32 %v6182, %v6184
  %v6186 = vrot.slane %v6172, %v6185
  %v6187 = vcombine.low %v5972, %v5996
  %v6188 = vcombine.high %v5972, %v5996
  %v6190 = vunpack.c.l.s4 1983009808
  %v6191 = vunpack.c.0.s8 %v6190
  %v6192 = vlaneseq
  %v6193 = vshrl.u32 %v6192, 7
  %v6194 = vsub.s32 %v6191, %v6193
  %v6195 = vrot.slane %v6187, %v6194
  %v6197 = vunpack.c.l.s4 1983009808
  %v6198 = vunpack.c.0.s8 %v6197
  %v6199 = vlaneseq
  %v6200 = vshrl.u32 %v6199, 7
  %v6201 = vsub.s32 %v6198, %v6200
  %v6202 = vrot.slane %v6188, %v6201
  %v6203 = vcombine.low %v5984, %v6008
  %v6204 = vcombine.high %v5984, %v6008
  %v6206 = vunpack.c.l.s4 1983009808
  %v6207 = vunpack.c.0.s8 %v6206
  %v6208 = vlaneseq
  %v6209 = vshrl.u32 %v6208, 7
  %v6210 = vsub.s32 %v6207, %v6209
  %v6211 = vrot.slane %v6203, %v6210
  %v6213 = vunpack.c.l.s4 1983009808
  %v6214 = vunpack.c.0.s8 %v6213
  %v6215 = vlaneseq
  %v6216 = vshrl.u32 %v6215, 7
  %v6217 = vsub.s32 %v6214, %v6216
  %v6218 = vrot.slane %v6204, %v6217
  %v6219 = vcombine.low %v6163, %v6179
  %v6220 = vcombine.high %v6163, %v6179
  %v6222 = vunpack.c.l.s4 1934713408
  %v6223 = vunpack.c.0.s8 %v6222
  %v6224 = vlaneseq
  %v6225 = vshrl.u32 %v6224, 7
  %v6226 = vsub.s32 %v6223, %v6225
  %v6227 = vrot.slane %v6219, %v6226
  %v6229 = vunpack.c.l.s4 1934713408
  %v6230 = vunpack.c.0.s8 %v6229
  %v6231 = vlaneseq
  %v6232 = vshrl.u32 %v6231, 7
  %v6233 = vsub.s32 %v6230, %v6232
  %v6234 = vrot.slane %v6220, %v6233
  %v6235 = vcombine.low %v6170, %v6186
  %v6236 = vcombine.high %v6170, %v6186
  %v6238 = vunpack.c.l.s4 1934713408
  %v6239 = vunpack.c.0.s8 %v6238
  %v6240 = vlaneseq
  %v6241 = vshrl.u32 %v6240, 7
  %v6242 = vsub.s32 %v6239, %v6241
  %v6243 = vrot.slane %v6235, %v6242
  %v6245 = vunpack.c.l.s4 1934713408
  %v6246 = vunpack.c.0.s8 %v6245
  %v6247 = vlaneseq
  %v6248 = vshrl.u32 %v6247, 7
  %v6249 = vsub.s32 %v6246, %v6248
  %v6250 = vrot.slane %v6236, %v6249
  %v6251 = vcombine.low %v6195, %v6211
  %v6252 = vcombine.high %v6195, %v6211
  %v6254 = vunpack.c.l.s4 1934713408
  %v6255 = vunpack.c.0.s8 %v6254
  %v6256 = vlaneseq
  %v6257 = vshrl.u32 %v6256, 7
  %v6258 = vsub.s32 %v6255, %v6257
  %v6259 = vrot.slane %v6251, %v6258
  %v6261 = vunpack.c.l.s4 1934713408
  %v6262 = vunpack.c.0.s8 %v6261
  %v6263 = vlaneseq
  %v6264 = vshrl.u32 %v6263, 7
  %v6265 = vsub.s32 %v6262, %v6264
  %v6266 = vrot.slane %v6252, %v6265
  %v6267 = vcombine.low %v6202, %v6218
  %v6268 = vcombine.high %v6202, %v6218
  %v6270 = vunpack.c.l.s4 1934713408
  %v6271 = vunpack.c.0.s8 %v6270
  %v6272 = vlaneseq
  %v6273 = vshrl.u32 %v6272, 7
  %v6274 = vsub.s32 %v6271, %v6273
  %v6275 = vrot.slane %v6267, %v6274
  %v6277 = vunpack.c.l.s4 1934713408
  %v6278 = vunpack.c.0.s8 %v6277
  %v6279 = vlaneseq
  %v6280 = vshrl.u32 %v6279, 7
  %v6281 = vsub.s32 %v6278, %v6280
  %v6282 = vrot.slane %v6268, %v6281
  %v6283 = vcombine.low %v6227, %v6259
  %v6284 = vcombine.high %v6227, %v6259
  %v6285 = vcombine.low %v6234, %v6266
  %v6286 = vcombine.high %v6234, %v6266
  %v6287 = vcombine.low %v6243, %v6275
  %v6288 = vcombine.high %v6243, %v6275
  %v6289 = vcombine.low %v6250, %v6282
  %v6290 = vcombine.high %v6250, %v6282
  %v6291 = vcombine.low %v5822, %v5854
  %v6292 = vcombine.high %v5822, %v5854
  %v6294 = vunpack.c.l.s4 1983009808
  %v6295 = vunpack.c.0.s8 %v6294
  %v6296 = vlaneseq
  %v6297 = vshrl.u32 %v6296, 7
  %v6298 = vsub.s32 %v6295, %v6297
  %v6299 = vrot.slane %v6291, %v6298
  %v6301 = vunpack.c.l.s4 1983009808
  %v6302 = vunpack.c.0.s8 %v6301
  %v6303 = vlaneseq
  %v6304 = vshrl.u32 %v6303, 7
  %v6305 = vsub.s32 %v6302, %v6304
  %v6306 = vrot.slane %v6292, %v6305
  %v6307 = vcombine.low %v5842, %v5866
  %v6308 = vcombine.high %v5842, %v5866
  %v6310 = vunpack.c.l.s4 1983009808
  %v6311 = vunpack.c.0.s8 %v6310
  %v6312 = vlaneseq
  %v6313 = vshrl.u32 %v6312, 7
  %v6314 = vsub.s32 %v6311, %v6313
  %v6315 = vrot.slane %v6307, %v6314
  %v6317 = vunpack.c.l.s4 1983009808
  %v6318 = vunpack.c.0.s8 %v6317
  %v6319 = vlaneseq
  %v6320 = vshrl.u32 %v6319, 7
  %v6321 = vsub.s32 %v6318, %v6320
  %v6322 = vrot.slane %v6308, %v6321
  %v6323 = vcombine.low %v5878, %v5902
  %v6324 = vcombine.high %v5878, %v5902
  %v6326 = vunpack.c.l.s4 1983009808
  %v6327 = vunpack.c.0.s8 %v6326
  %v6328 = vlaneseq
  %v6329 = vshrl.u32 %v6328, 7
  %v6330 = vsub.s32 %v6327, %v6329
  %v6331 = vrot.slane %v6323, %v6330
  %v6333 = vunpack.c.l.s4 1983009808
  %v6334 = vunpack.c.0.s8 %v6333
  %v6335 = vlaneseq
  %v6336 = vshrl.u32 %v6335, 7
  %v6337 = vsub.s32 %v6334, %v6336
  %v6338 = vrot.slane %v6324, %v6337
  %v6339 = vcombine.low %v5890, %v5914
  %v6340 = vcombine.high %v5890, %v5914
  %v6342 = vunpack.c.l.s4 1983009808
  %v6343 = vunpack.c.0.s8 %v6342
  %v6344 = vlaneseq
  %v6345 = vshrl.u32 %v6344, 7
  %v6346 = vsub.s32 %v6343, %v6345
  %v6347 = vrot.slane %v6339, %v6346
  %v6349 = vunpack.c.l.s4 1983009808
  %v6350 = vunpack.c.0.s8 %v6349
  %v6351 = vlaneseq
  %v6352 = vshrl.u32 %v6351, 7
  %v6353 = vsub.s32 %v6350, %v6352
  %v6354 = vrot.slane %v6340, %v6353
  %v6355 = vcombine.low %v6299, %v6315
  %v6356 = vcombine.high %v6299, %v6315
  %v6358 = vunpack.c.l.s4 1934713408
  %v6359 = vunpack.c.0.s8 %v6358
  %v6360 = vlaneseq
  %v6361 = vshrl.u32 %v6360, 7
  %v6362 = vsub.s32 %v6359, %v6361
  %v6363 = vrot.slane %v6355, %v6362
  %v6365 = vunpack.c.l.s4 1934713408
  %v6366 = vunpack.c.0.s8 %v6365
  %v6367 = vlaneseq
  %v6368 = vshrl.u32 %v6367, 7
  %v6369 = vsub.s32 %v6366, %v6368
  %v6370 = vrot.slane %v6356, %v6369
  %v6371 = vcombine.low %v6306, %v6322
  %v6372 = vcombine.high %v6306, %v6322
  %v6374 = vunpack.c.l.s4 1934713408
  %v6375 = vunpack.c.0.s8 %v6374
  %v6376 = vlaneseq
  %v6377 = vshrl.u32 %v6376, 7
  %v6378 = vsub.s32 %v6375, %v6377
  %v6379 = vrot.slane %v6371, %v6378
  %v6381 = vunpack.c.l.s4 1934713408
  %v6382 = vunpack.c.0.s8 %v6381
  %v6383 = vlaneseq
  %v6384 = vshrl.u32 %v6383, 7
  %v6385 = vsub.s32 %v6382, %v6384
  %v6386 = vrot.slane %v6372, %v6385
  %v6387 = vcombine.low %v6331, %v6347
  %v6388 = vcombine.high %v6331, %v6347
  %v6390 = vunpack.c.l.s4 1934713408
  %v6391 = vunpack.c.0.s8 %v6390
  %v6392 = vlaneseq
  %v6393 = vshrl.u32 %v6392, 7
  %v6394 = vsub.s32 %v6391, %v6393
  %v6395 = vrot.slane %v6387, %v6394
  %v6397 = vunpack.c.l.s4 1934713408
  %v6398 = vunpack.c.0.s8 %v6397
  %v6399 = vlaneseq
  %v6400 = vshrl.u32 %v6399, 7
  %v6401 = vsub.s32 %v6398, %v6400
  %v6402 = vrot.slane %v6388, %v6401
  %v6403 = vcombine.low %v6338, %v6354
  %v6404 = vcombine.high %v6338, %v6354
  %v6406 = vunpack.c.l.s4 1934713408
  %v6407 = vunpack.c.0.s8 %v6406
  %v6408 = vlaneseq
  %v6409 = vshrl.u32 %v6408, 7
  %v6410 = vsub.s32 %v6407, %v6409
  %v6411 = vrot.slane %v6403, %v6410
  %v6413 = vunpack.c.l.s4 1934713408
  %v6414 = vunpack.c.0.s8 %v6413
  %v6415 = vlaneseq
  %v6416 = vshrl.u32 %v6415, 7
  %v6417 = vsub.s32 %v6414, %v6416
  %v6418 = vrot.slane %v6404, %v6417
  %v6419 = vcombine.low %v6363, %v6395
  %v6420 = vcombine.high %v6363, %v6395
  %v6421 = vcombine.low %v6370, %v6402
  %v6422 = vcombine.high %v6370, %v6402
  %v6423 = vcombine.low %v6379, %v6411
  %v6424 = vcombine.high %v6379, %v6411
  %v6425 = vcombine.low %v6386, %v6418
  %v6426 = vcombine.high %v6386, %v6418
  %v6427 = vcombine.low %v5926, %v5950
  %v6428 = vcombine.high %v5926, %v5950
  %v6430 = vunpack.c.l.s4 1983009808
  %v6431 = vunpack.c.0.s8 %v6430
  %v6432 = vlaneseq
  %v6433 = vshrl.u32 %v6432, 7
  %v6434 = vsub.s32 %v6431, %v6433
  %v6435 = vrot.slane %v6427, %v6434
  %v6437 = vunpack.c.l.s4 1983009808
  %v6438 = vunpack.c.0.s8 %v6437
  %v6439 = vlaneseq
  %v6440 = vshrl.u32 %v6439, 7
  %v6441 = vsub.s32 %v6438, %v6440
  %v6442 = vrot.slane %v6428, %v6441
  %v6443 = vcombine.low %v5938, %v5962
  %v6444 = vcombine.high %v5938, %v5962
  %v6446 = vunpack.c.l.s4 1983009808
  %v6447 = vunpack.c.0.s8 %v6446
  %v6448 = vlaneseq
  %v6449 = vshrl.u32 %v6448, 7
  %v6450 = vsub.s32 %v6447, %v6449
  %v6451 = vrot.slane %v6443, %v6450
  %v6453 = vunpack.c.l.s4 1983009808
  %v6454 = vunpack.c.0.s8 %v6453
  %v6455 = vlaneseq
  %v6456 = vshrl.u32 %v6455, 7
  %v6457 = vsub.s32 %v6454, %v6456
  %v6458 = vrot.slane %v6444, %v6457
  %v6459 = vcombine.low %v5974, %v5998
  %v6460 = vcombine.high %v5974, %v5998
  %v6462 = vunpack.c.l.s4 1983009808
  %v6463 = vunpack.c.0.s8 %v6462
  %v6464 = vlaneseq
  %v6465 = vshrl.u32 %v6464, 7
  %v6466 = vsub.s32 %v6463, %v6465
  %v6467 = vrot.slane %v6459, %v6466
  %v6469 = vunpack.c.l.s4 1983009808
  %v6470 = vunpack.c.0.s8 %v6469
  %v6471 = vlaneseq
  %v6472 = vshrl.u32 %v6471, 7
  %v6473 = vsub.s32 %v6470, %v6472
  %v6474 = vrot.slane %v6460, %v6473
  %v6475 = vcombine.low %v5986, %v6010
  %v6476 = vcombine.high %v5986, %v6010
  %v6478 = vunpack.c.l.s4 1983009808
  %v6479 = vunpack.c.0.s8 %v6478
  %v6480 = vlaneseq
  %v6481 = vshrl.u32 %v6480, 7
  %v6482 = vsub.s32 %v6479, %v6481
  %v6483 = vrot.slane %v6475, %v6482
  %v6485 = vunpack.c.l.s4 1983009808
  %v6486 = vunpack.c.0.s8 %v6485
  %v6487 = vlaneseq
  %v6488 = vshrl.u32 %v6487, 7
  %v6489 = vsub.s32 %v6486, %v6488
  %v6490 = vrot.slane %v6476, %v6489
  %v6491 = vcombine.low %v6435, %v6451
  %v6492 = vcombine.high %v6435, %v6451
  %v6494 = vunpack.c.l.s4 1934713408
  %v6495 = vunpack.c.0.s8 %v6494
  %v6496 = vlaneseq
  %v6497 = vshrl.u32 %v6496, 7
  %v6498 = vsub.s32 %v6495, %v6497
  %v6499 = vrot.slane %v6491, %v6498
  %v6501 = vunpack.c.l.s4 1934713408
  %v6502 = vunpack.c.0.s8 %v6501
  %v6503 = vlaneseq
  %v6504 = vshrl.u32 %v6503, 7
  %v6505 = vsub.s32 %v6502, %v6504
  %v6506 = vrot.slane %v6492, %v6505
  %v6507 = vcombine.low %v6442, %v6458
  %v6508 = vcombine.high %v6442, %v6458
  %v6510 = vunpack.c.l.s4 1934713408
  %v6511 = vunpack.c.0.s8 %v6510
  %v6512 = vlaneseq
  %v6513 = vshrl.u32 %v6512, 7
  %v6514 = vsub.s32 %v6511, %v6513
  %v6515 = vrot.slane %v6507, %v6514
  %v6517 = vunpack.c.l.s4 1934713408
  %v6518 = vunpack.c.0.s8 %v6517
  %v6519 = vlaneseq
  %v6520 = vshrl.u32 %v6519, 7
  %v6521 = vsub.s32 %v6518, %v6520
  %v6522 = vrot.slane %v6508, %v6521
  %v6523 = vcombine.low %v6467, %v6483
  %v6524 = vcombine.high %v6467, %v6483
  %v6526 = vunpack.c.l.s4 1934713408
  %v6527 = vunpack.c.0.s8 %v6526
  %v6528 = vlaneseq
  %v6529 = vshrl.u32 %v6528, 7
  %v6530 = vsub.s32 %v6527, %v6529
  %v6531 = vrot.slane %v6523, %v6530
  %v6533 = vunpack.c.l.s4 1934713408
  %v6534 = vunpack.c.0.s8 %v6533
  %v6535 = vlaneseq
  %v6536 = vshrl.u32 %v6535, 7
  %v6537 = vsub.s32 %v6534, %v6536
  %v6538 = vrot.slane %v6524, %v6537
  %v6539 = vcombine.low %v6474, %v6490
  %v6540 = vcombine.high %v6474, %v6490
  %v6542 = vunpack.c.l.s4 1934713408
  %v6543 = vunpack.c.0.s8 %v6542
  %v6544 = vlaneseq
  %v6545 = vshrl.u32 %v6544, 7
  %v6546 = vsub.s32 %v6543, %v6545
  %v6547 = vrot.slane %v6539, %v6546
  %v6549 = vunpack.c.l.s4 1934713408
  %v6550 = vunpack.c.0.s8 %v6549
  %v6551 = vlaneseq
  %v6552 = vshrl.u32 %v6551, 7
  %v6553 = vsub.s32 %v6550, %v6552
  %v6554 = vrot.slane %v6540, %v6553
  %v6555 = vcombine.low %v6499, %v6531
  %v6556 = vcombine.high %v6499, %v6531
  %v6557 = vcombine.low %v6506, %v6538
  %v6558 = vcombine.high %v6506, %v6538
  %v6559 = vcombine.low %v6515, %v6547
  %v6560 = vcombine.high %v6515, %v6547
  %v6561 = vcombine.low %v6522, %v6554
  %v6562 = vcombine.high %v6522, %v6554
  %v6563 = vcombine.low %v5827, %v5856
  %v6564 = vcombine.high %v5827, %v5856
  %v6566 = vunpack.c.l.s4 1983009808
  %v6567 = vunpack.c.0.s8 %v6566
  %v6568 = vlaneseq
  %v6569 = vshrl.u32 %v6568, 7
  %v6570 = vsub.s32 %v6567, %v6569
  %v6571 = vrot.slane %v6563, %v6570
  %v6573 = vunpack.c.l.s4 1983009808
  %v6574 = vunpack.c.0.s8 %v6573
  %v6575 = vlaneseq
  %v6576 = vshrl.u32 %v6575, 7
  %v6577 = vsub.s32 %v6574, %v6576
  %v6578 = vrot.slane %v6564, %v6577
  %v6579 = vcombine.low %v5844, %v5868
  %v6580 = vcombine.high %v5844, %v5868
  %v6582 = vunpack.c.l.s4 1983009808
  %v6583 = vunpack.c.0.s8 %v6582
  %v6584 = vlaneseq
  %v6585 = vshrl.u32 %v6584, 7
  %v6586 = vsub.s32 %v6583, %v6585
  %v6587 = vrot.slane %v6579, %v6586
  %v6589 = vunpack.c.l.s4 1983009808
  %v6590 = vunpack.c.0.s8 %v6589
  %v6591 = vlaneseq
  %v6592 = vshrl.u32 %v6591, 7
  %v6593 = vsub.s32 %v6590, %v6592
  %v6594 = vrot.slane %v6580, %v6593
  %v6595 = vcombine.low %v5880, %v5904
  %v6596 = vcombine.high %v5880, %v5904
  %v6598 = vunpack.c.l.s4 1983009808
  %v6599 = vunpack.c.0.s8 %v6598
  %v6600 = vlaneseq
  %v6601 = vshrl.u32 %v6600, 7
  %v6602 = vsub.s32 %v6599, %v6601
  %v6603 = vrot.slane %v6595, %v6602
  %v6605 = vunpack.c.l.s4 1983009808
  %v6606 = vunpack.c.0.s8 %v6605
  %v6607 = vlaneseq
  %v6608 = vshrl.u32 %v6607, 7
  %v6609 = vsub.s32 %v6606, %v6608
  %v6610 = vrot.slane %v6596, %v6609
  %v6611 = vcombine.low %v5892, %v5916
  %v6612 = vcombine.high %v5892, %v5916
  %v6614 = vunpack.c.l.s4 1983009808
  %v6615 = vunpack.c.0.s8 %v6614
  %v6616 = vlaneseq
  %v6617 = vshrl.u32 %v6616, 7
  %v6618 = vsub.s32 %v6615, %v6617
  %v6619 = vrot.slane %v6611, %v6618
  %v6621 = vunpack.c.l.s4 1983009808
  %v6622 = vunpack.c.0.s8 %v6621
  %v6623 = vlaneseq
  %v6624 = vshrl.u32 %v6623, 7
  %v6625 = vsub.s32 %v6622, %v6624
  %v6626 = vrot.slane %v6612, %v6625
  %v6627 = vcombine.low %v6571, %v6587
  %v6628 = vcombine.high %v6571, %v6587
  %v6630 = vunpack.c.l.s4 1934713408
  %v6631 = vunpack.c.0.s8 %v6630
  %v6632 = vlaneseq
  %v6633 = vshrl.u32 %v6632, 7
  %v6634 = vsub.s32 %v6631, %v6633
  %v6635 = vrot.slane %v6627, %v6634
  %v6637 = vunpack.c.l.s4 1934713408
  %v6638 = vunpack.c.0.s8 %v6637
  %v6639 = vlaneseq
  %v6640 = vshrl.u32 %v6639, 7
  %v6641 = vsub.s32 %v6638, %v6640
  %v6642 = vrot.slane %v6628, %v6641
  %v6643 = vcombine.low %v6578, %v6594
  %v6644 = vcombine.high %v6578, %v6594
  %v6646 = vunpack.c.l.s4 1934713408
  %v6647 = vunpack.c.0.s8 %v6646
  %v6648 = vlaneseq
  %v6649 = vshrl.u32 %v6648, 7
  %v6650 = vsub.s32 %v6647, %v6649
  %v6651 = vrot.slane %v6643, %v6650
  %v6653 = vunpack.c.l.s4 1934713408
  %v6654 = vunpack.c.0.s8 %v6653
  %v6655 = vlaneseq
  %v6656 = vshrl.u32 %v6655, 7
  %v6657 = vsub.s32 %v6654, %v6656
  %v6658 = vrot.slane %v6644, %v6657
  %v6659 = vcombine.low %v6603, %v6619
  %v6660 = vcombine.high %v6603, %v6619
  %v6662 = vunpack.c.l.s4 1934713408
  %v6663 = vunpack.c.0.s8 %v6662
  %v6664 = vlaneseq
  %v6665 = vshrl.u32 %v6664, 7
  %v6666 = vsub.s32 %v6663, %v6665
  %v6667 = vrot.slane %v6659, %v6666
  %v6669 = vunpack.c.l.s4 1934713408
  %v6670 = vunpack.c.0.s8 %v6669
  %v6671 = vlaneseq
  %v6672 = vshrl.u32 %v6671, 7
  %v6673 = vsub.s32 %v6670, %v6672
  %v6674 = vrot.slane %v6660, %v6673
  %v6675 = vcombine.low %v6610, %v6626
  %v6676 = vcombine.high %v6610, %v6626
  %v6678 = vunpack.c.l.s4 1934713408
  %v6679 = vunpack.c.0.s8 %v6678
  %v6680 = vlaneseq
  %v6681 = vshrl.u32 %v6680, 7
  %v6682 = vsub.s32 %v6679, %v6681
  %v6683 = vrot.slane %v6675, %v6682
  %v6685 = vunpack.c.l.s4 1934713408
  %v6686 = vunpack.c.0.s8 %v6685
  %v6687 = vlaneseq
  %v6688 = vshrl.u32 %v6687, 7
  %v6689 = vsub.s32 %v6686, %v6688
  %v6690 = vrot.slane %v6676, %v6689
  %v6691 = vcombine.low %v6635, %v6667
  %v6692 = vcombine.high %v6635, %v6667
  %v6693 = vcombine.low %v6642, %v6674
  %v6694 = vcombine.high %v6642, %v6674
  %v6695 = vcombine.low %v6651, %v6683
  %v6696 = vcombine.high %v6651, %v6683
  %v6697 = vcombine.low %v6658, %v6690
  %v6698 = vcombine.high %v6658, %v6690
  %v6699 = vcombine.low %v5928, %v5952
  %v6700 = vcombine.high %v5928, %v5952
  %v6702 = vunpack.c.l.s4 1983009808
  %v6703 = vunpack.c.0.s8 %v6702
  %v6704 = vlaneseq
  %v6705 = vshrl.u32 %v6704, 7
  %v6706 = vsub.s32 %v6703, %v6705
  %v6707 = vrot.slane %v6699, %v6706
  %v6709 = vunpack.c.l.s4 1983009808
  %v6710 = vunpack.c.0.s8 %v6709
  %v6711 = vlaneseq
  %v6712 = vshrl.u32 %v6711, 7
  %v6713 = vsub.s32 %v6710, %v6712
  %v6714 = vrot.slane %v6700, %v6713
  %v6715 = vcombine.low %v5940, %v5964
  %v6716 = vcombine.high %v5940, %v5964
  %v6718 = vunpack.c.l.s4 1983009808
  %v6719 = vunpack.c.0.s8 %v6718
  %v6720 = vlaneseq
  %v6721 = vshrl.u32 %v6720, 7
  %v6722 = vsub.s32 %v6719, %v6721
  %v6723 = vrot.slane %v6715, %v6722
  %v6725 = vunpack.c.l.s4 1983009808
  %v6726 = vunpack.c.0.s8 %v6725
  %v6727 = vlaneseq
  %v6728 = vshrl.u32 %v6727, 7
  %v6729 = vsub.s32 %v6726, %v6728
  %v6730 = vrot.slane %v6716, %v6729
  %v6731 = vcombine.low %v5976, %v6000
  %v6732 = vcombine.high %v5976, %v6000
  %v6734 = vunpack.c.l.s4 1983009808
  %v6735 = vunpack.c.0.s8 %v6734
  %v6736 = vlaneseq
  %v6737 = vshrl.u32 %v6736, 7
  %v6738 = vsub.s32 %v6735, %v6737
  %v6739 = vrot.slane %v6731, %v6738
  %v6741 = vunpack.c.l.s4 1983009808
  %v6742 = vunpack.c.0.s8 %v6741
  %v6743 = vlaneseq
  %v6744 = vshrl.u32 %v6743, 7
  %v6745 = vsub.s32 %v6742, %v6744
  %v6746 = vrot.slane %v6732, %v6745
  %v6747 = vcombine.low %v5988, %v6012
  %v6748 = vcombine.high %v5988, %v6012
  %v6750 = vunpack.c.l.s4 1983009808
  %v6751 = vunpack.c.0.s8 %v6750
  %v6752 = vlaneseq
  %v6753 = vshrl.u32 %v6752, 7
  %v6754 = vsub.s32 %v6751, %v6753
  %v6755 = vrot.slane %v6747, %v6754
  %v6757 = vunpack.c.l.s4 1983009808
  %v6758 = vunpack.c.0.s8 %v6757
  %v6759 = vlaneseq
  %v6760 = vshrl.u32 %v6759, 7
  %v6761 = vsub.s32 %v6758, %v6760
  %v6762 = vrot.slane %v6748, %v6761
  %v6763 = vcombine.low %v6707, %v6723
  %v6764 = vcombine.high %v6707, %v6723
  %v6766 = vunpack.c.l.s4 1934713408
  %v6767 = vunpack.c.0.s8 %v6766
  %v6768 = vlaneseq
  %v6769 = vshrl.u32 %v6768, 7
  %v6770 = vsub.s32 %v6767, %v6769
  %v6771 = vrot.slane %v6763, %v6770
  %v6773 = vunpack.c.l.s4 1934713408
  %v6774 = vunpack.c.0.s8 %v6773
  %v6775 = vlaneseq
  %v6776 = vshrl.u32 %v6775, 7
  %v6777 = vsub.s32 %v6774, %v6776
  %v6778 = vrot.slane %v6764, %v6777
  %v6779 = vcombine.low %v6714, %v6730
  %v6780 = vcombine.high %v6714, %v6730
  %v6782 = vunpack.c.l.s4 1934713408
  %v6783 = vunpack.c.0.s8 %v6782
  %v6784 = vlaneseq
  %v6785 = vshrl.u32 %v6784, 7
  %v6786 = vsub.s32 %v6783, %v6785
  %v6787 = vrot.slane %v6779, %v6786
  %v6789 = vunpack.c.l.s4 1934713408
  %v6790 = vunpack.c.0.s8 %v6789
  %v6791 = vlaneseq
  %v6792 = vshrl.u32 %v6791, 7
  %v6793 = vsub.s32 %v6790, %v6792
  %v6794 = vrot.slane %v6780, %v6793
  %v6795 = vcombine.low %v6739, %v6755
  %v6796 = vcombine.high %v6739, %v6755
  %v6798 = vunpack.c.l.s4 1934713408
  %v6799 = vunpack.c.0.s8 %v6798
  %v6800 = vlaneseq
  %v6801 = vshrl.u32 %v6800, 7
  %v6802 = vsub.s32 %v6799, %v6801
  %v6803 = vrot.slane %v6795, %v6802
  %v6805 = vunpack.c.l.s4 1934713408
  %v6806 = vunpack.c.0.s8 %v6805
  %v6807 = vlaneseq
  %v6808 = vshrl.u32 %v6807, 7
  %v6809 = vsub.s32 %v6806, %v6808
  %v6810 = vrot.slane %v6796, %v6809
  %v6811 = vcombine.low %v6746, %v6762
  %v6812 = vcombine.high %v6746, %v6762
  %v6814 = vunpack.c.l.s4 1934713408
  %v6815 = vunpack.c.0.s8 %v6814
  %v6816 = vlaneseq
  %v6817 = vshrl.u32 %v6816, 7
  %v6818 = vsub.s32 %v6815, %v6817
  %v6819 = vrot.slane %v6811, %v6818
  %v6821 = vunpack.c.l.s4 1934713408
  %v6822 = vunpack.c.0.s8 %v6821
  %v6823 = vlaneseq
  %v6824 = vshrl.u32 %v6823, 7
  %v6825 = vsub.s32 %v6822, %v6824
  %v6826 = vrot.slane %v6812, %v6825
  %v6827 = vcombine.low %v6771, %v6803
  %v6828 = vcombine.high %v6771, %v6803
  %v6829 = vcombine.low %v6778, %v6810
  %v6830 = vcombine.high %v6778, %v6810
  %v6831 = vcombine.low %v6787, %v6819
  %v6832 = vcombine.high %v6787, %v6819
  %v6833 = vcombine.low %v6794, %v6826
  %v6834 = vcombine.high %v6794, %v6826
  %v6835 = vcombine.low %v5832, %v5858
  %v6836 = vcombine.high %v5832, %v5858
  %v6838 = vunpack.c.l.s4 1983009808
  %v6839 = vunpack.c.0.s8 %v6838
  %v6840 = vlaneseq
  %v6841 = vshrl.u32 %v6840, 7
  %v6842 = vsub.s32 %v6839, %v6841
  %v6843 = vrot.slane %v6835, %v6842
  %v6845 = vunpack.c.l.s4 1983009808
  %v6846 = vunpack.c.0.s8 %v6845
  %v6847 = vlaneseq
  %v6848 = vshrl.u32 %v6847, 7
  %v6849 = vsub.s32 %v6846, %v6848
  %v6850 = vrot.slane %v6836, %v6849
  %v6851 = vcombine.low %v5846, %v5870
  %v6852 = vcombine.high %v5846, %v5870
  %v6854 = vunpack.c.l.s4 1983009808
  %v6855 = vunpack.c.0.s8 %v6854
  %v6856 = vlaneseq
  %v6857 = vshrl.u32 %v6856, 7
  %v6858 = vsub.s32 %v6855, %v6857
  %v6859 = vrot.slane %v6851, %v6858
  %v6861 = vunpack.c.l.s4 1983009808
  %v6862 = vunpack.c.0.s8 %v6861
  %v6863 = vlaneseq
  %v6864 = vshrl.u32 %v6863, 7
  %v6865 = vsub.s32 %v6862, %v6864
  %v6866 = vrot.slane %v6852, %v6865
  %v6867 = vcombine.low %v5882, %v5906
  %v6868 = vcombine.high %v5882, %v5906
  %v6870 = vunpack.c.l.s4 1983009808
  %v6871 = vunpack.c.0.s8 %v6870
  %v6872 = vlaneseq
  %v6873 = vshrl.u32 %v6872, 7
  %v6874 = vsub.s32 %v6871, %v6873
  %v6875 = vrot.slane %v6867, %v6874
  %v6877 = vunpack.c.l.s4 1983009808
  %v6878 = vunpack.c.0.s8 %v6877
  %v6879 = vlaneseq
  %v6880 = vshrl.u32 %v6879, 7
  %v6881 = vsub.s32 %v6878, %v6880
  %v6882 = vrot.slane %v6868, %v6881
  %v6883 = vcombine.low %v5894, %v5918
  %v6884 = vcombine.high %v5894, %v5918
  %v6886 = vunpack.c.l.s4 1983009808
  %v6887 = vunpack.c.0.s8 %v6886
  %v6888 = vlaneseq
  %v6889 = vshrl.u32 %v6888, 7
  %v6890 = vsub.s32 %v6887, %v6889
  %v6891 = vrot.slane %v6883, %v6890
  %v6893 = vunpack.c.l.s4 1983009808
  %v6894 = vunpack.c.0.s8 %v6893
  %v6895 = vlaneseq
  %v6896 = vshrl.u32 %v6895, 7
  %v6897 = vsub.s32 %v6894, %v6896
  %v6898 = vrot.slane %v6884, %v6897
  %v6899 = vcombine.low %v6843, %v6859
  %v6900 = vcombine.high %v6843, %v6859
  %v6902 = vunpack.c.l.s4 1934713408
  %v6903 = vunpack.c.0.s8 %v6902
  %v6904 = vlaneseq
  %v6905 = vshrl.u32 %v6904, 7
  %v6906 = vsub.s32 %v6903, %v6905
  %v6907 = vrot.slane %v6899, %v6906
  %v6909 = vunpack.c.l.s4 1934713408
  %v6910 = vunpack.c.0.s8 %v6909
  %v6911 = vlaneseq
  %v6912 = vshrl.u32 %v6911, 7
  %v6913 = vsub.s32 %v6910, %v6912
  %v6914 = vrot.slane %v6900, %v6913
  %v6915 = vcombine.low %v6850, %v6866
  %v6916 = vcombine.high %v6850, %v6866
  %v6918 = vunpack.c.l.s4 1934713408
  %v6919 = vunpack.c.0.s8 %v6918
  %v6920 = vlaneseq
  %v6921 = vshrl.u32 %v6920, 7
  %v6922 = vsub.s32 %v6919, %v6921
  %v6923 = vrot.slane %v6915, %v6922
  %v6925 = vunpack.c.l.s4 1934713408
  %v6926 = vunpack.c.0.s8 %v6925
  %v6927 = vlaneseq
  %v6928 = vshrl.u32 %v6927, 7
  %v6929 = vsub.s32 %v6926, %v6928
  %v6930 = vrot.slane %v6916, %v6929
  %v6931 = vcombine.low %v6875, %v6891
  %v6932 = vcombine.high %v6875, %v6891
  %v6934 = vunpack.c.l.s4 1934713408
  %v6935 = vunpack.c.0.s8 %v6934
  %v6936 = vlaneseq
  %v6937 = vshrl.u32 %v6936, 7
  %v6938 = vsub.s32 %v6935, %v6937
  %v6939 = vrot.slane %v6931, %v6938
  %v6941 = vunpack.c.l.s4 1934713408
  %v6942 = vunpack.c.0.s8 %v6941
  %v6943 = vlaneseq
  %v6944 = vshrl.u32 %v6943, 7
  %v6945 = vsub.s32 %v6942, %v6944
  %v6946 = vrot.slane %v6932, %v6945
  %v6947 = vcombine.low %v6882, %v6898
  %v6948 = vcombine.high %v6882, %v6898
  %v6950 = vunpack.c.l.s4 1934713408
  %v6951 = vunpack.c.0.s8 %v6950
  %v6952 = vlaneseq
  %v6953 = vshrl.u32 %v6952, 7
  %v6954 = vsub.s32 %v6951, %v6953
  %v6955 = vrot.slane %v6947, %v6954
  %v6957 = vunpack.c.l.s4 1934713408
  %v6958 = vunpack.c.0.s8 %v6957
  %v6959 = vlaneseq
  %v6960 = vshrl.u32 %v6959, 7
  %v6961 = vsub.s32 %v6958, %v6960
  %v6962 = vrot.slane %v6948, %v6961
  %v6963 = vcombine.low %v6907, %v6939
  %v6964 = vcombine.high %v6907, %v6939
  %v6965 = vcombine.low %v6914, %v6946
  %v6966 = vcombine.high %v6914, %v6946
  %v6967 = vcombine.low %v6923, %v6955
  %v6968 = vcombine.high %v6923, %v6955
  %v6969 = vcombine.low %v6930, %v6962
  %v6970 = vcombine.high %v6930, %v6962
  %v6971 = vcombine.low %v5930, %v5954
  %v6972 = vcombine.high %v5930, %v5954
  %v6974 = vunpack.c.l.s4 1983009808
  %v6975 = vunpack.c.0.s8 %v6974
  %v6976 = vlaneseq
  %v6977 = vshrl.u32 %v6976, 7
  %v6978 = vsub.s32 %v6975, %v6977
  %v6979 = vrot.slane %v6971, %v6978
  %v6981 = vunpack.c.l.s4 1983009808
  %v6982 = vunpack.c.0.s8 %v6981
  %v6983 = vlaneseq
  %v6984 = vshrl.u32 %v6983, 7
  %v6985 = vsub.s32 %v6982, %v6984
  %v6986 = vrot.slane %v6972, %v6985
  %v6987 = vcombine.low %v5942, %v5966
  %v6988 = vcombine.high %v5942, %v5966
  %v6990 = vunpack.c.l.s4 1983009808
  %v6991 = vunpack.c.0.s8 %v6990
  %v6992 = vlaneseq
  %v6993 = vshrl.u32 %v6992, 7
  %v6994 = vsub.s32 %v6991, %v6993
  %v6995 = vrot.slane %v6987, %v6994
  %v6997 = vunpack.c.l.s4 1983009808
  %v6998 = vunpack.c.0.s8 %v6997
  %v6999 = vlaneseq
  %v7000 = vshrl.u32 %v6999, 7
  %v7001 = vsub.s32 %v6998, %v7000
  %v7002 = vrot.slane %v6988, %v7001
  %v7003 = vcombine.low %v5978, %v6002
  %v7004 = vcombine.high %v5978, %v6002
  %v7006 = vunpack.c.l.s4 1983009808
  %v7007 = vunpack.c.0.s8 %v7006
  %v7008 = vlaneseq
  %v7009 = vshrl.u32 %v7008, 7
  %v7010 = vsub.s32 %v7007, %v7009
  %v7011 = vrot.slane %v7003, %v7010
  %v7013 = vunpack.c.l.s4 1983009808
  %v7014 = vunpack.c.0.s8 %v7013
  %v7015 = vlaneseq
  %v7016 = vshrl.u32 %v7015, 7
  %v7017 = vsub.s32 %v7014, %v7016
  %v7018 = vrot.slane %v7004, %v7017
  %v7019 = vcombine.low %v5990, %v6014
  %v7020 = vcombine.high %v5990, %v6014
  %v7022 = vunpack.c.l.s4 1983009808
  %v7023 = vunpack.c.0.s8 %v7022
  %v7024 = vlaneseq
  %v7025 = vshrl.u32 %v7024, 7
  %v7026 = vsub.s32 %v7023, %v7025
  %v7027 = vrot.slane %v7019, %v7026
  %v7029 = vunpack.c.l.s4 1983009808
  %v7030 = vunpack.c.0.s8 %v7029
  %v7031 = vlaneseq
  %v7032 = vshrl.u32 %v7031, 7
  %v7033 = vsub.s32 %v7030, %v7032
  %v7034 = vrot.slane %v7020, %v7033
  %v7035 = vcombine.low %v6979, %v6995
  %v7036 = vcombine.high %v6979, %v6995
  %v7038 = vunpack.c.l.s4 1934713408
  %v7039 = vunpack.c.0.s8 %v7038
  %v7040 = vlaneseq
  %v7041 = vshrl.u32 %v7040, 7
  %v7042 = vsub.s32 %v7039, %v7041
  %v7043 = vrot.slane %v7035, %v7042
  %v7045 = vunpack.c.l.s4 1934713408
  %v7046 = vunpack.c.0.s8 %v7045
  %v7047 = vlaneseq
  %v7048 = vshrl.u32 %v7047, 7
  %v7049 = vsub.s32 %v7046, %v7048
  %v7050 = vrot.slane %v7036, %v7049
  %v7051 = vcombine.low %v6986, %v7002
  %v7052 = vcombine.high %v6986, %v7002
  %v7054 = vunpack.c.l.s4 1934713408
  %v7055 = vunpack.c.0.s8 %v7054
  %v7056 = vlaneseq
  %v7057 = vshrl.u32 %v7056, 7
  %v7058 = vsub.s32 %v7055, %v7057
  %v7059 = vrot.slane %v7051, %v7058
  %v7061 = vunpack.c.l.s4 1934713408
  %v7062 = vunpack.c.0.s8 %v7061
  %v7063 = vlaneseq
  %v7064 = vshrl.u32 %v7063, 7
  %v7065 = vsub.s32 %v7062, %v7064
  %v7066 = vrot.slane %v7052, %v7065
  %v7067 = vcombine.low %v7011, %v7027
  %v7068 = vcombine.high %v7011, %v7027
  %v7070 = vunpack.c.l.s4 1934713408
  %v7071 = vunpack.c.0.s8 %v7070
  %v7072 = vlaneseq
  %v7073 = vshrl.u32 %v7072, 7
  %v7074 = vsub.s32 %v7071, %v7073
  %v7075 = vrot.slane %v7067, %v7074
  %v7077 = vunpack.c.l.s4 1934713408
  %v7078 = vunpack.c.0.s8 %v7077
  %v7079 = vlaneseq
  %v7080 = vshrl.u32 %v7079, 7
  %v7081 = vsub.s32 %v7078, %v7080
  %v7082 = vrot.slane %v7068, %v7081
  %v7083 = vcombine.low %v7018, %v7034
  %v7084 = vcombine.high %v7018, %v7034
  %v7086 = vunpack.c.l.s4 1934713408
  %v7087 = vunpack.c.0.s8 %v7086
  %v7088 = vlaneseq
  %v7089 = vshrl.u32 %v7088, 7
  %v7090 = vsub.s32 %v7087, %v7089
  %v7091 = vrot.slane %v7083, %v7090
  %v7093 = vunpack.c.l.s4 1934713408
  %v7094 = vunpack.c.0.s8 %v7093
  %v7095 = vlaneseq
  %v7096 = vshrl.u32 %v7095, 7
  %v7097 = vsub.s32 %v7094, %v7096
  %v7098 = vrot.slane %v7084, %v7097
  %v7099 = vcombine.low %v7043, %v7075
  %v7100 = vcombine.high %v7043, %v7075
  %v7101 = vcombine.low %v7050, %v7082
  %v7102 = vcombine.high %v7050, %v7082
  %v7103 = vcombine.low %v7059, %v7091
  %v7104 = vcombine.high %v7059, %v7091
  %v7105 = vcombine.low %v7066, %v7098
  %v7106 = vcombine.high %v7066, %v7098
  %7107 = vmatprep.subr.mxu0 0.0
  %7108 = vmatpush1.msra.mxu0 %v6147
  %7109 = vmatprep.subr.mxu0 0.0
  %7110 = vmatpush1.msra.mxu0 %v6283
  %7111 = vmatprep.subr.mxu0 0.0
  %7112 = vmatpush1.msra.mxu0 0.0
  %7113 = vmatprep.subr.mxu0 0.0
  %7114 = vmatpush1.msra.mxu0 0.0
  %7115 = vmatprep.subr.mxu0 0.0
  %7116 = vmatpush1.msra.mxu0 0.0
  %7117 = vmatprep.subr.mxu0 0.0
  %7118 = vmatpush1.msra.mxu0 0.0
  %7119 = vmatprep.subr.mxu0 0.0
  %7120 = vmatpush1.msra.mxu0 0.0
  %7121 = vmatprep.subr.mxu0 0.0
  %7122 = vmatpush1.msra.mxu0 0.0
  %7123 = vmatprep.subr.mxu0 0.0
  %7124 = vmatpush1.msra.mxu0 0.0
  %7125 = vmatprep.subr.mxu0 0.0
  %7126 = vmatpush1.msra.mxu0 0.0
  %7127 = vmatprep.subr.mxu0 0.0
  %7128 = vmatpush1.msra.mxu0 0.0
  %7129 = vmatprep.subr.mxu0 0.0
  %7130 = vmatpush1.msra.mxu0 0.0
  %7131 = vmatprep.subr.mxu0 0.0
  %7132 = vmatpush1.msra.mxu0 0.0
  %7133 = vmatprep.subr.mxu0 0.0
  %7134 = vmatpush1.msra.mxu0 0.0
  %7135 = vmatprep.subr.mxu0 0.0
  %7136 = vmatpush1.msra.mxu0 0.0
  %7137 = vmatprep.subr.mxu0 0.0
  %7138 = vmatpush1.msra.mxu0 0.0
  %7139 = vmatprep.subr.mxu0 0.0
  %7140 = vmatpush1.msra.mxu0 0.0
  %7141 = vmatprep.subr.mxu0 0.0
  %7142 = vmatpush1.msra.mxu0 0.0
  %7143 = vmatprep.subr.mxu0 0.0
  %7144 = vmatpush1.msra.mxu0 0.0
  %7145 = vmatprep.subr.mxu0 0.0
  %7146 = vmatpush1.msra.mxu0 0.0
  %7147 = vmatprep.subr.mxu0 0.0
  %7148 = vmatpush1.msra.mxu0 0.0
  %7149 = vmatprep.subr.mxu0 0.0
  %7150 = vmatpush1.msra.mxu0 0.0
  %7151 = vmatprep.subr.mxu0 0.0
  %7152 = vmatpush1.msra.mxu0 0.0
  %7153 = vmatprep.subr.mxu0 0.0
  %7154 = vmatpush1.msra.mxu0 0.0
  %7155 = vmatprep.subr.mxu0 0.0
  %7156 = vmatpush1.msra.mxu0 0.0
  %7157 = vmatprep.subr.mxu0 0.0
  %7158 = vmatpush1.msra.mxu0 0.0
  %7159 = vmatprep.subr.mxu0 0.0
  %7160 = vmatpush1.msra.mxu0 0.0
  %7161 = vmatprep.subr.mxu0 0.0
  %7162 = vmatpush1.msra.mxu0 0.0
  %7163 = vmatprep.subr.mxu0 0.0
  %7164 = vmatpush1.msra.mxu0 0.0
  %7165 = vmatprep.subr.mxu0 0.0
  %7166 = vmatpush1.msra.mxu0 0.0
  %7167 = vmatprep.subr.mxu0 0.0
  %7168 = vmatpush1.msra.mxu0 0.0
  %7169 = vmatprep.subr.mxu0 0.0
  %7170 = vmatpush1.msra.mxu0 0.0
  %7171 = vmatprep.mubr.f32.mxu0 0.0
  %7172 = vmatmul.mubr.f32.gmra.mrb[0].mxu0 %v2133
  %v7173 = vpop.f32.mrb[0].mxu0
  %v7174 = vadd.f32 0.0, %v7173
  %v7175 = vpop.f32.mrb[0].mxu0
  %7176 = vmatprep.mubr.f32.mxu0 0.0
  %7177 = vmatmul.mubr.f32.gmra.mrb[0].mxu0 %v2136
  %v7178 = vpop.f32.mrb[0].mxu0
  %v7179 = vadd.f32 0.0, %v7178
  %v7180 = vpop.f32.mrb[0].mxu0
  %7181 = vmatprep.mubr.f32.mxu0 0.0
  %7182 = vmatmul.mubr.f32.gmra.mrb[0].mxu0 %v2139
  %v7183 = vpop.f32.mrb[0].mxu0
  %v7184 = vadd.f32 0.0, %v7183
  %v7185 = vpop.f32.mrb[0].mxu0
  %7186 = vmatprep.mubr.f32.mxu0 0.0
  %7187 = vmatmul.mubr.f32.gmra.mrb[0].mxu0 %v2142
  %v7188 = vpop.f32.mrb[0].mxu0
  %v7189 = vadd.f32 0.0, %v7188
  %v7190 = vpop.f32.mrb[0].mxu0
  %7191 = vdwg.mxu0
  %s7192 = scalar_lea.vmem %s3, 1024
  %7193 = vst.msk [vmem:[%s7192] sm:$0xff] %vm718, %v7174
  %7194 = vst.msk [vmem:[%s7192 + $0x8] sm:$0xff] %vm718, %v7179
  %7195 = vst.msk [vmem:[%s7192 + $0x10] sm:$0xff] %vm718, %v7184
  %7196 = vst.msk [vmem:[%s7192 + $0x18] sm:$0xff] %vm718, %v7189
  %7197 = vmatprep.subr.mxu0 0.0
  %7198 = vmatpush1.msra.mxu0 %v6148
  %7199 = vmatprep.subr.mxu0 0.0
  %7200 = vmatpush1.msra.mxu0 %v6284
  %7201 = vmatprep.subr.mxu0 0.0
  %7202 = vmatpush1.msra.mxu0 0.0
  %7203 = vmatprep.subr.mxu0 0.0
  %7204 = vmatpush1.msra.mxu0 0.0
  %7205 = vmatprep.subr.mxu0 0.0
  %7206 = vmatpush1.msra.mxu0 0.0
  %7207 = vmatprep.subr.mxu0 0.0
  %7208 = vmatpush1.msra.mxu0 0.0
  %7209 = vmatprep.subr.mxu0 0.0
  %7210 = vmatpush1.msra.mxu0 0.0
  %7211 = vmatprep.subr.mxu0 0.0
  %7212 = vmatpush1.msra.mxu0 0.0
  %7213 = vmatprep.subr.mxu0 0.0
  %7214 = vmatpush1.msra.mxu0 0.0
  %7215 = vmatprep.subr.mxu0 0.0
  %7216 = vmatpush1.msra.mxu0 0.0
  %7217 = vmatprep.subr.mxu0 0.0
  %7218 = vmatpush1.msra.mxu0 0.0
  %7219 = vmatprep.subr.mxu0 0.0
  %7220 = vmatpush1.msra.mxu0 0.0
  %7221 = vmatprep.subr.mxu0 0.0
  %7222 = vmatpush1.msra.mxu0 0.0
  %7223 = vmatprep.subr.mxu0 0.0
  %7224 = vmatpush1.msra.mxu0 0.0
  %7225 = vmatprep.subr.mxu0 0.0
  %7226 = vmatpush1.msra.mxu0 0.0
  %7227 = vmatprep.subr.mxu0 0.0
  %7228 = vmatpush1.msra.mxu0 0.0
  %7229 = vmatprep.subr.mxu0 0.0
  %7230 = vmatpush1.msra.mxu0 0.0
  %7231 = vmatprep.subr.mxu0 0.0
  %7232 = vmatpush1.msra.mxu0 0.0
  %7233 = vmatprep.subr.mxu0 0.0
  %7234 = vmatpush1.msra.mxu0 0.0
  %7235 = vmatprep.subr.mxu0 0.0
  %7236 = vmatpush1.msra.mxu0 0.0
  %7237 = vmatprep.subr.mxu0 0.0
  %7238 = vmatpush1.msra.mxu0 0.0
  %7239 = vmatprep.subr.mxu0 0.0
  %7240 = vmatpush1.msra.mxu0 0.0
  %7241 = vmatprep.subr.mxu0 0.0
  %7242 = vmatpush1.msra.mxu0 0.0
  %7243 = vmatprep.subr.mxu0 0.0
  %7244 = vmatpush1.msra.mxu0 0.0
  %7245 = vmatprep.subr.mxu0 0.0
  %7246 = vmatpush1.msra.mxu0 0.0
  %7247 = vmatprep.subr.mxu0 0.0
  %7248 = vmatpush1.msra.mxu0 0.0
  %7249 = vmatprep.subr.mxu0 0.0
  %7250 = vmatpush1.msra.mxu0 0.0
  %7251 = vmatprep.subr.mxu0 0.0
  %7252 = vmatpush1.msra.mxu0 0.0
  %7253 = vmatprep.subr.mxu0 0.0
  %7254 = vmatpush1.msra.mxu0 0.0
  %7255 = vmatprep.subr.mxu0 0.0
  %7256 = vmatpush1.msra.mxu0 0.0
  %7257 = vmatprep.subr.mxu0 0.0
  %7258 = vmatpush1.msra.mxu0 0.0
  %7259 = vmatprep.subr.mxu0 0.0
  %7260 = vmatpush1.msra.mxu0 0.0
  %7261 = vmatprep.mubr.f32.mxu0 0.0
  %7262 = vmatmul.mubr.f32.gmra.mrb[0].mxu0 %v2133
  %v7263 = vpop.f32.mrb[0].mxu0
  %v7264 = vadd.f32 0.0, %v7263
  %v7265 = vpop.f32.mrb[0].mxu0
  %7266 = vmatprep.mubr.f32.mxu0 0.0
  %7267 = vmatmul.mubr.f32.gmra.mrb[0].mxu0 %v2136
  %v7268 = vpop.f32.mrb[0].mxu0
  %v7269 = vadd.f32 0.0, %v7268
  %v7270 = vpop.f32.mrb[0].mxu0
  %7271 = vmatprep.mubr.f32.mxu0 0.0
  %7272 = vmatmul.mubr.f32.gmra.mrb[0].mxu0 %v2139
  %v7273 = vpop.f32.mrb[0].mxu0
  %v7274 = vadd.f32 0.0, %v7273
  %v7275 = vpop.f32.mrb[0].mxu0
  %7276 = vmatprep.mubr.f32.mxu0 0.0
  %7277 = vmatmul.mubr.f32.gmra.mrb[0].mxu0 %v2142
  %v7278 = vpop.f32.mrb[0].mxu0
  %v7279 = vadd.f32 0.0, %v7278
  %v7280 = vpop.f32.mrb[0].mxu0
  %7281 = vdwg.mxu0
  %s7282 = scalar_lea.vmem %s3, 1056
  %7283 = vst.msk [vmem:[%s7282] sm:$0xff] %vm718, %v7264
  %7284 = vst.msk [vmem:[%s7282 + $0x8] sm:$0xff] %vm718, %v7269
  %7285 = vst.msk [vmem:[%s7282 + $0x10] sm:$0xff] %vm718, %v7274
  %7286 = vst.msk [vmem:[%s7282 + $0x18] sm:$0xff] %vm718, %v7279
  %7287 = vmatprep.subr.mxu0 0.0
  %7288 = vmatpush1.msra.mxu0 %v6149
  %7289 = vmatprep.subr.mxu0 0.0
  %7290 = vmatpush1.msra.mxu0 %v6285
  %7291 = vmatprep.subr.mxu0 0.0
  %7292 = vmatpush1.msra.mxu0 0.0
  %7293 = vmatprep.subr.mxu0 0.0
  %7294 = vmatpush1.msra.mxu0 0.0
  %7295 = vmatprep.subr.mxu0 0.0
  %7296 = vmatpush1.msra.mxu0 0.0
  %7297 = vmatprep.subr.mxu0 0.0
  %7298 = vmatpush1.msra.mxu0 0.0
  %7299 = vmatprep.subr.mxu0 0.0
  %7300 = vmatpush1.msra.mxu0 0.0
  %7301 = vmatprep.subr.mxu0 0.0
  %7302 = vmatpush1.msra.mxu0 0.0
  %7303 = vmatprep.subr.mxu0 0.0
  %7304 = vmatpush1.msra.mxu0 0.0
  %7305 = vmatprep.subr.mxu0 0.0
  %7306 = vmatpush1.msra.mxu0 0.0
  %7307 = vmatprep.subr.mxu0 0.0
  %7308 = vmatpush1.msra.mxu0 0.0
  %7309 = vmatprep.subr.mxu0 0.0
  %7310 = vmatpush1.msra.mxu0 0.0
  %7311 = vmatprep.subr.mxu0 0.0
  %7312 = vmatpush1.msra.mxu0 0.0
  %7313 = vmatprep.subr.mxu0 0.0
  %7314 = vmatpush1.msra.mxu0 0.0
  %7315 = vmatprep.subr.mxu0 0.0
  %7316 = vmatpush1.msra.mxu0 0.0
  %7317 = vmatprep.subr.mxu0 0.0
  %7318 = vmatpush1.msra.mxu0 0.0
  %7319 = vmatprep.subr.mxu0 0.0
  %7320 = vmatpush1.msra.mxu0 0.0
  %7321 = vmatprep.subr.mxu0 0.0
  %7322 = vmatpush1.msra.mxu0 0.0
  %7323 = vmatprep.subr.mxu0 0.0
  %7324 = vmatpush1.msra.mxu0 0.0
  %7325 = vmatprep.subr.mxu0 0.0
  %7326 = vmatpush1.msra.mxu0 0.0
  %7327 = vmatprep.subr.mxu0 0.0
  %7328 = vmatpush1.msra.mxu0 0.0
  %7329 = vmatprep.subr.mxu0 0.0
  %7330 = vmatpush1.msra.mxu0 0.0
  %7331 = vmatprep.subr.mxu0 0.0
  %7332 = vmatpush1.msra.mxu0 0.0
  %7333 = vmatprep.subr.mxu0 0.0
  %7334 = vmatpush1.msra.mxu0 0.0
  %7335 = vmatprep.subr.mxu0 0.0
  %7336 = vmatpush1.msra.mxu0 0.0
  %7337 = vmatprep.subr.mxu0 0.0
  %7338 = vmatpush1.msra.mxu0 0.0
  %7339 = vmatprep.subr.mxu0 0.0
  %7340 = vmatpush1.msra.mxu0 0.0
  %7341 = vmatprep.subr.mxu0 0.0
  %7342 = vmatpush1.msra.mxu0 0.0
  %7343 = vmatprep.subr.mxu0 0.0
  %7344 = vmatpush1.msra.mxu0 0.0
  %7345 = vmatprep.subr.mxu0 0.0
  %7346 = vmatpush1.msra.mxu0 0.0
  %7347 = vmatprep.subr.mxu0 0.0
  %7348 = vmatpush1.msra.mxu0 0.0
  %7349 = vmatprep.subr.mxu0 0.0
  %7350 = vmatpush1.msra.mxu0 0.0
  %7351 = vmatprep.mubr.f32.mxu0 0.0
  %7352 = vmatmul.mubr.f32.gmra.mrb[0].mxu0 %v2133
  %v7353 = vpop.f32.mrb[0].mxu0
  %v7354 = vadd.f32 0.0, %v7353
  %v7355 = vpop.f32.mrb[0].mxu0
  %7356 = vmatprep.mubr.f32.mxu0 0.0
  %7357 = vmatmul.mubr.f32.gmra.mrb[0].mxu0 %v2136
  %v7358 = vpop.f32.mrb[0].mxu0
  %v7359 = vadd.f32 0.0, %v7358
  %v7360 = vpop.f32.mrb[0].mxu0
  %7361 = vmatprep.mubr.f32.mxu0 0.0
  %7362 = vmatmul.mubr.f32.gmra.mrb[0].mxu0 %v2139
  %v7363 = vpop.f32.mrb[0].mxu0
  %v7364 = vadd.f32 0.0, %v7363
  %v7365 = vpop.f32.mrb[0].mxu0
  %7366 = vmatprep.mubr.f32.mxu0 0.0
  %7367 = vmatmul.mubr.f32.gmra.mrb[0].mxu0 %v2142
  %v7368 = vpop.f32.mrb[0].mxu0
  %v7369 = vadd.f32 0.0, %v7368
  %v7370 = vpop.f32.mrb[0].mxu0
  %7371 = vdwg.mxu0
  %s7372 = scalar_lea.vmem %s3, 1088
  %7373 = vst.msk [vmem:[%s7372] sm:$0xff] %vm718, %v7354
  %7374 = vst.msk [vmem:[%s7372 + $0x8] sm:$0xff] %vm718, %v7359
  %7375 = vst.msk [vmem:[%s7372 + $0x10] sm:$0xff] %vm718, %v7364
  %7376 = vst.msk [vmem:[%s7372 + $0x18] sm:$0xff] %vm718, %v7369
  %7377 = vmatprep.subr.mxu0 0.0
  %7378 = vmatpush1.msra.mxu0 %v6150
  %7379 = vmatprep.subr.mxu0 0.0
  %7380 = vmatpush1.msra.mxu0 %v6286
  %7381 = vmatprep.subr.mxu0 0.0
  %7382 = vmatpush1.msra.mxu0 0.0
  %7383 = vmatprep.subr.mxu0 0.0
  %7384 = vmatpush1.msra.mxu0 0.0
  %7385 = vmatprep.subr.mxu0 0.0
  %7386 = vmatpush1.msra.mxu0 0.0
  %7387 = vmatprep.subr.mxu0 0.0
  %7388 = vmatpush1.msra.mxu0 0.0
  %7389 = vmatprep.subr.mxu0 0.0
  %7390 = vmatpush1.msra.mxu0 0.0
  %7391 = vmatprep.subr.mxu0 0.0
  %7392 = vmatpush1.msra.mxu0 0.0
  %7393 = vmatprep.subr.mxu0 0.0
  %7394 = vmatpush1.msra.mxu0 0.0
  %7395 = vmatprep.subr.mxu0 0.0
  %7396 = vmatpush1.msra.mxu0 0.0
  %7397 = vmatprep.subr.mxu0 0.0
  %7398 = vmatpush1.msra.mxu0 0.0
  %7399 = vmatprep.subr.mxu0 0.0
  %7400 = vmatpush1.msra.mxu0 0.0
  %7401 = vmatprep.subr.mxu0 0.0
  %7402 = vmatpush1.msra.mxu0 0.0
  %7403 = vmatprep.subr.mxu0 0.0
  %7404 = vmatpush1.msra.mxu0 0.0
  %7405 = vmatprep.subr.mxu0 0.0
  %7406 = vmatpush1.msra.mxu0 0.0
  %7407 = vmatprep.subr.mxu0 0.0
  %7408 = vmatpush1.msra.mxu0 0.0
  %7409 = vmatprep.subr.mxu0 0.0
  %7410 = vmatpush1.msra.mxu0 0.0
  %7411 = vmatprep.subr.mxu0 0.0
  %7412 = vmatpush1.msra.mxu0 0.0
  %7413 = vmatprep.subr.mxu0 0.0
  %7414 = vmatpush1.msra.mxu0 0.0
  %7415 = vmatprep.subr.mxu0 0.0
  %7416 = vmatpush1.msra.mxu0 0.0
  %7417 = vmatprep.subr.mxu0 0.0
  %7418 = vmatpush1.msra.mxu0 0.0
  %7419 = vmatprep.subr.mxu0 0.0
  %7420 = vmatpush1.msra.mxu0 0.0
  %7421 = vmatprep.subr.mxu0 0.0
  %7422 = vmatpush1.msra.mxu0 0.0
  %7423 = vmatprep.subr.mxu0 0.0
  %7424 = vmatpush1.msra.mxu0 0.0
  %7425 = vmatprep.subr.mxu0 0.0
  %7426 = vmatpush1.msra.mxu0 0.0
  %7427 = vmatprep.subr.mxu0 0.0
  %7428 = vmatpush1.msra.mxu0 0.0
  %7429 = vmatprep.subr.mxu0 0.0
  %7430 = vmatpush1.msra.mxu0 0.0
  %7431 = vmatprep.subr.mxu0 0.0
  %7432 = vmatpush1.msra.mxu0 0.0
  %7433 = vmatprep.subr.mxu0 0.0
  %7434 = vmatpush1.msra.mxu0 0.0
  %7435 = vmatprep.subr.mxu0 0.0
  %7436 = vmatpush1.msra.mxu0 0.0
  %7437 = vmatprep.subr.mxu0 0.0
  %7438 = vmatpush1.msra.mxu0 0.0
  %7439 = vmatprep.subr.mxu0 0.0
  %7440 = vmatpush1.msra.mxu0 0.0
  %7441 = vmatprep.mubr.f32.mxu0 0.0
  %7442 = vmatmul.mubr.f32.gmra.mrb[0].mxu0 %v2133
  %v7443 = vpop.f32.mrb[0].mxu0
  %v7444 = vadd.f32 0.0, %v7443
  %v7445 = vpop.f32.mrb[0].mxu0
  %7446 = vmatprep.mubr.f32.mxu0 0.0
  %7447 = vmatmul.mubr.f32.gmra.mrb[0].mxu0 %v2136
  %v7448 = vpop.f32.mrb[0].mxu0
  %v7449 = vadd.f32 0.0, %v7448
  %v7450 = vpop.f32.mrb[0].mxu0
  %7451 = vmatprep.mubr.f32.mxu0 0.0
  %7452 = vmatmul.mubr.f32.gmra.mrb[0].mxu0 %v2139
  %v7453 = vpop.f32.mrb[0].mxu0
  %v7454 = vadd.f32 0.0, %v7453
  %v7455 = vpop.f32.mrb[0].mxu0
  %7456 = vmatprep.mubr.f32.mxu0 0.0
  %7457 = vmatmul.mubr.f32.gmra.mrb[0].mxu0 %v2142
  %v7458 = vpop.f32.mrb[0].mxu0
  %v7459 = vadd.f32 0.0, %v7458
  %v7460 = vpop.f32.mrb[0].mxu0
  %7461 = vdwg.mxu0
  %s7462 = scalar_lea.vmem %s3, 1120
  %7463 = vst.msk [vmem:[%s7462] sm:$0xff] %vm718, %v7444
  %7464 = vst.msk [vmem:[%s7462 + $0x8] sm:$0xff] %vm718, %v7449
  %7465 = vst.msk [vmem:[%s7462 + $0x10] sm:$0xff] %vm718, %v7454
  %7466 = vst.msk [vmem:[%s7462 + $0x18] sm:$0xff] %vm718, %v7459
  %7467 = vmatprep.subr.mxu0 0.0
  %7468 = vmatpush1.msra.mxu0 %v6151
  %7469 = vmatprep.subr.mxu0 0.0
  %7470 = vmatpush1.msra.mxu0 %v6287
  %7471 = vmatprep.subr.mxu0 0.0
  %7472 = vmatpush1.msra.mxu0 0.0
  %7473 = vmatprep.subr.mxu0 0.0
  %7474 = vmatpush1.msra.mxu0 0.0
  %7475 = vmatprep.subr.mxu0 0.0
  %7476 = vmatpush1.msra.mxu0 0.0
  %7477 = vmatprep.subr.mxu0 0.0
  %7478 = vmatpush1.msra.mxu0 0.0
  %7479 = vmatprep.subr.mxu0 0.0
  %7480 = vmatpush1.msra.mxu0 0.0
  %7481 = vmatprep.subr.mxu0 0.0
  %7482 = vmatpush1.msra.mxu0 0.0
  %7483 = vmatprep.subr.mxu0 0.0
  %7484 = vmatpush1.msra.mxu0 0.0
  %7485 = vmatprep.subr.mxu0 0.0
  %7486 = vmatpush1.msra.mxu0 0.0
  %7487 = vmatprep.subr.mxu0 0.0
  %7488 = vmatpush1.msra.mxu0 0.0
  %7489 = vmatprep.subr.mxu0 0.0
  %7490 = vmatpush1.msra.mxu0 0.0
  %7491 = vmatprep.subr.mxu0 0.0
  %7492 = vmatpush1.msra.mxu0 0.0
  %7493 = vmatprep.subr.mxu0 0.0
  %7494 = vmatpush1.msra.mxu0 0.0
  %7495 = vmatprep.subr.mxu0 0.0
  %7496 = vmatpush1.msra.mxu0 0.0
  %7497 = vmatprep.subr.mxu0 0.0
  %7498 = vmatpush1.msra.mxu0 0.0
  %7499 = vmatprep.subr.mxu0 0.0
  %7500 = vmatpush1.msra.mxu0 0.0
  %7501 = vmatprep.subr.mxu0 0.0
  %7502 = vmatpush1.msra.mxu0 0.0
  %7503 = vmatprep.subr.mxu0 0.0
  %7504 = vmatpush1.msra.mxu0 0.0
  %7505 = vmatprep.subr.mxu0 0.0
  %7506 = vmatpush1.msra.mxu0 0.0
  %7507 = vmatprep.subr.mxu0 0.0
  %7508 = vmatpush1.msra.mxu0 0.0
  %7509 = vmatprep.subr.mxu0 0.0
  %7510 = vmatpush1.msra.mxu0 0.0
  %7511 = vmatprep.subr.mxu0 0.0
  %7512 = vmatpush1.msra.mxu0 0.0
  %7513 = vmatprep.subr.mxu0 0.0
  %7514 = vmatpush1.msra.mxu0 0.0
  %7515 = vmatprep.subr.mxu0 0.0
  %7516 = vmatpush1.msra.mxu0 0.0
  %7517 = vmatprep.subr.mxu0 0.0
  %7518 = vmatpush1.msra.mxu0 0.0
  %7519 = vmatprep.subr.mxu0 0.0
  %7520 = vmatpush1.msra.mxu0 0.0
  %7521 = vmatprep.subr.mxu0 0.0
  %7522 = vmatpush1.msra.mxu0 0.0
  %7523 = vmatprep.subr.mxu0 0.0
  %7524 = vmatpush1.msra.mxu0 0.0
  %7525 = vmatprep.subr.mxu0 0.0
  %7526 = vmatpush1.msra.mxu0 0.0
  %7527 = vmatprep.subr.mxu0 0.0
  %7528 = vmatpush1.msra.mxu0 0.0
  %7529 = vmatprep.subr.mxu0 0.0
  %7530 = vmatpush1.msra.mxu0 0.0
  %7531 = vmatprep.mubr.f32.mxu0 0.0
  %7532 = vmatmul.mubr.f32.gmra.mrb[0].mxu0 %v2133
  %v7533 = vpop.f32.mrb[0].mxu0
  %v7534 = vadd.f32 0.0, %v7533
  %v7535 = vpop.f32.mrb[0].mxu0
  %7536 = vmatprep.mubr.f32.mxu0 0.0
  %7537 = vmatmul.mubr.f32.gmra.mrb[0].mxu0 %v2136
  %v7538 = vpop.f32.mrb[0].mxu0
  %v7539 = vadd.f32 0.0, %v7538
  %v7540 = vpop.f32.mrb[0].mxu0
  %7541 = vmatprep.mubr.f32.mxu0 0.0
  %7542 = vmatmul.mubr.f32.gmra.mrb[0].mxu0 %v2139
  %v7543 = vpop.f32.mrb[0].mxu0
  %v7544 = vadd.f32 0.0, %v7543
  %v7545 = vpop.f32.mrb[0].mxu0
  %7546 = vmatprep.mubr.f32.mxu0 0.0
  %7547 = vmatmul.mubr.f32.gmra.mrb[0].mxu0 %v2142
  %v7548 = vpop.f32.mrb[0].mxu0
  %v7549 = vadd.f32 0.0, %v7548
  %v7550 = vpop.f32.mrb[0].mxu0
  %7551 = vdwg.mxu0
  %s7552 = scalar_lea.vmem %s3, 1152
  %7553 = vst.msk [vmem:[%s7552] sm:$0xff] %vm718, %v7534
  %7554 = vst.msk [vmem:[%s7552 + $0x8] sm:$0xff] %vm718, %v7539
  %7555 = vst.msk [vmem:[%s7552 + $0x10] sm:$0xff] %vm718, %v7544
  %7556 = vst.msk [vmem:[%s7552 + $0x18] sm:$0xff] %vm718, %v7549
  %7557 = vmatprep.subr.mxu0 0.0
  %7558 = vmatpush1.msra.mxu0 %v6152
  %7559 = vmatprep.subr.mxu0 0.0
  %7560 = vmatpush1.msra.mxu0 %v6288
  %7561 = vmatprep.subr.mxu0 0.0
  %7562 = vmatpush1.msra.mxu0 0.0
  %7563 = vmatprep.subr.mxu0 0.0
  %7564 = vmatpush1.msra.mxu0 0.0
  %7565 = vmatprep.subr.mxu0 0.0
  %7566 = vmatpush1.msra.mxu0 0.0
  %7567 = vmatprep.subr.mxu0 0.0
  %7568 = vmatpush1.msra.mxu0 0.0
  %7569 = vmatprep.subr.mxu0 0.0
  %7570 = vmatpush1.msra.mxu0 0.0
  %7571 = vmatprep.subr.mxu0 0.0
  %7572 = vmatpush1.msra.mxu0 0.0
  %7573 = vmatprep.subr.mxu0 0.0
  %7574 = vmatpush1.msra.mxu0 0.0
  %7575 = vmatprep.subr.mxu0 0.0
  %7576 = vmatpush1.msra.mxu0 0.0
  %7577 = vmatprep.subr.mxu0 0.0
  %7578 = vmatpush1.msra.mxu0 0.0
  %7579 = vmatprep.subr.mxu0 0.0
  %7580 = vmatpush1.msra.mxu0 0.0
  %7581 = vmatprep.subr.mxu0 0.0
  %7582 = vmatpush1.msra.mxu0 0.0
  %7583 = vmatprep.subr.mxu0 0.0
  %7584 = vmatpush1.msra.mxu0 0.0
  %7585 = vmatprep.subr.mxu0 0.0
  %7586 = vmatpush1.msra.mxu0 0.0
  %7587 = vmatprep.subr.mxu0 0.0
  %7588 = vmatpush1.msra.mxu0 0.0
  %7589 = vmatprep.subr.mxu0 0.0
  %7590 = vmatpush1.msra.mxu0 0.0
  %7591 = vmatprep.subr.mxu0 0.0
  %7592 = vmatpush1.msra.mxu0 0.0
  %7593 = vmatprep.subr.mxu0 0.0
  %7594 = vmatpush1.msra.mxu0 0.0
  %7595 = vmatprep.subr.mxu0 0.0
  %7596 = vmatpush1.msra.mxu0 0.0
  %7597 = vmatprep.subr.mxu0 0.0
  %7598 = vmatpush1.msra.mxu0 0.0
  %7599 = vmatprep.subr.mxu0 0.0
  %7600 = vmatpush1.msra.mxu0 0.0
  %7601 = vmatprep.subr.mxu0 0.0
  %7602 = vmatpush1.msra.mxu0 0.0
  %7603 = vmatprep.subr.mxu0 0.0
  %7604 = vmatpush1.msra.mxu0 0.0
  %7605 = vmatprep.subr.mxu0 0.0
  %7606 = vmatpush1.msra.mxu0 0.0
  %7607 = vmatprep.subr.mxu0 0.0
  %7608 = vmatpush1.msra.mxu0 0.0
  %7609 = vmatprep.subr.mxu0 0.0
  %7610 = vmatpush1.msra.mxu0 0.0
  %7611 = vmatprep.subr.mxu0 0.0
  %7612 = vmatpush1.msra.mxu0 0.0
  %7613 = vmatprep.subr.mxu0 0.0
  %7614 = vmatpush1.msra.mxu0 0.0
  %7615 = vmatprep.subr.mxu0 0.0
  %7616 = vmatpush1.msra.mxu0 0.0
  %7617 = vmatprep.subr.mxu0 0.0
  %7618 = vmatpush1.msra.mxu0 0.0
  %7619 = vmatprep.subr.mxu0 0.0
  %7620 = vmatpush1.msra.mxu0 0.0
  %7621 = vmatprep.mubr.f32.mxu0 0.0
  %7622 = vmatmul.mubr.f32.gmra.mrb[0].mxu0 %v2133
  %v7623 = vpop.f32.mrb[0].mxu0
  %v7624 = vadd.f32 0.0, %v7623
  %v7625 = vpop.f32.mrb[0].mxu0
  %7626 = vmatprep.mubr.f32.mxu0 0.0
  %7627 = vmatmul.mubr.f32.gmra.mrb[0].mxu0 %v2136
  %v7628 = vpop.f32.mrb[0].mxu0
  %v7629 = vadd.f32 0.0, %v7628
  %v7630 = vpop.f32.mrb[0].mxu0
  %7631 = vmatprep.mubr.f32.mxu0 0.0
  %7632 = vmatmul.mubr.f32.gmra.mrb[0].mxu0 %v2139
  %v7633 = vpop.f32.mrb[0].mxu0
  %v7634 = vadd.f32 0.0, %v7633
  %v7635 = vpop.f32.mrb[0].mxu0
  %7636 = vmatprep.mubr.f32.mxu0 0.0
  %7637 = vmatmul.mubr.f32.gmra.mrb[0].mxu0 %v2142
  %v7638 = vpop.f32.mrb[0].mxu0
  %v7639 = vadd.f32 0.0, %v7638
  %v7640 = vpop.f32.mrb[0].mxu0
  %7641 = vdwg.mxu0
  %s7642 = scalar_lea.vmem %s3, 1184
  %7643 = vst.msk [vmem:[%s7642] sm:$0xff] %vm718, %v7624
  %7644 = vst.msk [vmem:[%s7642 + $0x8] sm:$0xff] %vm718, %v7629
  %7645 = vst.msk [vmem:[%s7642 + $0x10] sm:$0xff] %vm718, %v7634
  %7646 = vst.msk [vmem:[%s7642 + $0x18] sm:$0xff] %vm718, %v7639
  %7647 = vmatprep.subr.mxu0 0.0
  %7648 = vmatpush1.msra.mxu0 %v6153
  %7649 = vmatprep.subr.mxu0 0.0
  %7650 = vmatpush1.msra.mxu0 %v6289
  %7651 = vmatprep.subr.mxu0 0.0
  %7652 = vmatpush1.msra.mxu0 0.0
  %7653 = vmatprep.subr.mxu0 0.0
  %7654 = vmatpush1.msra.mxu0 0.0
  %7655 = vmatprep.subr.mxu0 0.0
  %7656 = vmatpush1.msra.mxu0 0.0
  %7657 = vmatprep.subr.mxu0 0.0
  %7658 = vmatpush1.msra.mxu0 0.0
  %7659 = vmatprep.subr.mxu0 0.0
  %7660 = vmatpush1.msra.mxu0 0.0
  %7661 = vmatprep.subr.mxu0 0.0
  %7662 = vmatpush1.msra.mxu0 0.0
  %7663 = vmatprep.subr.mxu0 0.0
  %7664 = vmatpush1.msra.mxu0 0.0
  %7665 = vmatprep.subr.mxu0 0.0
  %7666 = vmatpush1.msra.mxu0 0.0
  %7667 = vmatprep.subr.mxu0 0.0
  %7668 = vmatpush1.msra.mxu0 0.0
  %7669 = vmatprep.subr.mxu0 0.0
  %7670 = vmatpush1.msra.mxu0 0.0
  %7671 = vmatprep.subr.mxu0 0.0
  %7672 = vmatpush1.msra.mxu0 0.0
  %7673 = vmatprep.subr.mxu0 0.0
  %7674 = vmatpush1.msra.mxu0 0.0
  %7675 = vmatprep.subr.mxu0 0.0
  %7676 = vmatpush1.msra.mxu0 0.0
  %7677 = vmatprep.subr.mxu0 0.0
  %7678 = vmatpush1.msra.mxu0 0.0
  %7679 = vmatprep.subr.mxu0 0.0
  %7680 = vmatpush1.msra.mxu0 0.0
  %7681 = vmatprep.subr.mxu0 0.0
  %7682 = vmatpush1.msra.mxu0 0.0
  %7683 = vmatprep.subr.mxu0 0.0
  %7684 = vmatpush1.msra.mxu0 0.0
  %7685 = vmatprep.subr.mxu0 0.0
  %7686 = vmatpush1.msra.mxu0 0.0
  %7687 = vmatprep.subr.mxu0 0.0
  %7688 = vmatpush1.msra.mxu0 0.0
  %7689 = vmatprep.subr.mxu0 0.0
  %7690 = vmatpush1.msra.mxu0 0.0
  %7691 = vmatprep.subr.mxu0 0.0
  %7692 = vmatpush1.msra.mxu0 0.0
  %7693 = vmatprep.subr.mxu0 0.0
  %7694 = vmatpush1.msra.mxu0 0.0
  %7695 = vmatprep.subr.mxu0 0.0
  %7696 = vmatpush1.msra.mxu0 0.0
  %7697 = vmatprep.subr.mxu0 0.0
  %7698 = vmatpush1.msra.mxu0 0.0
  %7699 = vmatprep.subr.mxu0 0.0
  %7700 = vmatpush1.msra.mxu0 0.0
  %7701 = vmatprep.subr.mxu0 0.0
  %7702 = vmatpush1.msra.mxu0 0.0
  %7703 = vmatprep.subr.mxu0 0.0
  %7704 = vmatpush1.msra.mxu0 0.0
  %7705 = vmatprep.subr.mxu0 0.0
  %7706 = vmatpush1.msra.mxu0 0.0
  %7707 = vmatprep.subr.mxu0 0.0
  %7708 = vmatpush1.msra.mxu0 0.0
  %7709 = vmatprep.subr.mxu0 0.0
  %7710 = vmatpush1.msra.mxu0 0.0
  %7711 = vmatprep.mubr.f32.mxu0 0.0
  %7712 = vmatmul.mubr.f32.gmra.mrb[0].mxu0 %v2133
  %v7713 = vpop.f32.mrb[0].mxu0
  %v7714 = vadd.f32 0.0, %v7713
  %v7715 = vpop.f32.mrb[0].mxu0
  %7716 = vmatprep.mubr.f32.mxu0 0.0
  %7717 = vmatmul.mubr.f32.gmra.mrb[0].mxu0 %v2136
  %v7718 = vpop.f32.mrb[0].mxu0
  %v7719 = vadd.f32 0.0, %v7718
  %v7720 = vpop.f32.mrb[0].mxu0
  %7721 = vmatprep.mubr.f32.mxu0 0.0
  %7722 = vmatmul.mubr.f32.gmra.mrb[0].mxu0 %v2139
  %v7723 = vpop.f32.mrb[0].mxu0
  %v7724 = vadd.f32 0.0, %v7723
  %v7725 = vpop.f32.mrb[0].mxu0
  %7726 = vmatprep.mubr.f32.mxu0 0.0
  %7727 = vmatmul.mubr.f32.gmra.mrb[0].mxu0 %v2142
  %v7728 = vpop.f32.mrb[0].mxu0
  %v7729 = vadd.f32 0.0, %v7728
  %v7730 = vpop.f32.mrb[0].mxu0
  %7731 = vdwg.mxu0
  %s7732 = scalar_lea.vmem %s3, 1216
  %7733 = vst.msk [vmem:[%s7732] sm:$0xff] %vm718, %v7714
  %7734 = vst.msk [vmem:[%s7732 + $0x8] sm:$0xff] %vm718, %v7719
  %7735 = vst.msk [vmem:[%s7732 + $0x10] sm:$0xff] %vm718, %v7724
  %7736 = vst.msk [vmem:[%s7732 + $0x18] sm:$0xff] %vm718, %v7729
  %7737 = vmatprep.subr.mxu0 0.0
  %7738 = vmatpush1.msra.mxu0 %v6154
  %7739 = vmatprep.subr.mxu0 0.0
  %7740 = vmatpush1.msra.mxu0 %v6290
  %7741 = vmatprep.subr.mxu0 0.0
  %7742 = vmatpush1.msra.mxu0 0.0
  %7743 = vmatprep.subr.mxu0 0.0
  %7744 = vmatpush1.msra.mxu0 0.0
  %7745 = vmatprep.subr.mxu0 0.0
  %7746 = vmatpush1.msra.mxu0 0.0
  %7747 = vmatprep.subr.mxu0 0.0
  %7748 = vmatpush1.msra.mxu0 0.0
  %7749 = vmatprep.subr.mxu0 0.0
  %7750 = vmatpush1.msra.mxu0 0.0
  %7751 = vmatprep.subr.mxu0 0.0
  %7752 = vmatpush1.msra.mxu0 0.0
  %7753 = vmatprep.subr.mxu0 0.0
  %7754 = vmatpush1.msra.mxu0 0.0
  %7755 = vmatprep.subr.mxu0 0.0
  %7756 = vmatpush1.msra.mxu0 0.0
  %7757 = vmatprep.subr.mxu0 0.0
  %7758 = vmatpush1.msra.mxu0 0.0
  %7759 = vmatprep.subr.mxu0 0.0
  %7760 = vmatpush1.msra.mxu0 0.0
  %7761 = vmatprep.subr.mxu0 0.0
  %7762 = vmatpush1.msra.mxu0 0.0
  %7763 = vmatprep.subr.mxu0 0.0
  %7764 = vmatpush1.msra.mxu0 0.0
  %7765 = vmatprep.subr.mxu0 0.0
  %7766 = vmatpush1.msra.mxu0 0.0
  %7767 = vmatprep.subr.mxu0 0.0
  %7768 = vmatpush1.msra.mxu0 0.0
  %7769 = vmatprep.subr.mxu0 0.0
  %7770 = vmatpush1.msra.mxu0 0.0
  %7771 = vmatprep.subr.mxu0 0.0
  %7772 = vmatpush1.msra.mxu0 0.0
  %7773 = vmatprep.subr.mxu0 0.0
  %7774 = vmatpush1.msra.mxu0 0.0
  %7775 = vmatprep.subr.mxu0 0.0
  %7776 = vmatpush1.msra.mxu0 0.0
  %7777 = vmatprep.subr.mxu0 0.0
  %7778 = vmatpush1.msra.mxu0 0.0
  %7779 = vmatprep.subr.mxu0 0.0
  %7780 = vmatpush1.msra.mxu0 0.0
  %7781 = vmatprep.subr.mxu0 0.0
  %7782 = vmatpush1.msra.mxu0 0.0
  %7783 = vmatprep.subr.mxu0 0.0
  %7784 = vmatpush1.msra.mxu0 0.0
  %7785 = vmatprep.subr.mxu0 0.0
  %7786 = vmatpush1.msra.mxu0 0.0
  %7787 = vmatprep.subr.mxu0 0.0
  %7788 = vmatpush1.msra.mxu0 0.0
  %7789 = vmatprep.subr.mxu0 0.0
  %7790 = vmatpush1.msra.mxu0 0.0
  %7791 = vmatprep.subr.mxu0 0.0
  %7792 = vmatpush1.msra.mxu0 0.0
  %7793 = vmatprep.subr.mxu0 0.0
  %7794 = vmatpush1.msra.mxu0 0.0
  %7795 = vmatprep.subr.mxu0 0.0
  %7796 = vmatpush1.msra.mxu0 0.0
  %7797 = vmatprep.subr.mxu0 0.0
  %7798 = vmatpush1.msra.mxu0 0.0
  %7799 = vmatprep.subr.mxu0 0.0
  %7800 = vmatpush1.msra.mxu0 0.0
  %7801 = vmatprep.mubr.f32.mxu0 0.0
  %7802 = vmatmul.mubr.f32.gmra.mrb[0].mxu0 %v2133
  %v7803 = vpop.f32.mrb[0].mxu0
  %v7804 = vadd.f32 0.0, %v7803
  %v7805 = vpop.f32.mrb[0].mxu0
  %7806 = vmatprep.mubr.f32.mxu0 0.0
  %7807 = vmatmul.mubr.f32.gmra.mrb[0].mxu0 %v2136
  %v7808 = vpop.f32.mrb[0].mxu0
  %v7809 = vadd.f32 0.0, %v7808
  %v7810 = vpop.f32.mrb[0].mxu0
  %7811 = vmatprep.mubr.f32.mxu0 0.0
  %7812 = vmatmul.mubr.f32.gmra.mrb[0].mxu0 %v2139
  %v7813 = vpop.f32.mrb[0].mxu0
  %v7814 = vadd.f32 0.0, %v7813
  %v7815 = vpop.f32.mrb[0].mxu0
  %7816 = vmatprep.mubr.f32.mxu0 0.0
  %7817 = vmatmul.mubr.f32.gmra.mrb[0].mxu0 %v2142
  %v7818 = vpop.f32.mrb[0].mxu0
  %v7819 = vadd.f32 0.0, %v7818
  %v7820 = vpop.f32.mrb[0].mxu0
  %7821 = vdwg.mxu0
  %s7822 = scalar_lea.vmem %s3, 1248
  %7823 = vst.msk [vmem:[%s7822] sm:$0xff] %vm718, %v7804
  %7824 = vst.msk [vmem:[%s7822 + $0x8] sm:$0xff] %vm718, %v7809
  %7825 = vst.msk [vmem:[%s7822 + $0x10] sm:$0xff] %vm718, %v7814
  %7826 = vst.msk [vmem:[%s7822 + $0x18] sm:$0xff] %vm718, %v7819
  %7827 = vmatprep.subr.mxu0 0.0
  %7828 = vmatpush1.msra.mxu0 %v6419
  %7829 = vmatprep.subr.mxu0 0.0
  %7830 = vmatpush1.msra.mxu0 %v6555
  %7831 = vmatprep.subr.mxu0 0.0
  %7832 = vmatpush1.msra.mxu0 0.0
  %7833 = vmatprep.subr.mxu0 0.0
  %7834 = vmatpush1.msra.mxu0 0.0
  %7835 = vmatprep.subr.mxu0 0.0
  %7836 = vmatpush1.msra.mxu0 0.0
  %7837 = vmatprep.subr.mxu0 0.0
  %7838 = vmatpush1.msra.mxu0 0.0
  %7839 = vmatprep.subr.mxu0 0.0
  %7840 = vmatpush1.msra.mxu0 0.0
  %7841 = vmatprep.subr.mxu0 0.0
  %7842 = vmatpush1.msra.mxu0 0.0
  %7843 = vmatprep.subr.mxu0 0.0
  %7844 = vmatpush1.msra.mxu0 0.0
  %7845 = vmatprep.subr.mxu0 0.0
  %7846 = vmatpush1.msra.mxu0 0.0
  %7847 = vmatprep.subr.mxu0 0.0
  %7848 = vmatpush1.msra.mxu0 0.0
  %7849 = vmatprep.subr.mxu0 0.0
  %7850 = vmatpush1.msra.mxu0 0.0
  %7851 = vmatprep.subr.mxu0 0.0
  %7852 = vmatpush1.msra.mxu0 0.0
  %7853 = vmatprep.subr.mxu0 0.0
  %7854 = vmatpush1.msra.mxu0 0.0
  %7855 = vmatprep.subr.mxu0 0.0
  %7856 = vmatpush1.msra.mxu0 0.0
  %7857 = vmatprep.subr.mxu0 0.0
  %7858 = vmatpush1.msra.mxu0 0.0
  %7859 = vmatprep.subr.mxu0 0.0
  %7860 = vmatpush1.msra.mxu0 0.0
  %7861 = vmatprep.subr.mxu0 0.0
  %7862 = vmatpush1.msra.mxu0 0.0
  %7863 = vmatprep.subr.mxu0 0.0
  %7864 = vmatpush1.msra.mxu0 0.0
  %7865 = vmatprep.subr.mxu0 0.0
  %7866 = vmatpush1.msra.mxu0 0.0
  %7867 = vmatprep.subr.mxu0 0.0
  %7868 = vmatpush1.msra.mxu0 0.0
  %7869 = vmatprep.subr.mxu0 0.0
  %7870 = vmatpush1.msra.mxu0 0.0
  %7871 = vmatprep.subr.mxu0 0.0
  %7872 = vmatpush1.msra.mxu0 0.0
  %7873 = vmatprep.subr.mxu0 0.0
  %7874 = vmatpush1.msra.mxu0 0.0
  %7875 = vmatprep.subr.mxu0 0.0
  %7876 = vmatpush1.msra.mxu0 0.0
  %7877 = vmatprep.subr.mxu0 0.0
  %7878 = vmatpush1.msra.mxu0 0.0
  %7879 = vmatprep.subr.mxu0 0.0
  %7880 = vmatpush1.msra.mxu0 0.0
  %7881 = vmatprep.subr.mxu0 0.0
  %7882 = vmatpush1.msra.mxu0 0.0
  %7883 = vmatprep.subr.mxu0 0.0
  %7884 = vmatpush1.msra.mxu0 0.0
  %7885 = vmatprep.subr.mxu0 0.0
  %7886 = vmatpush1.msra.mxu0 0.0
  %7887 = vmatprep.subr.mxu0 0.0
  %7888 = vmatpush1.msra.mxu0 0.0
  %7889 = vmatprep.subr.mxu0 0.0
  %7890 = vmatpush1.msra.mxu0 0.0
  %7891 = vmatprep.mubr.f32.mxu0 0.0
  %7892 = vmatmul.mubr.f32.gmra.mrb[0].mxu0 %v2133
  %v7893 = vpop.f32.mrb[0].mxu0
  %v7894 = vadd.f32 0.0, %v7893
  %v7895 = vpop.f32.mrb[0].mxu0
  %7896 = vmatprep.mubr.f32.mxu0 0.0
  %7897 = vmatmul.mubr.f32.gmra.mrb[0].mxu0 %v2136
  %v7898 = vpop.f32.mrb[0].mxu0
  %v7899 = vadd.f32 0.0, %v7898
  %v7900 = vpop.f32.mrb[0].mxu0
  %7901 = vmatprep.mubr.f32.mxu0 0.0
  %7902 = vmatmul.mubr.f32.gmra.mrb[0].mxu0 %v2139
  %v7903 = vpop.f32.mrb[0].mxu0
  %v7904 = vadd.f32 0.0, %v7903
  %v7905 = vpop.f32.mrb[0].mxu0
  %7906 = vmatprep.mubr.f32.mxu0 0.0
  %7907 = vmatmul.mubr.f32.gmra.mrb[0].mxu0 %v2142
  %v7908 = vpop.f32.mrb[0].mxu0
  %v7909 = vadd.f32 0.0, %v7908
  %v7910 = vpop.f32.mrb[0].mxu0
  %7911 = vdwg.mxu0
  %s7912 = scalar_lea.vmem %s3, 1280
  %7913 = vst.msk [vmem:[%s7912] sm:$0xff] %vm718, %v7894
  %7914 = vst.msk [vmem:[%s7912 + $0x8] sm:$0xff] %vm718, %v7899
  %7915 = vst.msk [vmem:[%s7912 + $0x10] sm:$0xff] %vm718, %v7904
  %7916 = vst.msk [vmem:[%s7912 + $0x18] sm:$0xff] %vm718, %v7909
  %7917 = vmatprep.subr.mxu0 0.0
  %7918 = vmatpush1.msra.mxu0 %v6420
  %7919 = vmatprep.subr.mxu0 0.0
  %7920 = vmatpush1.msra.mxu0 %v6556
  %7921 = vmatprep.subr.mxu0 0.0
  %7922 = vmatpush1.msra.mxu0 0.0
  %7923 = vmatprep.subr.mxu0 0.0
  %7924 = vmatpush1.msra.mxu0 0.0
  %7925 = vmatprep.subr.mxu0 0.0
  %7926 = vmatpush1.msra.mxu0 0.0
  %7927 = vmatprep.subr.mxu0 0.0
  %7928 = vmatpush1.msra.mxu0 0.0
  %7929 = vmatprep.subr.mxu0 0.0
  %7930 = vmatpush1.msra.mxu0 0.0
  %7931 = vmatprep.subr.mxu0 0.0
  %7932 = vmatpush1.msra.mxu0 0.0
  %7933 = vmatprep.subr.mxu0 0.0
  %7934 = vmatpush1.msra.mxu0 0.0
  %7935 = vmatprep.subr.mxu0 0.0
  %7936 = vmatpush1.msra.mxu0 0.0
  %7937 = vmatprep.subr.mxu0 0.0
  %7938 = vmatpush1.msra.mxu0 0.0
  %7939 = vmatprep.subr.mxu0 0.0
  %7940 = vmatpush1.msra.mxu0 0.0
  %7941 = vmatprep.subr.mxu0 0.0
  %7942 = vmatpush1.msra.mxu0 0.0
  %7943 = vmatprep.subr.mxu0 0.0
  %7944 = vmatpush1.msra.mxu0 0.0
  %7945 = vmatprep.subr.mxu0 0.0
  %7946 = vmatpush1.msra.mxu0 0.0
  %7947 = vmatprep.subr.mxu0 0.0
  %7948 = vmatpush1.msra.mxu0 0.0
  %7949 = vmatprep.subr.mxu0 0.0
  %7950 = vmatpush1.msra.mxu0 0.0
  %7951 = vmatprep.subr.mxu0 0.0
  %7952 = vmatpush1.msra.mxu0 0.0
  %7953 = vmatprep.subr.mxu0 0.0
  %7954 = vmatpush1.msra.mxu0 0.0
  %7955 = vmatprep.subr.mxu0 0.0
  %7956 = vmatpush1.msra.mxu0 0.0
  %7957 = vmatprep.subr.mxu0 0.0
  %7958 = vmatpush1.msra.mxu0 0.0
  %7959 = vmatprep.subr.mxu0 0.0
  %7960 = vmatpush1.msra.mxu0 0.0
  %7961 = vmatprep.subr.mxu0 0.0
  %7962 = vmatpush1.msra.mxu0 0.0
  %7963 = vmatprep.subr.mxu0 0.0
  %7964 = vmatpush1.msra.mxu0 0.0
  %7965 = vmatprep.subr.mxu0 0.0
  %7966 = vmatpush1.msra.mxu0 0.0
  %7967 = vmatprep.subr.mxu0 0.0
  %7968 = vmatpush1.msra.mxu0 0.0
  %7969 = vmatprep.subr.mxu0 0.0
  %7970 = vmatpush1.msra.mxu0 0.0
  %7971 = vmatprep.subr.mxu0 0.0
  %7972 = vmatpush1.msra.mxu0 0.0
  %7973 = vmatprep.subr.mxu0 0.0
  %7974 = vmatpush1.msra.mxu0 0.0
  %7975 = vmatprep.subr.mxu0 0.0
  %7976 = vmatpush1.msra.mxu0 0.0
  %7977 = vmatprep.subr.mxu0 0.0
  %7978 = vmatpush1.msra.mxu0 0.0
  %7979 = vmatprep.subr.mxu0 0.0
  %7980 = vmatpush1.msra.mxu0 0.0
  %7981 = vmatprep.mubr.f32.mxu0 0.0
  %7982 = vmatmul.mubr.f32.gmra.mrb[0].mxu0 %v2133
  %v7983 = vpop.f32.mrb[0].mxu0
  %v7984 = vadd.f32 0.0, %v7983
  %v7985 = vpop.f32.mrb[0].mxu0
  %7986 = vmatprep.mubr.f32.mxu0 0.0
  %7987 = vmatmul.mubr.f32.gmra.mrb[0].mxu0 %v2136
  %v7988 = vpop.f32.mrb[0].mxu0
  %v7989 = vadd.f32 0.0, %v7988
  %v7990 = vpop.f32.mrb[0].mxu0
  %7991 = vmatprep.mubr.f32.mxu0 0.0
  %7992 = vmatmul.mubr.f32.gmra.mrb[0].mxu0 %v2139
  %v7993 = vpop.f32.mrb[0].mxu0
  %v7994 = vadd.f32 0.0, %v7993
  %v7995 = vpop.f32.mrb[0].mxu0
  %7996 = vmatprep.mubr.f32.mxu0 0.0
  %7997 = vmatmul.mubr.f32.gmra.mrb[0].mxu0 %v2142
  %v7998 = vpop.f32.mrb[0].mxu0
  %v7999 = vadd.f32 0.0, %v7998
  %v8000 = vpop.f32.mrb[0].mxu0
  %8001 = vdwg.mxu0
  %s8002 = scalar_lea.vmem %s3, 1312
  %8003 = vst.msk [vmem:[%s8002] sm:$0xff] %vm718, %v7984
  %8004 = vst.msk [vmem:[%s8002 + $0x8] sm:$0xff] %vm718, %v7989
  %8005 = vst.msk [vmem:[%s8002 + $0x10] sm:$0xff] %vm718, %v7994
  %8006 = vst.msk [vmem:[%s8002 + $0x18] sm:$0xff] %vm718, %v7999
  %8007 = vmatprep.subr.mxu0 0.0
  %8008 = vmatpush1.msra.mxu0 %v6421
  %8009 = vmatprep.subr.mxu0 0.0
  %8010 = vmatpush1.msra.mxu0 %v6557
  %8011 = vmatprep.subr.mxu0 0.0
  %8012 = vmatpush1.msra.mxu0 0.0
  %8013 = vmatprep.subr.mxu0 0.0
  %8014 = vmatpush1.msra.mxu0 0.0
  %8015 = vmatprep.subr.mxu0 0.0
  %8016 = vmatpush1.msra.mxu0 0.0
  %8017 = vmatprep.subr.mxu0 0.0
  %8018 = vmatpush1.msra.mxu0 0.0
  %8019 = vmatprep.subr.mxu0 0.0
  %8020 = vmatpush1.msra.mxu0 0.0
  %8021 = vmatprep.subr.mxu0 0.0
  %8022 = vmatpush1.msra.mxu0 0.0
  %8023 = vmatprep.subr.mxu0 0.0
  %8024 = vmatpush1.msra.mxu0 0.0
  %8025 = vmatprep.subr.mxu0 0.0
  %8026 = vmatpush1.msra.mxu0 0.0
  %8027 = vmatprep.subr.mxu0 0.0
  %8028 = vmatpush1.msra.mxu0 0.0
  %8029 = vmatprep.subr.mxu0 0.0
  %8030 = vmatpush1.msra.mxu0 0.0
  %8031 = vmatprep.subr.mxu0 0.0
  %8032 = vmatpush1.msra.mxu0 0.0
  %8033 = vmatprep.subr.mxu0 0.0
  %8034 = vmatpush1.msra.mxu0 0.0
  %8035 = vmatprep.subr.mxu0 0.0
  %8036 = vmatpush1.msra.mxu0 0.0
  %8037 = vmatprep.subr.mxu0 0.0
  %8038 = vmatpush1.msra.mxu0 0.0
  %8039 = vmatprep.subr.mxu0 0.0
  %8040 = vmatpush1.msra.mxu0 0.0
  %8041 = vmatprep.subr.mxu0 0.0
  %8042 = vmatpush1.msra.mxu0 0.0
  %8043 = vmatprep.subr.mxu0 0.0
  %8044 = vmatpush1.msra.mxu0 0.0
  %8045 = vmatprep.subr.mxu0 0.0
  %8046 = vmatpush1.msra.mxu0 0.0
  %8047 = vmatprep.subr.mxu0 0.0
  %8048 = vmatpush1.msra.mxu0 0.0
  %8049 = vmatprep.subr.mxu0 0.0
  %8050 = vmatpush1.msra.mxu0 0.0
  %8051 = vmatprep.subr.mxu0 0.0
  %8052 = vmatpush1.msra.mxu0 0.0
  %8053 = vmatprep.subr.mxu0 0.0
  %8054 = vmatpush1.msra.mxu0 0.0
  %8055 = vmatprep.subr.mxu0 0.0
  %8056 = vmatpush1.msra.mxu0 0.0
  %8057 = vmatprep.subr.mxu0 0.0
  %8058 = vmatpush1.msra.mxu0 0.0
  %8059 = vmatprep.subr.mxu0 0.0
  %8060 = vmatpush1.msra.mxu0 0.0
  %8061 = vmatprep.subr.mxu0 0.0
  %8062 = vmatpush1.msra.mxu0 0.0
  %8063 = vmatprep.subr.mxu0 0.0
  %8064 = vmatpush1.msra.mxu0 0.0
  %8065 = vmatprep.subr.mxu0 0.0
  %8066 = vmatpush1.msra.mxu0 0.0
  %8067 = vmatprep.subr.mxu0 0.0
  %8068 = vmatpush1.msra.mxu0 0.0
  %8069 = vmatprep.subr.mxu0 0.0
  %8070 = vmatpush1.msra.mxu0 0.0
  %8071 = vmatprep.mubr.f32.mxu0 0.0
  %8072 = vmatmul.mubr.f32.gmra.mrb[0].mxu0 %v2133
  %v8073 = vpop.f32.mrb[0].mxu0
  %v8074 = vadd.f32 0.0, %v8073
  %v8075 = vpop.f32.mrb[0].mxu0
  %8076 = vmatprep.mubr.f32.mxu0 0.0
  %8077 = vmatmul.mubr.f32.gmra.mrb[0].mxu0 %v2136
  %v8078 = vpop.f32.mrb[0].mxu0
  %v8079 = vadd.f32 0.0, %v8078
  %v8080 = vpop.f32.mrb[0].mxu0
  %8081 = vmatprep.mubr.f32.mxu0 0.0
  %8082 = vmatmul.mubr.f32.gmra.mrb[0].mxu0 %v2139
  %v8083 = vpop.f32.mrb[0].mxu0
  %v8084 = vadd.f32 0.0, %v8083
  %v8085 = vpop.f32.mrb[0].mxu0
  %8086 = vmatprep.mubr.f32.mxu0 0.0
  %8087 = vmatmul.mubr.f32.gmra.mrb[0].mxu0 %v2142
  %v8088 = vpop.f32.mrb[0].mxu0
  %v8089 = vadd.f32 0.0, %v8088
  %v8090 = vpop.f32.mrb[0].mxu0
  %8091 = vdwg.mxu0
  %s8092 = scalar_lea.vmem %s3, 1344
  %8093 = vst.msk [vmem:[%s8092] sm:$0xff] %vm718, %v8074
  %8094 = vst.msk [vmem:[%s8092 + $0x8] sm:$0xff] %vm718, %v8079
  %8095 = vst.msk [vmem:[%s8092 + $0x10] sm:$0xff] %vm718, %v8084
  %8096 = vst.msk [vmem:[%s8092 + $0x18] sm:$0xff] %vm718, %v8089
  %8097 = vmatprep.subr.mxu0 0.0
  %8098 = vmatpush1.msra.mxu0 %v6422
  %8099 = vmatprep.subr.mxu0 0.0
  %8100 = vmatpush1.msra.mxu0 %v6558
  %8101 = vmatprep.subr.mxu0 0.0
  %8102 = vmatpush1.msra.mxu0 0.0
  %8103 = vmatprep.subr.mxu0 0.0
  %8104 = vmatpush1.msra.mxu0 0.0
  %8105 = vmatprep.subr.mxu0 0.0
  %8106 = vmatpush1.msra.mxu0 0.0
  %8107 = vmatprep.subr.mxu0 0.0
  %8108 = vmatpush1.msra.mxu0 0.0
  %8109 = vmatprep.subr.mxu0 0.0
  %8110 = vmatpush1.msra.mxu0 0.0
  %8111 = vmatprep.subr.mxu0 0.0
  %8112 = vmatpush1.msra.mxu0 0.0
  %8113 = vmatprep.subr.mxu0 0.0
  %8114 = vmatpush1.msra.mxu0 0.0
  %8115 = vmatprep.subr.mxu0 0.0
  %8116 = vmatpush1.msra.mxu0 0.0
  %8117 = vmatprep.subr.mxu0 0.0
  %8118 = vmatpush1.msra.mxu0 0.0
  %8119 = vmatprep.subr.mxu0 0.0
  %8120 = vmatpush1.msra.mxu0 0.0
  %8121 = vmatprep.subr.mxu0 0.0
  %8122 = vmatpush1.msra.mxu0 0.0
  %8123 = vmatprep.subr.mxu0 0.0
  %8124 = vmatpush1.msra.mxu0 0.0
  %8125 = vmatprep.subr.mxu0 0.0
  %8126 = vmatpush1.msra.mxu0 0.0
  %8127 = vmatprep.subr.mxu0 0.0
  %8128 = vmatpush1.msra.mxu0 0.0
  %8129 = vmatprep.subr.mxu0 0.0
  %8130 = vmatpush1.msra.mxu0 0.0
  %8131 = vmatprep.subr.mxu0 0.0
  %8132 = vmatpush1.msra.mxu0 0.0
  %8133 = vmatprep.subr.mxu0 0.0
  %8134 = vmatpush1.msra.mxu0 0.0
  %8135 = vmatprep.subr.mxu0 0.0
  %8136 = vmatpush1.msra.mxu0 0.0
  %8137 = vmatprep.subr.mxu0 0.0
  %8138 = vmatpush1.msra.mxu0 0.0
  %8139 = vmatprep.subr.mxu0 0.0
  %8140 = vmatpush1.msra.mxu0 0.0
  %8141 = vmatprep.subr.mxu0 0.0
  %8142 = vmatpush1.msra.mxu0 0.0
  %8143 = vmatprep.subr.mxu0 0.0
  %8144 = vmatpush1.msra.mxu0 0.0
  %8145 = vmatprep.subr.mxu0 0.0
  %8146 = vmatpush1.msra.mxu0 0.0
  %8147 = vmatprep.subr.mxu0 0.0
  %8148 = vmatpush1.msra.mxu0 0.0
  %8149 = vmatprep.subr.mxu0 0.0
  %8150 = vmatpush1.msra.mxu0 0.0
  %8151 = vmatprep.subr.mxu0 0.0
  %8152 = vmatpush1.msra.mxu0 0.0
  %8153 = vmatprep.subr.mxu0 0.0
  %8154 = vmatpush1.msra.mxu0 0.0
  %8155 = vmatprep.subr.mxu0 0.0
  %8156 = vmatpush1.msra.mxu0 0.0
  %8157 = vmatprep.subr.mxu0 0.0
  %8158 = vmatpush1.msra.mxu0 0.0
  %8159 = vmatprep.subr.mxu0 0.0
  %8160 = vmatpush1.msra.mxu0 0.0
  %8161 = vmatprep.mubr.f32.mxu0 0.0
  %8162 = vmatmul.mubr.f32.gmra.mrb[0].mxu0 %v2133
  %v8163 = vpop.f32.mrb[0].mxu0
  %v8164 = vadd.f32 0.0, %v8163
  %v8165 = vpop.f32.mrb[0].mxu0
  %8166 = vmatprep.mubr.f32.mxu0 0.0
  %8167 = vmatmul.mubr.f32.gmra.mrb[0].mxu0 %v2136
  %v8168 = vpop.f32.mrb[0].mxu0
  %v8169 = vadd.f32 0.0, %v8168
  %v8170 = vpop.f32.mrb[0].mxu0
  %8171 = vmatprep.mubr.f32.mxu0 0.0
  %8172 = vmatmul.mubr.f32.gmra.mrb[0].mxu0 %v2139
  %v8173 = vpop.f32.mrb[0].mxu0
  %v8174 = vadd.f32 0.0, %v8173
  %v8175 = vpop.f32.mrb[0].mxu0
  %8176 = vmatprep.mubr.f32.mxu0 0.0
  %8177 = vmatmul.mubr.f32.gmra.mrb[0].mxu0 %v2142
  %v8178 = vpop.f32.mrb[0].mxu0
  %v8179 = vadd.f32 0.0, %v8178
  %v8180 = vpop.f32.mrb[0].mxu0
  %8181 = vdwg.mxu0
  %s8182 = scalar_lea.vmem %s3, 1376
  %8183 = vst.msk [vmem:[%s8182] sm:$0xff] %vm718, %v8164
  %8184 = vst.msk [vmem:[%s8182 + $0x8] sm:$0xff] %vm718, %v8169
  %8185 = vst.msk [vmem:[%s8182 + $0x10] sm:$0xff] %vm718, %v8174
  %8186 = vst.msk [vmem:[%s8182 + $0x18] sm:$0xff] %vm718, %v8179
  %8187 = vmatprep.subr.mxu0 0.0
  %8188 = vmatpush1.msra.mxu0 %v6423
  %8189 = vmatprep.subr.mxu0 0.0
  %8190 = vmatpush1.msra.mxu0 %v6559
  %8191 = vmatprep.subr.mxu0 0.0
  %8192 = vmatpush1.msra.mxu0 0.0
  %8193 = vmatprep.subr.mxu0 0.0
  %8194 = vmatpush1.msra.mxu0 0.0
  %8195 = vmatprep.subr.mxu0 0.0
  %8196 = vmatpush1.msra.mxu0 0.0
  %8197 = vmatprep.subr.mxu0 0.0
  %8198 = vmatpush1.msra.mxu0 0.0
  %8199 = vmatprep.subr.mxu0 0.0
  %8200 = vmatpush1.msra.mxu0 0.0
  %8201 = vmatprep.subr.mxu0 0.0
  %8202 = vmatpush1.msra.mxu0 0.0
  %8203 = vmatprep.subr.mxu0 0.0
  %8204 = vmatpush1.msra.mxu0 0.0
  %8205 = vmatprep.subr.mxu0 0.0
  %8206 = vmatpush1.msra.mxu0 0.0
  %8207 = vmatprep.subr.mxu0 0.0
  %8208 = vmatpush1.msra.mxu0 0.0
  %8209 = vmatprep.subr.mxu0 0.0
  %8210 = vmatpush1.msra.mxu0 0.0
  %8211 = vmatprep.subr.mxu0 0.0
  %8212 = vmatpush1.msra.mxu0 0.0
  %8213 = vmatprep.subr.mxu0 0.0
  %8214 = vmatpush1.msra.mxu0 0.0
  %8215 = vmatprep.subr.mxu0 0.0
  %8216 = vmatpush1.msra.mxu0 0.0
  %8217 = vmatprep.subr.mxu0 0.0
  %8218 = vmatpush1.msra.mxu0 0.0
  %8219 = vmatprep.subr.mxu0 0.0
  %8220 = vmatpush1.msra.mxu0 0.0
  %8221 = vmatprep.subr.mxu0 0.0
  %8222 = vmatpush1.msra.mxu0 0.0
  %8223 = vmatprep.subr.mxu0 0.0
  %8224 = vmatpush1.msra.mxu0 0.0
  %8225 = vmatprep.subr.mxu0 0.0
  %8226 = vmatpush1.msra.mxu0 0.0
  %8227 = vmatprep.subr.mxu0 0.0
  %8228 = vmatpush1.msra.mxu0 0.0
  %8229 = vmatprep.subr.mxu0 0.0
  %8230 = vmatpush1.msra.mxu0 0.0
  %8231 = vmatprep.subr.mxu0 0.0
  %8232 = vmatpush1.msra.mxu0 0.0
  %8233 = vmatprep.subr.mxu0 0.0
  %8234 = vmatpush1.msra.mxu0 0.0
  %8235 = vmatprep.subr.mxu0 0.0
  %8236 = vmatpush1.msra.mxu0 0.0
  %8237 = vmatprep.subr.mxu0 0.0
  %8238 = vmatpush1.msra.mxu0 0.0
  %8239 = vmatprep.subr.mxu0 0.0
  %8240 = vmatpush1.msra.mxu0 0.0
  %8241 = vmatprep.subr.mxu0 0.0
  %8242 = vmatpush1.msra.mxu0 0.0
  %8243 = vmatprep.subr.mxu0 0.0
  %8244 = vmatpush1.msra.mxu0 0.0
  %8245 = vmatprep.subr.mxu0 0.0
  %8246 = vmatpush1.msra.mxu0 0.0
  %8247 = vmatprep.subr.mxu0 0.0
  %8248 = vmatpush1.msra.mxu0 0.0
  %8249 = vmatprep.subr.mxu0 0.0
  %8250 = vmatpush1.msra.mxu0 0.0
  %8251 = vmatprep.mubr.f32.mxu0 0.0
  %8252 = vmatmul.mubr.f32.gmra.mrb[0].mxu0 %v2133
  %v8253 = vpop.f32.mrb[0].mxu0
  %v8254 = vadd.f32 0.0, %v8253
  %v8255 = vpop.f32.mrb[0].mxu0
  %8256 = vmatprep.mubr.f32.mxu0 0.0
  %8257 = vmatmul.mubr.f32.gmra.mrb[0].mxu0 %v2136
  %v8258 = vpop.f32.mrb[0].mxu0
  %v8259 = vadd.f32 0.0, %v8258
  %v8260 = vpop.f32.mrb[0].mxu0
  %8261 = vmatprep.mubr.f32.mxu0 0.0
  %8262 = vmatmul.mubr.f32.gmra.mrb[0].mxu0 %v2139
  %v8263 = vpop.f32.mrb[0].mxu0
  %v8264 = vadd.f32 0.0, %v8263
  %v8265 = vpop.f32.mrb[0].mxu0
  %8266 = vmatprep.mubr.f32.mxu0 0.0
  %8267 = vmatmul.mubr.f32.gmra.mrb[0].mxu0 %v2142
  %v8268 = vpop.f32.mrb[0].mxu0
  %v8269 = vadd.f32 0.0, %v8268
  %v8270 = vpop.f32.mrb[0].mxu0
  %8271 = vdwg.mxu0
  %s8272 = scalar_lea.vmem %s3, 1408
  %8273 = vst.msk [vmem:[%s8272] sm:$0xff] %vm718, %v8254
  %8274 = vst.msk [vmem:[%s8272 + $0x8] sm:$0xff] %vm718, %v8259
  %8275 = vst.msk [vmem:[%s8272 + $0x10] sm:$0xff] %vm718, %v8264
  %8276 = vst.msk [vmem:[%s8272 + $0x18] sm:$0xff] %vm718, %v8269
  %8277 = vmatprep.subr.mxu0 0.0
  %8278 = vmatpush1.msra.mxu0 %v6424
  %8279 = vmatprep.subr.mxu0 0.0
  %8280 = vmatpush1.msra.mxu0 %v6560
  %8281 = vmatprep.subr.mxu0 0.0
  %8282 = vmatpush1.msra.mxu0 0.0
  %8283 = vmatprep.subr.mxu0 0.0
  %8284 = vmatpush1.msra.mxu0 0.0
  %8285 = vmatprep.subr.mxu0 0.0
  %8286 = vmatpush1.msra.mxu0 0.0
  %8287 = vmatprep.subr.mxu0 0.0
  %8288 = vmatpush1.msra.mxu0 0.0
  %8289 = vmatprep.subr.mxu0 0.0
  %8290 = vmatpush1.msra.mxu0 0.0
  %8291 = vmatprep.subr.mxu0 0.0
  %8292 = vmatpush1.msra.mxu0 0.0
  %8293 = vmatprep.subr.mxu0 0.0
  %8294 = vmatpush1.msra.mxu0 0.0
  %8295 = vmatprep.subr.mxu0 0.0
  %8296 = vmatpush1.msra.mxu0 0.0
  %8297 = vmatprep.subr.mxu0 0.0
  %8298 = vmatpush1.msra.mxu0 0.0
  %8299 = vmatprep.subr.mxu0 0.0
  %8300 = vmatpush1.msra.mxu0 0.0
  %8301 = vmatprep.subr.mxu0 0.0
  %8302 = vmatpush1.msra.mxu0 0.0
  %8303 = vmatprep.subr.mxu0 0.0
  %8304 = vmatpush1.msra.mxu0 0.0
  %8305 = vmatprep.subr.mxu0 0.0
  %8306 = vmatpush1.msra.mxu0 0.0
  %8307 = vmatprep.subr.mxu0 0.0
  %8308 = vmatpush1.msra.mxu0 0.0
  %8309 = vmatprep.subr.mxu0 0.0
  %8310 = vmatpush1.msra.mxu0 0.0
  %8311 = vmatprep.subr.mxu0 0.0
  %8312 = vmatpush1.msra.mxu0 0.0
  %8313 = vmatprep.subr.mxu0 0.0
  %8314 = vmatpush1.msra.mxu0 0.0
  %8315 = vmatprep.subr.mxu0 0.0
  %8316 = vmatpush1.msra.mxu0 0.0
  %8317 = vmatprep.subr.mxu0 0.0
  %8318 = vmatpush1.msra.mxu0 0.0
  %8319 = vmatprep.subr.mxu0 0.0
  %8320 = vmatpush1.msra.mxu0 0.0
  %8321 = vmatprep.subr.mxu0 0.0
  %8322 = vmatpush1.msra.mxu0 0.0
  %8323 = vmatprep.subr.mxu0 0.0
  %8324 = vmatpush1.msra.mxu0 0.0
  %8325 = vmatprep.subr.mxu0 0.0
  %8326 = vmatpush1.msra.mxu0 0.0
  %8327 = vmatprep.subr.mxu0 0.0
  %8328 = vmatpush1.msra.mxu0 0.0
  %8329 = vmatprep.subr.mxu0 0.0
  %8330 = vmatpush1.msra.mxu0 0.0
  %8331 = vmatprep.subr.mxu0 0.0
  %8332 = vmatpush1.msra.mxu0 0.0
  %8333 = vmatprep.subr.mxu0 0.0
  %8334 = vmatpush1.msra.mxu0 0.0
  %8335 = vmatprep.subr.mxu0 0.0
  %8336 = vmatpush1.msra.mxu0 0.0
  %8337 = vmatprep.subr.mxu0 0.0
  %8338 = vmatpush1.msra.mxu0 0.0
  %8339 = vmatprep.subr.mxu0 0.0
  %8340 = vmatpush1.msra.mxu0 0.0
  %8341 = vmatprep.mubr.f32.mxu0 0.0
  %8342 = vmatmul.mubr.f32.gmra.mrb[0].mxu0 %v2133
  %v8343 = vpop.f32.mrb[0].mxu0
  %v8344 = vadd.f32 0.0, %v8343
  %v8345 = vpop.f32.mrb[0].mxu0
  %8346 = vmatprep.mubr.f32.mxu0 0.0
  %8347 = vmatmul.mubr.f32.gmra.mrb[0].mxu0 %v2136
  %v8348 = vpop.f32.mrb[0].mxu0
  %v8349 = vadd.f32 0.0, %v8348
  %v8350 = vpop.f32.mrb[0].mxu0
  %8351 = vmatprep.mubr.f32.mxu0 0.0
  %8352 = vmatmul.mubr.f32.gmra.mrb[0].mxu0 %v2139
  %v8353 = vpop.f32.mrb[0].mxu0
  %v8354 = vadd.f32 0.0, %v8353
  %v8355 = vpop.f32.mrb[0].mxu0
  %8356 = vmatprep.mubr.f32.mxu0 0.0
  %8357 = vmatmul.mubr.f32.gmra.mrb[0].mxu0 %v2142
  %v8358 = vpop.f32.mrb[0].mxu0
  %v8359 = vadd.f32 0.0, %v8358
  %v8360 = vpop.f32.mrb[0].mxu0
  %8361 = vdwg.mxu0
  %s8362 = scalar_lea.vmem %s3, 1440
  %8363 = vst.msk [vmem:[%s8362] sm:$0xff] %vm718, %v8344
  %8364 = vst.msk [vmem:[%s8362 + $0x8] sm:$0xff] %vm718, %v8349
  %8365 = vst.msk [vmem:[%s8362 + $0x10] sm:$0xff] %vm718, %v8354
  %8366 = vst.msk [vmem:[%s8362 + $0x18] sm:$0xff] %vm718, %v8359
  %8367 = vmatprep.subr.mxu0 0.0
  %8368 = vmatpush1.msra.mxu0 %v6425
  %8369 = vmatprep.subr.mxu0 0.0
  %8370 = vmatpush1.msra.mxu0 %v6561
  %8371 = vmatprep.subr.mxu0 0.0
  %8372 = vmatpush1.msra.mxu0 0.0
  %8373 = vmatprep.subr.mxu0 0.0
  %8374 = vmatpush1.msra.mxu0 0.0
  %8375 = vmatprep.subr.mxu0 0.0
  %8376 = vmatpush1.msra.mxu0 0.0
  %8377 = vmatprep.subr.mxu0 0.0
  %8378 = vmatpush1.msra.mxu0 0.0
  %8379 = vmatprep.subr.mxu0 0.0
  %8380 = vmatpush1.msra.mxu0 0.0
  %8381 = vmatprep.subr.mxu0 0.0
  %8382 = vmatpush1.msra.mxu0 0.0
  %8383 = vmatprep.subr.mxu0 0.0
  %8384 = vmatpush1.msra.mxu0 0.0
  %8385 = vmatprep.subr.mxu0 0.0
  %8386 = vmatpush1.msra.mxu0 0.0
  %8387 = vmatprep.subr.mxu0 0.0
  %8388 = vmatpush1.msra.mxu0 0.0
  %8389 = vmatprep.subr.mxu0 0.0
  %8390 = vmatpush1.msra.mxu0 0.0
  %8391 = vmatprep.subr.mxu0 0.0
  %8392 = vmatpush1.msra.mxu0 0.0
  %8393 = vmatprep.subr.mxu0 0.0
  %8394 = vmatpush1.msra.mxu0 0.0
  %8395 = vmatprep.subr.mxu0 0.0
  %8396 = vmatpush1.msra.mxu0 0.0
  %8397 = vmatprep.subr.mxu0 0.0
  %8398 = vmatpush1.msra.mxu0 0.0
  %8399 = vmatprep.subr.mxu0 0.0
  %8400 = vmatpush1.msra.mxu0 0.0
  %8401 = vmatprep.subr.mxu0 0.0
  %8402 = vmatpush1.msra.mxu0 0.0
  %8403 = vmatprep.subr.mxu0 0.0
  %8404 = vmatpush1.msra.mxu0 0.0
  %8405 = vmatprep.subr.mxu0 0.0
  %8406 = vmatpush1.msra.mxu0 0.0
  %8407 = vmatprep.subr.mxu0 0.0
  %8408 = vmatpush1.msra.mxu0 0.0
  %8409 = vmatprep.subr.mxu0 0.0
  %8410 = vmatpush1.msra.mxu0 0.0
  %8411 = vmatprep.subr.mxu0 0.0
  %8412 = vmatpush1.msra.mxu0 0.0
  %8413 = vmatprep.subr.mxu0 0.0
  %8414 = vmatpush1.msra.mxu0 0.0
  %8415 = vmatprep.subr.mxu0 0.0
  %8416 = vmatpush1.msra.mxu0 0.0
  %8417 = vmatprep.subr.mxu0 0.0
  %8418 = vmatpush1.msra.mxu0 0.0
  %8419 = vmatprep.subr.mxu0 0.0
  %8420 = vmatpush1.msra.mxu0 0.0
  %8421 = vmatprep.subr.mxu0 0.0
  %8422 = vmatpush1.msra.mxu0 0.0
  %8423 = vmatprep.subr.mxu0 0.0
  %8424 = vmatpush1.msra.mxu0 0.0
  %8425 = vmatprep.subr.mxu0 0.0
  %8426 = vmatpush1.msra.mxu0 0.0
  %8427 = vmatprep.subr.mxu0 0.0
  %8428 = vmatpush1.msra.mxu0 0.0
  %8429 = vmatprep.subr.mxu0 0.0
  %8430 = vmatpush1.msra.mxu0 0.0
  %8431 = vmatprep.mubr.f32.mxu0 0.0
  %8432 = vmatmul.mubr.f32.gmra.mrb[0].mxu0 %v2133
  %v8433 = vpop.f32.mrb[0].mxu0
  %v8434 = vadd.f32 0.0, %v8433
  %v8435 = vpop.f32.mrb[0].mxu0
  %8436 = vmatprep.mubr.f32.mxu0 0.0
  %8437 = vmatmul.mubr.f32.gmra.mrb[0].mxu0 %v2136
  %v8438 = vpop.f32.mrb[0].mxu0
  %v8439 = vadd.f32 0.0, %v8438
  %v8440 = vpop.f32.mrb[0].mxu0
  %8441 = vmatprep.mubr.f32.mxu0 0.0
  %8442 = vmatmul.mubr.f32.gmra.mrb[0].mxu0 %v2139
  %v8443 = vpop.f32.mrb[0].mxu0
  %v8444 = vadd.f32 0.0, %v8443
  %v8445 = vpop.f32.mrb[0].mxu0
  %8446 = vmatprep.mubr.f32.mxu0 0.0
  %8447 = vmatmul.mubr.f32.gmra.mrb[0].mxu0 %v2142
  %v8448 = vpop.f32.mrb[0].mxu0
  %v8449 = vadd.f32 0.0, %v8448
  %v8450 = vpop.f32.mrb[0].mxu0
  %8451 = vdwg.mxu0
  %s8452 = scalar_lea.vmem %s3, 1472
  %8453 = vst.msk [vmem:[%s8452] sm:$0xff] %vm718, %v8434
  %8454 = vst.msk [vmem:[%s8452 + $0x8] sm:$0xff] %vm718, %v8439
  %8455 = vst.msk [vmem:[%s8452 + $0x10] sm:$0xff] %vm718, %v8444
  %8456 = vst.msk [vmem:[%s8452 + $0x18] sm:$0xff] %vm718, %v8449
  %8457 = vmatprep.subr.mxu0 0.0
  %8458 = vmatpush1.msra.mxu0 %v6426
  %8459 = vmatprep.subr.mxu0 0.0
  %8460 = vmatpush1.msra.mxu0 %v6562
  %8461 = vmatprep.subr.mxu0 0.0
  %8462 = vmatpush1.msra.mxu0 0.0
  %8463 = vmatprep.subr.mxu0 0.0
  %8464 = vmatpush1.msra.mxu0 0.0
  %8465 = vmatprep.subr.mxu0 0.0
  %8466 = vmatpush1.msra.mxu0 0.0
  %8467 = vmatprep.subr.mxu0 0.0
  %8468 = vmatpush1.msra.mxu0 0.0
  %8469 = vmatprep.subr.mxu0 0.0
  %8470 = vmatpush1.msra.mxu0 0.0
  %8471 = vmatprep.subr.mxu0 0.0
  %8472 = vmatpush1.msra.mxu0 0.0
  %8473 = vmatprep.subr.mxu0 0.0
  %8474 = vmatpush1.msra.mxu0 0.0
  %8475 = vmatprep.subr.mxu0 0.0
  %8476 = vmatpush1.msra.mxu0 0.0
  %8477 = vmatprep.subr.mxu0 0.0
  %8478 = vmatpush1.msra.mxu0 0.0
  %8479 = vmatprep.subr.mxu0 0.0
  %8480 = vmatpush1.msra.mxu0 0.0
  %8481 = vmatprep.subr.mxu0 0.0
  %8482 = vmatpush1.msra.mxu0 0.0
  %8483 = vmatprep.subr.mxu0 0.0
  %8484 = vmatpush1.msra.mxu0 0.0
  %8485 = vmatprep.subr.mxu0 0.0
  %8486 = vmatpush1.msra.mxu0 0.0
  %8487 = vmatprep.subr.mxu0 0.0
  %8488 = vmatpush1.msra.mxu0 0.0
  %8489 = vmatprep.subr.mxu0 0.0
  %8490 = vmatpush1.msra.mxu0 0.0
  %8491 = vmatprep.subr.mxu0 0.0
  %8492 = vmatpush1.msra.mxu0 0.0
  %8493 = vmatprep.subr.mxu0 0.0
  %8494 = vmatpush1.msra.mxu0 0.0
  %8495 = vmatprep.subr.mxu0 0.0
  %8496 = vmatpush1.msra.mxu0 0.0
  %8497 = vmatprep.subr.mxu0 0.0
  %8498 = vmatpush1.msra.mxu0 0.0
  %8499 = vmatprep.subr.mxu0 0.0
  %8500 = vmatpush1.msra.mxu0 0.0
  %8501 = vmatprep.subr.mxu0 0.0
  %8502 = vmatpush1.msra.mxu0 0.0
  %8503 = vmatprep.subr.mxu0 0.0
  %8504 = vmatpush1.msra.mxu0 0.0
  %8505 = vmatprep.subr.mxu0 0.0
  %8506 = vmatpush1.msra.mxu0 0.0
  %8507 = vmatprep.subr.mxu0 0.0
  %8508 = vmatpush1.msra.mxu0 0.0
  %8509 = vmatprep.subr.mxu0 0.0
  %8510 = vmatpush1.msra.mxu0 0.0
  %8511 = vmatprep.subr.mxu0 0.0
  %8512 = vmatpush1.msra.mxu0 0.0
  %8513 = vmatprep.subr.mxu0 0.0
  %8514 = vmatpush1.msra.mxu0 0.0
  %8515 = vmatprep.subr.mxu0 0.0
  %8516 = vmatpush1.msra.mxu0 0.0
  %8517 = vmatprep.subr.mxu0 0.0
  %8518 = vmatpush1.msra.mxu0 0.0
  %8519 = vmatprep.subr.mxu0 0.0
  %8520 = vmatpush1.msra.mxu0 0.0
  %8521 = vmatprep.mubr.f32.mxu0 0.0
  %8522 = vmatmul.mubr.f32.gmra.mrb[0].mxu0 %v2133
  %v8523 = vpop.f32.mrb[0].mxu0
  %v8524 = vadd.f32 0.0, %v8523
  %v8525 = vpop.f32.mrb[0].mxu0
  %8526 = vmatprep.mubr.f32.mxu0 0.0
  %8527 = vmatmul.mubr.f32.gmra.mrb[0].mxu0 %v2136
  %v8528 = vpop.f32.mrb[0].mxu0
  %v8529 = vadd.f32 0.0, %v8528
  %v8530 = vpop.f32.mrb[0].mxu0
  %8531 = vmatprep.mubr.f32.mxu0 0.0
  %8532 = vmatmul.mubr.f32.gmra.mrb[0].mxu0 %v2139
  %v8533 = vpop.f32.mrb[0].mxu0
  %v8534 = vadd.f32 0.0, %v8533
  %v8535 = vpop.f32.mrb[0].mxu0
  %8536 = vmatprep.mubr.f32.mxu0 0.0
  %8537 = vmatmul.mubr.f32.gmra.mrb[0].mxu0 %v2142
  %v8538 = vpop.f32.mrb[0].mxu0
  %v8539 = vadd.f32 0.0, %v8538
  %v8540 = vpop.f32.mrb[0].mxu0
  %8541 = vdwg.mxu0
  %s8542 = scalar_lea.vmem %s3, 1504
  %8543 = vst.msk [vmem:[%s8542] sm:$0xff] %vm718, %v8524
  %8544 = vst.msk [vmem:[%s8542 + $0x8] sm:$0xff] %vm718, %v8529
  %8545 = vst.msk [vmem:[%s8542 + $0x10] sm:$0xff] %vm718, %v8534
  %8546 = vst.msk [vmem:[%s8542 + $0x18] sm:$0xff] %vm718, %v8539
  %8547 = vmatprep.subr.mxu0 0.0
  %8548 = vmatpush1.msra.mxu0 %v6691
  %8549 = vmatprep.subr.mxu0 0.0
  %8550 = vmatpush1.msra.mxu0 %v6827
  %8551 = vmatprep.subr.mxu0 0.0
  %8552 = vmatpush1.msra.mxu0 0.0
  %8553 = vmatprep.subr.mxu0 0.0
  %8554 = vmatpush1.msra.mxu0 0.0
  %8555 = vmatprep.subr.mxu0 0.0
  %8556 = vmatpush1.msra.mxu0 0.0
  %8557 = vmatprep.subr.mxu0 0.0
  %8558 = vmatpush1.msra.mxu0 0.0
  %8559 = vmatprep.subr.mxu0 0.0
  %8560 = vmatpush1.msra.mxu0 0.0
  %8561 = vmatprep.subr.mxu0 0.0
  %8562 = vmatpush1.msra.mxu0 0.0
  %8563 = vmatprep.subr.mxu0 0.0
  %8564 = vmatpush1.msra.mxu0 0.0
  %8565 = vmatprep.subr.mxu0 0.0
  %8566 = vmatpush1.msra.mxu0 0.0
  %8567 = vmatprep.subr.mxu0 0.0
  %8568 = vmatpush1.msra.mxu0 0.0
  %8569 = vmatprep.subr.mxu0 0.0
  %8570 = vmatpush1.msra.mxu0 0.0
  %8571 = vmatprep.subr.mxu0 0.0
  %8572 = vmatpush1.msra.mxu0 0.0
  %8573 = vmatprep.subr.mxu0 0.0
  %8574 = vmatpush1.msra.mxu0 0.0
  %8575 = vmatprep.subr.mxu0 0.0
  %8576 = vmatpush1.msra.mxu0 0.0
  %8577 = vmatprep.subr.mxu0 0.0
  %8578 = vmatpush1.msra.mxu0 0.0
  %8579 = vmatprep.subr.mxu0 0.0
  %8580 = vmatpush1.msra.mxu0 0.0
  %8581 = vmatprep.subr.mxu0 0.0
  %8582 = vmatpush1.msra.mxu0 0.0
  %8583 = vmatprep.subr.mxu0 0.0
  %8584 = vmatpush1.msra.mxu0 0.0
  %8585 = vmatprep.subr.mxu0 0.0
  %8586 = vmatpush1.msra.mxu0 0.0
  %8587 = vmatprep.subr.mxu0 0.0
  %8588 = vmatpush1.msra.mxu0 0.0
  %8589 = vmatprep.subr.mxu0 0.0
  %8590 = vmatpush1.msra.mxu0 0.0
  %8591 = vmatprep.subr.mxu0 0.0
  %8592 = vmatpush1.msra.mxu0 0.0
  %8593 = vmatprep.subr.mxu0 0.0
  %8594 = vmatpush1.msra.mxu0 0.0
  %8595 = vmatprep.subr.mxu0 0.0
  %8596 = vmatpush1.msra.mxu0 0.0
  %8597 = vmatprep.subr.mxu0 0.0
  %8598 = vmatpush1.msra.mxu0 0.0
  %8599 = vmatprep.subr.mxu0 0.0
  %8600 = vmatpush1.msra.mxu0 0.0
  %8601 = vmatprep.subr.mxu0 0.0
  %8602 = vmatpush1.msra.mxu0 0.0
  %8603 = vmatprep.subr.mxu0 0.0
  %8604 = vmatpush1.msra.mxu0 0.0
  %8605 = vmatprep.subr.mxu0 0.0
  %8606 = vmatpush1.msra.mxu0 0.0
  %8607 = vmatprep.subr.mxu0 0.0
  %8608 = vmatpush1.msra.mxu0 0.0
  %8609 = vmatprep.subr.mxu0 0.0
  %8610 = vmatpush1.msra.mxu0 0.0
  %8611 = vmatprep.mubr.f32.mxu0 0.0
  %8612 = vmatmul.mubr.f32.gmra.mrb[0].mxu0 %v2133
  %v8613 = vpop.f32.mrb[0].mxu0
  %v8614 = vadd.f32 0.0, %v8613
  %v8615 = vpop.f32.mrb[0].mxu0
  %8616 = vmatprep.mubr.f32.mxu0 0.0
  %8617 = vmatmul.mubr.f32.gmra.mrb[0].mxu0 %v2136
  %v8618 = vpop.f32.mrb[0].mxu0
  %v8619 = vadd.f32 0.0, %v8618
  %v8620 = vpop.f32.mrb[0].mxu0
  %8621 = vmatprep.mubr.f32.mxu0 0.0
  %8622 = vmatmul.mubr.f32.gmra.mrb[0].mxu0 %v2139
  %v8623 = vpop.f32.mrb[0].mxu0
  %v8624 = vadd.f32 0.0, %v8623
  %v8625 = vpop.f32.mrb[0].mxu0
  %8626 = vmatprep.mubr.f32.mxu0 0.0
  %8627 = vmatmul.mubr.f32.gmra.mrb[0].mxu0 %v2142
  %v8628 = vpop.f32.mrb[0].mxu0
  %v8629 = vadd.f32 0.0, %v8628
  %v8630 = vpop.f32.mrb[0].mxu0
  %8631 = vdwg.mxu0
  %s8632 = scalar_lea.vmem %s3, 1536
  %8633 = vst.msk [vmem:[%s8632] sm:$0xff] %vm718, %v8614
  %8634 = vst.msk [vmem:[%s8632 + $0x8] sm:$0xff] %vm718, %v8619
  %8635 = vst.msk [vmem:[%s8632 + $0x10] sm:$0xff] %vm718, %v8624
  %8636 = vst.msk [vmem:[%s8632 + $0x18] sm:$0xff] %vm718, %v8629
  %8637 = vmatprep.subr.mxu0 0.0
  %8638 = vmatpush1.msra.mxu0 %v6692
  %8639 = vmatprep.subr.mxu0 0.0
  %8640 = vmatpush1.msra.mxu0 %v6828
  %8641 = vmatprep.subr.mxu0 0.0
  %8642 = vmatpush1.msra.mxu0 0.0
  %8643 = vmatprep.subr.mxu0 0.0
  %8644 = vmatpush1.msra.mxu0 0.0
  %8645 = vmatprep.subr.mxu0 0.0
  %8646 = vmatpush1.msra.mxu0 0.0
  %8647 = vmatprep.subr.mxu0 0.0
  %8648 = vmatpush1.msra.mxu0 0.0
  %8649 = vmatprep.subr.mxu0 0.0
  %8650 = vmatpush1.msra.mxu0 0.0
  %8651 = vmatprep.subr.mxu0 0.0
  %8652 = vmatpush1.msra.mxu0 0.0
  %8653 = vmatprep.subr.mxu0 0.0
  %8654 = vmatpush1.msra.mxu0 0.0
  %8655 = vmatprep.subr.mxu0 0.0
  %8656 = vmatpush1.msra.mxu0 0.0
  %8657 = vmatprep.subr.mxu0 0.0
  %8658 = vmatpush1.msra.mxu0 0.0
  %8659 = vmatprep.subr.mxu0 0.0
  %8660 = vmatpush1.msra.mxu0 0.0
  %8661 = vmatprep.subr.mxu0 0.0
  %8662 = vmatpush1.msra.mxu0 0.0
  %8663 = vmatprep.subr.mxu0 0.0
  %8664 = vmatpush1.msra.mxu0 0.0
  %8665 = vmatprep.subr.mxu0 0.0
  %8666 = vmatpush1.msra.mxu0 0.0
  %8667 = vmatprep.subr.mxu0 0.0
  %8668 = vmatpush1.msra.mxu0 0.0
  %8669 = vmatprep.subr.mxu0 0.0
  %8670 = vmatpush1.msra.mxu0 0.0
  %8671 = vmatprep.subr.mxu0 0.0
  %8672 = vmatpush1.msra.mxu0 0.0
  %8673 = vmatprep.subr.mxu0 0.0
  %8674 = vmatpush1.msra.mxu0 0.0
  %8675 = vmatprep.subr.mxu0 0.0
  %8676 = vmatpush1.msra.mxu0 0.0
  %8677 = vmatprep.subr.mxu0 0.0
  %8678 = vmatpush1.msra.mxu0 0.0
  %8679 = vmatprep.subr.mxu0 0.0
  %8680 = vmatpush1.msra.mxu0 0.0
  %8681 = vmatprep.subr.mxu0 0.0
  %8682 = vmatpush1.msra.mxu0 0.0
  %8683 = vmatprep.subr.mxu0 0.0
  %8684 = vmatpush1.msra.mxu0 0.0
  %8685 = vmatprep.subr.mxu0 0.0
  %8686 = vmatpush1.msra.mxu0 0.0
  %8687 = vmatprep.subr.mxu0 0.0
  %8688 = vmatpush1.msra.mxu0 0.0
  %8689 = vmatprep.subr.mxu0 0.0
  %8690 = vmatpush1.msra.mxu0 0.0
  %8691 = vmatprep.subr.mxu0 0.0
  %8692 = vmatpush1.msra.mxu0 0.0
  %8693 = vmatprep.subr.mxu0 0.0
  %8694 = vmatpush1.msra.mxu0 0.0
  %8695 = vmatprep.subr.mxu0 0.0
  %8696 = vmatpush1.msra.mxu0 0.0
  %8697 = vmatprep.subr.mxu0 0.0
  %8698 = vmatpush1.msra.mxu0 0.0
  %8699 = vmatprep.subr.mxu0 0.0
  %8700 = vmatpush1.msra.mxu0 0.0
  %8701 = vmatprep.mubr.f32.mxu0 0.0
  %8702 = vmatmul.mubr.f32.gmra.mrb[0].mxu0 %v2133
  %v8703 = vpop.f32.mrb[0].mxu0
  %v8704 = vadd.f32 0.0, %v8703
  %v8705 = vpop.f32.mrb[0].mxu0
  %8706 = vmatprep.mubr.f32.mxu0 0.0
  %8707 = vmatmul.mubr.f32.gmra.mrb[0].mxu0 %v2136
  %v8708 = vpop.f32.mrb[0].mxu0
  %v8709 = vadd.f32 0.0, %v8708
  %v8710 = vpop.f32.mrb[0].mxu0
  %8711 = vmatprep.mubr.f32.mxu0 0.0
  %8712 = vmatmul.mubr.f32.gmra.mrb[0].mxu0 %v2139
  %v8713 = vpop.f32.mrb[0].mxu0
  %v8714 = vadd.f32 0.0, %v8713
  %v8715 = vpop.f32.mrb[0].mxu0
  %8716 = vmatprep.mubr.f32.mxu0 0.0
  %8717 = vmatmul.mubr.f32.gmra.mrb[0].mxu0 %v2142
  %v8718 = vpop.f32.mrb[0].mxu0
  %v8719 = vadd.f32 0.0, %v8718
  %v8720 = vpop.f32.mrb[0].mxu0
  %8721 = vdwg.mxu0
  %s8722 = scalar_lea.vmem %s3, 1568
  %8723 = vst.msk [vmem:[%s8722] sm:$0xff] %vm718, %v8704
  %8724 = vst.msk [vmem:[%s8722 + $0x8] sm:$0xff] %vm718, %v8709
  %8725 = vst.msk [vmem:[%s8722 + $0x10] sm:$0xff] %vm718, %v8714
  %8726 = vst.msk [vmem:[%s8722 + $0x18] sm:$0xff] %vm718, %v8719
  %8727 = vmatprep.subr.mxu0 0.0
  %8728 = vmatpush1.msra.mxu0 %v6693
  %8729 = vmatprep.subr.mxu0 0.0
  %8730 = vmatpush1.msra.mxu0 %v6829
  %8731 = vmatprep.subr.mxu0 0.0
  %8732 = vmatpush1.msra.mxu0 0.0
  %8733 = vmatprep.subr.mxu0 0.0
  %8734 = vmatpush1.msra.mxu0 0.0
  %8735 = vmatprep.subr.mxu0 0.0
  %8736 = vmatpush1.msra.mxu0 0.0
  %8737 = vmatprep.subr.mxu0 0.0
  %8738 = vmatpush1.msra.mxu0 0.0
  %8739 = vmatprep.subr.mxu0 0.0
  %8740 = vmatpush1.msra.mxu0 0.0
  %8741 = vmatprep.subr.mxu0 0.0
  %8742 = vmatpush1.msra.mxu0 0.0
  %8743 = vmatprep.subr.mxu0 0.0
  %8744 = vmatpush1.msra.mxu0 0.0
  %8745 = vmatprep.subr.mxu0 0.0
  %8746 = vmatpush1.msra.mxu0 0.0
  %8747 = vmatprep.subr.mxu0 0.0
  %8748 = vmatpush1.msra.mxu0 0.0
  %8749 = vmatprep.subr.mxu0 0.0
  %8750 = vmatpush1.msra.mxu0 0.0
  %8751 = vmatprep.subr.mxu0 0.0
  %8752 = vmatpush1.msra.mxu0 0.0
  %8753 = vmatprep.subr.mxu0 0.0
  %8754 = vmatpush1.msra.mxu0 0.0
  %8755 = vmatprep.subr.mxu0 0.0
  %8756 = vmatpush1.msra.mxu0 0.0
  %8757 = vmatprep.subr.mxu0 0.0
  %8758 = vmatpush1.msra.mxu0 0.0
  %8759 = vmatprep.subr.mxu0 0.0
  %8760 = vmatpush1.msra.mxu0 0.0
  %8761 = vmatprep.subr.mxu0 0.0
  %8762 = vmatpush1.msra.mxu0 0.0
  %8763 = vmatprep.subr.mxu0 0.0
  %8764 = vmatpush1.msra.mxu0 0.0
  %8765 = vmatprep.subr.mxu0 0.0
  %8766 = vmatpush1.msra.mxu0 0.0
  %8767 = vmatprep.subr.mxu0 0.0
  %8768 = vmatpush1.msra.mxu0 0.0
  %8769 = vmatprep.subr.mxu0 0.0
  %8770 = vmatpush1.msra.mxu0 0.0
  %8771 = vmatprep.subr.mxu0 0.0
  %8772 = vmatpush1.msra.mxu0 0.0
  %8773 = vmatprep.subr.mxu0 0.0
  %8774 = vmatpush1.msra.mxu0 0.0
  %8775 = vmatprep.subr.mxu0 0.0
  %8776 = vmatpush1.msra.mxu0 0.0
  %8777 = vmatprep.subr.mxu0 0.0
  %8778 = vmatpush1.msra.mxu0 0.0
  %8779 = vmatprep.subr.mxu0 0.0
  %8780 = vmatpush1.msra.mxu0 0.0
  %8781 = vmatprep.subr.mxu0 0.0
  %8782 = vmatpush1.msra.mxu0 0.0
  %8783 = vmatprep.subr.mxu0 0.0
  %8784 = vmatpush1.msra.mxu0 0.0
  %8785 = vmatprep.subr.mxu0 0.0
  %8786 = vmatpush1.msra.mxu0 0.0
  %8787 = vmatprep.subr.mxu0 0.0
  %8788 = vmatpush1.msra.mxu0 0.0
  %8789 = vmatprep.subr.mxu0 0.0
  %8790 = vmatpush1.msra.mxu0 0.0
  %8791 = vmatprep.mubr.f32.mxu0 0.0
  %8792 = vmatmul.mubr.f32.gmra.mrb[0].mxu0 %v2133
  %v8793 = vpop.f32.mrb[0].mxu0
  %v8794 = vadd.f32 0.0, %v8793
  %v8795 = vpop.f32.mrb[0].mxu0
  %8796 = vmatprep.mubr.f32.mxu0 0.0
  %8797 = vmatmul.mubr.f32.gmra.mrb[0].mxu0 %v2136
  %v8798 = vpop.f32.mrb[0].mxu0
  %v8799 = vadd.f32 0.0, %v8798
  %v8800 = vpop.f32.mrb[0].mxu0
  %8801 = vmatprep.mubr.f32.mxu0 0.0
  %8802 = vmatmul.mubr.f32.gmra.mrb[0].mxu0 %v2139
  %v8803 = vpop.f32.mrb[0].mxu0
  %v8804 = vadd.f32 0.0, %v8803
  %v8805 = vpop.f32.mrb[0].mxu0
  %8806 = vmatprep.mubr.f32.mxu0 0.0
  %8807 = vmatmul.mubr.f32.gmra.mrb[0].mxu0 %v2142
  %v8808 = vpop.f32.mrb[0].mxu0
  %v8809 = vadd.f32 0.0, %v8808
  %v8810 = vpop.f32.mrb[0].mxu0
  %8811 = vdwg.mxu0
  %s8812 = scalar_lea.vmem %s3, 1600
  %8813 = vst.msk [vmem:[%s8812] sm:$0xff] %vm718, %v8794
  %8814 = vst.msk [vmem:[%s8812 + $0x8] sm:$0xff] %vm718, %v8799
  %8815 = vst.msk [vmem:[%s8812 + $0x10] sm:$0xff] %vm718, %v8804
  %8816 = vst.msk [vmem:[%s8812 + $0x18] sm:$0xff] %vm718, %v8809
  %8817 = vmatprep.subr.mxu0 0.0
  %8818 = vmatpush1.msra.mxu0 %v6694
  %8819 = vmatprep.subr.mxu0 0.0
  %8820 = vmatpush1.msra.mxu0 %v6830
  %8821 = vmatprep.subr.mxu0 0.0
  %8822 = vmatpush1.msra.mxu0 0.0
  %8823 = vmatprep.subr.mxu0 0.0
  %8824 = vmatpush1.msra.mxu0 0.0
  %8825 = vmatprep.subr.mxu0 0.0
  %8826 = vmatpush1.msra.mxu0 0.0
  %8827 = vmatprep.subr.mxu0 0.0
  %8828 = vmatpush1.msra.mxu0 0.0
  %8829 = vmatprep.subr.mxu0 0.0
  %8830 = vmatpush1.msra.mxu0 0.0
  %8831 = vmatprep.subr.mxu0 0.0
  %8832 = vmatpush1.msra.mxu0 0.0
  %8833 = vmatprep.subr.mxu0 0.0
  %8834 = vmatpush1.msra.mxu0 0.0
  %8835 = vmatprep.subr.mxu0 0.0
  %8836 = vmatpush1.msra.mxu0 0.0
  %8837 = vmatprep.subr.mxu0 0.0
  %8838 = vmatpush1.msra.mxu0 0.0
  %8839 = vmatprep.subr.mxu0 0.0
  %8840 = vmatpush1.msra.mxu0 0.0
  %8841 = vmatprep.subr.mxu0 0.0
  %8842 = vmatpush1.msra.mxu0 0.0
  %8843 = vmatprep.subr.mxu0 0.0
  %8844 = vmatpush1.msra.mxu0 0.0
  %8845 = vmatprep.subr.mxu0 0.0
  %8846 = vmatpush1.msra.mxu0 0.0
  %8847 = vmatprep.subr.mxu0 0.0
  %8848 = vmatpush1.msra.mxu0 0.0
  %8849 = vmatprep.subr.mxu0 0.0
  %8850 = vmatpush1.msra.mxu0 0.0
  %8851 = vmatprep.subr.mxu0 0.0
  %8852 = vmatpush1.msra.mxu0 0.0
  %8853 = vmatprep.subr.mxu0 0.0
  %8854 = vmatpush1.msra.mxu0 0.0
  %8855 = vmatprep.subr.mxu0 0.0
  %8856 = vmatpush1.msra.mxu0 0.0
  %8857 = vmatprep.subr.mxu0 0.0
  %8858 = vmatpush1.msra.mxu0 0.0
  %8859 = vmatprep.subr.mxu0 0.0
  %8860 = vmatpush1.msra.mxu0 0.0
  %8861 = vmatprep.subr.mxu0 0.0
  %8862 = vmatpush1.msra.mxu0 0.0
  %8863 = vmatprep.subr.mxu0 0.0
  %8864 = vmatpush1.msra.mxu0 0.0
  %8865 = vmatprep.subr.mxu0 0.0
  %8866 = vmatpush1.msra.mxu0 0.0
  %8867 = vmatprep.subr.mxu0 0.0
  %8868 = vmatpush1.msra.mxu0 0.0
  %8869 = vmatprep.subr.mxu0 0.0
  %8870 = vmatpush1.msra.mxu0 0.0
  %8871 = vmatprep.subr.mxu0 0.0
  %8872 = vmatpush1.msra.mxu0 0.0
  %8873 = vmatprep.subr.mxu0 0.0
  %8874 = vmatpush1.msra.mxu0 0.0
  %8875 = vmatprep.subr.mxu0 0.0
  %8876 = vmatpush1.msra.mxu0 0.0
  %8877 = vmatprep.subr.mxu0 0.0
  %8878 = vmatpush1.msra.mxu0 0.0
  %8879 = vmatprep.subr.mxu0 0.0
  %8880 = vmatpush1.msra.mxu0 0.0
  %8881 = vmatprep.mubr.f32.mxu0 0.0
  %8882 = vmatmul.mubr.f32.gmra.mrb[0].mxu0 %v2133
  %v8883 = vpop.f32.mrb[0].mxu0
  %v8884 = vadd.f32 0.0, %v8883
  %v8885 = vpop.f32.mrb[0].mxu0
  %8886 = vmatprep.mubr.f32.mxu0 0.0
  %8887 = vmatmul.mubr.f32.gmra.mrb[0].mxu0 %v2136
  %v8888 = vpop.f32.mrb[0].mxu0
  %v8889 = vadd.f32 0.0, %v8888
  %v8890 = vpop.f32.mrb[0].mxu0
  %8891 = vmatprep.mubr.f32.mxu0 0.0
  %8892 = vmatmul.mubr.f32.gmra.mrb[0].mxu0 %v2139
  %v8893 = vpop.f32.mrb[0].mxu0
  %v8894 = vadd.f32 0.0, %v8893
  %v8895 = vpop.f32.mrb[0].mxu0
  %8896 = vmatprep.mubr.f32.mxu0 0.0
  %8897 = vmatmul.mubr.f32.gmra.mrb[0].mxu0 %v2142
  %v8898 = vpop.f32.mrb[0].mxu0
  %v8899 = vadd.f32 0.0, %v8898
  %v8900 = vpop.f32.mrb[0].mxu0
  %8901 = vdwg.mxu0
  %s8902 = scalar_lea.vmem %s3, 1632
  %8903 = vst.msk [vmem:[%s8902] sm:$0xff] %vm718, %v8884
  %8904 = vst.msk [vmem:[%s8902 + $0x8] sm:$0xff] %vm718, %v8889
  %8905 = vst.msk [vmem:[%s8902 + $0x10] sm:$0xff] %vm718, %v8894
  %8906 = vst.msk [vmem:[%s8902 + $0x18] sm:$0xff] %vm718, %v8899
  %8907 = vmatprep.subr.mxu0 0.0
  %8908 = vmatpush1.msra.mxu0 %v6695
  %8909 = vmatprep.subr.mxu0 0.0
  %8910 = vmatpush1.msra.mxu0 %v6831
  %8911 = vmatprep.subr.mxu0 0.0
  %8912 = vmatpush1.msra.mxu0 0.0
  %8913 = vmatprep.subr.mxu0 0.0
  %8914 = vmatpush1.msra.mxu0 0.0
  %8915 = vmatprep.subr.mxu0 0.0
  %8916 = vmatpush1.msra.mxu0 0.0
  %8917 = vmatprep.subr.mxu0 0.0
  %8918 = vmatpush1.msra.mxu0 0.0
  %8919 = vmatprep.subr.mxu0 0.0
  %8920 = vmatpush1.msra.mxu0 0.0
  %8921 = vmatprep.subr.mxu0 0.0
  %8922 = vmatpush1.msra.mxu0 0.0
  %8923 = vmatprep.subr.mxu0 0.0
  %8924 = vmatpush1.msra.mxu0 0.0
  %8925 = vmatprep.subr.mxu0 0.0
  %8926 = vmatpush1.msra.mxu0 0.0
  %8927 = vmatprep.subr.mxu0 0.0
  %8928 = vmatpush1.msra.mxu0 0.0
  %8929 = vmatprep.subr.mxu0 0.0
  %8930 = vmatpush1.msra.mxu0 0.0
  %8931 = vmatprep.subr.mxu0 0.0
  %8932 = vmatpush1.msra.mxu0 0.0
  %8933 = vmatprep.subr.mxu0 0.0
  %8934 = vmatpush1.msra.mxu0 0.0
  %8935 = vmatprep.subr.mxu0 0.0
  %8936 = vmatpush1.msra.mxu0 0.0
  %8937 = vmatprep.subr.mxu0 0.0
  %8938 = vmatpush1.msra.mxu0 0.0
  %8939 = vmatprep.subr.mxu0 0.0
  %8940 = vmatpush1.msra.mxu0 0.0
  %8941 = vmatprep.subr.mxu0 0.0
  %8942 = vmatpush1.msra.mxu0 0.0
  %8943 = vmatprep.subr.mxu0 0.0
  %8944 = vmatpush1.msra.mxu0 0.0
  %8945 = vmatprep.subr.mxu0 0.0
  %8946 = vmatpush1.msra.mxu0 0.0
  %8947 = vmatprep.subr.mxu0 0.0
  %8948 = vmatpush1.msra.mxu0 0.0
  %8949 = vmatprep.subr.mxu0 0.0
  %8950 = vmatpush1.msra.mxu0 0.0
  %8951 = vmatprep.subr.mxu0 0.0
  %8952 = vmatpush1.msra.mxu0 0.0
  %8953 = vmatprep.subr.mxu0 0.0
  %8954 = vmatpush1.msra.mxu0 0.0
  %8955 = vmatprep.subr.mxu0 0.0
  %8956 = vmatpush1.msra.mxu0 0.0
  %8957 = vmatprep.subr.mxu0 0.0
  %8958 = vmatpush1.msra.mxu0 0.0
  %8959 = vmatprep.subr.mxu0 0.0
  %8960 = vmatpush1.msra.mxu0 0.0
  %8961 = vmatprep.subr.mxu0 0.0
  %8962 = vmatpush1.msra.mxu0 0.0
  %8963 = vmatprep.subr.mxu0 0.0
  %8964 = vmatpush1.msra.mxu0 0.0
  %8965 = vmatprep.subr.mxu0 0.0
  %8966 = vmatpush1.msra.mxu0 0.0
  %8967 = vmatprep.subr.mxu0 0.0
  %8968 = vmatpush1.msra.mxu0 0.0
  %8969 = vmatprep.subr.mxu0 0.0
  %8970 = vmatpush1.msra.mxu0 0.0
  %8971 = vmatprep.mubr.f32.mxu0 0.0
  %8972 = vmatmul.mubr.f32.gmra.mrb[0].mxu0 %v2133
  %v8973 = vpop.f32.mrb[0].mxu0
  %v8974 = vadd.f32 0.0, %v8973
  %v8975 = vpop.f32.mrb[0].mxu0
  %8976 = vmatprep.mubr.f32.mxu0 0.0
  %8977 = vmatmul.mubr.f32.gmra.mrb[0].mxu0 %v2136
  %v8978 = vpop.f32.mrb[0].mxu0
  %v8979 = vadd.f32 0.0, %v8978
  %v8980 = vpop.f32.mrb[0].mxu0
  %8981 = vmatprep.mubr.f32.mxu0 0.0
  %8982 = vmatmul.mubr.f32.gmra.mrb[0].mxu0 %v2139
  %v8983 = vpop.f32.mrb[0].mxu0
  %v8984 = vadd.f32 0.0, %v8983
  %v8985 = vpop.f32.mrb[0].mxu0
  %8986 = vmatprep.mubr.f32.mxu0 0.0
  %8987 = vmatmul.mubr.f32.gmra.mrb[0].mxu0 %v2142
  %v8988 = vpop.f32.mrb[0].mxu0
  %v8989 = vadd.f32 0.0, %v8988
  %v8990 = vpop.f32.mrb[0].mxu0
  %8991 = vdwg.mxu0
  %s8992 = scalar_lea.vmem %s3, 1664
  %8993 = vst.msk [vmem:[%s8992] sm:$0xff] %vm718, %v8974
  %8994 = vst.msk [vmem:[%s8992 + $0x8] sm:$0xff] %vm718, %v8979
  %8995 = vst.msk [vmem:[%s8992 + $0x10] sm:$0xff] %vm718, %v8984
  %8996 = vst.msk [vmem:[%s8992 + $0x18] sm:$0xff] %vm718, %v8989
  %8997 = vmatprep.subr.mxu0 0.0
  %8998 = vmatpush1.msra.mxu0 %v6696
  %8999 = vmatprep.subr.mxu0 0.0
  %9000 = vmatpush1.msra.mxu0 %v6832
  %9001 = vmatprep.subr.mxu0 0.0
  %9002 = vmatpush1.msra.mxu0 0.0
  %9003 = vmatprep.subr.mxu0 0.0
  %9004 = vmatpush1.msra.mxu0 0.0
  %9005 = vmatprep.subr.mxu0 0.0
  %9006 = vmatpush1.msra.mxu0 0.0
  %9007 = vmatprep.subr.mxu0 0.0
  %9008 = vmatpush1.msra.mxu0 0.0
  %9009 = vmatprep.subr.mxu0 0.0
  %9010 = vmatpush1.msra.mxu0 0.0
  %9011 = vmatprep.subr.mxu0 0.0
  %9012 = vmatpush1.msra.mxu0 0.0
  %9013 = vmatprep.subr.mxu0 0.0
  %9014 = vmatpush1.msra.mxu0 0.0
  %9015 = vmatprep.subr.mxu0 0.0
  %9016 = vmatpush1.msra.mxu0 0.0
  %9017 = vmatprep.subr.mxu0 0.0
  %9018 = vmatpush1.msra.mxu0 0.0
  %9019 = vmatprep.subr.mxu0 0.0
  %9020 = vmatpush1.msra.mxu0 0.0
  %9021 = vmatprep.subr.mxu0 0.0
  %9022 = vmatpush1.msra.mxu0 0.0
  %9023 = vmatprep.subr.mxu0 0.0
  %9024 = vmatpush1.msra.mxu0 0.0
  %9025 = vmatprep.subr.mxu0 0.0
  %9026 = vmatpush1.msra.mxu0 0.0
  %9027 = vmatprep.subr.mxu0 0.0
  %9028 = vmatpush1.msra.mxu0 0.0
  %9029 = vmatprep.subr.mxu0 0.0
  %9030 = vmatpush1.msra.mxu0 0.0
  %9031 = vmatprep.subr.mxu0 0.0
  %9032 = vmatpush1.msra.mxu0 0.0
  %9033 = vmatprep.subr.mxu0 0.0
  %9034 = vmatpush1.msra.mxu0 0.0
  %9035 = vmatprep.subr.mxu0 0.0
  %9036 = vmatpush1.msra.mxu0 0.0
  %9037 = vmatprep.subr.mxu0 0.0
  %9038 = vmatpush1.msra.mxu0 0.0
  %9039 = vmatprep.subr.mxu0 0.0
  %9040 = vmatpush1.msra.mxu0 0.0
  %9041 = vmatprep.subr.mxu0 0.0
  %9042 = vmatpush1.msra.mxu0 0.0
  %9043 = vmatprep.subr.mxu0 0.0
  %9044 = vmatpush1.msra.mxu0 0.0
  %9045 = vmatprep.subr.mxu0 0.0
  %9046 = vmatpush1.msra.mxu0 0.0
  %9047 = vmatprep.subr.mxu0 0.0
  %9048 = vmatpush1.msra.mxu0 0.0
  %9049 = vmatprep.subr.mxu0 0.0
  %9050 = vmatpush1.msra.mxu0 0.0
  %9051 = vmatprep.subr.mxu0 0.0
  %9052 = vmatpush1.msra.mxu0 0.0
  %9053 = vmatprep.subr.mxu0 0.0
  %9054 = vmatpush1.msra.mxu0 0.0
  %9055 = vmatprep.subr.mxu0 0.0
  %9056 = vmatpush1.msra.mxu0 0.0
  %9057 = vmatprep.subr.mxu0 0.0
  %9058 = vmatpush1.msra.mxu0 0.0
  %9059 = vmatprep.subr.mxu0 0.0
  %9060 = vmatpush1.msra.mxu0 0.0
  %9061 = vmatprep.mubr.f32.mxu0 0.0
  %9062 = vmatmul.mubr.f32.gmra.mrb[0].mxu0 %v2133
  %v9063 = vpop.f32.mrb[0].mxu0
  %v9064 = vadd.f32 0.0, %v9063
  %v9065 = vpop.f32.mrb[0].mxu0
  %9066 = vmatprep.mubr.f32.mxu0 0.0
  %9067 = vmatmul.mubr.f32.gmra.mrb[0].mxu0 %v2136
  %v9068 = vpop.f32.mrb[0].mxu0
  %v9069 = vadd.f32 0.0, %v9068
  %v9070 = vpop.f32.mrb[0].mxu0
  %9071 = vmatprep.mubr.f32.mxu0 0.0
  %9072 = vmatmul.mubr.f32.gmra.mrb[0].mxu0 %v2139
  %v9073 = vpop.f32.mrb[0].mxu0
  %v9074 = vadd.f32 0.0, %v9073
  %v9075 = vpop.f32.mrb[0].mxu0
  %9076 = vmatprep.mubr.f32.mxu0 0.0
  %9077 = vmatmul.mubr.f32.gmra.mrb[0].mxu0 %v2142
  %v9078 = vpop.f32.mrb[0].mxu0
  %v9079 = vadd.f32 0.0, %v9078
  %v9080 = vpop.f32.mrb[0].mxu0
  %9081 = vdwg.mxu0
  %s9082 = scalar_lea.vmem %s3, 1696
  %9083 = vst.msk [vmem:[%s9082] sm:$0xff] %vm718, %v9064
  %9084 = vst.msk [vmem:[%s9082 + $0x8] sm:$0xff] %vm718, %v9069
  %9085 = vst.msk [vmem:[%s9082 + $0x10] sm:$0xff] %vm718, %v9074
  %9086 = vst.msk [vmem:[%s9082 + $0x18] sm:$0xff] %vm718, %v9079
  %9087 = vmatprep.subr.mxu0 0.0
  %9088 = vmatpush1.msra.mxu0 %v6697
  %9089 = vmatprep.subr.mxu0 0.0
  %9090 = vmatpush1.msra.mxu0 %v6833
  %9091 = vmatprep.subr.mxu0 0.0
  %9092 = vmatpush1.msra.mxu0 0.0
  %9093 = vmatprep.subr.mxu0 0.0
  %9094 = vmatpush1.msra.mxu0 0.0
  %9095 = vmatprep.subr.mxu0 0.0
  %9096 = vmatpush1.msra.mxu0 0.0
  %9097 = vmatprep.subr.mxu0 0.0
  %9098 = vmatpush1.msra.mxu0 0.0
  %9099 = vmatprep.subr.mxu0 0.0
  %9100 = vmatpush1.msra.mxu0 0.0
  %9101 = vmatprep.subr.mxu0 0.0
  %9102 = vmatpush1.msra.mxu0 0.0
  %9103 = vmatprep.subr.mxu0 0.0
  %9104 = vmatpush1.msra.mxu0 0.0
  %9105 = vmatprep.subr.mxu0 0.0
  %9106 = vmatpush1.msra.mxu0 0.0
  %9107 = vmatprep.subr.mxu0 0.0
  %9108 = vmatpush1.msra.mxu0 0.0
  %9109 = vmatprep.subr.mxu0 0.0
  %9110 = vmatpush1.msra.mxu0 0.0
  %9111 = vmatprep.subr.mxu0 0.0
  %9112 = vmatpush1.msra.mxu0 0.0
  %9113 = vmatprep.subr.mxu0 0.0
  %9114 = vmatpush1.msra.mxu0 0.0
  %9115 = vmatprep.subr.mxu0 0.0
  %9116 = vmatpush1.msra.mxu0 0.0
  %9117 = vmatprep.subr.mxu0 0.0
  %9118 = vmatpush1.msra.mxu0 0.0
  %9119 = vmatprep.subr.mxu0 0.0
  %9120 = vmatpush1.msra.mxu0 0.0
  %9121 = vmatprep.subr.mxu0 0.0
  %9122 = vmatpush1.msra.mxu0 0.0
  %9123 = vmatprep.subr.mxu0 0.0
  %9124 = vmatpush1.msra.mxu0 0.0
  %9125 = vmatprep.subr.mxu0 0.0
  %9126 = vmatpush1.msra.mxu0 0.0
  %9127 = vmatprep.subr.mxu0 0.0
  %9128 = vmatpush1.msra.mxu0 0.0
  %9129 = vmatprep.subr.mxu0 0.0
  %9130 = vmatpush1.msra.mxu0 0.0
  %9131 = vmatprep.subr.mxu0 0.0
  %9132 = vmatpush1.msra.mxu0 0.0
  %9133 = vmatprep.subr.mxu0 0.0
  %9134 = vmatpush1.msra.mxu0 0.0
  %9135 = vmatprep.subr.mxu0 0.0
  %9136 = vmatpush1.msra.mxu0 0.0
  %9137 = vmatprep.subr.mxu0 0.0
  %9138 = vmatpush1.msra.mxu0 0.0
  %9139 = vmatprep.subr.mxu0 0.0
  %9140 = vmatpush1.msra.mxu0 0.0
  %9141 = vmatprep.subr.mxu0 0.0
  %9142 = vmatpush1.msra.mxu0 0.0
  %9143 = vmatprep.subr.mxu0 0.0
  %9144 = vmatpush1.msra.mxu0 0.0
  %9145 = vmatprep.subr.mxu0 0.0
  %9146 = vmatpush1.msra.mxu0 0.0
  %9147 = vmatprep.subr.mxu0 0.0
  %9148 = vmatpush1.msra.mxu0 0.0
  %9149 = vmatprep.subr.mxu0 0.0
  %9150 = vmatpush1.msra.mxu0 0.0
  %9151 = vmatprep.mubr.f32.mxu0 0.0
  %9152 = vmatmul.mubr.f32.gmra.mrb[0].mxu0 %v2133
  %v9153 = vpop.f32.mrb[0].mxu0
  %v9154 = vadd.f32 0.0, %v9153
  %v9155 = vpop.f32.mrb[0].mxu0
  %9156 = vmatprep.mubr.f32.mxu0 0.0
  %9157 = vmatmul.mubr.f32.gmra.mrb[0].mxu0 %v2136
  %v9158 = vpop.f32.mrb[0].mxu0
  %v9159 = vadd.f32 0.0, %v9158
  %v9160 = vpop.f32.mrb[0].mxu0
  %9161 = vmatprep.mubr.f32.mxu0 0.0
  %9162 = vmatmul.mubr.f32.gmra.mrb[0].mxu0 %v2139
  %v9163 = vpop.f32.mrb[0].mxu0
  %v9164 = vadd.f32 0.0, %v9163
  %v9165 = vpop.f32.mrb[0].mxu0
  %9166 = vmatprep.mubr.f32.mxu0 0.0
  %9167 = vmatmul.mubr.f32.gmra.mrb[0].mxu0 %v2142
  %v9168 = vpop.f32.mrb[0].mxu0
  %v9169 = vadd.f32 0.0, %v9168
  %v9170 = vpop.f32.mrb[0].mxu0
  %9171 = vdwg.mxu0
  %s9172 = scalar_lea.vmem %s3, 1728
  %9173 = vst.msk [vmem:[%s9172] sm:$0xff] %vm718, %v9154
  %9174 = vst.msk [vmem:[%s9172 + $0x8] sm:$0xff] %vm718, %v9159
  %9175 = vst.msk [vmem:[%s9172 + $0x10] sm:$0xff] %vm718, %v9164
  %9176 = vst.msk [vmem:[%s9172 + $0x18] sm:$0xff] %vm718, %v9169
  %9177 = vmatprep.subr.mxu0 0.0
  %9178 = vmatpush1.msra.mxu0 %v6698
  %9179 = vmatprep.subr.mxu0 0.0
  %9180 = vmatpush1.msra.mxu0 %v6834
  %9181 = vmatprep.subr.mxu0 0.0
  %9182 = vmatpush1.msra.mxu0 0.0
  %9183 = vmatprep.subr.mxu0 0.0
  %9184 = vmatpush1.msra.mxu0 0.0
  %9185 = vmatprep.subr.mxu0 0.0
  %9186 = vmatpush1.msra.mxu0 0.0
  %9187 = vmatprep.subr.mxu0 0.0
  %9188 = vmatpush1.msra.mxu0 0.0
  %9189 = vmatprep.subr.mxu0 0.0
  %9190 = vmatpush1.msra.mxu0 0.0
  %9191 = vmatprep.subr.mxu0 0.0
  %9192 = vmatpush1.msra.mxu0 0.0
  %9193 = vmatprep.subr.mxu0 0.0
  %9194 = vmatpush1.msra.mxu0 0.0
  %9195 = vmatprep.subr.mxu0 0.0
  %9196 = vmatpush1.msra.mxu0 0.0
  %9197 = vmatprep.subr.mxu0 0.0
  %9198 = vmatpush1.msra.mxu0 0.0
  %9199 = vmatprep.subr.mxu0 0.0
  %9200 = vmatpush1.msra.mxu0 0.0
  %9201 = vmatprep.subr.mxu0 0.0
  %9202 = vmatpush1.msra.mxu0 0.0
  %9203 = vmatprep.subr.mxu0 0.0
  %9204 = vmatpush1.msra.mxu0 0.0
  %9205 = vmatprep.subr.mxu0 0.0
  %9206 = vmatpush1.msra.mxu0 0.0
  %9207 = vmatprep.subr.mxu0 0.0
  %9208 = vmatpush1.msra.mxu0 0.0
  %9209 = vmatprep.subr.mxu0 0.0
  %9210 = vmatpush1.msra.mxu0 0.0
  %9211 = vmatprep.subr.mxu0 0.0
  %9212 = vmatpush1.msra.mxu0 0.0
  %9213 = vmatprep.subr.mxu0 0.0
  %9214 = vmatpush1.msra.mxu0 0.0
  %9215 = vmatprep.subr.mxu0 0.0
  %9216 = vmatpush1.msra.mxu0 0.0
  %9217 = vmatprep.subr.mxu0 0.0
  %9218 = vmatpush1.msra.mxu0 0.0
  %9219 = vmatprep.subr.mxu0 0.0
  %9220 = vmatpush1.msra.mxu0 0.0
  %9221 = vmatprep.subr.mxu0 0.0
  %9222 = vmatpush1.msra.mxu0 0.0
  %9223 = vmatprep.subr.mxu0 0.0
  %9224 = vmatpush1.msra.mxu0 0.0
  %9225 = vmatprep.subr.mxu0 0.0
  %9226 = vmatpush1.msra.mxu0 0.0
  %9227 = vmatprep.subr.mxu0 0.0
  %9228 = vmatpush1.msra.mxu0 0.0
  %9229 = vmatprep.subr.mxu0 0.0
  %9230 = vmatpush1.msra.mxu0 0.0
  %9231 = vmatprep.subr.mxu0 0.0
  %9232 = vmatpush1.msra.mxu0 0.0
  %9233 = vmatprep.subr.mxu0 0.0
  %9234 = vmatpush1.msra.mxu0 0.0
  %9235 = vmatprep.subr.mxu0 0.0
  %9236 = vmatpush1.msra.mxu0 0.0
  %9237 = vmatprep.subr.mxu0 0.0
  %9238 = vmatpush1.msra.mxu0 0.0
  %9239 = vmatprep.subr.mxu0 0.0
  %9240 = vmatpush1.msra.mxu0 0.0
  %9241 = vmatprep.mubr.f32.mxu0 0.0
  %9242 = vmatmul.mubr.f32.gmra.mrb[0].mxu0 %v2133
  %v9243 = vpop.f32.mrb[0].mxu0
  %v9244 = vadd.f32 0.0, %v9243
  %v9245 = vpop.f32.mrb[0].mxu0
  %9246 = vmatprep.mubr.f32.mxu0 0.0
  %9247 = vmatmul.mubr.f32.gmra.mrb[0].mxu0 %v2136
  %v9248 = vpop.f32.mrb[0].mxu0
  %v9249 = vadd.f32 0.0, %v9248
  %v9250 = vpop.f32.mrb[0].mxu0
  %9251 = vmatprep.mubr.f32.mxu0 0.0
  %9252 = vmatmul.mubr.f32.gmra.mrb[0].mxu0 %v2139
  %v9253 = vpop.f32.mrb[0].mxu0
  %v9254 = vadd.f32 0.0, %v9253
  %v9255 = vpop.f32.mrb[0].mxu0
  %9256 = vmatprep.mubr.f32.mxu0 0.0
  %9257 = vmatmul.mubr.f32.gmra.mrb[0].mxu0 %v2142
  %v9258 = vpop.f32.mrb[0].mxu0
  %v9259 = vadd.f32 0.0, %v9258
  %v9260 = vpop.f32.mrb[0].mxu0
  %9261 = vdwg.mxu0
  %s9262 = scalar_lea.vmem %s3, 1760
  %9263 = vst.msk [vmem:[%s9262] sm:$0xff] %vm718, %v9244
  %9264 = vst.msk [vmem:[%s9262 + $0x8] sm:$0xff] %vm718, %v9249
  %9265 = vst.msk [vmem:[%s9262 + $0x10] sm:$0xff] %vm718, %v9254
  %9266 = vst.msk [vmem:[%s9262 + $0x18] sm:$0xff] %vm718, %v9259
  %9267 = vmatprep.subr.mxu0 0.0
  %9268 = vmatpush1.msra.mxu0 %v6963
  %9269 = vmatprep.subr.mxu0 0.0
  %9270 = vmatpush1.msra.mxu0 %v7099
  %9271 = vmatprep.subr.mxu0 0.0
  %9272 = vmatpush1.msra.mxu0 0.0
  %9273 = vmatprep.subr.mxu0 0.0
  %9274 = vmatpush1.msra.mxu0 0.0
  %9275 = vmatprep.subr.mxu0 0.0
  %9276 = vmatpush1.msra.mxu0 0.0
  %9277 = vmatprep.subr.mxu0 0.0
  %9278 = vmatpush1.msra.mxu0 0.0
  %9279 = vmatprep.subr.mxu0 0.0
  %9280 = vmatpush1.msra.mxu0 0.0
  %9281 = vmatprep.subr.mxu0 0.0
  %9282 = vmatpush1.msra.mxu0 0.0
  %9283 = vmatprep.subr.mxu0 0.0
  %9284 = vmatpush1.msra.mxu0 0.0
  %9285 = vmatprep.subr.mxu0 0.0
  %9286 = vmatpush1.msra.mxu0 0.0
  %9287 = vmatprep.subr.mxu0 0.0
  %9288 = vmatpush1.msra.mxu0 0.0
  %9289 = vmatprep.subr.mxu0 0.0
  %9290 = vmatpush1.msra.mxu0 0.0
  %9291 = vmatprep.subr.mxu0 0.0
  %9292 = vmatpush1.msra.mxu0 0.0
  %9293 = vmatprep.subr.mxu0 0.0
  %9294 = vmatpush1.msra.mxu0 0.0
  %9295 = vmatprep.subr.mxu0 0.0
  %9296 = vmatpush1.msra.mxu0 0.0
  %9297 = vmatprep.subr.mxu0 0.0
  %9298 = vmatpush1.msra.mxu0 0.0
  %9299 = vmatprep.subr.mxu0 0.0
  %9300 = vmatpush1.msra.mxu0 0.0
  %9301 = vmatprep.subr.mxu0 0.0
  %9302 = vmatpush1.msra.mxu0 0.0
  %9303 = vmatprep.subr.mxu0 0.0
  %9304 = vmatpush1.msra.mxu0 0.0
  %9305 = vmatprep.subr.mxu0 0.0
  %9306 = vmatpush1.msra.mxu0 0.0
  %9307 = vmatprep.subr.mxu0 0.0
  %9308 = vmatpush1.msra.mxu0 0.0
  %9309 = vmatprep.subr.mxu0 0.0
  %9310 = vmatpush1.msra.mxu0 0.0
  %9311 = vmatprep.subr.mxu0 0.0
  %9312 = vmatpush1.msra.mxu0 0.0
  %9313 = vmatprep.subr.mxu0 0.0
  %9314 = vmatpush1.msra.mxu0 0.0
  %9315 = vmatprep.subr.mxu0 0.0
  %9316 = vmatpush1.msra.mxu0 0.0
  %9317 = vmatprep.subr.mxu0 0.0
  %9318 = vmatpush1.msra.mxu0 0.0
  %9319 = vmatprep.subr.mxu0 0.0
  %9320 = vmatpush1.msra.mxu0 0.0
  %9321 = vmatprep.subr.mxu0 0.0
  %9322 = vmatpush1.msra.mxu0 0.0
  %9323 = vmatprep.subr.mxu0 0.0
  %9324 = vmatpush1.msra.mxu0 0.0
  %9325 = vmatprep.subr.mxu0 0.0
  %9326 = vmatpush1.msra.mxu0 0.0
  %9327 = vmatprep.subr.mxu0 0.0
  %9328 = vmatpush1.msra.mxu0 0.0
  %9329 = vmatprep.subr.mxu0 0.0
  %9330 = vmatpush1.msra.mxu0 0.0
  %9331 = vmatprep.mubr.f32.mxu0 0.0
  %9332 = vmatmul.mubr.f32.gmra.mrb[0].mxu0 %v2133
  %v9333 = vpop.f32.mrb[0].mxu0
  %v9334 = vadd.f32 0.0, %v9333
  %v9335 = vpop.f32.mrb[0].mxu0
  %9336 = vmatprep.mubr.f32.mxu0 0.0
  %9337 = vmatmul.mubr.f32.gmra.mrb[0].mxu0 %v2136
  %v9338 = vpop.f32.mrb[0].mxu0
  %v9339 = vadd.f32 0.0, %v9338
  %v9340 = vpop.f32.mrb[0].mxu0
  %9341 = vmatprep.mubr.f32.mxu0 0.0
  %9342 = vmatmul.mubr.f32.gmra.mrb[0].mxu0 %v2139
  %v9343 = vpop.f32.mrb[0].mxu0
  %v9344 = vadd.f32 0.0, %v9343
  %v9345 = vpop.f32.mrb[0].mxu0
  %9346 = vmatprep.mubr.f32.mxu0 0.0
  %9347 = vmatmul.mubr.f32.gmra.mrb[0].mxu0 %v2142
  %v9348 = vpop.f32.mrb[0].mxu0
  %v9349 = vadd.f32 0.0, %v9348
  %v9350 = vpop.f32.mrb[0].mxu0
  %9351 = vdwg.mxu0
  %s9352 = scalar_lea.vmem %s3, 1792
  %9353 = vst.msk [vmem:[%s9352] sm:$0xff] %vm718, %v9334
  %9354 = vst.msk [vmem:[%s9352 + $0x8] sm:$0xff] %vm718, %v9339
  %9355 = vst.msk [vmem:[%s9352 + $0x10] sm:$0xff] %vm718, %v9344
  %9356 = vst.msk [vmem:[%s9352 + $0x18] sm:$0xff] %vm718, %v9349
  %9357 = vmatprep.subr.mxu0 0.0
  %9358 = vmatpush1.msra.mxu0 %v6964
  %9359 = vmatprep.subr.mxu0 0.0
  %9360 = vmatpush1.msra.mxu0 %v7100
  %9361 = vmatprep.subr.mxu0 0.0
  %9362 = vmatpush1.msra.mxu0 0.0
  %9363 = vmatprep.subr.mxu0 0.0
  %9364 = vmatpush1.msra.mxu0 0.0
  %9365 = vmatprep.subr.mxu0 0.0
  %9366 = vmatpush1.msra.mxu0 0.0
  %9367 = vmatprep.subr.mxu0 0.0
  %9368 = vmatpush1.msra.mxu0 0.0
  %9369 = vmatprep.subr.mxu0 0.0
  %9370 = vmatpush1.msra.mxu0 0.0
  %9371 = vmatprep.subr.mxu0 0.0
  %9372 = vmatpush1.msra.mxu0 0.0
  %9373 = vmatprep.subr.mxu0 0.0
  %9374 = vmatpush1.msra.mxu0 0.0
  %9375 = vmatprep.subr.mxu0 0.0
  %9376 = vmatpush1.msra.mxu0 0.0
  %9377 = vmatprep.subr.mxu0 0.0
  %9378 = vmatpush1.msra.mxu0 0.0
  %9379 = vmatprep.subr.mxu0 0.0
  %9380 = vmatpush1.msra.mxu0 0.0
  %9381 = vmatprep.subr.mxu0 0.0
  %9382 = vmatpush1.msra.mxu0 0.0
  %9383 = vmatprep.subr.mxu0 0.0
  %9384 = vmatpush1.msra.mxu0 0.0
  %9385 = vmatprep.subr.mxu0 0.0
  %9386 = vmatpush1.msra.mxu0 0.0
  %9387 = vmatprep.subr.mxu0 0.0
  %9388 = vmatpush1.msra.mxu0 0.0
  %9389 = vmatprep.subr.mxu0 0.0
  %9390 = vmatpush1.msra.mxu0 0.0
  %9391 = vmatprep.subr.mxu0 0.0
  %9392 = vmatpush1.msra.mxu0 0.0
  %9393 = vmatprep.subr.mxu0 0.0
  %9394 = vmatpush1.msra.mxu0 0.0
  %9395 = vmatprep.subr.mxu0 0.0
  %9396 = vmatpush1.msra.mxu0 0.0
  %9397 = vmatprep.subr.mxu0 0.0
  %9398 = vmatpush1.msra.mxu0 0.0
  %9399 = vmatprep.subr.mxu0 0.0
  %9400 = vmatpush1.msra.mxu0 0.0
  %9401 = vmatprep.subr.mxu0 0.0
  %9402 = vmatpush1.msra.mxu0 0.0
  %9403 = vmatprep.subr.mxu0 0.0
  %9404 = vmatpush1.msra.mxu0 0.0
  %9405 = vmatprep.subr.mxu0 0.0
  %9406 = vmatpush1.msra.mxu0 0.0
  %9407 = vmatprep.subr.mxu0 0.0
  %9408 = vmatpush1.msra.mxu0 0.0
  %9409 = vmatprep.subr.mxu0 0.0
  %9410 = vmatpush1.msra.mxu0 0.0
  %9411 = vmatprep.subr.mxu0 0.0
  %9412 = vmatpush1.msra.mxu0 0.0
  %9413 = vmatprep.subr.mxu0 0.0
  %9414 = vmatpush1.msra.mxu0 0.0
  %9415 = vmatprep.subr.mxu0 0.0
  %9416 = vmatpush1.msra.mxu0 0.0
  %9417 = vmatprep.subr.mxu0 0.0
  %9418 = vmatpush1.msra.mxu0 0.0
  %9419 = vmatprep.subr.mxu0 0.0
  %9420 = vmatpush1.msra.mxu0 0.0
  %9421 = vmatprep.mubr.f32.mxu0 0.0
  %9422 = vmatmul.mubr.f32.gmra.mrb[0].mxu0 %v2133
  %v9423 = vpop.f32.mrb[0].mxu0
  %v9424 = vadd.f32 0.0, %v9423
  %v9425 = vpop.f32.mrb[0].mxu0
  %9426 = vmatprep.mubr.f32.mxu0 0.0
  %9427 = vmatmul.mubr.f32.gmra.mrb[0].mxu0 %v2136
  %v9428 = vpop.f32.mrb[0].mxu0
  %v9429 = vadd.f32 0.0, %v9428
  %v9430 = vpop.f32.mrb[0].mxu0
  %9431 = vmatprep.mubr.f32.mxu0 0.0
  %9432 = vmatmul.mubr.f32.gmra.mrb[0].mxu0 %v2139
  %v9433 = vpop.f32.mrb[0].mxu0
  %v9434 = vadd.f32 0.0, %v9433
  %v9435 = vpop.f32.mrb[0].mxu0
  %9436 = vmatprep.mubr.f32.mxu0 0.0
  %9437 = vmatmul.mubr.f32.gmra.mrb[0].mxu0 %v2142
  %v9438 = vpop.f32.mrb[0].mxu0
  %v9439 = vadd.f32 0.0, %v9438
  %v9440 = vpop.f32.mrb[0].mxu0
  %9441 = vdwg.mxu0
  %s9442 = scalar_lea.vmem %s3, 1824
  %9443 = vst.msk [vmem:[%s9442] sm:$0xff] %vm718, %v9424
  %9444 = vst.msk [vmem:[%s9442 + $0x8] sm:$0xff] %vm718, %v9429
  %9445 = vst.msk [vmem:[%s9442 + $0x10] sm:$0xff] %vm718, %v9434
  %9446 = vst.msk [vmem:[%s9442 + $0x18] sm:$0xff] %vm718, %v9439
  %9447 = vmatprep.subr.mxu0 0.0
  %9448 = vmatpush1.msra.mxu0 %v6965
  %9449 = vmatprep.subr.mxu0 0.0
  %9450 = vmatpush1.msra.mxu0 %v7101
  %9451 = vmatprep.subr.mxu0 0.0
  %9452 = vmatpush1.msra.mxu0 0.0
  %9453 = vmatprep.subr.mxu0 0.0
  %9454 = vmatpush1.msra.mxu0 0.0
  %9455 = vmatprep.subr.mxu0 0.0
  %9456 = vmatpush1.msra.mxu0 0.0
  %9457 = vmatprep.subr.mxu0 0.0
  %9458 = vmatpush1.msra.mxu0 0.0
  %9459 = vmatprep.subr.mxu0 0.0
  %9460 = vmatpush1.msra.mxu0 0.0
  %9461 = vmatprep.subr.mxu0 0.0
  %9462 = vmatpush1.msra.mxu0 0.0
  %9463 = vmatprep.subr.mxu0 0.0
  %9464 = vmatpush1.msra.mxu0 0.0
  %9465 = vmatprep.subr.mxu0 0.0
  %9466 = vmatpush1.msra.mxu0 0.0
  %9467 = vmatprep.subr.mxu0 0.0
  %9468 = vmatpush1.msra.mxu0 0.0
  %9469 = vmatprep.subr.mxu0 0.0
  %9470 = vmatpush1.msra.mxu0 0.0
  %9471 = vmatprep.subr.mxu0 0.0
  %9472 = vmatpush1.msra.mxu0 0.0
  %9473 = vmatprep.subr.mxu0 0.0
  %9474 = vmatpush1.msra.mxu0 0.0
  %9475 = vmatprep.subr.mxu0 0.0
  %9476 = vmatpush1.msra.mxu0 0.0
  %9477 = vmatprep.subr.mxu0 0.0
  %9478 = vmatpush1.msra.mxu0 0.0
  %9479 = vmatprep.subr.mxu0 0.0
  %9480 = vmatpush1.msra.mxu0 0.0
  %9481 = vmatprep.subr.mxu0 0.0
  %9482 = vmatpush1.msra.mxu0 0.0
  %9483 = vmatprep.subr.mxu0 0.0
  %9484 = vmatpush1.msra.mxu0 0.0
  %9485 = vmatprep.subr.mxu0 0.0
  %9486 = vmatpush1.msra.mxu0 0.0
  %9487 = vmatprep.subr.mxu0 0.0
  %9488 = vmatpush1.msra.mxu0 0.0
  %9489 = vmatprep.subr.mxu0 0.0
  %9490 = vmatpush1.msra.mxu0 0.0
  %9491 = vmatprep.subr.mxu0 0.0
  %9492 = vmatpush1.msra.mxu0 0.0
  %9493 = vmatprep.subr.mxu0 0.0
  %9494 = vmatpush1.msra.mxu0 0.0
  %9495 = vmatprep.subr.mxu0 0.0
  %9496 = vmatpush1.msra.mxu0 0.0
  %9497 = vmatprep.subr.mxu0 0.0
  %9498 = vmatpush1.msra.mxu0 0.0
  %9499 = vmatprep.subr.mxu0 0.0
  %9500 = vmatpush1.msra.mxu0 0.0
  %9501 = vmatprep.subr.mxu0 0.0
  %9502 = vmatpush1.msra.mxu0 0.0
  %9503 = vmatprep.subr.mxu0 0.0
  %9504 = vmatpush1.msra.mxu0 0.0
  %9505 = vmatprep.subr.mxu0 0.0
  %9506 = vmatpush1.msra.mxu0 0.0
  %9507 = vmatprep.subr.mxu0 0.0
  %9508 = vmatpush1.msra.mxu0 0.0
  %9509 = vmatprep.subr.mxu0 0.0
  %9510 = vmatpush1.msra.mxu0 0.0
  %9511 = vmatprep.mubr.f32.mxu0 0.0
  %9512 = vmatmul.mubr.f32.gmra.mrb[0].mxu0 %v2133
  %v9513 = vpop.f32.mrb[0].mxu0
  %v9514 = vadd.f32 0.0, %v9513
  %v9515 = vpop.f32.mrb[0].mxu0
  %9516 = vmatprep.mubr.f32.mxu0 0.0
  %9517 = vmatmul.mubr.f32.gmra.mrb[0].mxu0 %v2136
  %v9518 = vpop.f32.mrb[0].mxu0
  %v9519 = vadd.f32 0.0, %v9518
  %v9520 = vpop.f32.mrb[0].mxu0
  %9521 = vmatprep.mubr.f32.mxu0 0.0
  %9522 = vmatmul.mubr.f32.gmra.mrb[0].mxu0 %v2139
  %v9523 = vpop.f32.mrb[0].mxu0
  %v9524 = vadd.f32 0.0, %v9523
  %v9525 = vpop.f32.mrb[0].mxu0
  %9526 = vmatprep.mubr.f32.mxu0 0.0
  %9527 = vmatmul.mubr.f32.gmra.mrb[0].mxu0 %v2142
  %v9528 = vpop.f32.mrb[0].mxu0
  %v9529 = vadd.f32 0.0, %v9528
  %v9530 = vpop.f32.mrb[0].mxu0
  %9531 = vdwg.mxu0
  %s9532 = scalar_lea.vmem %s3, 1856
  %9533 = vst.msk [vmem:[%s9532] sm:$0xff] %vm718, %v9514
  %9534 = vst.msk [vmem:[%s9532 + $0x8] sm:$0xff] %vm718, %v9519
  %9535 = vst.msk [vmem:[%s9532 + $0x10] sm:$0xff] %vm718, %v9524
  %9536 = vst.msk [vmem:[%s9532 + $0x18] sm:$0xff] %vm718, %v9529
  %9537 = vmatprep.subr.mxu0 0.0
  %9538 = vmatpush1.msra.mxu0 %v6966
  %9539 = vmatprep.subr.mxu0 0.0
  %9540 = vmatpush1.msra.mxu0 %v7102
  %9541 = vmatprep.subr.mxu0 0.0
  %9542 = vmatpush1.msra.mxu0 0.0
  %9543 = vmatprep.subr.mxu0 0.0
  %9544 = vmatpush1.msra.mxu0 0.0
  %9545 = vmatprep.subr.mxu0 0.0
  %9546 = vmatpush1.msra.mxu0 0.0
  %9547 = vmatprep.subr.mxu0 0.0
  %9548 = vmatpush1.msra.mxu0 0.0
  %9549 = vmatprep.subr.mxu0 0.0
  %9550 = vmatpush1.msra.mxu0 0.0
  %9551 = vmatprep.subr.mxu0 0.0
  %9552 = vmatpush1.msra.mxu0 0.0
  %9553 = vmatprep.subr.mxu0 0.0
  %9554 = vmatpush1.msra.mxu0 0.0
  %9555 = vmatprep.subr.mxu0 0.0
  %9556 = vmatpush1.msra.mxu0 0.0
  %9557 = vmatprep.subr.mxu0 0.0
  %9558 = vmatpush1.msra.mxu0 0.0
  %9559 = vmatprep.subr.mxu0 0.0
  %9560 = vmatpush1.msra.mxu0 0.0
  %9561 = vmatprep.subr.mxu0 0.0
  %9562 = vmatpush1.msra.mxu0 0.0
  %9563 = vmatprep.subr.mxu0 0.0
  %9564 = vmatpush1.msra.mxu0 0.0
  %9565 = vmatprep.subr.mxu0 0.0
  %9566 = vmatpush1.msra.mxu0 0.0
  %9567 = vmatprep.subr.mxu0 0.0
  %9568 = vmatpush1.msra.mxu0 0.0
  %9569 = vmatprep.subr.mxu0 0.0
  %9570 = vmatpush1.msra.mxu0 0.0
  %9571 = vmatprep.subr.mxu0 0.0
  %9572 = vmatpush1.msra.mxu0 0.0
  %9573 = vmatprep.subr.mxu0 0.0
  %9574 = vmatpush1.msra.mxu0 0.0
  %9575 = vmatprep.subr.mxu0 0.0
  %9576 = vmatpush1.msra.mxu0 0.0
  %9577 = vmatprep.subr.mxu0 0.0
  %9578 = vmatpush1.msra.mxu0 0.0
  %9579 = vmatprep.subr.mxu0 0.0
  %9580 = vmatpush1.msra.mxu0 0.0
  %9581 = vmatprep.subr.mxu0 0.0
  %9582 = vmatpush1.msra.mxu0 0.0
  %9583 = vmatprep.subr.mxu0 0.0
  %9584 = vmatpush1.msra.mxu0 0.0
  %9585 = vmatprep.subr.mxu0 0.0
  %9586 = vmatpush1.msra.mxu0 0.0
  %9587 = vmatprep.subr.mxu0 0.0
  %9588 = vmatpush1.msra.mxu0 0.0
  %9589 = vmatprep.subr.mxu0 0.0
  %9590 = vmatpush1.msra.mxu0 0.0
  %9591 = vmatprep.subr.mxu0 0.0
  %9592 = vmatpush1.msra.mxu0 0.0
  %9593 = vmatprep.subr.mxu0 0.0
  %9594 = vmatpush1.msra.mxu0 0.0
  %9595 = vmatprep.subr.mxu0 0.0
  %9596 = vmatpush1.msra.mxu0 0.0
  %9597 = vmatprep.subr.mxu0 0.0
  %9598 = vmatpush1.msra.mxu0 0.0
  %9599 = vmatprep.subr.mxu0 0.0
  %9600 = vmatpush1.msra.mxu0 0.0
  %9601 = vmatprep.mubr.f32.mxu0 0.0
  %9602 = vmatmul.mubr.f32.gmra.mrb[0].mxu0 %v2133
  %v9603 = vpop.f32.mrb[0].mxu0
  %v9604 = vadd.f32 0.0, %v9603
  %v9605 = vpop.f32.mrb[0].mxu0
  %9606 = vmatprep.mubr.f32.mxu0 0.0
  %9607 = vmatmul.mubr.f32.gmra.mrb[0].mxu0 %v2136
  %v9608 = vpop.f32.mrb[0].mxu0
  %v9609 = vadd.f32 0.0, %v9608
  %v9610 = vpop.f32.mrb[0].mxu0
  %9611 = vmatprep.mubr.f32.mxu0 0.0
  %9612 = vmatmul.mubr.f32.gmra.mrb[0].mxu0 %v2139
  %v9613 = vpop.f32.mrb[0].mxu0
  %v9614 = vadd.f32 0.0, %v9613
  %v9615 = vpop.f32.mrb[0].mxu0
  %9616 = vmatprep.mubr.f32.mxu0 0.0
  %9617 = vmatmul.mubr.f32.gmra.mrb[0].mxu0 %v2142
  %v9618 = vpop.f32.mrb[0].mxu0
  %v9619 = vadd.f32 0.0, %v9618
  %v9620 = vpop.f32.mrb[0].mxu0
  %9621 = vdwg.mxu0
  %s9622 = scalar_lea.vmem %s3, 1888
  %9623 = vst.msk [vmem:[%s9622] sm:$0xff] %vm718, %v9604
  %9624 = vst.msk [vmem:[%s9622 + $0x8] sm:$0xff] %vm718, %v9609
  %9625 = vst.msk [vmem:[%s9622 + $0x10] sm:$0xff] %vm718, %v9614
  %9626 = vst.msk [vmem:[%s9622 + $0x18] sm:$0xff] %vm718, %v9619
  %9627 = vmatprep.subr.mxu0 0.0
  %9628 = vmatpush1.msra.mxu0 %v6967
  %9629 = vmatprep.subr.mxu0 0.0
  %9630 = vmatpush1.msra.mxu0 %v7103
  %9631 = vmatprep.subr.mxu0 0.0
  %9632 = vmatpush1.msra.mxu0 0.0
  %9633 = vmatprep.subr.mxu0 0.0
  %9634 = vmatpush1.msra.mxu0 0.0
  %9635 = vmatprep.subr.mxu0 0.0
  %9636 = vmatpush1.msra.mxu0 0.0
  %9637 = vmatprep.subr.mxu0 0.0
  %9638 = vmatpush1.msra.mxu0 0.0
  %9639 = vmatprep.subr.mxu0 0.0
  %9640 = vmatpush1.msra.mxu0 0.0
  %9641 = vmatprep.subr.mxu0 0.0
  %9642 = vmatpush1.msra.mxu0 0.0
  %9643 = vmatprep.subr.mxu0 0.0
  %9644 = vmatpush1.msra.mxu0 0.0
  %9645 = vmatprep.subr.mxu0 0.0
  %9646 = vmatpush1.msra.mxu0 0.0
  %9647 = vmatprep.subr.mxu0 0.0
  %9648 = vmatpush1.msra.mxu0 0.0
  %9649 = vmatprep.subr.mxu0 0.0
  %9650 = vmatpush1.msra.mxu0 0.0
  %9651 = vmatprep.subr.mxu0 0.0
  %9652 = vmatpush1.msra.mxu0 0.0
  %9653 = vmatprep.subr.mxu0 0.0
  %9654 = vmatpush1.msra.mxu0 0.0
  %9655 = vmatprep.subr.mxu0 0.0
  %9656 = vmatpush1.msra.mxu0 0.0
  %9657 = vmatprep.subr.mxu0 0.0
  %9658 = vmatpush1.msra.mxu0 0.0
  %9659 = vmatprep.subr.mxu0 0.0
  %9660 = vmatpush1.msra.mxu0 0.0
  %9661 = vmatprep.subr.mxu0 0.0
  %9662 = vmatpush1.msra.mxu0 0.0
  %9663 = vmatprep.subr.mxu0 0.0
  %9664 = vmatpush1.msra.mxu0 0.0
  %9665 = vmatprep.subr.mxu0 0.0
  %9666 = vmatpush1.msra.mxu0 0.0
  %9667 = vmatprep.subr.mxu0 0.0
  %9668 = vmatpush1.msra.mxu0 0.0
  %9669 = vmatprep.subr.mxu0 0.0
  %9670 = vmatpush1.msra.mxu0 0.0
  %9671 = vmatprep.subr.mxu0 0.0
  %9672 = vmatpush1.msra.mxu0 0.0
  %9673 = vmatprep.subr.mxu0 0.0
  %9674 = vmatpush1.msra.mxu0 0.0
  %9675 = vmatprep.subr.mxu0 0.0
  %9676 = vmatpush1.msra.mxu0 0.0
  %9677 = vmatprep.subr.mxu0 0.0
  %9678 = vmatpush1.msra.mxu0 0.0
  %9679 = vmatprep.subr.mxu0 0.0
  %9680 = vmatpush1.msra.mxu0 0.0
  %9681 = vmatprep.subr.mxu0 0.0
  %9682 = vmatpush1.msra.mxu0 0.0
  %9683 = vmatprep.subr.mxu0 0.0
  %9684 = vmatpush1.msra.mxu0 0.0
  %9685 = vmatprep.subr.mxu0 0.0
  %9686 = vmatpush1.msra.mxu0 0.0
  %9687 = vmatprep.subr.mxu0 0.0
  %9688 = vmatpush1.msra.mxu0 0.0
  %9689 = vmatprep.subr.mxu0 0.0
  %9690 = vmatpush1.msra.mxu0 0.0
  %9691 = vmatprep.mubr.f32.mxu0 0.0
  %9692 = vmatmul.mubr.f32.gmra.mrb[0].mxu0 %v2133
  %v9693 = vpop.f32.mrb[0].mxu0
  %v9694 = vadd.f32 0.0, %v9693
  %v9695 = vpop.f32.mrb[0].mxu0
  %9696 = vmatprep.mubr.f32.mxu0 0.0
  %9697 = vmatmul.mubr.f32.gmra.mrb[0].mxu0 %v2136
  %v9698 = vpop.f32.mrb[0].mxu0
  %v9699 = vadd.f32 0.0, %v9698
  %v9700 = vpop.f32.mrb[0].mxu0
  %9701 = vmatprep.mubr.f32.mxu0 0.0
  %9702 = vmatmul.mubr.f32.gmra.mrb[0].mxu0 %v2139
  %v9703 = vpop.f32.mrb[0].mxu0
  %v9704 = vadd.f32 0.0, %v9703
  %v9705 = vpop.f32.mrb[0].mxu0
  %9706 = vmatprep.mubr.f32.mxu0 0.0
  %9707 = vmatmul.mubr.f32.gmra.mrb[0].mxu0 %v2142
  %v9708 = vpop.f32.mrb[0].mxu0
  %v9709 = vadd.f32 0.0, %v9708
  %v9710 = vpop.f32.mrb[0].mxu0
  %9711 = vdwg.mxu0
  %s9712 = scalar_lea.vmem %s3, 1920
  %9713 = vst.msk [vmem:[%s9712] sm:$0xff] %vm718, %v9694
  %9714 = vst.msk [vmem:[%s9712 + $0x8] sm:$0xff] %vm718, %v9699
  %9715 = vst.msk [vmem:[%s9712 + $0x10] sm:$0xff] %vm718, %v9704
  %9716 = vst.msk [vmem:[%s9712 + $0x18] sm:$0xff] %vm718, %v9709
  %9717 = vmatprep.subr.mxu0 0.0
  %9718 = vmatpush1.msra.mxu0 %v6968
  %9719 = vmatprep.subr.mxu0 0.0
  %9720 = vmatpush1.msra.mxu0 %v7104
  %9721 = vmatprep.subr.mxu0 0.0
  %9722 = vmatpush1.msra.mxu0 0.0
  %9723 = vmatprep.subr.mxu0 0.0
  %9724 = vmatpush1.msra.mxu0 0.0
  %9725 = vmatprep.subr.mxu0 0.0
  %9726 = vmatpush1.msra.mxu0 0.0
  %9727 = vmatprep.subr.mxu0 0.0
  %9728 = vmatpush1.msra.mxu0 0.0
  %9729 = vmatprep.subr.mxu0 0.0
  %9730 = vmatpush1.msra.mxu0 0.0
  %9731 = vmatprep.subr.mxu0 0.0
  %9732 = vmatpush1.msra.mxu0 0.0
  %9733 = vmatprep.subr.mxu0 0.0
  %9734 = vmatpush1.msra.mxu0 0.0
  %9735 = vmatprep.subr.mxu0 0.0
  %9736 = vmatpush1.msra.mxu0 0.0
  %9737 = vmatprep.subr.mxu0 0.0
  %9738 = vmatpush1.msra.mxu0 0.0
  %9739 = vmatprep.subr.mxu0 0.0
  %9740 = vmatpush1.msra.mxu0 0.0
  %9741 = vmatprep.subr.mxu0 0.0
  %9742 = vmatpush1.msra.mxu0 0.0
  %9743 = vmatprep.subr.mxu0 0.0
  %9744 = vmatpush1.msra.mxu0 0.0
  %9745 = vmatprep.subr.mxu0 0.0
  %9746 = vmatpush1.msra.mxu0 0.0
  %9747 = vmatprep.subr.mxu0 0.0
  %9748 = vmatpush1.msra.mxu0 0.0
  %9749 = vmatprep.subr.mxu0 0.0
  %9750 = vmatpush1.msra.mxu0 0.0
  %9751 = vmatprep.subr.mxu0 0.0
  %9752 = vmatpush1.msra.mxu0 0.0
  %9753 = vmatprep.subr.mxu0 0.0
  %9754 = vmatpush1.msra.mxu0 0.0
  %9755 = vmatprep.subr.mxu0 0.0
  %9756 = vmatpush1.msra.mxu0 0.0
  %9757 = vmatprep.subr.mxu0 0.0
  %9758 = vmatpush1.msra.mxu0 0.0
  %9759 = vmatprep.subr.mxu0 0.0
  %9760 = vmatpush1.msra.mxu0 0.0
  %9761 = vmatprep.subr.mxu0 0.0
  %9762 = vmatpush1.msra.mxu0 0.0
  %9763 = vmatprep.subr.mxu0 0.0
  %9764 = vmatpush1.msra.mxu0 0.0
  %9765 = vmatprep.subr.mxu0 0.0
  %9766 = vmatpush1.msra.mxu0 0.0
  %9767 = vmatprep.subr.mxu0 0.0
  %9768 = vmatpush1.msra.mxu0 0.0
  %9769 = vmatprep.subr.mxu0 0.0
  %9770 = vmatpush1.msra.mxu0 0.0
  %9771 = vmatprep.subr.mxu0 0.0
  %9772 = vmatpush1.msra.mxu0 0.0
  %9773 = vmatprep.subr.mxu0 0.0
  %9774 = vmatpush1.msra.mxu0 0.0
  %9775 = vmatprep.subr.mxu0 0.0
  %9776 = vmatpush1.msra.mxu0 0.0
  %9777 = vmatprep.subr.mxu0 0.0
  %9778 = vmatpush1.msra.mxu0 0.0
  %9779 = vmatprep.subr.mxu0 0.0
  %9780 = vmatpush1.msra.mxu0 0.0
  %9781 = vmatprep.mubr.f32.mxu0 0.0
  %9782 = vmatmul.mubr.f32.gmra.mrb[0].mxu0 %v2133
  %v9783 = vpop.f32.mrb[0].mxu0
  %v9784 = vadd.f32 0.0, %v9783
  %v9785 = vpop.f32.mrb[0].mxu0
  %9786 = vmatprep.mubr.f32.mxu0 0.0
  %9787 = vmatmul.mubr.f32.gmra.mrb[0].mxu0 %v2136
  %v9788 = vpop.f32.mrb[0].mxu0
  %v9789 = vadd.f32 0.0, %v9788
  %v9790 = vpop.f32.mrb[0].mxu0
  %9791 = vmatprep.mubr.f32.mxu0 0.0
  %9792 = vmatmul.mubr.f32.gmra.mrb[0].mxu0 %v2139
  %v9793 = vpop.f32.mrb[0].mxu0
  %v9794 = vadd.f32 0.0, %v9793
  %v9795 = vpop.f32.mrb[0].mxu0
  %9796 = vmatprep.mubr.f32.mxu0 0.0
  %9797 = vmatmul.mubr.f32.gmra.mrb[0].mxu0 %v2142
  %v9798 = vpop.f32.mrb[0].mxu0
  %v9799 = vadd.f32 0.0, %v9798
  %v9800 = vpop.f32.mrb[0].mxu0
  %9801 = vdwg.mxu0
  %s9802 = scalar_lea.vmem %s3, 1952
  %9803 = vst.msk [vmem:[%s9802] sm:$0xff] %vm718, %v9784
  %9804 = vst.msk [vmem:[%s9802 + $0x8] sm:$0xff] %vm718, %v9789
  %9805 = vst.msk [vmem:[%s9802 + $0x10] sm:$0xff] %vm718, %v9794
  %9806 = vst.msk [vmem:[%s9802 + $0x18] sm:$0xff] %vm718, %v9799
  %9807 = vmatprep.subr.mxu0 0.0
  %9808 = vmatpush1.msra.mxu0 %v6969
  %9809 = vmatprep.subr.mxu0 0.0
  %9810 = vmatpush1.msra.mxu0 %v7105
  %9811 = vmatprep.subr.mxu0 0.0
  %9812 = vmatpush1.msra.mxu0 0.0
  %9813 = vmatprep.subr.mxu0 0.0
  %9814 = vmatpush1.msra.mxu0 0.0
  %9815 = vmatprep.subr.mxu0 0.0
  %9816 = vmatpush1.msra.mxu0 0.0
  %9817 = vmatprep.subr.mxu0 0.0
  %9818 = vmatpush1.msra.mxu0 0.0
  %9819 = vmatprep.subr.mxu0 0.0
  %9820 = vmatpush1.msra.mxu0 0.0
  %9821 = vmatprep.subr.mxu0 0.0
  %9822 = vmatpush1.msra.mxu0 0.0
  %9823 = vmatprep.subr.mxu0 0.0
  %9824 = vmatpush1.msra.mxu0 0.0
  %9825 = vmatprep.subr.mxu0 0.0
  %9826 = vmatpush1.msra.mxu0 0.0
  %9827 = vmatprep.subr.mxu0 0.0
  %9828 = vmatpush1.msra.mxu0 0.0
  %9829 = vmatprep.subr.mxu0 0.0
  %9830 = vmatpush1.msra.mxu0 0.0
  %9831 = vmatprep.subr.mxu0 0.0
  %9832 = vmatpush1.msra.mxu0 0.0
  %9833 = vmatprep.subr.mxu0 0.0
  %9834 = vmatpush1.msra.mxu0 0.0
  %9835 = vmatprep.subr.mxu0 0.0
  %9836 = vmatpush1.msra.mxu0 0.0
  %9837 = vmatprep.subr.mxu0 0.0
  %9838 = vmatpush1.msra.mxu0 0.0
  %9839 = vmatprep.subr.mxu0 0.0
  %9840 = vmatpush1.msra.mxu0 0.0
  %9841 = vmatprep.subr.mxu0 0.0
  %9842 = vmatpush1.msra.mxu0 0.0
  %9843 = vmatprep.subr.mxu0 0.0
  %9844 = vmatpush1.msra.mxu0 0.0
  %9845 = vmatprep.subr.mxu0 0.0
  %9846 = vmatpush1.msra.mxu0 0.0
  %9847 = vmatprep.subr.mxu0 0.0
  %9848 = vmatpush1.msra.mxu0 0.0
  %9849 = vmatprep.subr.mxu0 0.0
  %9850 = vmatpush1.msra.mxu0 0.0
  %9851 = vmatprep.subr.mxu0 0.0
  %9852 = vmatpush1.msra.mxu0 0.0
  %9853 = vmatprep.subr.mxu0 0.0
  %9854 = vmatpush1.msra.mxu0 0.0
  %9855 = vmatprep.subr.mxu0 0.0
  %9856 = vmatpush1.msra.mxu0 0.0
  %9857 = vmatprep.subr.mxu0 0.0
  %9858 = vmatpush1.msra.mxu0 0.0
  %9859 = vmatprep.subr.mxu0 0.0
  %9860 = vmatpush1.msra.mxu0 0.0
  %9861 = vmatprep.subr.mxu0 0.0
  %9862 = vmatpush1.msra.mxu0 0.0
  %9863 = vmatprep.subr.mxu0 0.0
  %9864 = vmatpush1.msra.mxu0 0.0
  %9865 = vmatprep.subr.mxu0 0.0
  %9866 = vmatpush1.msra.mxu0 0.0
  %9867 = vmatprep.subr.mxu0 0.0
  %9868 = vmatpush1.msra.mxu0 0.0
  %9869 = vmatprep.subr.mxu0 0.0
  %9870 = vmatpush1.msra.mxu0 0.0
  %9871 = vmatprep.mubr.f32.mxu0 0.0
  %9872 = vmatmul.mubr.f32.gmra.mrb[0].mxu0 %v2133
  %v9873 = vpop.f32.mrb[0].mxu0
  %v9874 = vadd.f32 0.0, %v9873
  %v9875 = vpop.f32.mrb[0].mxu0
  %9876 = vmatprep.mubr.f32.mxu0 0.0
  %9877 = vmatmul.mubr.f32.gmra.mrb[0].mxu0 %v2136
  %v9878 = vpop.f32.mrb[0].mxu0
  %v9879 = vadd.f32 0.0, %v9878
  %v9880 = vpop.f32.mrb[0].mxu0
  %9881 = vmatprep.mubr.f32.mxu0 0.0
  %9882 = vmatmul.mubr.f32.gmra.mrb[0].mxu0 %v2139
  %v9883 = vpop.f32.mrb[0].mxu0
  %v9884 = vadd.f32 0.0, %v9883
  %v9885 = vpop.f32.mrb[0].mxu0
  %9886 = vmatprep.mubr.f32.mxu0 0.0
  %9887 = vmatmul.mubr.f32.gmra.mrb[0].mxu0 %v2142
  %v9888 = vpop.f32.mrb[0].mxu0
  %v9889 = vadd.f32 0.0, %v9888
  %v9890 = vpop.f32.mrb[0].mxu0
  %9891 = vdwg.mxu0
  %s9892 = scalar_lea.vmem %s3, 1984
  %9893 = vst.msk [vmem:[%s9892] sm:$0xff] %vm718, %v9874
  %9894 = vst.msk [vmem:[%s9892 + $0x8] sm:$0xff] %vm718, %v9879
  %9895 = vst.msk [vmem:[%s9892 + $0x10] sm:$0xff] %vm718, %v9884
  %9896 = vst.msk [vmem:[%s9892 + $0x18] sm:$0xff] %vm718, %v9889
  %9897 = vmatprep.subr.mxu0 0.0
  %9898 = vmatpush1.msra.mxu0 %v6970
  %9899 = vmatprep.subr.mxu0 0.0
  %9900 = vmatpush1.msra.mxu0 %v7106
  %9901 = vmatprep.subr.mxu0 0.0
  %9902 = vmatpush1.msra.mxu0 0.0
  %9903 = vmatprep.subr.mxu0 0.0
  %9904 = vmatpush1.msra.mxu0 0.0
  %9905 = vmatprep.subr.mxu0 0.0
  %9906 = vmatpush1.msra.mxu0 0.0
  %9907 = vmatprep.subr.mxu0 0.0
  %9908 = vmatpush1.msra.mxu0 0.0
  %9909 = vmatprep.subr.mxu0 0.0
  %9910 = vmatpush1.msra.mxu0 0.0
  %9911 = vmatprep.subr.mxu0 0.0
  %9912 = vmatpush1.msra.mxu0 0.0
  %9913 = vmatprep.subr.mxu0 0.0
  %9914 = vmatpush1.msra.mxu0 0.0
  %9915 = vmatprep.subr.mxu0 0.0
  %9916 = vmatpush1.msra.mxu0 0.0
  %9917 = vmatprep.subr.mxu0 0.0
  %9918 = vmatpush1.msra.mxu0 0.0
  %9919 = vmatprep.subr.mxu0 0.0
  %9920 = vmatpush1.msra.mxu0 0.0
  %9921 = vmatprep.subr.mxu0 0.0
  %9922 = vmatpush1.msra.mxu0 0.0
  %9923 = vmatprep.subr.mxu0 0.0
  %9924 = vmatpush1.msra.mxu0 0.0
  %9925 = vmatprep.subr.mxu0 0.0
  %9926 = vmatpush1.msra.mxu0 0.0
  %9927 = vmatprep.subr.mxu0 0.0
  %9928 = vmatpush1.msra.mxu0 0.0
  %9929 = vmatprep.subr.mxu0 0.0
  %9930 = vmatpush1.msra.mxu0 0.0
  %9931 = vmatprep.subr.mxu0 0.0
  %9932 = vmatpush1.msra.mxu0 0.0
  %9933 = vmatprep.subr.mxu0 0.0
  %9934 = vmatpush1.msra.mxu0 0.0
  %9935 = vmatprep.subr.mxu0 0.0
  %9936 = vmatpush1.msra.mxu0 0.0
  %9937 = vmatprep.subr.mxu0 0.0
  %9938 = vmatpush1.msra.mxu0 0.0
  %9939 = vmatprep.subr.mxu0 0.0
  %9940 = vmatpush1.msra.mxu0 0.0
  %9941 = vmatprep.subr.mxu0 0.0
  %9942 = vmatpush1.msra.mxu0 0.0
  %9943 = vmatprep.subr.mxu0 0.0
  %9944 = vmatpush1.msra.mxu0 0.0
  %9945 = vmatprep.subr.mxu0 0.0
  %9946 = vmatpush1.msra.mxu0 0.0
  %9947 = vmatprep.subr.mxu0 0.0
  %9948 = vmatpush1.msra.mxu0 0.0
  %9949 = vmatprep.subr.mxu0 0.0
  %9950 = vmatpush1.msra.mxu0 0.0
  %9951 = vmatprep.subr.mxu0 0.0
  %9952 = vmatpush1.msra.mxu0 0.0
  %9953 = vmatprep.subr.mxu0 0.0
  %9954 = vmatpush1.msra.mxu0 0.0
  %9955 = vmatprep.subr.mxu0 0.0
  %9956 = vmatpush1.msra.mxu0 0.0
  %9957 = vmatprep.subr.mxu0 0.0
  %9958 = vmatpush1.msra.mxu0 0.0
  %9959 = vmatprep.subr.mxu0 0.0
  %9960 = vmatpush1.msra.mxu0 0.0
  %9961 = vmatprep.mubr.f32.mxu0 0.0
  %9962 = vmatmul.mubr.f32.gmra.mrb[0].mxu0 %v2133
  %v9963 = vpop.f32.mrb[0].mxu0
  %v9964 = vadd.f32 0.0, %v9963
  %v9965 = vpop.f32.mrb[0].mxu0
  %9966 = vmatprep.mubr.f32.mxu0 0.0
  %9967 = vmatmul.mubr.f32.gmra.mrb[0].mxu0 %v2136
  %v9968 = vpop.f32.mrb[0].mxu0
  %v9969 = vadd.f32 0.0, %v9968
  %v9970 = vpop.f32.mrb[0].mxu0
  %9971 = vmatprep.mubr.f32.mxu0 0.0
  %9972 = vmatmul.mubr.f32.gmra.mrb[0].mxu0 %v2139
  %v9973 = vpop.f32.mrb[0].mxu0
  %v9974 = vadd.f32 0.0, %v9973
  %v9975 = vpop.f32.mrb[0].mxu0
  %9976 = vmatprep.mubr.f32.mxu0 0.0
  %9977 = vmatmul.mubr.f32.gmra.mrb[0].mxu0 %v2142
  %v9978 = vpop.f32.mrb[0].mxu0
  %v9979 = vadd.f32 0.0, %v9978
  %v9980 = vpop.f32.mrb[0].mxu0
  %9981 = vdwg.mxu0
  %s9982 = scalar_lea.vmem %s3, 2016
  %9983 = vst.msk [vmem:[%s9982] sm:$0xff] %vm718, %v9964
  %9984 = vst.msk [vmem:[%s9982 + $0x8] sm:$0xff] %vm718, %v9969
  %9985 = vst.msk [vmem:[%s9982 + $0x10] sm:$0xff] %vm718, %v9974
  %9986 = vst.msk [vmem:[%s9982 + $0x18] sm:$0xff] %vm718, %v9979
  // Predicated region
  $region14: #{tpu_custom_call.1} parent=0 // pred_check
    _
  $region15: #{tpu_custom_call.1} parent=0 // pred_check_branch
    %9988 = sbr.rel (0) target = $region17
  $region16: #{tpu_custom_call.1} parent=0 // pred_region
    _
  $region17: #{tpu_custom_call.1} parent=0 // pred_fallthru
    _
  // Predicated region
  $region18: #{tpu_custom_call.1} parent=0 // pred_check
    _
  $region19: #{tpu_custom_call.1} parent=0 // pred_check_branch
    %9990 = sbr.rel (0) target = $region21
  $region20: #{tpu_custom_call.1} parent=0 // pred_region
    _
  $region21: #{tpu_custom_call.1} parent=0 // pred_fallthru
    _

</llo_original>
